<compile_context>
chip_gen: v7x
topology: tpu7x:2x2x1
jax: 0.10.0
libtpu: 0.0.40
codegen_flags: <defaults>
</compile_context>

<pallas_src>
import functools

import jax
import jax.numpy as jnp
from jax.experimental import pallas as pl
from jax.experimental.pallas import tpu as pltpu

_HI = jax.lax.Precision.HIGHEST


# ----------------------------------------------------------------------------
# Fused Pallas kernel: both SwitchModules + soft selection + critic head
# ----------------------------------------------------------------------------
def _fused_switch_kernel(*refs, num_hidden):
    f32 = jnp.float32
    x_ref, th_ref, w_in_ref, b_in_ref = refs[0:4]
    idx = 4
    if num_hidden > 0:
        w_hid_ref, b_hid_ref = refs[4:6]
        idx = 6
    (w_out_ref, b_out_ref, w_att_ref, b_att_ref, half_ref, expand_ref,
     reduce_ref, head_w_ref, head_b_ref, out_ref) = refs[idx:idx + 10]

    def mm(a, b):
        return jnp.dot(a, b, precision=_HI, preferred_element_type=f32)

    x = x_ref[...]                                            # (TB, I)

    # ---- MLP over all G = 2*num_modules modules at once (lane-folded) ------
    h = jnp.tanh(mm(x, w_in_ref[...]) + b_in_ref[...])        # (TB, G*H)
    if num_hidden > 0:
        for l in range(num_hidden):                           # static unroll
            h = jnp.tanh(mm(h, w_hid_ref[l]) + b_hid_ref[l])  # block-diag weights
    out = mm(h, w_out_ref[...]) + b_out_ref[...]              # (TB, G*H), pre-tanh

    # ---- Soft switch: per-net softmax over modules (lane-blocked) ----------
    att = mm(th_ref[...], w_att_ref[...]) + b_att_ref[...]    # (TB, G)
    # Per-row global max; softmax is shift-invariant within each half.
    att = att - jnp.max(att, axis=-1, keepdims=True)
    e = jnp.exp(att)
    denom = mm(e, half_ref[...])                              # per-half sums, (TB, G)
    sel = e * pl.reciprocal(denom, approx=False)              # (TB, G)
    sel_rep = mm(sel, expand_ref[...])                        # broadcast over H lanes
    # Weighted sum over each net's modules: (TB, G*H) x (G*H, 2H) -> (TB, 2H)
    combined = jnp.tanh(mm(out * sel_rep, reduce_ref[...]))   # [tanh critic | tanh actor]

    # ---- Lane-dense output slab: actor lanes 0..H-1, value lane H ----------
    out_ref[...] = mm(combined, head_w_ref[...]) + head_b_ref[...]   # (TB, OUT_W)


def _choose_tile(B):
    if B <= 256:
        return max(8, ((B + 7) // 8) * 8)          # single tile for tiny B
    # Large B: 512-1024-row tiles, but keep >= 2 tiles so both v7x TCs get work.
    half = (B + 1) // 2
    return min(1024, ((half + 127) // 128) * 128)


def fused_switch_forward(fused, net_input, theta_input, *, num_hidden):
    """net_input (B, I), theta_input (B, T) -> (value (B, 1), actor (B, H))."""
    B, I = net_input.shape
    T = theta_input.shape[1]
    two_H, OUT_W = fused['head'].shape
    H = two_H // 2

    TB = _choose_tile(B)
    Bp = ((B + TB - 1) // TB) * TB
    if Bp != B:
        net_input = jnp.pad(net_input, ((0, Bp - B), (0, 0)))
        theta_input = jnp.pad(theta_input, ((0, Bp - B), (0, 0)))

    def _full_spec(a):
        nd = a.ndim
        return pl.BlockSpec(a.shape, lambda i, _nd=nd: (0,) * _nd)

    weight_args = [fused['w_in'], fused['b_in']]
    if num_hidden > 0:
        weight_args += [fused['w_hid'], fused['b_hid']]
    weight_args += [fused['w_out'], fused['b_out'], fused['w_att'], fused['b_att'],
                    fused['half_ones'], fused['expand'], fused['reduce'],
                    fused['head'], fused['head_bias']]

    kernel = functools.partial(_fused_switch_kernel, num_hidden=num_hidden)
    slab = pl.pallas_call(
        kernel,
        out_shape=jax.ShapeDtypeStruct((Bp, OUT_W), jnp.float32),
        grid=(Bp // TB,),
        in_specs=[pl.BlockSpec((TB, I), lambda i: (i, 0)),
                  pl.BlockSpec((TB, T), lambda i: (i, 0))]
                 + [_full_spec(a) for a in weight_args],
        out_specs=pl.BlockSpec((TB, OUT_W), lambda i: (i, 0)),
        compiler_params=pltpu.CompilerParams(
            dimension_semantics=("parallel",),
            vmem_limit_bytes=32 << 20),
    )(net_input.astype(jnp.float32), theta_input.astype(jnp.float32), *weight_args)

    value = slab[:B, H:H + 1]
    actor = slab[:B, :H]
    return value, actor


# ----------------------------------------------------------------------------
# Parameters (deterministic).  Forward math matches the PyTorch module; the
# init distribution is a simple scaled normal (the repo's init_normc_ helper is
# not part of the spec and does not affect forward semantics).
# ----------------------------------------------------------------------------
def init_params(key, *, input_sz, theta_sz, hid_sz, num_modules, num_layer,
                phase_period=None, obs_sz=None):
    L = num_layer - 2            # no dummy hidden slab when num_layer == 2
    f = jnp.float32

    def net(k):
        ks = jax.random.split(k, 7)
        p = {
            'w_in':  0.3 * jax.random.normal(ks[0], (num_modules, hid_sz, input_sz), f),
            'b_in':  0.1 * jax.random.normal(ks[1], (num_modules, hid_sz), f),
            'w_out': 0.3 * jax.random.normal(ks[4], (num_modules, hid_sz, hid_sz), f),
            'b_out': 0.1 * jax.random.normal(ks[5], (num_modules, hid_sz), f),
            'w_att': 0.5 * jax.random.normal(ks[6], (num_modules, theta_sz), f),
            'b_att': jnp.zeros((num_modules,), f),
        }
        if L > 0:
            p['w_hid'] = 0.3 * jax.random.normal(ks[2], (L, num_modules, hid_sz, hid_sz), f)
            p['b_hid'] = 0.1 * jax.random.normal(ks[3], (L, num_modules, hid_sz), f)
        return p

    kc, ka, kv, kp = jax.random.split(key, 4)
    params = {
        'critic': net(kc),
        'actor': net(ka),
        'critic_out_w': 0.3 * jax.random.normal(kv, (1, hid_sz), f),
        'critic_out_b': jnp.zeros((1,), f),
    }
    if phase_period is not None:
        params['phase_param'] = 0.5 * jax.random.normal(kp, (phase_period, obs_sz), f)
    return params


def fold_params(params, *, num_hidden):
    """One-time packing of both SwitchModules into lane-folded / block-diagonal
    weights plus the structural selection / output-head matrices."""
    f32 = jnp.float32
    c, a = params['critic'], params['actor']
    w_in_G = jnp.concatenate([c['w_in'], a['w_in']], 0)       # (G, H, I)
    b_in_G = jnp.concatenate([c['b_in'], a['b_in']], 0)       # (G, H)
    w_out_G = jnp.concatenate([c['w_out'], a['w_out']], 0)    # (G, H, H)
    b_out_G = jnp.concatenate([c['b_out'], a['b_out']], 0)
    w_att_G = jnp.concatenate([c['w_att'], a['w_att']], 0)    # (G, T)
    b_att_G = jnp.concatenate([c['b_att'], a['b_att']], 0)    # (G,)

    G, H, I = w_in_G.shape
    M = G // 2
    GH = G * H

    def block_diag_T(w):   # (G, Ho, Hi) -> (G*Hi, G*Ho), block g = w[g].T
        g_, Ho, Hi = w.shape
        eyeG = jnp.eye(g_, dtype=f32)
        wT = jnp.transpose(w, (0, 2, 1))                      # (G, Hi, Ho)
        bd = eyeG[:, None, :, None] * wT[:, :, None, :]       # (G, Hi, G, Ho)
        return bd.reshape(g_ * Hi, g_ * Ho)

    fused = {
        'w_in': jnp.transpose(w_in_G, (2, 0, 1)).reshape(I, GH),
        'b_in': b_in_G.reshape(1, GH),
        'w_out': block_diag_T(w_out_G),
        'b_out': b_out_G.reshape(1, GH),
        'w_att': w_att_G.T,                                   # (T, G)
        'b_att': b_att_G.reshape(1, G),
    }
    if num_hidden > 0:
        w_hid_G = jnp.concatenate([c['w_hid'], a['w_hid']], 1)   # (L, G, H, H)
        b_hid_G = jnp.concatenate([c['b_hid'], a['b_hid']], 1)   # (L, G, H)
        fused['w_hid'] = jnp.stack(
            [block_diag_T(w_hid_G[l]) for l in range(num_hidden)], 0)   # (L, GH, GH)
        fused['b_hid'] = b_hid_G[:num_hidden].reshape(num_hidden, 1, GH)

    # Structural matrices (built once): per-half softmax denominator, lane
    # expansion of the selection, block reduction over modules, output head.
    fused['half_ones'] = jnp.kron(jnp.eye(2, dtype=f32), jnp.ones((M, M), f32))   # (G, G)
    fused['expand'] = jnp.kron(jnp.eye(G, dtype=f32), jnp.ones((1, H), f32))      # (G, GH)
    fused['reduce'] = jnp.kron(jnp.repeat(jnp.eye(2, dtype=f32), M, axis=0),
                               jnp.eye(H, dtype=f32))                             # (GH, 2H)
    OUT_W = max(128, ((H + 1 + 127) // 128) * 128)
    head = jnp.zeros((2 * H, OUT_W), f32)
    head = head.at[H:2 * H, 0:H].set(jnp.eye(H, dtype=f32))       # actor -> lanes 0..H-1
    head = head.at[0:H, H].set(params['critic_out_w'][0])          # critic head -> lane H
    head_b = jnp.zeros((1, OUT_W), f32).at[0, H].set(params['critic_out_b'][0])
    fused['head'] = head
    fused['head_bias'] = head_b
    return fused


# ----------------------------------------------------------------------------
# Forward (matches SwitchModuleBaseTheta.forward)
# ----------------------------------------------------------------------------
def _preprocess(cfg, params, inputs):
    theta_sz = cfg['theta_sz']
    if cfg['mode'] == 'phase_lowlevel':
        obs_in = inputs[:, :-1]
        step_count = jnp.round(inputs[:, -1] * (1.0 / cfg['time_scale'])).astype(jnp.int32)
        phase_idx = jnp.mod(step_count, cfg['phase_period'])
        # TODO(synk): phase-embedding gather + column slicing/concat stay in plain JAX
        # (tiny, data-dependent gather) rather than inside the Pallas kernel.
        phase_input = jnp.take(params['phase_param'], phase_idx, axis=0)
        theta_input = obs_in[:, -theta_sz:]
        net_input = jnp.concatenate([obs_in[:, :-theta_sz], phase_input], axis=1)
    else:
        theta_input = inputs[:, -theta_sz:]
        net_input = inputs[:, :-theta_sz]
    return net_input, theta_input


def forward(params, fused, cfg, inputs, states, masks):
    net_input, theta_input = _preprocess(cfg, params, inputs)
    value, actor = fused_switch_forward(fused, net_input, theta_input,
                                        num_hidden=cfg['num_hidden'])
    return value, actor, states


# ----------------------------------------------------------------------------
# Pure-JAX reference (mirrors the PyTorch module op-for-op)
# ----------------------------------------------------------------------------
def _switch_module_ref(p, net_input, theta_input, num_hidden):
    B = net_input.shape[0]
    M = p['w_in'].shape[0]
    x = jnp.broadcast_to(net_input[:, None, :], (B, M, net_input.shape[1]))
    h = jnp.tanh(jnp.einsum('bmi,mhi->bmh', x, p['w_in'], precision=_HI) + p['b_in'][None])
    for l in range(num_hidden):
        h = jnp.tanh(jnp.einsum('bmh,mkh->bmk', h, p['w_hid'][l], precision=_HI)
                     + p['b_hid'][l][None])
    out = jnp.einsum('bmh,mkh->bmk', h, p['w_out'], precision=_HI) + p['b_out'][None]
    logits = jnp.einsum('bt,mt->bm', theta_input, p['w_att'], precision=_HI) + p['b_att'][None]
    sel = jax.nn.softmax(logits, axis=-1)
    return jnp.sum(out * sel[:, :, None], axis=1)


def reference_forward(params, cfg, inputs, states, masks):
    net_input, theta_input = _preprocess(cfg, params, inputs)
    hc = _switch_module_ref(params['critic'], net_input, theta_input, cfg['num_hidden'])
    value = (jnp.einsum('bh,oh->bo', jnp.tanh(hc), params['critic_out_w'], precision=_HI)
             + params['critic_out_b'][None])
    ha = _switch_module_ref(params['actor'], net_input, theta_input, cfg['num_hidden'])
    return value, jnp.tanh(ha), states


# ----------------------------------------------------------------------------
if __name__ == "__main__":
    key = jax.random.PRNGKey(0)
    B = 2
    theta_sz, hid_sz, num_modules, num_layer = 4, 32, 4, 3
    states = jnp.zeros((B, 1), jnp.float32)
    masks = jnp.ones((B, 1), jnp.float32)
    kp1, ki1, kp2, ki2, ki3 = jax.random.split(key, 5)

    # ---------------- phase_lowlevel configuration ----------------
    phase_period, time_scale = 5, 0.05
    obs_sz = 16                       # num_inputs = obs_sz + theta_sz + 1 = 21
    input_sz = 2 * obs_sz
    cfg1 = dict(mode='phase_lowlevel', theta_sz=theta_sz, num_modules=num_modules,
                num_hidden=num_layer - 2, time_scale=time_scale,
                phase_period=phase_period)
    params1 = init_params(kp1, input_sz=input_sz, theta_sz=theta_sz, hid_sz=hid_sz,
                          num_modules=num_modules, num_layer=num_layer,
                          phase_period=phase_period, obs_sz=obs_sz)
    fused1 = fold_params(params1, num_hidden=cfg1['num_hidden'])
    obs_theta = jax.random.normal(ki1, (B, obs_sz + theta_sz), jnp.float32)
    steps = jnp.array([[3.0], [11.0]], jnp.float32) * time_scale   # integer step counts
    inputs1 = jnp.concatenate([obs_theta, steps], axis=1)          # (B, 21)

    v1, a1, s1 = jax.block_until_ready(forward(params1, fused1, cfg1, inputs1, states, masks))
    rv1, ra1, rs1 = reference_forward(params1, cfg1, inputs1, states, masks)
    assert v1.shape == (B, 1) and a1.shape == (B, hid_sz)
    assert jnp.allclose(v1, rv1, rtol=1e-4, atol=1e-4)
    assert jnp.allclose(a1, ra1, rtol=1e-4, atol=1e-4)
    assert jnp.allclose(s1, rs1)

    # ---------------- baseline_lowlevel configuration ----------------
    cfg2 = dict(mode='baseline_lowlevel', theta_sz=theta_sz, num_modules=num_modules,
                num_hidden=num_layer - 2, time_scale=time_scale, phase_period=None)
    input_sz2 = obs_sz                # num_inputs = obs_sz + theta_sz = 20
    params2 = init_params(kp2, input_sz=input_sz2, theta_sz=theta_sz, hid_sz=hid_sz,
                          num_modules=num_modules, num_layer=num_layer)
    fused2 = fold_params(params2, num_hidden=cfg2['num_hidden'])
    inputs2 = jax.random.normal(ki2, (B, obs_sz + theta_sz), jnp.float32)

    v2, a2, s2 = jax.block_until_ready(forward(params2, fused2, cfg2, inputs2, states, masks))
    rv2, ra2, rs2 = reference_forward(params2, cfg2, inputs2, states, masks)
    assert jnp.allclose(v2, rv2, rtol=1e-4, atol=1e-4)
    assert jnp.allclose(a2, ra2, rtol=1e-4, atol=1e-4)
    assert jnp.allclose(s2, rs2)

    # ---------------- larger batch: exercises the multi-tile grid path --------
    B3 = 300
    inputs3 = jax.random.normal(ki3, (B3, obs_sz + theta_sz), jnp.float32)
    states3 = jnp.zeros((B3, 1), jnp.float32)
    masks3 = jnp.ones((B3, 1), jnp.float32)
    v3, a3, s3 = jax.block_until_ready(forward(params2, fused2, cfg2, inputs3, states3, masks3))
    rv3, ra3, rs3 = reference_forward(params2, cfg2, inputs3, states3, masks3)
    assert v3.shape == (B3, 1) and a3.shape == (B3, hid_sz)
    assert jnp.allclose(v3, rv3, rtol=1e-4, atol=1e-4)
    assert jnp.allclose(a3, ra3, rtol=1e-4, atol=1e-4)

    print("KERNEL_OK")
</pallas_src>

<mosaic_0001>
module attributes {stable_mosaic.version = 11 : i64} {
  func.func @_fused_switch_kernel(%arg0: i32, %arg1: memref<8x32xf32, #tpu.memory_space<vmem>>, %arg2: memref<8x4xf32, #tpu.memory_space<vmem>>, %arg3: memref<32x256xf32, #tpu.memory_space<vmem>>, %arg4: memref<1x256xf32, #tpu.memory_space<vmem>>, %arg5: memref<1x256x256xf32, #tpu.memory_space<vmem>>, %arg6: memref<1x1x256xf32, #tpu.memory_space<vmem>>, %arg7: memref<256x256xf32, #tpu.memory_space<vmem>>, %arg8: memref<1x256xf32, #tpu.memory_space<vmem>>, %arg9: memref<4x8xf32, #tpu.memory_space<vmem>>, %arg10: memref<1x8xf32, #tpu.memory_space<vmem>>, %arg11: memref<8x8xf32, #tpu.memory_space<vmem>>, %arg12: memref<8x256xf32, #tpu.memory_space<vmem>>, %arg13: memref<256x64xf32, #tpu.memory_space<vmem>>, %arg14: memref<64x128xf32, #tpu.memory_space<vmem>>, %arg15: memref<1x128xf32, #tpu.memory_space<vmem>>, %arg16: memref<8x128xf32, #tpu.memory_space<vmem>>) attributes {dimension_semantics = [#tpu.dimension_semantics<parallel>], iteration_bounds = array<i64: 1>, scalar_prefetch = 0 : i64, scratch_operands = 0 : i64, tpu.core_type = #tpu.core_type<tc>, window_params = [{transform_indices = @transform_0, window_bounds = array<i64: 8, 32>}, {transform_indices = @transform_1, window_bounds = array<i64: 8, 4>}, {pipeline_mode = #tpu.pipeline_mode<synchronous>, transform_indices = @transform_2, window_bounds = array<i64: 32, 256>}, {pipeline_mode = #tpu.pipeline_mode<synchronous>, transform_indices = @transform_3, window_bounds = array<i64: 1, 256>}, {pipeline_mode = #tpu.pipeline_mode<synchronous>, transform_indices = @transform_4, window_bounds = array<i64: 1, 256, 256>}, {pipeline_mode = #tpu.pipeline_mode<synchronous>, transform_indices = @transform_5, window_bounds = array<i64: 1, 1, 256>}, {pipeline_mode = #tpu.pipeline_mode<synchronous>, transform_indices = @transform_6, window_bounds = array<i64: 256, 256>}, {pipeline_mode = #tpu.pipeline_mode<synchronous>, transform_indices = @transform_7, window_bounds = array<i64: 1, 256>}, {pipeline_mode = #tpu.pipeline_mode<synchronous>, transform_indices = @transform_8, window_bounds = array<i64: 4, 8>}, {pipeline_mode = #tpu.pipeline_mode<synchronous>, transform_indices = @transform_9, window_bounds = array<i64: 1, 8>}, {pipeline_mode = #tpu.pipeline_mode<synchronous>, transform_indices = @transform_10, window_bounds = array<i64: 8, 8>}, {pipeline_mode = #tpu.pipeline_mode<synchronous>, transform_indices = @transform_11, window_bounds = array<i64: 8, 256>}, {pipeline_mode = #tpu.pipeline_mode<synchronous>, transform_indices = @transform_12, window_bounds = array<i64: 256, 64>}, {pipeline_mode = #tpu.pipeline_mode<synchronous>, transform_indices = @transform_13, window_bounds = array<i64: 64, 128>}, {pipeline_mode = #tpu.pipeline_mode<synchronous>, transform_indices = @transform_14, window_bounds = array<i64: 1, 128>}, {transform_indices = @transform_15, window_bounds = array<i64: 8, 128>}]} {
    %c0 = arith.constant 0 : index
    %c0_0 = arith.constant 0 : index
    %0 = vector.load %arg1[%c0, %c0_0] : memref<8x32xf32, #tpu.memory_space<vmem>>, vector<8x32xf32>
    %c0_1 = arith.constant 0 : index
    %c0_2 = arith.constant 0 : index
    %1 = vector.load %arg3[%c0_1, %c0_2] : memref<32x256xf32, #tpu.memory_space<vmem>>, vector<32x256xf32>
    %cst = arith.constant dense<0.000000e+00> : vector<8x256xf32>
    %2 = tpu.matmul %0, %1, %cst {dimension_numbers = #tpu.dot_dimension_numbers<[1], [0], [0], [1], [0, 0, 1, 1], [], []>, precision = #tpu.contract_precision<fp32>} : vector<8x32xf32>, vector<32x256xf32>, vector<8x256xf32> -> vector<8x256xf32>
    %c0_3 = arith.constant 0 : index
    %c0_4 = arith.constant 0 : index
    %3 = vector.load %arg4[%c0_3, %c0_4] : memref<1x256xf32, #tpu.memory_space<vmem>>, vector<1x256xf32>
    %4 = vector.broadcast %3 : vector<1x256xf32> to vector<8x256xf32>
    %5 = arith.addf %2, %4 : vector<8x256xf32>
    %6 = math.tanh %5 : vector<8x256xf32>
    %c0_5 = arith.constant 0 : index
    %c0_6 = arith.constant 0 : index
    %c0_7 = arith.constant 0 : index
    %7 = vector.load %arg5[%c0_5, %c0_6, %c0_7] : memref<1x256x256xf32, #tpu.memory_space<vmem>>, vector<1x256x256xf32>
    %8 = vector.shape_cast %7 : vector<1x256x256xf32> to vector<256x256xf32>
    %cst_8 = arith.constant dense<0.000000e+00> : vector<8x256xf32>
    %9 = tpu.matmul %6, %8, %cst_8 {dimension_numbers = #tpu.dot_dimension_numbers<[1], [0], [0], [1], [0, 0, 1, 1], [], []>, precision = #tpu.contract_precision<fp32>} : vector<8x256xf32>, vector<256x256xf32>, vector<8x256xf32> -> vector<8x256xf32>
    %c0_9 = arith.constant 0 : index
    %c0_10 = arith.constant 0 : index
    %c0_11 = arith.constant 0 : index
    %10 = vector.load %arg6[%c0_9, %c0_10, %c0_11] : memref<1x1x256xf32, #tpu.memory_space<vmem>>, vector<1x1x256xf32>
    %11 = vector.shape_cast %10 : vector<1x1x256xf32> to vector<1x256xf32>
    %12 = vector.broadcast %11 : vector<1x256xf32> to vector<8x256xf32>
    %13 = arith.addf %9, %12 : vector<8x256xf32>
    %14 = math.tanh %13 : vector<8x256xf32>
    %c0_12 = arith.constant 0 : index
    %c0_13 = arith.constant 0 : index
    %15 = vector.load %arg7[%c0_12, %c0_13] : memref<256x256xf32, #tpu.memory_space<vmem>>, vector<256x256xf32>
    %cst_14 = arith.constant dense<0.000000e+00> : vector<8x256xf32>
    %16 = tpu.matmul %14, %15, %cst_14 {dimension_numbers = #tpu.dot_dimension_numbers<[1], [0], [0], [1], [0, 0, 1, 1], [], []>, precision = #tpu.contract_precision<fp32>} : vector<8x256xf32>, vector<256x256xf32>, vector<8x256xf32> -> vector<8x256xf32>
    %c0_15 = arith.constant 0 : index
    %c0_16 = arith.constant 0 : index
    %17 = vector.load %arg8[%c0_15, %c0_16] : memref<1x256xf32, #tpu.memory_space<vmem>>, vector<1x256xf32>
    %18 = vector.broadcast %17 : vector<1x256xf32> to vector<8x256xf32>
    %19 = arith.addf %16, %18 : vector<8x256xf32>
    %c0_17 = arith.constant 0 : index
    %c0_18 = arith.constant 0 : index
    %20 = vector.load %arg2[%c0_17, %c0_18] : memref<8x4xf32, #tpu.memory_space<vmem>>, vector<8x4xf32>
    %c0_19 = arith.constant 0 : index
    %c0_20 = arith.constant 0 : index
    %21 = vector.load %arg9[%c0_19, %c0_20] : memref<4x8xf32, #tpu.memory_space<vmem>>, vector<4x8xf32>
    %cst_21 = arith.constant dense<0.000000e+00> : vector<8x8xf32>
    %22 = tpu.matmul %20, %21, %cst_21 {dimension_numbers = #tpu.dot_dimension_numbers<[1], [0], [0], [1], [0, 0, 1, 1], [], []>, precision = #tpu.contract_precision<fp32>} : vector<8x4xf32>, vector<4x8xf32>, vector<8x8xf32> -> vector<8x8xf32>
    %c0_22 = arith.constant 0 : index
    %c0_23 = arith.constant 0 : index
    %23 = vector.load %arg10[%c0_22, %c0_23] : memref<1x8xf32, #tpu.memory_space<vmem>>, vector<1x8xf32>
    %24 = vector.broadcast %23 : vector<1x8xf32> to vector<8x8xf32>
    %25 = arith.addf %22, %24 : vector<8x8xf32>
    %cst_24 = arith.constant dense<0xFF800000> : vector<8xf32>
    %26 = vector.multi_reduction <maximumf>, %25, %cst_24 [1] : vector<8x8xf32> to vector<8xf32>
    %27 = vector.shape_cast %26 : vector<8xf32> to vector<8x1xf32>
    %28 = vector.broadcast %27 : vector<8x1xf32> to vector<8x8xf32>
    %29 = arith.subf %25, %28 : vector<8x8xf32>
    %30 = math.exp %29 : vector<8x8xf32>
    %c0_25 = arith.constant 0 : index
    %c0_26 = arith.constant 0 : index
    %31 = vector.load %arg11[%c0_25, %c0_26] : memref<8x8xf32, #tpu.memory_space<vmem>>, vector<8x8xf32>
    %cst_27 = arith.constant dense<0.000000e+00> : vector<8x8xf32>
    %32 = tpu.matmul %30, %31, %cst_27 {dimension_numbers = #tpu.dot_dimension_numbers<[1], [0], [0], [1], [0, 0, 1, 1], [], []>, precision = #tpu.contract_precision<fp32>} : vector<8x8xf32>, vector<8x8xf32>, vector<8x8xf32> -> vector<8x8xf32>
    %33 = tpu.reciprocal %32 : vector<8x8xf32> -> vector<8x8xf32>
    %34 = arith.mulf %30, %33 : vector<8x8xf32>
    %c0_28 = arith.constant 0 : index
    %c0_29 = arith.constant 0 : index
    %35 = vector.load %arg12[%c0_28, %c0_29] : memref<8x256xf32, #tpu.memory_space<vmem>>, vector<8x256xf32>
    %cst_30 = arith.constant dense<0.000000e+00> : vector<8x256xf32>
    %36 = tpu.matmul %34, %35, %cst_30 {dimension_numbers = #tpu.dot_dimension_numbers<[1], [0], [0], [1], [0, 0, 1, 1], [], []>, precision = #tpu.contract_precision<fp32>} : vector<8x8xf32>, vector<8x256xf32>, vector<8x256xf32> -> vector<8x256xf32>
    %37 = arith.mulf %19, %36 : vector<8x256xf32>
    %c0_31 = arith.constant 0 : index
    %c0_32 = arith.constant 0 : index
    %38 = vector.load %arg13[%c0_31, %c0_32] : memref<256x64xf32, #tpu.memory_space<vmem>>, vector<256x64xf32>
    %cst_33 = arith.constant dense<0.000000e+00> : vector<8x64xf32>
    %39 = tpu.matmul %37, %38, %cst_33 {dimension_numbers = #tpu.dot_dimension_numbers<[1], [0], [0], [1], [0, 0, 1, 1], [], []>, precision = #tpu.contract_precision<fp32>} : vector<8x256xf32>, vector<256x64xf32>, vector<8x64xf32> -> vector<8x64xf32>
    %40 = math.tanh %39 : vector<8x64xf32>
    %c0_34 = arith.constant 0 : index
    %c0_35 = arith.constant 0 : index
    %41 = vector.load %arg14[%c0_34, %c0_35] : memref<64x128xf32, #tpu.memory_space<vmem>>, vector<64x128xf32>
    %cst_36 = arith.constant dense<0.000000e+00> : vector<8x128xf32>
    %42 = tpu.matmul %40, %41, %cst_36 {dimension_numbers = #tpu.dot_dimension_numbers<[1], [0], [0], [1], [0, 0, 1, 1], [], []>, precision = #tpu.contract_precision<fp32>} : vector<8x64xf32>, vector<64x128xf32>, vector<8x128xf32> -> vector<8x128xf32>
    %c0_37 = arith.constant 0 : index
    %c0_38 = arith.constant 0 : index
    %43 = vector.load %arg15[%c0_37, %c0_38] : memref<1x128xf32, #tpu.memory_space<vmem>>, vector<1x128xf32>
    %44 = vector.broadcast %43 : vector<1x128xf32> to vector<8x128xf32>
    %45 = arith.addf %42, %44 : vector<8x128xf32>
    %c0_39 = arith.constant 0 : index
    %c0_40 = arith.constant 0 : index
    %46 = vector.load %arg16[%c0_39, %c0_40] : memref<8x128xf32, #tpu.memory_space<vmem>>, vector<8x128xf32>
    tpu.vector_store %arg16[%c0_39, %c0_40], %45 {strides = array<i32>} : memref<8x128xf32, #tpu.memory_space<vmem>>, vector<8x128xf32>,
    return
  }
  func.func @transform_0(%arg0: i32) -> (i32, i32) {
    %c0_i32 = arith.constant 0 : i32
    %c0_i32_0 = arith.constant 0 : i32
    return %arg0, %c0_i32 : i32, i32
  }
  func.func @transform_1(%arg0: i32) -> (i32, i32) {
    %c0_i32 = arith.constant 0 : i32
    %c0_i32_0 = arith.constant 0 : i32
    return %arg0, %c0_i32 : i32, i32
  }
  func.func @transform_2(%arg0: i32) -> (i32, i32) {
    %c0_i32 = arith.constant 0 : i32
    %c0_i32_0 = arith.constant 0 : i32
    %c0_i32_1 = arith.constant 0 : i32
    return %c0_i32, %c0_i32_0 : i32, i32
  }
  func.func @transform_3(%arg0: i32) -> (i32, i32) {
    %c0_i32 = arith.constant 0 : i32
    %c0_i32_0 = arith.constant 0 : i32
    %c0_i32_1 = arith.constant 0 : i32
    return %c0_i32, %c0_i32_0 : i32, i32
  }
  func.func @transform_4(%arg0: i32) -> (i32, i32, i32) {
    %c0_i32 = arith.constant 0 : i32
    %c0_i32_0 = arith.constant 0 : i32
    %c0_i32_1 = arith.constant 0 : i32
    %c0_i32_2 = arith.constant 0 : i32
    return %c0_i32, %c0_i32_0, %c0_i32_1 : i32, i32, i32
  }
  func.func @transform_5(%arg0: i32) -> (i32, i32, i32) {
    %c0_i32 = arith.constant 0 : i32
    %c0_i32_0 = arith.constant 0 : i32
    %c0_i32_1 = arith.constant 0 : i32
    %c0_i32_2 = arith.constant 0 : i32
    return %c0_i32, %c0_i32_0, %c0_i32_1 : i32, i32, i32
  }
  func.func @transform_6(%arg0: i32) -> (i32, i32) {
    %c0_i32 = arith.constant 0 : i32
    %c0_i32_0 = arith.constant 0 : i32
    %c0_i32_1 = arith.constant 0 : i32
    return %c0_i32, %c0_i32_0 : i32, i32
  }
  func.func @transform_7(%arg0: i32) -> (i32, i32) {
    %c0_i32 = arith.constant 0 : i32
    %c0_i32_0 = arith.constant 0 : i32
    %c0_i32_1 = arith.constant 0 : i32
    return %c0_i32, %c0_i32_0 : i32, i32
  }
  func.func @transform_8(%arg0: i32) -> (i32, i32) {
    %c0_i32 = arith.constant 0 : i32
    %c0_i32_0 = arith.constant 0 : i32
    %c0_i32_1 = arith.constant 0 : i32
    return %c0_i32, %c0_i32_0 : i32, i32
  }
  func.func @transform_9(%arg0: i32) -> (i32, i32) {
    %c0_i32 = arith.constant 0 : i32
    %c0_i32_0 = arith.constant 0 : i32
    %c0_i32_1 = arith.constant 0 : i32
    return %c0_i32, %c0_i32_0 : i32, i32
  }
  func.func @transform_10(%arg0: i32) -> (i32, i32) {
    %c0_i32 = arith.constant 0 : i32
    %c0_i32_0 = arith.constant 0 : i32
    %c0_i32_1 = arith.constant 0 : i32
    return %c0_i32, %c0_i32_0 : i32, i32
  }
  func.func @transform_11(%arg0: i32) -> (i32, i32) {
    %c0_i32 = arith.constant 0 : i32
    %c0_i32_0 = arith.constant 0 : i32
    %c0_i32_1 = arith.constant 0 : i32
    return %c0_i32, %c0_i32_0 : i32, i32
  }
  func.func @transform_12(%arg0: i32) -> (i32, i32) {
    %c0_i32 = arith.constant 0 : i32
    %c0_i32_0 = arith.constant 0 : i32
    %c0_i32_1 = arith.constant 0 : i32
    return %c0_i32, %c0_i32_0 : i32, i32
  }
  func.func @transform_13(%arg0: i32) -> (i32, i32) {
    %c0_i32 = arith.constant 0 : i32
    %c0_i32_0 = arith.constant 0 : i32
    %c0_i32_1 = arith.constant 0 : i32
    return %c0_i32, %c0_i32_0 : i32, i32
  }
  func.func @transform_14(%arg0: i32) -> (i32, i32) {
    %c0_i32 = arith.constant 0 : i32
    %c0_i32_0 = arith.constant 0 : i32
    %c0_i32_1 = arith.constant 0 : i32
    return %c0_i32, %c0_i32_0 : i32, i32
  }
  func.func @transform_15(%arg0: i32) -> (i32, i32) {
    %c0_i32 = arith.constant 0 : i32
    %c0_i32_0 = arith.constant 0 : i32
    return %arg0, %c0_i32 : i32, i32
  }
}

</mosaic_0001>

<llo_original>
// kernel: tpu_custom_call.1
$region0: #{tpu_custom_call.1}
  #allocation0 [shape = 'u32[]', space=smem, size = 0x4, offset = 0x4, fixed_abs, tag = 'smem constant byte address 0x4 - core index']
  #allocation1 [shape = 'u32[144,128]{1,0:T(1,128)}', space=vmem, size = 0x12000, scoped, tag = 'internal scratch']
  %s0 = inlined_call_operand.vmem [shape: f32[8,32], index: 0, kind: input, shape index: {}]
  %s1 = inlined_call_operand.vmem [shape: f32[8,4], index: 1, kind: input, shape index: {}]
  %s2 = inlined_call_operand.vmem [shape: f32[32,256], index: 2, kind: input, shape index: {}]
  %s3 = inlined_call_operand.vmem [shape: f32[1,256], index: 3, kind: input, shape index: {}]
  %s4 = inlined_call_operand.hbm [shape: f32[1,256,256], index: 4, kind: input, shape index: {}]
  %s5 = inlined_call_operand.vmem [shape: f32[1,1,256], index: 5, kind: input, shape index: {}]
  %s6 = inlined_call_operand.hbm [shape: f32[256,256], index: 6, kind: input, shape index: {}]
  %s7 = inlined_call_operand.vmem [shape: f32[1,256], index: 7, kind: input, shape index: {}]
  %s8 = inlined_call_operand.vmem [shape: f32[4,8], index: 8, kind: input, shape index: {}]
  %s9 = inlined_call_operand.vmem [shape: f32[1,8], index: 9, kind: input, shape index: {}]
  %s10 = inlined_call_operand.vmem [shape: f32[8,8], index: 10, kind: input, shape index: {}]
  %s11 = inlined_call_operand.vmem [shape: f32[8,256], index: 11, kind: input, shape index: {}]
  %s12 = inlined_call_operand.vmem [shape: f32[256,64], index: 12, kind: input, shape index: {}]
  %s13 = inlined_call_operand.vmem [shape: f32[64,128], index: 13, kind: input, shape index: {}]
  %s14 = inlined_call_operand.vmem [shape: f32[1,128], index: 14, kind: input, shape index: {}]
  %s15 = inlined_call_operand.hbm [shape: f32[8,128], index: 15, kind: output, shape index: {}]
  %s16 = sld [smem:[#allocation0]]
  $region78: #{tpu_custom_call.1} parent=0
    _
  %s18 = ssub.s32 1, %s16
  %s19 = scalar_select 0, %s18, %s16
  $region1: #{tpu_custom_call.1} parent=0
    #allocation2 [shape = 'u8[262144]{0}', space=vmem, size = 0x40000, scoped, tag = 'input window, operand 4, single buffered']
    #allocation3 [shape = 's32[1]{0}', space=sflag, size = 0x4, scoped, tag = 'scoped memory for tpu_custom_call.1']
    #allocation4 [shape = 's32[1]{0}', space=sflag, size = 0x4, scoped, tag = 'scoped memory for tpu_custom_call.1']
    #allocation5 [shape = 'u8[262144]{0}', space=vmem, size = 0x40000, scoped, tag = 'input window, operand 6, single buffered']
    #allocation6 [shape = 's32[1]{0}', space=sflag, size = 0x4, scoped, tag = 'scoped memory for tpu_custom_call.1']
    #allocation7 [shape = 'u8[4096]{0}', space=vmem, size = 0x1000, scoped, tag = 'output window, operand 0, single buffered']
    %20 = vsyncpa [#allocation3], 0
    %21 = vsyncpa [#allocation6], 0
    %22 = vsyncpa [#allocation4], 0
    // Predicated region
    $region2: #{tpu_custom_call.1} parent=1 // pred_check
      _
    $region3: #{tpu_custom_call.1} parent=1 // pred_check_branch
      %24 = sbr.rel (0) target = $region5
    $region4: #{tpu_custom_call.1} parent=1 // pred_region
      _
    $region5: #{tpu_custom_call.1} parent=1 // pred_fallthru
      _
    // Predicated region
    $region6: #{tpu_custom_call.1} parent=1 // pred_check
      _
    $region7: #{tpu_custom_call.1} parent=1 // pred_check_branch
      %26 = sbr.rel (0) target = $region9
    $region8: #{tpu_custom_call.1} parent=1 // pred_region
      _
    $region9: #{tpu_custom_call.1} parent=1 // pred_fallthru
      _
    // Predicated region
    $region10: #{tpu_custom_call.1} parent=1 // pred_check
      _
    $region11: #{tpu_custom_call.1} parent=1 // pred_check_branch
      %28 = sbr.rel (0) target = $region13
    $region12: #{tpu_custom_call.1} parent=1 // pred_region
      _
    $region13: #{tpu_custom_call.1} parent=1 // pred_fallthru
      _
    // Predicated region
    $region14: #{tpu_custom_call.1} parent=1 // pred_check
      _
    $region15: #{tpu_custom_call.1} parent=1 // pred_check_branch
      %30 = sbr.rel (0) target = $region17
    $region16: #{tpu_custom_call.1} parent=1 // pred_region
      _
    $region17: #{tpu_custom_call.1} parent=1 // pred_fallthru
      _
    // Predicated region
    $region18: #{tpu_custom_call.1} parent=1 // pred_check
      _
    $region19: #{tpu_custom_call.1} parent=1 // pred_check_branch
      %32 = sbr.rel (0) target = $region21
    $region20: #{tpu_custom_call.1} parent=1 // pred_region
      %s34 = ssub.s32 8192, 8192
      %35 = vsyncadd [#allocation3], %s34
      %s36 = sshll.u32 [#allocation2], 4
      %s37 = int_to_ptr.vmem [resolvable:$true] %s36
      %42 = dma.hbm_to_vmem [thread:$0]  %s4, 8192, %s37, [#allocation3], 256, 256, 16
    $region21: #{tpu_custom_call.1} parent=1 // pred_fallthru
      _
    // Predicated region
    $region22: #{tpu_custom_call.1} parent=1 // pred_check
      _
    $region23: #{tpu_custom_call.1} parent=1 // pred_check_branch
      %44 = sbr.rel (0) target = $region25
    $region24: #{tpu_custom_call.1} parent=1 // pred_region
      _
    $region25: #{tpu_custom_call.1} parent=1 // pred_fallthru
      _
    // Predicated region
    $region26: #{tpu_custom_call.1} parent=1 // pred_check
      _
    $region27: #{tpu_custom_call.1} parent=1 // pred_check_branch
      %46 = sbr.rel (0) target = $region29
    $region28: #{tpu_custom_call.1} parent=1 // pred_region
      %s48 = ssub.s32 8192, 8192
      %49 = vsyncadd [#allocation6], %s48
      %s50 = sshll.u32 [#allocation5], 4
      %s51 = int_to_ptr.vmem [resolvable:$true] %s50
      %56 = dma.hbm_to_vmem [thread:$0]  %s6, 8192, %s51, [#allocation6], 256, 256, 16
    $region29: #{tpu_custom_call.1} parent=1 // pred_fallthru
      _
    // Predicated region
    $region30: #{tpu_custom_call.1} parent=1 // pred_check
      _
    $region31: #{tpu_custom_call.1} parent=1 // pred_check_branch
      %58 = sbr.rel (0) target = $region33
    $region32: #{tpu_custom_call.1} parent=1 // pred_region
      _
    $region33: #{tpu_custom_call.1} parent=1 // pred_fallthru
      _
    // Predicated region
    $region34: #{tpu_custom_call.1} parent=1 // pred_check
      _
    $region35: #{tpu_custom_call.1} parent=1 // pred_check_branch
      %60 = sbr.rel (0) target = $region37
    $region36: #{tpu_custom_call.1} parent=1 // pred_region
      _
    $region37: #{tpu_custom_call.1} parent=1 // pred_fallthru
      _
    // Predicated region
    $region38: #{tpu_custom_call.1} parent=1 // pred_check
      _
    $region39: #{tpu_custom_call.1} parent=1 // pred_check_branch
      %62 = sbr.rel (0) target = $region41
    $region40: #{tpu_custom_call.1} parent=1 // pred_region
      _
    $region41: #{tpu_custom_call.1} parent=1 // pred_fallthru
      _
    // Predicated region
    $region42: #{tpu_custom_call.1} parent=1 // pred_check
      _
    $region43: #{tpu_custom_call.1} parent=1 // pred_check_branch
      %64 = sbr.rel (0) target = $region45
    $region44: #{tpu_custom_call.1} parent=1 // pred_region
      _
    $region45: #{tpu_custom_call.1} parent=1 // pred_fallthru
      _
    // Predicated region
    $region46: #{tpu_custom_call.1} parent=1 // pred_check
      _
    $region47: #{tpu_custom_call.1} parent=1 // pred_check_branch
      %66 = sbr.rel (0) target = $region49
    $region48: #{tpu_custom_call.1} parent=1 // pred_region
      _
    $region49: #{tpu_custom_call.1} parent=1 // pred_fallthru
      _
    // Predicated region
    $region50: #{tpu_custom_call.1} parent=1 // pred_check
      _
    $region51: #{tpu_custom_call.1} parent=1 // pred_check_branch
      %68 = sbr.rel (0) target = $region53
    $region52: #{tpu_custom_call.1} parent=1 // pred_region
      _
    $region53: #{tpu_custom_call.1} parent=1 // pred_fallthru
      _
    // Predicated region
    $region54: #{tpu_custom_call.1} parent=1 // pred_check
      _
    $region55: #{tpu_custom_call.1} parent=1 // pred_check_branch
      %70 = sbr.rel (0) target = $region57
    $region56: #{tpu_custom_call.1} parent=1 // pred_region
      _
    $region57: #{tpu_custom_call.1} parent=1 // pred_fallthru
      _
    // Predicated region
    $region58: #{tpu_custom_call.1} parent=1 // pred_check
      _
    $region59: #{tpu_custom_call.1} parent=1 // pred_check_branch
      %72 = sbr.rel (0) target = $region61
    $region60: #{tpu_custom_call.1} parent=1 // pred_region
      _
    $region61: #{tpu_custom_call.1} parent=1 // pred_fallthru
      _
    // Predicated region
    $region62: #{tpu_custom_call.1} parent=1 // pred_check
      _
    $region63: #{tpu_custom_call.1} parent=1 // pred_check_branch
      %74 = sbr.rel (0) target = $region65
    $region64: #{tpu_custom_call.1} parent=1 // pred_region
      %75 = dma.done [#allocation3], 8192
    $region65: #{tpu_custom_call.1} parent=1 // pred_fallthru
      _
    // Predicated region
    $region66: #{tpu_custom_call.1} parent=1 // pred_check
      _
    $region67: #{tpu_custom_call.1} parent=1 // pred_check_branch
      %77 = sbr.rel (0) target = $region69
    $region68: #{tpu_custom_call.1} parent=1 // pred_region
      %78 = dma.done [#allocation6], 8192
    $region69: #{tpu_custom_call.1} parent=1 // pred_fallthru
      _
    %v79 = vld [vmem:[%s0] sm:$0xff]
    %v80 = vld [vmem:[%s2] sm:$0xff]
    %v81 = vld [vmem:[%s2 + $0x8] sm:$0xff]
    %v82 = vld [vmem:[%s2 + $0x10] sm:$0xff]
    %v83 = vld [vmem:[%s2 + $0x18] sm:$0xff]
    %v84 = vld [vmem:[%s2 + $0x20] sm:$0xff]
    %v85 = vld [vmem:[%s2 + $0x28] sm:$0xff]
    %v86 = vld [vmem:[%s2 + $0x30] sm:$0xff]
    %v87 = vld [vmem:[%s2 + $0x38] sm:$0xff]
    %v88 = vld [vmem:[%s3] sm:$0x3]
    %v90 = vlaneseq
    %v91 = vshrl.u32 %v90, 7
    %v92 = vsub.s32 0, %v91
    %v93 = vrot.slane %v88, %v92
    %v94 = vlaneseq
    %v95 = vshrl.u32 %v94, 7
    %v96 = vsub.s32 1, %v95
    %v97 = vrot.slane %v88, %v96
    %vm100 = vcmask 261120
    %v102 = vsel %vm100, %v79, 0
    %v104 = vand.u32 %v81, 4294901760
    %105 = vmatprep.subr.mxu0 %v104
    %v106 = vand.u32 %v80, 4294901760
    %107 = vmatpush1.msra.mxu0 %v106
    %v108 = vand.u32 %v83, 4294901760
    %109 = vmatprep.subr.mxu0 %v108
    %v110 = vand.u32 %v82, 4294901760
    %111 = vmatpush1.msra.mxu0 %v110
    %v112 = vand.u32 %v85, 4294901760
    %113 = vmatprep.subr.mxu0 %v112
    %v114 = vand.u32 %v84, 4294901760
    %115 = vmatpush1.msra.mxu0 %v114
    %v116 = vand.u32 %v87, 4294901760
    %117 = vmatprep.subr.mxu0 %v116
    %v118 = vand.u32 %v86, 4294901760
    %119 = vmatpush1.msra.mxu0 %v118
    %120 = vmatprep.subr.mxu0 0.0
    %121 = vmatpush1.msra.mxu0 0.0
    %122 = vmatprep.subr.mxu0 0.0
    %123 = vmatpush1.msra.mxu0 0.0
    %124 = vmatprep.subr.mxu0 0.0
    %125 = vmatpush1.msra.mxu0 0.0
    %126 = vmatprep.subr.mxu0 0.0
    %127 = vmatpush1.msra.mxu0 0.0
    %128 = vmatprep.subr.mxu0 0.0
    %129 = vmatpush1.msra.mxu0 0.0
    %130 = vmatprep.subr.mxu0 0.0
    %131 = vmatpush1.msra.mxu0 0.0
    %132 = vmatprep.subr.mxu0 0.0
    %133 = vmatpush1.msra.mxu0 0.0
    %134 = vmatprep.subr.mxu0 0.0
    %135 = vmatpush1.msra.mxu0 0.0
    %136 = vmatprep.subr.mxu0 0.0
    %137 = vmatpush1.msra.mxu0 0.0
    %138 = vmatprep.subr.mxu0 0.0
    %139 = vmatpush1.msra.mxu0 0.0
    %140 = vmatprep.subr.mxu0 0.0
    %141 = vmatpush1.msra.mxu0 0.0
    %142 = vmatprep.subr.mxu0 0.0
    %143 = vmatpush1.msra.mxu0 0.0
    %144 = vmatprep.subr.mxu0 0.0
    %145 = vmatpush1.msra.mxu0 0.0
    %146 = vmatprep.subr.mxu0 0.0
    %147 = vmatpush1.msra.mxu0 0.0
    %148 = vmatprep.subr.mxu0 0.0
    %149 = vmatpush1.msra.mxu0 0.0
    %150 = vmatprep.subr.mxu0 0.0
    %151 = vmatpush1.msra.mxu0 0.0
    %152 = vmatprep.subr.mxu0 0.0
    %153 = vmatpush1.msra.mxu0 0.0
    %154 = vmatprep.subr.mxu0 0.0
    %155 = vmatpush1.msra.mxu0 0.0
    %156 = vmatprep.subr.mxu0 0.0
    %157 = vmatpush1.msra.mxu0 0.0
    %158 = vmatprep.subr.mxu0 0.0
    %159 = vmatpush1.msra.mxu0 0.0
    %160 = vmatprep.subr.mxu0 0.0
    %161 = vmatpush1.msra.mxu0 0.0
    %162 = vmatprep.subr.mxu0 0.0
    %163 = vmatpush1.msra.mxu0 0.0
    %164 = vmatprep.subr.mxu0 0.0
    %165 = vmatpush1.msra.mxu0 0.0
    %166 = vmatprep.subr.mxu0 0.0
    %167 = vmatpush1.msra.mxu0 0.0
    %168 = vmatprep.subr.mxu0 0.0
    %169 = vmatpush1.msra.mxu0 0.0
    %170 = vmatprep.subr.mxu0 0.0
    %171 = vmatpush1.msra.mxu0 0.0
    %172 = vmatprep.subr.mxu0 0.0
    %173 = vmatpush1.msra.mxu0 0.0
    %174 = vmatprep.subr.mxu0 0.0
    %175 = vmatpush1.msra.mxu0 0.0
    %176 = vmatprep.mubr.f32.mxu0 0.0
    %v177 = vand.u32 %v102, 4294901760
    %v178 = vsub.f32 %v102, %v177
    %v179 = vand.u32 %v178, 4294901760
    %v180 = vsub.f32 %v178, %v179
    %v181 = vand.u32 %v180, 4294901760
    %182 = vmatmul.mubr.f32.gmra.mrb[0].mxu0 %v181
    %v183 = vpop.f32.mrb[0].mxu0
    %v184 = vadd.f32 %v93, %v183
    %v185 = vpop.f32.mrb[0].mxu0
    %v186 = vadd.f32 %v97, %v185
    %187 = vdwg.mxu0
    %v188 = vand.u32 %v81, 4294901760
    %v189 = vsub.f32 %v81, %v188
    %v190 = vand.u32 %v189, 4294901760
    %v191 = vsub.f32 %v189, %v190
    %v192 = vand.u32 %v191, 4294901760
    %193 = vmatprep.subr.mxu0 %v192
    %v194 = vand.u32 %v80, 4294901760
    %v195 = vsub.f32 %v80, %v194
    %v196 = vand.u32 %v195, 4294901760
    %v197 = vsub.f32 %v195, %v196
    %v198 = vand.u32 %v197, 4294901760
    %199 = vmatpush1.msra.mxu0 %v198
    %v200 = vand.u32 %v83, 4294901760
    %v201 = vsub.f32 %v83, %v200
    %v202 = vand.u32 %v201, 4294901760
    %v203 = vsub.f32 %v201, %v202
    %v204 = vand.u32 %v203, 4294901760
    %205 = vmatprep.subr.mxu0 %v204
    %v206 = vand.u32 %v82, 4294901760
    %v207 = vsub.f32 %v82, %v206
    %v208 = vand.u32 %v207, 4294901760
    %v209 = vsub.f32 %v207, %v208
    %v210 = vand.u32 %v209, 4294901760
    %211 = vmatpush1.msra.mxu0 %v210
    %v212 = vand.u32 %v85, 4294901760
    %v213 = vsub.f32 %v85, %v212
    %v214 = vand.u32 %v213, 4294901760
    %v215 = vsub.f32 %v213, %v214
    %v216 = vand.u32 %v215, 4294901760
    %217 = vmatprep.subr.mxu0 %v216
    %v218 = vand.u32 %v84, 4294901760
    %v219 = vsub.f32 %v84, %v218
    %v220 = vand.u32 %v219, 4294901760
    %v221 = vsub.f32 %v219, %v220
    %v222 = vand.u32 %v221, 4294901760
    %223 = vmatpush1.msra.mxu0 %v222
    %v224 = vand.u32 %v87, 4294901760
    %v225 = vsub.f32 %v87, %v224
    %v226 = vand.u32 %v225, 4294901760
    %v227 = vsub.f32 %v225, %v226
    %v228 = vand.u32 %v227, 4294901760
    %229 = vmatprep.subr.mxu0 %v228
    %v230 = vand.u32 %v86, 4294901760
    %v231 = vsub.f32 %v86, %v230
    %v232 = vand.u32 %v231, 4294901760
    %v233 = vsub.f32 %v231, %v232
    %v234 = vand.u32 %v233, 4294901760
    %235 = vmatpush1.msra.mxu0 %v234
    %236 = vmatprep.subr.mxu0 0.0
    %237 = vmatpush1.msra.mxu0 0.0
    %238 = vmatprep.subr.mxu0 0.0
    %239 = vmatpush1.msra.mxu0 0.0
    %240 = vmatprep.subr.mxu0 0.0
    %241 = vmatpush1.msra.mxu0 0.0
    %242 = vmatprep.subr.mxu0 0.0
    %243 = vmatpush1.msra.mxu0 0.0
    %244 = vmatprep.subr.mxu0 0.0
    %245 = vmatpush1.msra.mxu0 0.0
    %246 = vmatprep.subr.mxu0 0.0
    %247 = vmatpush1.msra.mxu0 0.0
    %248 = vmatprep.subr.mxu0 0.0
    %249 = vmatpush1.msra.mxu0 0.0
    %250 = vmatprep.subr.mxu0 0.0
    %251 = vmatpush1.msra.mxu0 0.0
    %252 = vmatprep.subr.mxu0 0.0
    %253 = vmatpush1.msra.mxu0 0.0
    %254 = vmatprep.subr.mxu0 0.0
    %255 = vmatpush1.msra.mxu0 0.0
    %256 = vmatprep.subr.mxu0 0.0
    %257 = vmatpush1.msra.mxu0 0.0
    %258 = vmatprep.subr.mxu0 0.0
    %259 = vmatpush1.msra.mxu0 0.0
    %260 = vmatprep.subr.mxu0 0.0
    %261 = vmatpush1.msra.mxu0 0.0
    %262 = vmatprep.subr.mxu0 0.0
    %263 = vmatpush1.msra.mxu0 0.0
    %264 = vmatprep.subr.mxu0 0.0
    %265 = vmatpush1.msra.mxu0 0.0
    %266 = vmatprep.subr.mxu0 0.0
    %267 = vmatpush1.msra.mxu0 0.0
    %268 = vmatprep.subr.mxu0 0.0
    %269 = vmatpush1.msra.mxu0 0.0
    %270 = vmatprep.subr.mxu0 0.0
    %271 = vmatpush1.msra.mxu0 0.0
    %272 = vmatprep.subr.mxu0 0.0
    %273 = vmatpush1.msra.mxu0 0.0
    %274 = vmatprep.subr.mxu0 0.0
    %275 = vmatpush1.msra.mxu0 0.0
    %276 = vmatprep.subr.mxu0 0.0
    %277 = vmatpush1.msra.mxu0 0.0
    %278 = vmatprep.subr.mxu0 0.0
    %279 = vmatpush1.msra.mxu0 0.0
    %280 = vmatprep.subr.mxu0 0.0
    %281 = vmatpush1.msra.mxu0 0.0
    %282 = vmatprep.subr.mxu0 0.0
    %283 = vmatpush1.msra.mxu0 0.0
    %284 = vmatprep.subr.mxu0 0.0
    %285 = vmatpush1.msra.mxu0 0.0
    %286 = vmatprep.subr.mxu0 0.0
    %287 = vmatpush1.msra.mxu0 0.0
    %288 = vmatprep.subr.mxu0 0.0
    %289 = vmatpush1.msra.mxu0 0.0
    %290 = vmatprep.subr.mxu0 0.0
    %291 = vmatpush1.msra.mxu0 0.0
    %292 = vmatprep.mubr.f32.mxu0 0.0
    %v293 = vand.u32 %v102, 4294901760
    %294 = vmatmul.mubr.f32.gmra.mrb[0].mxu0 %v293
    %v295 = vpop.f32.mrb[0].mxu0
    %v296 = vadd.f32 %v184, %v295
    %v297 = vpop.f32.mrb[0].mxu0
    %v298 = vadd.f32 %v186, %v297
    %299 = vdwg.mxu0
    %v300 = vand.u32 %v81, 4294901760
    %v301 = vsub.f32 %v81, %v300
    %302 = vmatprep.subr.mxu0 %v301
    %v303 = vand.u32 %v80, 4294901760
    %v304 = vsub.f32 %v80, %v303
    %305 = vmatpush1.msra.mxu0 %v304
    %v306 = vand.u32 %v83, 4294901760
    %v307 = vsub.f32 %v83, %v306
    %308 = vmatprep.subr.mxu0 %v307
    %v309 = vand.u32 %v82, 4294901760
    %v310 = vsub.f32 %v82, %v309
    %311 = vmatpush1.msra.mxu0 %v310
    %v312 = vand.u32 %v85, 4294901760
    %v313 = vsub.f32 %v85, %v312
    %314 = vmatprep.subr.mxu0 %v313
    %v315 = vand.u32 %v84, 4294901760
    %v316 = vsub.f32 %v84, %v315
    %317 = vmatpush1.msra.mxu0 %v316
    %v318 = vand.u32 %v87, 4294901760
    %v319 = vsub.f32 %v87, %v318
    %320 = vmatprep.subr.mxu0 %v319
    %v321 = vand.u32 %v86, 4294901760
    %v322 = vsub.f32 %v86, %v321
    %323 = vmatpush1.msra.mxu0 %v322
    %324 = vmatprep.subr.mxu0 0.0
    %325 = vmatpush1.msra.mxu0 0.0
    %326 = vmatprep.subr.mxu0 0.0
    %327 = vmatpush1.msra.mxu0 0.0
    %328 = vmatprep.subr.mxu0 0.0
    %329 = vmatpush1.msra.mxu0 0.0
    %330 = vmatprep.subr.mxu0 0.0
    %331 = vmatpush1.msra.mxu0 0.0
    %332 = vmatprep.subr.mxu0 0.0
    %333 = vmatpush1.msra.mxu0 0.0
    %334 = vmatprep.subr.mxu0 0.0
    %335 = vmatpush1.msra.mxu0 0.0
    %336 = vmatprep.subr.mxu0 0.0
    %337 = vmatpush1.msra.mxu0 0.0
    %338 = vmatprep.subr.mxu0 0.0
    %339 = vmatpush1.msra.mxu0 0.0
    %340 = vmatprep.subr.mxu0 0.0
    %341 = vmatpush1.msra.mxu0 0.0
    %342 = vmatprep.subr.mxu0 0.0
    %343 = vmatpush1.msra.mxu0 0.0
    %344 = vmatprep.subr.mxu0 0.0
    %345 = vmatpush1.msra.mxu0 0.0
    %346 = vmatprep.subr.mxu0 0.0
    %347 = vmatpush1.msra.mxu0 0.0
    %348 = vmatprep.subr.mxu0 0.0
    %349 = vmatpush1.msra.mxu0 0.0
    %350 = vmatprep.subr.mxu0 0.0
    %351 = vmatpush1.msra.mxu0 0.0
    %352 = vmatprep.subr.mxu0 0.0
    %353 = vmatpush1.msra.mxu0 0.0
    %354 = vmatprep.subr.mxu0 0.0
    %355 = vmatpush1.msra.mxu0 0.0
    %356 = vmatprep.subr.mxu0 0.0
    %357 = vmatpush1.msra.mxu0 0.0
    %358 = vmatprep.subr.mxu0 0.0
    %359 = vmatpush1.msra.mxu0 0.0
    %360 = vmatprep.subr.mxu0 0.0
    %361 = vmatpush1.msra.mxu0 0.0
    %362 = vmatprep.subr.mxu0 0.0
    %363 = vmatpush1.msra.mxu0 0.0
    %364 = vmatprep.subr.mxu0 0.0
    %365 = vmatpush1.msra.mxu0 0.0
    %366 = vmatprep.subr.mxu0 0.0
    %367 = vmatpush1.msra.mxu0 0.0
    %368 = vmatprep.subr.mxu0 0.0
    %369 = vmatpush1.msra.mxu0 0.0
    %370 = vmatprep.subr.mxu0 0.0
    %371 = vmatpush1.msra.mxu0 0.0
    %372 = vmatprep.subr.mxu0 0.0
    %373 = vmatpush1.msra.mxu0 0.0
    %374 = vmatprep.subr.mxu0 0.0
    %375 = vmatpush1.msra.mxu0 0.0
    %376 = vmatprep.subr.mxu0 0.0
    %377 = vmatpush1.msra.mxu0 0.0
    %378 = vmatprep.subr.mxu0 0.0
    %379 = vmatpush1.msra.mxu0 0.0
    %380 = vmatprep.mubr.f32.mxu0 0.0
    %v381 = vand.u32 %v102, 4294901760
    %v382 = vsub.f32 %v102, %v381
    %383 = vmatmul.mubr.f32.gmra.mrb[0].mxu0 %v382
    %v384 = vpop.f32.mrb[0].mxu0
    %v385 = vadd.f32 %v296, %v384
    %v386 = vpop.f32.mrb[0].mxu0
    %v387 = vadd.f32 %v298, %v386
    %388 = vdwg.mxu0
    %v389 = vand.u32 %v81, 4294901760
    %390 = vmatprep.subr.mxu0 %v389
    %v391 = vand.u32 %v80, 4294901760
    %392 = vmatpush1.msra.mxu0 %v391
    %v393 = vand.u32 %v83, 4294901760
    %394 = vmatprep.subr.mxu0 %v393
    %v395 = vand.u32 %v82, 4294901760
    %396 = vmatpush1.msra.mxu0 %v395
    %v397 = vand.u32 %v85, 4294901760
    %398 = vmatprep.subr.mxu0 %v397
    %v399 = vand.u32 %v84, 4294901760
    %400 = vmatpush1.msra.mxu0 %v399
    %v401 = vand.u32 %v87, 4294901760
    %402 = vmatprep.subr.mxu0 %v401
    %v403 = vand.u32 %v86, 4294901760
    %404 = vmatpush1.msra.mxu0 %v403
    %405 = vmatprep.subr.mxu0 0.0
    %406 = vmatpush1.msra.mxu0 0.0
    %407 = vmatprep.subr.mxu0 0.0
    %408 = vmatpush1.msra.mxu0 0.0
    %409 = vmatprep.subr.mxu0 0.0
    %410 = vmatpush1.msra.mxu0 0.0
    %411 = vmatprep.subr.mxu0 0.0
    %412 = vmatpush1.msra.mxu0 0.0
    %413 = vmatprep.subr.mxu0 0.0
    %414 = vmatpush1.msra.mxu0 0.0
    %415 = vmatprep.subr.mxu0 0.0
    %416 = vmatpush1.msra.mxu0 0.0
    %417 = vmatprep.subr.mxu0 0.0
    %418 = vmatpush1.msra.mxu0 0.0
    %419 = vmatprep.subr.mxu0 0.0
    %420 = vmatpush1.msra.mxu0 0.0
    %421 = vmatprep.subr.mxu0 0.0
    %422 = vmatpush1.msra.mxu0 0.0
    %423 = vmatprep.subr.mxu0 0.0
    %424 = vmatpush1.msra.mxu0 0.0
    %425 = vmatprep.subr.mxu0 0.0
    %426 = vmatpush1.msra.mxu0 0.0
    %427 = vmatprep.subr.mxu0 0.0
    %428 = vmatpush1.msra.mxu0 0.0
    %429 = vmatprep.subr.mxu0 0.0
    %430 = vmatpush1.msra.mxu0 0.0
    %431 = vmatprep.subr.mxu0 0.0
    %432 = vmatpush1.msra.mxu0 0.0
    %433 = vmatprep.subr.mxu0 0.0
    %434 = vmatpush1.msra.mxu0 0.0
    %435 = vmatprep.subr.mxu0 0.0
    %436 = vmatpush1.msra.mxu0 0.0
    %437 = vmatprep.subr.mxu0 0.0
    %438 = vmatpush1.msra.mxu0 0.0
    %439 = vmatprep.subr.mxu0 0.0
    %440 = vmatpush1.msra.mxu0 0.0
    %441 = vmatprep.subr.mxu0 0.0
    %442 = vmatpush1.msra.mxu0 0.0
    %443 = vmatprep.subr.mxu0 0.0
    %444 = vmatpush1.msra.mxu0 0.0
    %445 = vmatprep.subr.mxu0 0.0
    %446 = vmatpush1.msra.mxu0 0.0
    %447 = vmatprep.subr.mxu0 0.0
    %448 = vmatpush1.msra.mxu0 0.0
    %449 = vmatprep.subr.mxu0 0.0
    %450 = vmatpush1.msra.mxu0 0.0
    %451 = vmatprep.subr.mxu0 0.0
    %452 = vmatpush1.msra.mxu0 0.0
    %453 = vmatprep.subr.mxu0 0.0
    %454 = vmatpush1.msra.mxu0 0.0
    %455 = vmatprep.subr.mxu0 0.0
    %456 = vmatpush1.msra.mxu0 0.0
    %457 = vmatprep.subr.mxu0 0.0
    %458 = vmatpush1.msra.mxu0 0.0
    %459 = vmatprep.subr.mxu0 0.0
    %460 = vmatpush1.msra.mxu0 0.0
    %461 = vmatprep.mubr.f32.mxu0 0.0
    %v462 = vand.u32 %v102, 4294901760
    %v463 = vsub.f32 %v102, %v462
    %v464 = vand.u32 %v463, 4294901760
    %465 = vmatmul.mubr.f32.gmra.mrb[0].mxu0 %v464
    %v466 = vpop.f32.mrb[0].mxu0
    %v467 = vadd.f32 %v385, %v466
    %v468 = vpop.f32.mrb[0].mxu0
    %v469 = vadd.f32 %v387, %v468
    %470 = vdwg.mxu0
    %v471 = vand.u32 %v81, 4294901760
    %v472 = vsub.f32 %v81, %v471
    %v473 = vand.u32 %v472, 4294901760
    %474 = vmatprep.subr.mxu0 %v473
    %v475 = vand.u32 %v80, 4294901760
    %v476 = vsub.f32 %v80, %v475
    %v477 = vand.u32 %v476, 4294901760
    %478 = vmatpush1.msra.mxu0 %v477
    %v479 = vand.u32 %v83, 4294901760
    %v480 = vsub.f32 %v83, %v479
    %v481 = vand.u32 %v480, 4294901760
    %482 = vmatprep.subr.mxu0 %v481
    %v483 = vand.u32 %v82, 4294901760
    %v484 = vsub.f32 %v82, %v483
    %v485 = vand.u32 %v484, 4294901760
    %486 = vmatpush1.msra.mxu0 %v485
    %v487 = vand.u32 %v85, 4294901760
    %v488 = vsub.f32 %v85, %v487
    %v489 = vand.u32 %v488, 4294901760
    %490 = vmatprep.subr.mxu0 %v489
    %v491 = vand.u32 %v84, 4294901760
    %v492 = vsub.f32 %v84, %v491
    %v493 = vand.u32 %v492, 4294901760
    %494 = vmatpush1.msra.mxu0 %v493
    %v495 = vand.u32 %v87, 4294901760
    %v496 = vsub.f32 %v87, %v495
    %v497 = vand.u32 %v496, 4294901760
    %498 = vmatprep.subr.mxu0 %v497
    %v499 = vand.u32 %v86, 4294901760
    %v500 = vsub.f32 %v86, %v499
    %v501 = vand.u32 %v500, 4294901760
    %502 = vmatpush1.msra.mxu0 %v501
    %503 = vmatprep.subr.mxu0 0.0
    %504 = vmatpush1.msra.mxu0 0.0
    %505 = vmatprep.subr.mxu0 0.0
    %506 = vmatpush1.msra.mxu0 0.0
    %507 = vmatprep.subr.mxu0 0.0
    %508 = vmatpush1.msra.mxu0 0.0
    %509 = vmatprep.subr.mxu0 0.0
    %510 = vmatpush1.msra.mxu0 0.0
    %511 = vmatprep.subr.mxu0 0.0
    %512 = vmatpush1.msra.mxu0 0.0
    %513 = vmatprep.subr.mxu0 0.0
    %514 = vmatpush1.msra.mxu0 0.0
    %515 = vmatprep.subr.mxu0 0.0
    %516 = vmatpush1.msra.mxu0 0.0
    %517 = vmatprep.subr.mxu0 0.0
    %518 = vmatpush1.msra.mxu0 0.0
    %519 = vmatprep.subr.mxu0 0.0
    %520 = vmatpush1.msra.mxu0 0.0
    %521 = vmatprep.subr.mxu0 0.0
    %522 = vmatpush1.msra.mxu0 0.0
    %523 = vmatprep.subr.mxu0 0.0
    %524 = vmatpush1.msra.mxu0 0.0
    %525 = vmatprep.subr.mxu0 0.0
    %526 = vmatpush1.msra.mxu0 0.0
    %527 = vmatprep.subr.mxu0 0.0
    %528 = vmatpush1.msra.mxu0 0.0
    %529 = vmatprep.subr.mxu0 0.0
    %530 = vmatpush1.msra.mxu0 0.0
    %531 = vmatprep.subr.mxu0 0.0
    %532 = vmatpush1.msra.mxu0 0.0
    %533 = vmatprep.subr.mxu0 0.0
    %534 = vmatpush1.msra.mxu0 0.0
    %535 = vmatprep.subr.mxu0 0.0
    %536 = vmatpush1.msra.mxu0 0.0
    %537 = vmatprep.subr.mxu0 0.0
    %538 = vmatpush1.msra.mxu0 0.0
    %539 = vmatprep.subr.mxu0 0.0
    %540 = vmatpush1.msra.mxu0 0.0
    %541 = vmatprep.subr.mxu0 0.0
    %542 = vmatpush1.msra.mxu0 0.0
    %543 = vmatprep.subr.mxu0 0.0
    %544 = vmatpush1.msra.mxu0 0.0
    %545 = vmatprep.subr.mxu0 0.0
    %546 = vmatpush1.msra.mxu0 0.0
    %547 = vmatprep.subr.mxu0 0.0
    %548 = vmatpush1.msra.mxu0 0.0
    %549 = vmatprep.subr.mxu0 0.0
    %550 = vmatpush1.msra.mxu0 0.0
    %551 = vmatprep.subr.mxu0 0.0
    %552 = vmatpush1.msra.mxu0 0.0
    %553 = vmatprep.subr.mxu0 0.0
    %554 = vmatpush1.msra.mxu0 0.0
    %555 = vmatprep.subr.mxu0 0.0
    %556 = vmatpush1.msra.mxu0 0.0
    %557 = vmatprep.subr.mxu0 0.0
    %558 = vmatpush1.msra.mxu0 0.0
    %559 = vmatprep.mubr.f32.mxu0 0.0
    %v560 = vand.u32 %v102, 4294901760
    %561 = vmatmul.mubr.f32.gmra.mrb[0].mxu0 %v560
    %v562 = vpop.f32.mrb[0].mxu0
    %v563 = vadd.f32 %v467, %v562
    %v564 = vpop.f32.mrb[0].mxu0
    %v565 = vadd.f32 %v469, %v564
    %566 = vdwg.mxu0
    %v567 = vand.u32 %v81, 4294901760
    %568 = vmatprep.subr.mxu0 %v567
    %v569 = vand.u32 %v80, 4294901760
    %570 = vmatpush1.msra.mxu0 %v569
    %v571 = vand.u32 %v83, 4294901760
    %572 = vmatprep.subr.mxu0 %v571
    %v573 = vand.u32 %v82, 4294901760
    %574 = vmatpush1.msra.mxu0 %v573
    %v575 = vand.u32 %v85, 4294901760
    %576 = vmatprep.subr.mxu0 %v575
    %v577 = vand.u32 %v84, 4294901760
    %578 = vmatpush1.msra.mxu0 %v577
    %v579 = vand.u32 %v87, 4294901760
    %580 = vmatprep.subr.mxu0 %v579
    %v581 = vand.u32 %v86, 4294901760
    %582 = vmatpush1.msra.mxu0 %v581
    %583 = vmatprep.subr.mxu0 0.0
    %584 = vmatpush1.msra.mxu0 0.0
    %585 = vmatprep.subr.mxu0 0.0
    %586 = vmatpush1.msra.mxu0 0.0
    %587 = vmatprep.subr.mxu0 0.0
    %588 = vmatpush1.msra.mxu0 0.0
    %589 = vmatprep.subr.mxu0 0.0
    %590 = vmatpush1.msra.mxu0 0.0
    %591 = vmatprep.subr.mxu0 0.0
    %592 = vmatpush1.msra.mxu0 0.0
    %593 = vmatprep.subr.mxu0 0.0
    %594 = vmatpush1.msra.mxu0 0.0
    %595 = vmatprep.subr.mxu0 0.0
    %596 = vmatpush1.msra.mxu0 0.0
    %597 = vmatprep.subr.mxu0 0.0
    %598 = vmatpush1.msra.mxu0 0.0
    %599 = vmatprep.subr.mxu0 0.0
    %600 = vmatpush1.msra.mxu0 0.0
    %601 = vmatprep.subr.mxu0 0.0
    %602 = vmatpush1.msra.mxu0 0.0
    %603 = vmatprep.subr.mxu0 0.0
    %604 = vmatpush1.msra.mxu0 0.0
    %605 = vmatprep.subr.mxu0 0.0
    %606 = vmatpush1.msra.mxu0 0.0
    %607 = vmatprep.subr.mxu0 0.0
    %608 = vmatpush1.msra.mxu0 0.0
    %609 = vmatprep.subr.mxu0 0.0
    %610 = vmatpush1.msra.mxu0 0.0
    %611 = vmatprep.subr.mxu0 0.0
    %612 = vmatpush1.msra.mxu0 0.0
    %613 = vmatprep.subr.mxu0 0.0
    %614 = vmatpush1.msra.mxu0 0.0
    %615 = vmatprep.subr.mxu0 0.0
    %616 = vmatpush1.msra.mxu0 0.0
    %617 = vmatprep.subr.mxu0 0.0
    %618 = vmatpush1.msra.mxu0 0.0
    %619 = vmatprep.subr.mxu0 0.0
    %620 = vmatpush1.msra.mxu0 0.0
    %621 = vmatprep.subr.mxu0 0.0
    %622 = vmatpush1.msra.mxu0 0.0
    %623 = vmatprep.subr.mxu0 0.0
    %624 = vmatpush1.msra.mxu0 0.0
    %625 = vmatprep.subr.mxu0 0.0
    %626 = vmatpush1.msra.mxu0 0.0
    %627 = vmatprep.subr.mxu0 0.0
    %628 = vmatpush1.msra.mxu0 0.0
    %629 = vmatprep.subr.mxu0 0.0
    %630 = vmatpush1.msra.mxu0 0.0
    %631 = vmatprep.subr.mxu0 0.0
    %632 = vmatpush1.msra.mxu0 0.0
    %633 = vmatprep.subr.mxu0 0.0
    %634 = vmatpush1.msra.mxu0 0.0
    %635 = vmatprep.subr.mxu0 0.0
    %636 = vmatpush1.msra.mxu0 0.0
    %637 = vmatprep.subr.mxu0 0.0
    %638 = vmatpush1.msra.mxu0 0.0
    %639 = vmatprep.mubr.f32.mxu0 0.0
    %v640 = vand.u32 %v102, 4294901760
    %641 = vmatmul.mubr.f32.gmra.mrb[0].mxu0 %v640
    %v642 = vpop.f32.mrb[0].mxu0
    %v643 = vadd.f32 %v563, %v642
    %v644 = vpop.f32.mrb[0].mxu0
    %v645 = vadd.f32 %v565, %v644
    %646 = vdwg.mxu0
    %v647 = vtanh.pop %v643
    %v648 = vtanh.pop %v645
    %v649 = vld [vmem:[#allocation2] sm:$0xff]
    %v650 = vld [vmem:[#allocation2 + $0x8] sm:$0xff]
    %v651 = vld [vmem:[#allocation2 + $0x10] sm:$0xff]
    %v652 = vld [vmem:[#allocation2 + $0x18] sm:$0xff]
    %v653 = vld [vmem:[#allocation2 + $0x20] sm:$0xff]
    %v654 = vld [vmem:[#allocation2 + $0x28] sm:$0xff]
    %v655 = vld [vmem:[#allocation2 + $0x30] sm:$0xff]
    %v656 = vld [vmem:[#allocation2 + $0x38] sm:$0xff]
    %v657 = vld [vmem:[#allocation2 + $0x40] sm:$0xff]
    %v658 = vld [vmem:[#allocation2 + $0x48] sm:$0xff]
    %v659 = vld [vmem:[#allocation2 + $0x50] sm:$0xff]
    %v660 = vld [vmem:[#allocation2 + $0x58] sm:$0xff]
    %v661 = vld [vmem:[#allocation2 + $0x60] sm:$0xff]
    %v662 = vld [vmem:[#allocation2 + $0x68] sm:$0xff]
    %v663 = vld [vmem:[#allocation2 + $0x70] sm:$0xff]
    %v664 = vld [vmem:[#allocation2 + $0x78] sm:$0xff]
    %v665 = vld [vmem:[#allocation2 + $0x80] sm:$0xff]
    %v666 = vld [vmem:[#allocation2 + $0x88] sm:$0xff]
    %v667 = vld [vmem:[#allocation2 + $0x90] sm:$0xff]
    %v668 = vld [vmem:[#allocation2 + $0x98] sm:$0xff]
    %v669 = vld [vmem:[#allocation2 + $0xa0] sm:$0xff]
    %v670 = vld [vmem:[#allocation2 + $0xa8] sm:$0xff]
    %v671 = vld [vmem:[#allocation2 + $0xb0] sm:$0xff]
    %v672 = vld [vmem:[#allocation2 + $0xb8] sm:$0xff]
    %v673 = vld [vmem:[#allocation2 + $0xc0] sm:$0xff]
    %v674 = vld [vmem:[#allocation2 + $0xc8] sm:$0xff]
    %v675 = vld [vmem:[#allocation2 + $0xd0] sm:$0xff]
    %v676 = vld [vmem:[#allocation2 + $0xd8] sm:$0xff]
    %v677 = vld [vmem:[#allocation2 + $0xe0] sm:$0xff]
    %v678 = vld [vmem:[#allocation2 + $0xe8] sm:$0xff]
    %v679 = vld [vmem:[#allocation2 + $0xf0] sm:$0xff]
    %v680 = vld [vmem:[#allocation2 + $0xf8] sm:$0xff]
    %v681 = vld [vmem:[#allocation2 + $0x100] sm:$0xff]
    %v682 = vld [vmem:[#allocation2 + $0x108] sm:$0xff]
    %v683 = vld [vmem:[#allocation2 + $0x110] sm:$0xff]
    %v684 = vld [vmem:[#allocation2 + $0x118] sm:$0xff]
    %v685 = vld [vmem:[#allocation2 + $0x120] sm:$0xff]
    %v686 = vld [vmem:[#allocation2 + $0x128] sm:$0xff]
    %v687 = vld [vmem:[#allocation2 + $0x130] sm:$0xff]
    %v688 = vld [vmem:[#allocation2 + $0x138] sm:$0xff]
    %v689 = vld [vmem:[#allocation2 + $0x140] sm:$0xff]
    %v690 = vld [vmem:[#allocation2 + $0x148] sm:$0xff]
    %v691 = vld [vmem:[#allocation2 + $0x150] sm:$0xff]
    %v692 = vld [vmem:[#allocation2 + $0x158] sm:$0xff]
    %v693 = vld [vmem:[#allocation2 + $0x160] sm:$0xff]
    %v694 = vld [vmem:[#allocation2 + $0x168] sm:$0xff]
    %v695 = vld [vmem:[#allocation2 + $0x170] sm:$0xff]
    %v696 = vld [vmem:[#allocation2 + $0x178] sm:$0xff]
    %v697 = vld [vmem:[#allocation2 + $0x180] sm:$0xff]
    %v698 = vld [vmem:[#allocation2 + $0x188] sm:$0xff]
    %v699 = vld [vmem:[#allocation2 + $0x190] sm:$0xff]
    %v700 = vld [vmem:[#allocation2 + $0x198] sm:$0xff]
    %v701 = vld [vmem:[#allocation2 + $0x1a0] sm:$0xff]
    %v702 = vld [vmem:[#allocation2 + $0x1a8] sm:$0xff]
    %v703 = vld [vmem:[#allocation2 + $0x1b0] sm:$0xff]
    %v704 = vld [vmem:[#allocation2 + $0x1b8] sm:$0xff]
    %v705 = vld [vmem:[#allocation2 + $0x1c0] sm:$0xff]
    %v706 = vld [vmem:[#allocation2 + $0x1c8] sm:$0xff]
    %v707 = vld [vmem:[#allocation2 + $0x1d0] sm:$0xff]
    %v708 = vld [vmem:[#allocation2 + $0x1d8] sm:$0xff]
    %v709 = vld [vmem:[#allocation2 + $0x1e0] sm:$0xff]
    %v710 = vld [vmem:[#allocation2 + $0x1e8] sm:$0xff]
    %v711 = vld [vmem:[#allocation2 + $0x1f0] sm:$0xff]
    %v712 = vld [vmem:[#allocation2 + $0x1f8] sm:$0xff]
    %v713 = vld [vmem:[%s5] sm:$0x3]
    %v715 = vlaneseq
    %v716 = vshrl.u32 %v715, 7
    %v717 = vsub.s32 0, %v716
    %v718 = vrot.slane %v713, %v717
    %v719 = vlaneseq
    %v720 = vshrl.u32 %v719, 7
    %v721 = vsub.s32 1, %v720
    %v722 = vrot.slane %v713, %v721
    %v725 = vand.u32 %v650, 4294901760
    %726 = vmatprep.subr.mxu0 %v725
    %v727 = vand.u32 %v649, 4294901760
    %728 = vmatpush1.msra.mxu0 %v727
    %v729 = vand.u32 %v652, 4294901760
    %730 = vmatprep.subr.mxu0 %v729
    %v731 = vand.u32 %v651, 4294901760
    %732 = vmatpush1.msra.mxu0 %v731
    %v733 = vand.u32 %v654, 4294901760
    %734 = vmatprep.subr.mxu0 %v733
    %v735 = vand.u32 %v653, 4294901760
    %736 = vmatpush1.msra.mxu0 %v735
    %v737 = vand.u32 %v656, 4294901760
    %738 = vmatprep.subr.mxu0 %v737
    %v739 = vand.u32 %v655, 4294901760
    %740 = vmatpush1.msra.mxu0 %v739
    %v741 = vand.u32 %v658, 4294901760
    %742 = vmatprep.subr.mxu0 %v741
    %v743 = vand.u32 %v657, 4294901760
    %744 = vmatpush1.msra.mxu0 %v743
    %v745 = vand.u32 %v660, 4294901760
    %746 = vmatprep.subr.mxu0 %v745
    %v747 = vand.u32 %v659, 4294901760
    %748 = vmatpush1.msra.mxu0 %v747
    %v749 = vand.u32 %v662, 4294901760
    %750 = vmatprep.subr.mxu0 %v749
    %v751 = vand.u32 %v661, 4294901760
    %752 = vmatpush1.msra.mxu0 %v751
    %v753 = vand.u32 %v664, 4294901760
    %754 = vmatprep.subr.mxu0 %v753
    %v755 = vand.u32 %v663, 4294901760
    %756 = vmatpush1.msra.mxu0 %v755
    %v757 = vand.u32 %v666, 4294901760
    %758 = vmatprep.subr.mxu0 %v757
    %v759 = vand.u32 %v665, 4294901760
    %760 = vmatpush1.msra.mxu0 %v759
    %v761 = vand.u32 %v668, 4294901760
    %762 = vmatprep.subr.mxu0 %v761
    %v763 = vand.u32 %v667, 4294901760
    %764 = vmatpush1.msra.mxu0 %v763
    %v765 = vand.u32 %v670, 4294901760
    %766 = vmatprep.subr.mxu0 %v765
    %v767 = vand.u32 %v669, 4294901760
    %768 = vmatpush1.msra.mxu0 %v767
    %v769 = vand.u32 %v672, 4294901760
    %770 = vmatprep.subr.mxu0 %v769
    %v771 = vand.u32 %v671, 4294901760
    %772 = vmatpush1.msra.mxu0 %v771
    %v773 = vand.u32 %v674, 4294901760
    %774 = vmatprep.subr.mxu0 %v773
    %v775 = vand.u32 %v673, 4294901760
    %776 = vmatpush1.msra.mxu0 %v775
    %v777 = vand.u32 %v676, 4294901760
    %778 = vmatprep.subr.mxu0 %v777
    %v779 = vand.u32 %v675, 4294901760
    %780 = vmatpush1.msra.mxu0 %v779
    %v781 = vand.u32 %v678, 4294901760
    %782 = vmatprep.subr.mxu0 %v781
    %v783 = vand.u32 %v677, 4294901760
    %784 = vmatpush1.msra.mxu0 %v783
    %v785 = vand.u32 %v680, 4294901760
    %786 = vmatprep.subr.mxu0 %v785
    %v787 = vand.u32 %v679, 4294901760
    %788 = vmatpush1.msra.mxu0 %v787
    %v789 = vand.u32 %v682, 4294901760
    %790 = vmatprep.subr.mxu0 %v789
    %v791 = vand.u32 %v681, 4294901760
    %792 = vmatpush1.msra.mxu0 %v791
    %v793 = vand.u32 %v684, 4294901760
    %794 = vmatprep.subr.mxu0 %v793
    %v795 = vand.u32 %v683, 4294901760
    %796 = vmatpush1.msra.mxu0 %v795
    %v797 = vand.u32 %v686, 4294901760
    %798 = vmatprep.subr.mxu0 %v797
    %v799 = vand.u32 %v685, 4294901760
    %800 = vmatpush1.msra.mxu0 %v799
    %v801 = vand.u32 %v688, 4294901760
    %802 = vmatprep.subr.mxu0 %v801
    %v803 = vand.u32 %v687, 4294901760
    %804 = vmatpush1.msra.mxu0 %v803
    %v805 = vand.u32 %v690, 4294901760
    %806 = vmatprep.subr.mxu0 %v805
    %v807 = vand.u32 %v689, 4294901760
    %808 = vmatpush1.msra.mxu0 %v807
    %v809 = vand.u32 %v692, 4294901760
    %810 = vmatprep.subr.mxu0 %v809
    %v811 = vand.u32 %v691, 4294901760
    %812 = vmatpush1.msra.mxu0 %v811
    %v813 = vand.u32 %v694, 4294901760
    %814 = vmatprep.subr.mxu0 %v813
    %v815 = vand.u32 %v693, 4294901760
    %816 = vmatpush1.msra.mxu0 %v815
    %v817 = vand.u32 %v696, 4294901760
    %818 = vmatprep.subr.mxu0 %v817
    %v819 = vand.u32 %v695, 4294901760
    %820 = vmatpush1.msra.mxu0 %v819
    %v821 = vand.u32 %v698, 4294901760
    %822 = vmatprep.subr.mxu0 %v821
    %v823 = vand.u32 %v697, 4294901760
    %824 = vmatpush1.msra.mxu0 %v823
    %v825 = vand.u32 %v700, 4294901760
    %826 = vmatprep.subr.mxu0 %v825
    %v827 = vand.u32 %v699, 4294901760
    %828 = vmatpush1.msra.mxu0 %v827
    %v829 = vand.u32 %v702, 4294901760
    %830 = vmatprep.subr.mxu0 %v829
    %v831 = vand.u32 %v701, 4294901760
    %832 = vmatpush1.msra.mxu0 %v831
    %v833 = vand.u32 %v704, 4294901760
    %834 = vmatprep.subr.mxu0 %v833
    %v835 = vand.u32 %v703, 4294901760
    %836 = vmatpush1.msra.mxu0 %v835
    %v837 = vand.u32 %v706, 4294901760
    %838 = vmatprep.subr.mxu0 %v837
    %v839 = vand.u32 %v705, 4294901760
    %840 = vmatpush1.msra.mxu0 %v839
    %v841 = vand.u32 %v708, 4294901760
    %842 = vmatprep.subr.mxu0 %v841
    %v843 = vand.u32 %v707, 4294901760
    %844 = vmatpush1.msra.mxu0 %v843
    %v845 = vand.u32 %v710, 4294901760
    %846 = vmatprep.subr.mxu0 %v845
    %v847 = vand.u32 %v709, 4294901760
    %848 = vmatpush1.msra.mxu0 %v847
    %v849 = vand.u32 %v712, 4294901760
    %850 = vmatprep.subr.mxu0 %v849
    %v851 = vand.u32 %v711, 4294901760
    %852 = vmatpush1.msra.mxu0 %v851
    %v853 = vand.u32 %v648, 4294901760
    %v854 = vsub.f32 %v648, %v853
    %v855 = vand.u32 %v854, 4294901760
    %v856 = vsub.f32 %v854, %v855
    %v857 = vand.u32 %v856, 4294901760
    %858 = vmatprep.mubr.f32.mxu0 %v857
    %v859 = vand.u32 %v647, 4294901760
    %v860 = vsub.f32 %v647, %v859
    %v861 = vand.u32 %v860, 4294901760
    %v862 = vsub.f32 %v860, %v861
    %v863 = vand.u32 %v862, 4294901760
    %864 = vmatmul.mubr.f32.gmra.mrb[0].mxu0 %v863
    %v865 = vpop.f32.mrb[0].mxu0
    %v866 = vadd.f32 %v718, %v865
    %v867 = vpop.f32.mrb[0].mxu0
    %v868 = vadd.f32 %v722, %v867
    %869 = vdwg.mxu0
    %v870 = vand.u32 %v650, 4294901760
    %v871 = vsub.f32 %v650, %v870
    %v872 = vand.u32 %v871, 4294901760
    %v873 = vsub.f32 %v871, %v872
    %v874 = vand.u32 %v873, 4294901760
    %875 = vmatprep.subr.mxu0 %v874
    %v876 = vand.u32 %v649, 4294901760
    %v877 = vsub.f32 %v649, %v876
    %v878 = vand.u32 %v877, 4294901760
    %v879 = vsub.f32 %v877, %v878
    %v880 = vand.u32 %v879, 4294901760
    %881 = vmatpush1.msra.mxu0 %v880
    %v882 = vand.u32 %v652, 4294901760
    %v883 = vsub.f32 %v652, %v882
    %v884 = vand.u32 %v883, 4294901760
    %v885 = vsub.f32 %v883, %v884
    %v886 = vand.u32 %v885, 4294901760
    %887 = vmatprep.subr.mxu0 %v886
    %v888 = vand.u32 %v651, 4294901760
    %v889 = vsub.f32 %v651, %v888
    %v890 = vand.u32 %v889, 4294901760
    %v891 = vsub.f32 %v889, %v890
    %v892 = vand.u32 %v891, 4294901760
    %893 = vmatpush1.msra.mxu0 %v892
    %v894 = vand.u32 %v654, 4294901760
    %v895 = vsub.f32 %v654, %v894
    %v896 = vand.u32 %v895, 4294901760
    %v897 = vsub.f32 %v895, %v896
    %v898 = vand.u32 %v897, 4294901760
    %899 = vmatprep.subr.mxu0 %v898
    %v900 = vand.u32 %v653, 4294901760
    %v901 = vsub.f32 %v653, %v900
    %v902 = vand.u32 %v901, 4294901760
    %v903 = vsub.f32 %v901, %v902
    %v904 = vand.u32 %v903, 4294901760
    %905 = vmatpush1.msra.mxu0 %v904
    %v906 = vand.u32 %v656, 4294901760
    %v907 = vsub.f32 %v656, %v906
    %v908 = vand.u32 %v907, 4294901760
    %v909 = vsub.f32 %v907, %v908
    %v910 = vand.u32 %v909, 4294901760
    %911 = vmatprep.subr.mxu0 %v910
    %v912 = vand.u32 %v655, 4294901760
    %v913 = vsub.f32 %v655, %v912
    %v914 = vand.u32 %v913, 4294901760
    %v915 = vsub.f32 %v913, %v914
    %v916 = vand.u32 %v915, 4294901760
    %917 = vmatpush1.msra.mxu0 %v916
    %v918 = vand.u32 %v658, 4294901760
    %v919 = vsub.f32 %v658, %v918
    %v920 = vand.u32 %v919, 4294901760
    %v921 = vsub.f32 %v919, %v920
    %v922 = vand.u32 %v921, 4294901760
    %923 = vmatprep.subr.mxu0 %v922
    %v924 = vand.u32 %v657, 4294901760
    %v925 = vsub.f32 %v657, %v924
    %v926 = vand.u32 %v925, 4294901760
    %v927 = vsub.f32 %v925, %v926
    %v928 = vand.u32 %v927, 4294901760
    %929 = vmatpush1.msra.mxu0 %v928
    %v930 = vand.u32 %v660, 4294901760
    %v931 = vsub.f32 %v660, %v930
    %v932 = vand.u32 %v931, 4294901760
    %v933 = vsub.f32 %v931, %v932
    %v934 = vand.u32 %v933, 4294901760
    %935 = vmatprep.subr.mxu0 %v934
    %v936 = vand.u32 %v659, 4294901760
    %v937 = vsub.f32 %v659, %v936
    %v938 = vand.u32 %v937, 4294901760
    %v939 = vsub.f32 %v937, %v938
    %v940 = vand.u32 %v939, 4294901760
    %941 = vmatpush1.msra.mxu0 %v940
    %v942 = vand.u32 %v662, 4294901760
    %v943 = vsub.f32 %v662, %v942
    %v944 = vand.u32 %v943, 4294901760
    %v945 = vsub.f32 %v943, %v944
    %v946 = vand.u32 %v945, 4294901760
    %947 = vmatprep.subr.mxu0 %v946
    %v948 = vand.u32 %v661, 4294901760
    %v949 = vsub.f32 %v661, %v948
    %v950 = vand.u32 %v949, 4294901760
    %v951 = vsub.f32 %v949, %v950
    %v952 = vand.u32 %v951, 4294901760
    %953 = vmatpush1.msra.mxu0 %v952
    %v954 = vand.u32 %v664, 4294901760
    %v955 = vsub.f32 %v664, %v954
    %v956 = vand.u32 %v955, 4294901760
    %v957 = vsub.f32 %v955, %v956
    %v958 = vand.u32 %v957, 4294901760
    %959 = vmatprep.subr.mxu0 %v958
    %v960 = vand.u32 %v663, 4294901760
    %v961 = vsub.f32 %v663, %v960
    %v962 = vand.u32 %v961, 4294901760
    %v963 = vsub.f32 %v961, %v962
    %v964 = vand.u32 %v963, 4294901760
    %965 = vmatpush1.msra.mxu0 %v964
    %v966 = vand.u32 %v666, 4294901760
    %v967 = vsub.f32 %v666, %v966
    %v968 = vand.u32 %v967, 4294901760
    %v969 = vsub.f32 %v967, %v968
    %v970 = vand.u32 %v969, 4294901760
    %971 = vmatprep.subr.mxu0 %v970
    %v972 = vand.u32 %v665, 4294901760
    %v973 = vsub.f32 %v665, %v972
    %v974 = vand.u32 %v973, 4294901760
    %v975 = vsub.f32 %v973, %v974
    %v976 = vand.u32 %v975, 4294901760
    %977 = vmatpush1.msra.mxu0 %v976
    %v978 = vand.u32 %v668, 4294901760
    %v979 = vsub.f32 %v668, %v978
    %v980 = vand.u32 %v979, 4294901760
    %v981 = vsub.f32 %v979, %v980
    %v982 = vand.u32 %v981, 4294901760
    %983 = vmatprep.subr.mxu0 %v982
    %v984 = vand.u32 %v667, 4294901760
    %v985 = vsub.f32 %v667, %v984
    %v986 = vand.u32 %v985, 4294901760
    %v987 = vsub.f32 %v985, %v986
    %v988 = vand.u32 %v987, 4294901760
    %989 = vmatpush1.msra.mxu0 %v988
    %v990 = vand.u32 %v670, 4294901760
    %v991 = vsub.f32 %v670, %v990
    %v992 = vand.u32 %v991, 4294901760
    %v993 = vsub.f32 %v991, %v992
    %v994 = vand.u32 %v993, 4294901760
    %995 = vmatprep.subr.mxu0 %v994
    %v996 = vand.u32 %v669, 4294901760
    %v997 = vsub.f32 %v669, %v996
    %v998 = vand.u32 %v997, 4294901760
    %v999 = vsub.f32 %v997, %v998
    %v1000 = vand.u32 %v999, 4294901760
    %1001 = vmatpush1.msra.mxu0 %v1000
    %v1002 = vand.u32 %v672, 4294901760
    %v1003 = vsub.f32 %v672, %v1002
    %v1004 = vand.u32 %v1003, 4294901760
    %v1005 = vsub.f32 %v1003, %v1004
    %v1006 = vand.u32 %v1005, 4294901760
    %1007 = vmatprep.subr.mxu0 %v1006
    %v1008 = vand.u32 %v671, 4294901760
    %v1009 = vsub.f32 %v671, %v1008
    %v1010 = vand.u32 %v1009, 4294901760
    %v1011 = vsub.f32 %v1009, %v1010
    %v1012 = vand.u32 %v1011, 4294901760
    %1013 = vmatpush1.msra.mxu0 %v1012
    %v1014 = vand.u32 %v674, 4294901760
    %v1015 = vsub.f32 %v674, %v1014
    %v1016 = vand.u32 %v1015, 4294901760
    %v1017 = vsub.f32 %v1015, %v1016
    %v1018 = vand.u32 %v1017, 4294901760
    %1019 = vmatprep.subr.mxu0 %v1018
    %v1020 = vand.u32 %v673, 4294901760
    %v1021 = vsub.f32 %v673, %v1020
    %v1022 = vand.u32 %v1021, 4294901760
    %v1023 = vsub.f32 %v1021, %v1022
    %v1024 = vand.u32 %v1023, 4294901760
    %1025 = vmatpush1.msra.mxu0 %v1024
    %v1026 = vand.u32 %v676, 4294901760
    %v1027 = vsub.f32 %v676, %v1026
    %v1028 = vand.u32 %v1027, 4294901760
    %v1029 = vsub.f32 %v1027, %v1028
    %v1030 = vand.u32 %v1029, 4294901760
    %1031 = vmatprep.subr.mxu0 %v1030
    %v1032 = vand.u32 %v675, 4294901760
    %v1033 = vsub.f32 %v675, %v1032
    %v1034 = vand.u32 %v1033, 4294901760
    %v1035 = vsub.f32 %v1033, %v1034
    %v1036 = vand.u32 %v1035, 4294901760
    %1037 = vmatpush1.msra.mxu0 %v1036
    %v1038 = vand.u32 %v678, 4294901760
    %v1039 = vsub.f32 %v678, %v1038
    %v1040 = vand.u32 %v1039, 4294901760
    %v1041 = vsub.f32 %v1039, %v1040
    %v1042 = vand.u32 %v1041, 4294901760
    %1043 = vmatprep.subr.mxu0 %v1042
    %v1044 = vand.u32 %v677, 4294901760
    %v1045 = vsub.f32 %v677, %v1044
    %v1046 = vand.u32 %v1045, 4294901760
    %v1047 = vsub.f32 %v1045, %v1046
    %v1048 = vand.u32 %v1047, 4294901760
    %1049 = vmatpush1.msra.mxu0 %v1048
    %v1050 = vand.u32 %v680, 4294901760
    %v1051 = vsub.f32 %v680, %v1050
    %v1052 = vand.u32 %v1051, 4294901760
    %v1053 = vsub.f32 %v1051, %v1052
    %v1054 = vand.u32 %v1053, 4294901760
    %1055 = vmatprep.subr.mxu0 %v1054
    %v1056 = vand.u32 %v679, 4294901760
    %v1057 = vsub.f32 %v679, %v1056
    %v1058 = vand.u32 %v1057, 4294901760
    %v1059 = vsub.f32 %v1057, %v1058
    %v1060 = vand.u32 %v1059, 4294901760
    %1061 = vmatpush1.msra.mxu0 %v1060
    %v1062 = vand.u32 %v682, 4294901760
    %v1063 = vsub.f32 %v682, %v1062
    %v1064 = vand.u32 %v1063, 4294901760
    %v1065 = vsub.f32 %v1063, %v1064
    %v1066 = vand.u32 %v1065, 4294901760
    %1067 = vmatprep.subr.mxu0 %v1066
    %v1068 = vand.u32 %v681, 4294901760
    %v1069 = vsub.f32 %v681, %v1068
    %v1070 = vand.u32 %v1069, 4294901760
    %v1071 = vsub.f32 %v1069, %v1070
    %v1072 = vand.u32 %v1071, 4294901760
    %1073 = vmatpush1.msra.mxu0 %v1072
    %v1074 = vand.u32 %v684, 4294901760
    %v1075 = vsub.f32 %v684, %v1074
    %v1076 = vand.u32 %v1075, 4294901760
    %v1077 = vsub.f32 %v1075, %v1076
    %v1078 = vand.u32 %v1077, 4294901760
    %1079 = vmatprep.subr.mxu0 %v1078
    %v1080 = vand.u32 %v683, 4294901760
    %v1081 = vsub.f32 %v683, %v1080
    %v1082 = vand.u32 %v1081, 4294901760
    %v1083 = vsub.f32 %v1081, %v1082
    %v1084 = vand.u32 %v1083, 4294901760
    %1085 = vmatpush1.msra.mxu0 %v1084
    %v1086 = vand.u32 %v686, 4294901760
    %v1087 = vsub.f32 %v686, %v1086
    %v1088 = vand.u32 %v1087, 4294901760
    %v1089 = vsub.f32 %v1087, %v1088
    %v1090 = vand.u32 %v1089, 4294901760
    %1091 = vmatprep.subr.mxu0 %v1090
    %v1092 = vand.u32 %v685, 4294901760
    %v1093 = vsub.f32 %v685, %v1092
    %v1094 = vand.u32 %v1093, 4294901760
    %v1095 = vsub.f32 %v1093, %v1094
    %v1096 = vand.u32 %v1095, 4294901760
    %1097 = vmatpush1.msra.mxu0 %v1096
    %v1098 = vand.u32 %v688, 4294901760
    %v1099 = vsub.f32 %v688, %v1098
    %v1100 = vand.u32 %v1099, 4294901760
    %v1101 = vsub.f32 %v1099, %v1100
    %v1102 = vand.u32 %v1101, 4294901760
    %1103 = vmatprep.subr.mxu0 %v1102
    %v1104 = vand.u32 %v687, 4294901760
    %v1105 = vsub.f32 %v687, %v1104
    %v1106 = vand.u32 %v1105, 4294901760
    %v1107 = vsub.f32 %v1105, %v1106
    %v1108 = vand.u32 %v1107, 4294901760
    %1109 = vmatpush1.msra.mxu0 %v1108
    %v1110 = vand.u32 %v690, 4294901760
    %v1111 = vsub.f32 %v690, %v1110
    %v1112 = vand.u32 %v1111, 4294901760
    %v1113 = vsub.f32 %v1111, %v1112
    %v1114 = vand.u32 %v1113, 4294901760
    %1115 = vmatprep.subr.mxu0 %v1114
    %v1116 = vand.u32 %v689, 4294901760
    %v1117 = vsub.f32 %v689, %v1116
    %v1118 = vand.u32 %v1117, 4294901760
    %v1119 = vsub.f32 %v1117, %v1118
    %v1120 = vand.u32 %v1119, 4294901760
    %1121 = vmatpush1.msra.mxu0 %v1120
    %v1122 = vand.u32 %v692, 4294901760
    %v1123 = vsub.f32 %v692, %v1122
    %v1124 = vand.u32 %v1123, 4294901760
    %v1125 = vsub.f32 %v1123, %v1124
    %v1126 = vand.u32 %v1125, 4294901760
    %1127 = vmatprep.subr.mxu0 %v1126
    %v1128 = vand.u32 %v691, 4294901760
    %v1129 = vsub.f32 %v691, %v1128
    %v1130 = vand.u32 %v1129, 4294901760
    %v1131 = vsub.f32 %v1129, %v1130
    %v1132 = vand.u32 %v1131, 4294901760
    %1133 = vmatpush1.msra.mxu0 %v1132
    %v1134 = vand.u32 %v694, 4294901760
    %v1135 = vsub.f32 %v694, %v1134
    %v1136 = vand.u32 %v1135, 4294901760
    %v1137 = vsub.f32 %v1135, %v1136
    %v1138 = vand.u32 %v1137, 4294901760
    %1139 = vmatprep.subr.mxu0 %v1138
    %v1140 = vand.u32 %v693, 4294901760
    %v1141 = vsub.f32 %v693, %v1140
    %v1142 = vand.u32 %v1141, 4294901760
    %v1143 = vsub.f32 %v1141, %v1142
    %v1144 = vand.u32 %v1143, 4294901760
    %1145 = vmatpush1.msra.mxu0 %v1144
    %v1146 = vand.u32 %v696, 4294901760
    %v1147 = vsub.f32 %v696, %v1146
    %v1148 = vand.u32 %v1147, 4294901760
    %v1149 = vsub.f32 %v1147, %v1148
    %v1150 = vand.u32 %v1149, 4294901760
    %1151 = vmatprep.subr.mxu0 %v1150
    %v1152 = vand.u32 %v695, 4294901760
    %v1153 = vsub.f32 %v695, %v1152
    %v1154 = vand.u32 %v1153, 4294901760
    %v1155 = vsub.f32 %v1153, %v1154
    %v1156 = vand.u32 %v1155, 4294901760
    %1157 = vmatpush1.msra.mxu0 %v1156
    %v1158 = vand.u32 %v698, 4294901760
    %v1159 = vsub.f32 %v698, %v1158
    %v1160 = vand.u32 %v1159, 4294901760
    %v1161 = vsub.f32 %v1159, %v1160
    %v1162 = vand.u32 %v1161, 4294901760
    %1163 = vmatprep.subr.mxu0 %v1162
    %v1164 = vand.u32 %v697, 4294901760
    %v1165 = vsub.f32 %v697, %v1164
    %v1166 = vand.u32 %v1165, 4294901760
    %v1167 = vsub.f32 %v1165, %v1166
    %v1168 = vand.u32 %v1167, 4294901760
    %1169 = vmatpush1.msra.mxu0 %v1168
    %v1170 = vand.u32 %v700, 4294901760
    %v1171 = vsub.f32 %v700, %v1170
    %v1172 = vand.u32 %v1171, 4294901760
    %v1173 = vsub.f32 %v1171, %v1172
    %v1174 = vand.u32 %v1173, 4294901760
    %1175 = vmatprep.subr.mxu0 %v1174
    %v1176 = vand.u32 %v699, 4294901760
    %v1177 = vsub.f32 %v699, %v1176
    %v1178 = vand.u32 %v1177, 4294901760
    %v1179 = vsub.f32 %v1177, %v1178
    %v1180 = vand.u32 %v1179, 4294901760
    %1181 = vmatpush1.msra.mxu0 %v1180
    %v1182 = vand.u32 %v702, 4294901760
    %v1183 = vsub.f32 %v702, %v1182
    %v1184 = vand.u32 %v1183, 4294901760
    %v1185 = vsub.f32 %v1183, %v1184
    %v1186 = vand.u32 %v1185, 4294901760
    %1187 = vmatprep.subr.mxu0 %v1186
    %v1188 = vand.u32 %v701, 4294901760
    %v1189 = vsub.f32 %v701, %v1188
    %v1190 = vand.u32 %v1189, 4294901760
    %v1191 = vsub.f32 %v1189, %v1190
    %v1192 = vand.u32 %v1191, 4294901760
    %1193 = vmatpush1.msra.mxu0 %v1192
    %v1194 = vand.u32 %v704, 4294901760
    %v1195 = vsub.f32 %v704, %v1194
    %v1196 = vand.u32 %v1195, 4294901760
    %v1197 = vsub.f32 %v1195, %v1196
    %v1198 = vand.u32 %v1197, 4294901760
    %1199 = vmatprep.subr.mxu0 %v1198
    %v1200 = vand.u32 %v703, 4294901760
    %v1201 = vsub.f32 %v703, %v1200
    %v1202 = vand.u32 %v1201, 4294901760
    %v1203 = vsub.f32 %v1201, %v1202
    %v1204 = vand.u32 %v1203, 4294901760
    %1205 = vmatpush1.msra.mxu0 %v1204
    %v1206 = vand.u32 %v706, 4294901760
    %v1207 = vsub.f32 %v706, %v1206
    %v1208 = vand.u32 %v1207, 4294901760
    %v1209 = vsub.f32 %v1207, %v1208
    %v1210 = vand.u32 %v1209, 4294901760
    %1211 = vmatprep.subr.mxu0 %v1210
    %v1212 = vand.u32 %v705, 4294901760
    %v1213 = vsub.f32 %v705, %v1212
    %v1214 = vand.u32 %v1213, 4294901760
    %v1215 = vsub.f32 %v1213, %v1214
    %v1216 = vand.u32 %v1215, 4294901760
    %1217 = vmatpush1.msra.mxu0 %v1216
    %v1218 = vand.u32 %v708, 4294901760
    %v1219 = vsub.f32 %v708, %v1218
    %v1220 = vand.u32 %v1219, 4294901760
    %v1221 = vsub.f32 %v1219, %v1220
    %v1222 = vand.u32 %v1221, 4294901760
    %1223 = vmatprep.subr.mxu0 %v1222
    %v1224 = vand.u32 %v707, 4294901760
    %v1225 = vsub.f32 %v707, %v1224
    %v1226 = vand.u32 %v1225, 4294901760
    %v1227 = vsub.f32 %v1225, %v1226
    %v1228 = vand.u32 %v1227, 4294901760
    %1229 = vmatpush1.msra.mxu0 %v1228
    %v1230 = vand.u32 %v710, 4294901760
    %v1231 = vsub.f32 %v710, %v1230
    %v1232 = vand.u32 %v1231, 4294901760
    %v1233 = vsub.f32 %v1231, %v1232
    %v1234 = vand.u32 %v1233, 4294901760
    %1235 = vmatprep.subr.mxu0 %v1234
    %v1236 = vand.u32 %v709, 4294901760
    %v1237 = vsub.f32 %v709, %v1236
    %v1238 = vand.u32 %v1237, 4294901760
    %v1239 = vsub.f32 %v1237, %v1238
    %v1240 = vand.u32 %v1239, 4294901760
    %1241 = vmatpush1.msra.mxu0 %v1240
    %v1242 = vand.u32 %v712, 4294901760
    %v1243 = vsub.f32 %v712, %v1242
    %v1244 = vand.u32 %v1243, 4294901760
    %v1245 = vsub.f32 %v1243, %v1244
    %v1246 = vand.u32 %v1245, 4294901760
    %1247 = vmatprep.subr.mxu0 %v1246
    %v1248 = vand.u32 %v711, 4294901760
    %v1249 = vsub.f32 %v711, %v1248
    %v1250 = vand.u32 %v1249, 4294901760
    %v1251 = vsub.f32 %v1249, %v1250
    %v1252 = vand.u32 %v1251, 4294901760
    %1253 = vmatpush1.msra.mxu0 %v1252
    %v1254 = vand.u32 %v648, 4294901760
    %1255 = vmatprep.mubr.f32.mxu0 %v1254
    %v1256 = vand.u32 %v647, 4294901760
    %1257 = vmatmul.mubr.f32.gmra.mrb[0].mxu0 %v1256
    %v1258 = vpop.f32.mrb[0].mxu0
    %v1259 = vadd.f32 %v866, %v1258
    %v1260 = vpop.f32.mrb[0].mxu0
    %v1261 = vadd.f32 %v868, %v1260
    %1262 = vdwg.mxu0
    %v1263 = vand.u32 %v650, 4294901760
    %v1264 = vsub.f32 %v650, %v1263
    %1265 = vmatprep.subr.mxu0 %v1264
    %v1266 = vand.u32 %v649, 4294901760
    %v1267 = vsub.f32 %v649, %v1266
    %1268 = vmatpush1.msra.mxu0 %v1267
    %v1269 = vand.u32 %v652, 4294901760
    %v1270 = vsub.f32 %v652, %v1269
    %1271 = vmatprep.subr.mxu0 %v1270
    %v1272 = vand.u32 %v651, 4294901760
    %v1273 = vsub.f32 %v651, %v1272
    %1274 = vmatpush1.msra.mxu0 %v1273
    %v1275 = vand.u32 %v654, 4294901760
    %v1276 = vsub.f32 %v654, %v1275
    %1277 = vmatprep.subr.mxu0 %v1276
    %v1278 = vand.u32 %v653, 4294901760
    %v1279 = vsub.f32 %v653, %v1278
    %1280 = vmatpush1.msra.mxu0 %v1279
    %v1281 = vand.u32 %v656, 4294901760
    %v1282 = vsub.f32 %v656, %v1281
    %1283 = vmatprep.subr.mxu0 %v1282
    %v1284 = vand.u32 %v655, 4294901760
    %v1285 = vsub.f32 %v655, %v1284
    %1286 = vmatpush1.msra.mxu0 %v1285
    %v1287 = vand.u32 %v658, 4294901760
    %v1288 = vsub.f32 %v658, %v1287
    %1289 = vmatprep.subr.mxu0 %v1288
    %v1290 = vand.u32 %v657, 4294901760
    %v1291 = vsub.f32 %v657, %v1290
    %1292 = vmatpush1.msra.mxu0 %v1291
    %v1293 = vand.u32 %v660, 4294901760
    %v1294 = vsub.f32 %v660, %v1293
    %1295 = vmatprep.subr.mxu0 %v1294
    %v1296 = vand.u32 %v659, 4294901760
    %v1297 = vsub.f32 %v659, %v1296
    %1298 = vmatpush1.msra.mxu0 %v1297
    %v1299 = vand.u32 %v662, 4294901760
    %v1300 = vsub.f32 %v662, %v1299
    %1301 = vmatprep.subr.mxu0 %v1300
    %v1302 = vand.u32 %v661, 4294901760
    %v1303 = vsub.f32 %v661, %v1302
    %1304 = vmatpush1.msra.mxu0 %v1303
    %v1305 = vand.u32 %v664, 4294901760
    %v1306 = vsub.f32 %v664, %v1305
    %1307 = vmatprep.subr.mxu0 %v1306
    %v1308 = vand.u32 %v663, 4294901760
    %v1309 = vsub.f32 %v663, %v1308
    %1310 = vmatpush1.msra.mxu0 %v1309
    %v1311 = vand.u32 %v666, 4294901760
    %v1312 = vsub.f32 %v666, %v1311
    %1313 = vmatprep.subr.mxu0 %v1312
    %v1314 = vand.u32 %v665, 4294901760
    %v1315 = vsub.f32 %v665, %v1314
    %1316 = vmatpush1.msra.mxu0 %v1315
    %v1317 = vand.u32 %v668, 4294901760
    %v1318 = vsub.f32 %v668, %v1317
    %1319 = vmatprep.subr.mxu0 %v1318
    %v1320 = vand.u32 %v667, 4294901760
    %v1321 = vsub.f32 %v667, %v1320
    %1322 = vmatpush1.msra.mxu0 %v1321
    %v1323 = vand.u32 %v670, 4294901760
    %v1324 = vsub.f32 %v670, %v1323
    %1325 = vmatprep.subr.mxu0 %v1324
    %v1326 = vand.u32 %v669, 4294901760
    %v1327 = vsub.f32 %v669, %v1326
    %1328 = vmatpush1.msra.mxu0 %v1327
    %v1329 = vand.u32 %v672, 4294901760
    %v1330 = vsub.f32 %v672, %v1329
    %1331 = vmatprep.subr.mxu0 %v1330
    %v1332 = vand.u32 %v671, 4294901760
    %v1333 = vsub.f32 %v671, %v1332
    %1334 = vmatpush1.msra.mxu0 %v1333
    %v1335 = vand.u32 %v674, 4294901760
    %v1336 = vsub.f32 %v674, %v1335
    %1337 = vmatprep.subr.mxu0 %v1336
    %v1338 = vand.u32 %v673, 4294901760
    %v1339 = vsub.f32 %v673, %v1338
    %1340 = vmatpush1.msra.mxu0 %v1339
    %v1341 = vand.u32 %v676, 4294901760
    %v1342 = vsub.f32 %v676, %v1341
    %1343 = vmatprep.subr.mxu0 %v1342
    %v1344 = vand.u32 %v675, 4294901760
    %v1345 = vsub.f32 %v675, %v1344
    %1346 = vmatpush1.msra.mxu0 %v1345
    %v1347 = vand.u32 %v678, 4294901760
    %v1348 = vsub.f32 %v678, %v1347
    %1349 = vmatprep.subr.mxu0 %v1348
    %v1350 = vand.u32 %v677, 4294901760
    %v1351 = vsub.f32 %v677, %v1350
    %1352 = vmatpush1.msra.mxu0 %v1351
    %v1353 = vand.u32 %v680, 4294901760
    %v1354 = vsub.f32 %v680, %v1353
    %1355 = vmatprep.subr.mxu0 %v1354
    %v1356 = vand.u32 %v679, 4294901760
    %v1357 = vsub.f32 %v679, %v1356
    %1358 = vmatpush1.msra.mxu0 %v1357
    %v1359 = vand.u32 %v682, 4294901760
    %v1360 = vsub.f32 %v682, %v1359
    %1361 = vmatprep.subr.mxu0 %v1360
    %v1362 = vand.u32 %v681, 4294901760
    %v1363 = vsub.f32 %v681, %v1362
    %1364 = vmatpush1.msra.mxu0 %v1363
    %v1365 = vand.u32 %v684, 4294901760
    %v1366 = vsub.f32 %v684, %v1365
    %1367 = vmatprep.subr.mxu0 %v1366
    %v1368 = vand.u32 %v683, 4294901760
    %v1369 = vsub.f32 %v683, %v1368
    %1370 = vmatpush1.msra.mxu0 %v1369
    %v1371 = vand.u32 %v686, 4294901760
    %v1372 = vsub.f32 %v686, %v1371
    %1373 = vmatprep.subr.mxu0 %v1372
    %v1374 = vand.u32 %v685, 4294901760
    %v1375 = vsub.f32 %v685, %v1374
    %1376 = vmatpush1.msra.mxu0 %v1375
    %v1377 = vand.u32 %v688, 4294901760
    %v1378 = vsub.f32 %v688, %v1377
    %1379 = vmatprep.subr.mxu0 %v1378
    %v1380 = vand.u32 %v687, 4294901760
    %v1381 = vsub.f32 %v687, %v1380
    %1382 = vmatpush1.msra.mxu0 %v1381
    %v1383 = vand.u32 %v690, 4294901760
    %v1384 = vsub.f32 %v690, %v1383
    %1385 = vmatprep.subr.mxu0 %v1384
    %v1386 = vand.u32 %v689, 4294901760
    %v1387 = vsub.f32 %v689, %v1386
    %1388 = vmatpush1.msra.mxu0 %v1387
    %v1389 = vand.u32 %v692, 4294901760
    %v1390 = vsub.f32 %v692, %v1389
    %1391 = vmatprep.subr.mxu0 %v1390
    %v1392 = vand.u32 %v691, 4294901760
    %v1393 = vsub.f32 %v691, %v1392
    %1394 = vmatpush1.msra.mxu0 %v1393
    %v1395 = vand.u32 %v694, 4294901760
    %v1396 = vsub.f32 %v694, %v1395
    %1397 = vmatprep.subr.mxu0 %v1396
    %v1398 = vand.u32 %v693, 4294901760
    %v1399 = vsub.f32 %v693, %v1398
    %1400 = vmatpush1.msra.mxu0 %v1399
    %v1401 = vand.u32 %v696, 4294901760
    %v1402 = vsub.f32 %v696, %v1401
    %1403 = vmatprep.subr.mxu0 %v1402
    %v1404 = vand.u32 %v695, 4294901760
    %v1405 = vsub.f32 %v695, %v1404
    %1406 = vmatpush1.msra.mxu0 %v1405
    %v1407 = vand.u32 %v698, 4294901760
    %v1408 = vsub.f32 %v698, %v1407
    %1409 = vmatprep.subr.mxu0 %v1408
    %v1410 = vand.u32 %v697, 4294901760
    %v1411 = vsub.f32 %v697, %v1410
    %1412 = vmatpush1.msra.mxu0 %v1411
    %v1413 = vand.u32 %v700, 4294901760
    %v1414 = vsub.f32 %v700, %v1413
    %1415 = vmatprep.subr.mxu0 %v1414
    %v1416 = vand.u32 %v699, 4294901760
    %v1417 = vsub.f32 %v699, %v1416
    %1418 = vmatpush1.msra.mxu0 %v1417
    %v1419 = vand.u32 %v702, 4294901760
    %v1420 = vsub.f32 %v702, %v1419
    %1421 = vmatprep.subr.mxu0 %v1420
    %v1422 = vand.u32 %v701, 4294901760
    %v1423 = vsub.f32 %v701, %v1422
    %1424 = vmatpush1.msra.mxu0 %v1423
    %v1425 = vand.u32 %v704, 4294901760
    %v1426 = vsub.f32 %v704, %v1425
    %1427 = vmatprep.subr.mxu0 %v1426
    %v1428 = vand.u32 %v703, 4294901760
    %v1429 = vsub.f32 %v703, %v1428
    %1430 = vmatpush1.msra.mxu0 %v1429
    %v1431 = vand.u32 %v706, 4294901760
    %v1432 = vsub.f32 %v706, %v1431
    %1433 = vmatprep.subr.mxu0 %v1432
    %v1434 = vand.u32 %v705, 4294901760
    %v1435 = vsub.f32 %v705, %v1434
    %1436 = vmatpush1.msra.mxu0 %v1435
    %v1437 = vand.u32 %v708, 4294901760
    %v1438 = vsub.f32 %v708, %v1437
    %1439 = vmatprep.subr.mxu0 %v1438
    %v1440 = vand.u32 %v707, 4294901760
    %v1441 = vsub.f32 %v707, %v1440
    %1442 = vmatpush1.msra.mxu0 %v1441
    %v1443 = vand.u32 %v710, 4294901760
    %v1444 = vsub.f32 %v710, %v1443
    %1445 = vmatprep.subr.mxu0 %v1444
    %v1446 = vand.u32 %v709, 4294901760
    %v1447 = vsub.f32 %v709, %v1446
    %1448 = vmatpush1.msra.mxu0 %v1447
    %v1449 = vand.u32 %v712, 4294901760
    %v1450 = vsub.f32 %v712, %v1449
    %1451 = vmatprep.subr.mxu0 %v1450
    %v1452 = vand.u32 %v711, 4294901760
    %v1453 = vsub.f32 %v711, %v1452
    %1454 = vmatpush1.msra.mxu0 %v1453
    %v1455 = vand.u32 %v648, 4294901760
    %v1456 = vsub.f32 %v648, %v1455
    %1457 = vmatprep.mubr.f32.mxu0 %v1456
    %v1458 = vand.u32 %v647, 4294901760
    %v1459 = vsub.f32 %v647, %v1458
    %1460 = vmatmul.mubr.f32.gmra.mrb[0].mxu0 %v1459
    %v1461 = vpop.f32.mrb[0].mxu0
    %v1462 = vadd.f32 %v1259, %v1461
    %v1463 = vpop.f32.mrb[0].mxu0
    %v1464 = vadd.f32 %v1261, %v1463
    %1465 = vdwg.mxu0
    %v1466 = vand.u32 %v650, 4294901760
    %1467 = vmatprep.subr.mxu0 %v1466
    %v1468 = vand.u32 %v649, 4294901760
    %1469 = vmatpush1.msra.mxu0 %v1468
    %v1470 = vand.u32 %v652, 4294901760
    %1471 = vmatprep.subr.mxu0 %v1470
    %v1472 = vand.u32 %v651, 4294901760
    %1473 = vmatpush1.msra.mxu0 %v1472
    %v1474 = vand.u32 %v654, 4294901760
    %1475 = vmatprep.subr.mxu0 %v1474
    %v1476 = vand.u32 %v653, 4294901760
    %1477 = vmatpush1.msra.mxu0 %v1476
    %v1478 = vand.u32 %v656, 4294901760
    %1479 = vmatprep.subr.mxu0 %v1478
    %v1480 = vand.u32 %v655, 4294901760
    %1481 = vmatpush1.msra.mxu0 %v1480
    %v1482 = vand.u32 %v658, 4294901760
    %1483 = vmatprep.subr.mxu0 %v1482
    %v1484 = vand.u32 %v657, 4294901760
    %1485 = vmatpush1.msra.mxu0 %v1484
    %v1486 = vand.u32 %v660, 4294901760
    %1487 = vmatprep.subr.mxu0 %v1486
    %v1488 = vand.u32 %v659, 4294901760
    %1489 = vmatpush1.msra.mxu0 %v1488
    %v1490 = vand.u32 %v662, 4294901760
    %1491 = vmatprep.subr.mxu0 %v1490
    %v1492 = vand.u32 %v661, 4294901760
    %1493 = vmatpush1.msra.mxu0 %v1492
    %v1494 = vand.u32 %v664, 4294901760
    %1495 = vmatprep.subr.mxu0 %v1494
    %v1496 = vand.u32 %v663, 4294901760
    %1497 = vmatpush1.msra.mxu0 %v1496
    %v1498 = vand.u32 %v666, 4294901760
    %1499 = vmatprep.subr.mxu0 %v1498
    %v1500 = vand.u32 %v665, 4294901760
    %1501 = vmatpush1.msra.mxu0 %v1500
    %v1502 = vand.u32 %v668, 4294901760
    %1503 = vmatprep.subr.mxu0 %v1502
    %v1504 = vand.u32 %v667, 4294901760
    %1505 = vmatpush1.msra.mxu0 %v1504
    %v1506 = vand.u32 %v670, 4294901760
    %1507 = vmatprep.subr.mxu0 %v1506
    %v1508 = vand.u32 %v669, 4294901760
    %1509 = vmatpush1.msra.mxu0 %v1508
    %v1510 = vand.u32 %v672, 4294901760
    %1511 = vmatprep.subr.mxu0 %v1510
    %v1512 = vand.u32 %v671, 4294901760
    %1513 = vmatpush1.msra.mxu0 %v1512
    %v1514 = vand.u32 %v674, 4294901760
    %1515 = vmatprep.subr.mxu0 %v1514
    %v1516 = vand.u32 %v673, 4294901760
    %1517 = vmatpush1.msra.mxu0 %v1516
    %v1518 = vand.u32 %v676, 4294901760
    %1519 = vmatprep.subr.mxu0 %v1518
    %v1520 = vand.u32 %v675, 4294901760
    %1521 = vmatpush1.msra.mxu0 %v1520
    %v1522 = vand.u32 %v678, 4294901760
    %1523 = vmatprep.subr.mxu0 %v1522
    %v1524 = vand.u32 %v677, 4294901760
    %1525 = vmatpush1.msra.mxu0 %v1524
    %v1526 = vand.u32 %v680, 4294901760
    %1527 = vmatprep.subr.mxu0 %v1526
    %v1528 = vand.u32 %v679, 4294901760
    %1529 = vmatpush1.msra.mxu0 %v1528
    %v1530 = vand.u32 %v682, 4294901760
    %1531 = vmatprep.subr.mxu0 %v1530
    %v1532 = vand.u32 %v681, 4294901760
    %1533 = vmatpush1.msra.mxu0 %v1532
    %v1534 = vand.u32 %v684, 4294901760
    %1535 = vmatprep.subr.mxu0 %v1534
    %v1536 = vand.u32 %v683, 4294901760
    %1537 = vmatpush1.msra.mxu0 %v1536
    %v1538 = vand.u32 %v686, 4294901760
    %1539 = vmatprep.subr.mxu0 %v1538
    %v1540 = vand.u32 %v685, 4294901760
    %1541 = vmatpush1.msra.mxu0 %v1540
    %v1542 = vand.u32 %v688, 4294901760
    %1543 = vmatprep.subr.mxu0 %v1542
    %v1544 = vand.u32 %v687, 4294901760
    %1545 = vmatpush1.msra.mxu0 %v1544
    %v1546 = vand.u32 %v690, 4294901760
    %1547 = vmatprep.subr.mxu0 %v1546
    %v1548 = vand.u32 %v689, 4294901760
    %1549 = vmatpush1.msra.mxu0 %v1548
    %v1550 = vand.u32 %v692, 4294901760
    %1551 = vmatprep.subr.mxu0 %v1550
    %v1552 = vand.u32 %v691, 4294901760
    %1553 = vmatpush1.msra.mxu0 %v1552
    %v1554 = vand.u32 %v694, 4294901760
    %1555 = vmatprep.subr.mxu0 %v1554
    %v1556 = vand.u32 %v693, 4294901760
    %1557 = vmatpush1.msra.mxu0 %v1556
    %v1558 = vand.u32 %v696, 4294901760
    %1559 = vmatprep.subr.mxu0 %v1558
    %v1560 = vand.u32 %v695, 4294901760
    %1561 = vmatpush1.msra.mxu0 %v1560
    %v1562 = vand.u32 %v698, 4294901760
    %1563 = vmatprep.subr.mxu0 %v1562
    %v1564 = vand.u32 %v697, 4294901760
    %1565 = vmatpush1.msra.mxu0 %v1564
    %v1566 = vand.u32 %v700, 4294901760
    %1567 = vmatprep.subr.mxu0 %v1566
    %v1568 = vand.u32 %v699, 4294901760
    %1569 = vmatpush1.msra.mxu0 %v1568
    %v1570 = vand.u32 %v702, 4294901760
    %1571 = vmatprep.subr.mxu0 %v1570
    %v1572 = vand.u32 %v701, 4294901760
    %1573 = vmatpush1.msra.mxu0 %v1572
    %v1574 = vand.u32 %v704, 4294901760
    %1575 = vmatprep.subr.mxu0 %v1574
    %v1576 = vand.u32 %v703, 4294901760
    %1577 = vmatpush1.msra.mxu0 %v1576
    %v1578 = vand.u32 %v706, 4294901760
    %1579 = vmatprep.subr.mxu0 %v1578
    %v1580 = vand.u32 %v705, 4294901760
    %1581 = vmatpush1.msra.mxu0 %v1580
    %v1582 = vand.u32 %v708, 4294901760
    %1583 = vmatprep.subr.mxu0 %v1582
    %v1584 = vand.u32 %v707, 4294901760
    %1585 = vmatpush1.msra.mxu0 %v1584
    %v1586 = vand.u32 %v710, 4294901760
    %1587 = vmatprep.subr.mxu0 %v1586
    %v1588 = vand.u32 %v709, 4294901760
    %1589 = vmatpush1.msra.mxu0 %v1588
    %v1590 = vand.u32 %v712, 4294901760
    %1591 = vmatprep.subr.mxu0 %v1590
    %v1592 = vand.u32 %v711, 4294901760
    %1593 = vmatpush1.msra.mxu0 %v1592
    %v1594 = vand.u32 %v648, 4294901760
    %v1595 = vsub.f32 %v648, %v1594
    %v1596 = vand.u32 %v1595, 4294901760
    %1597 = vmatprep.mubr.f32.mxu0 %v1596
    %v1598 = vand.u32 %v647, 4294901760
    %v1599 = vsub.f32 %v647, %v1598
    %v1600 = vand.u32 %v1599, 4294901760
    %1601 = vmatmul.mubr.f32.gmra.mrb[0].mxu0 %v1600
    %v1602 = vpop.f32.mrb[0].mxu0
    %v1603 = vadd.f32 %v1462, %v1602
    %v1604 = vpop.f32.mrb[0].mxu0
    %v1605 = vadd.f32 %v1464, %v1604
    %1606 = vdwg.mxu0
    %v1607 = vand.u32 %v650, 4294901760
    %v1608 = vsub.f32 %v650, %v1607
    %v1609 = vand.u32 %v1608, 4294901760
    %1610 = vmatprep.subr.mxu0 %v1609
    %v1611 = vand.u32 %v649, 4294901760
    %v1612 = vsub.f32 %v649, %v1611
    %v1613 = vand.u32 %v1612, 4294901760
    %1614 = vmatpush1.msra.mxu0 %v1613
    %v1615 = vand.u32 %v652, 4294901760
    %v1616 = vsub.f32 %v652, %v1615
    %v1617 = vand.u32 %v1616, 4294901760
    %1618 = vmatprep.subr.mxu0 %v1617
    %v1619 = vand.u32 %v651, 4294901760
    %v1620 = vsub.f32 %v651, %v1619
    %v1621 = vand.u32 %v1620, 4294901760
    %1622 = vmatpush1.msra.mxu0 %v1621
    %v1623 = vand.u32 %v654, 4294901760
    %v1624 = vsub.f32 %v654, %v1623
    %v1625 = vand.u32 %v1624, 4294901760
    %1626 = vmatprep.subr.mxu0 %v1625
    %v1627 = vand.u32 %v653, 4294901760
    %v1628 = vsub.f32 %v653, %v1627
    %v1629 = vand.u32 %v1628, 4294901760
    %1630 = vmatpush1.msra.mxu0 %v1629
    %v1631 = vand.u32 %v656, 4294901760
    %v1632 = vsub.f32 %v656, %v1631
    %v1633 = vand.u32 %v1632, 4294901760
    %1634 = vmatprep.subr.mxu0 %v1633
    %v1635 = vand.u32 %v655, 4294901760
    %v1636 = vsub.f32 %v655, %v1635
    %v1637 = vand.u32 %v1636, 4294901760
    %1638 = vmatpush1.msra.mxu0 %v1637
    %v1639 = vand.u32 %v658, 4294901760
    %v1640 = vsub.f32 %v658, %v1639
    %v1641 = vand.u32 %v1640, 4294901760
    %1642 = vmatprep.subr.mxu0 %v1641
    %v1643 = vand.u32 %v657, 4294901760
    %v1644 = vsub.f32 %v657, %v1643
    %v1645 = vand.u32 %v1644, 4294901760
    %1646 = vmatpush1.msra.mxu0 %v1645
    %v1647 = vand.u32 %v660, 4294901760
    %v1648 = vsub.f32 %v660, %v1647
    %v1649 = vand.u32 %v1648, 4294901760
    %1650 = vmatprep.subr.mxu0 %v1649
    %v1651 = vand.u32 %v659, 4294901760
    %v1652 = vsub.f32 %v659, %v1651
    %v1653 = vand.u32 %v1652, 4294901760
    %1654 = vmatpush1.msra.mxu0 %v1653
    %v1655 = vand.u32 %v662, 4294901760
    %v1656 = vsub.f32 %v662, %v1655
    %v1657 = vand.u32 %v1656, 4294901760
    %1658 = vmatprep.subr.mxu0 %v1657
    %v1659 = vand.u32 %v661, 4294901760
    %v1660 = vsub.f32 %v661, %v1659
    %v1661 = vand.u32 %v1660, 4294901760
    %1662 = vmatpush1.msra.mxu0 %v1661
    %v1663 = vand.u32 %v664, 4294901760
    %v1664 = vsub.f32 %v664, %v1663
    %v1665 = vand.u32 %v1664, 4294901760
    %1666 = vmatprep.subr.mxu0 %v1665
    %v1667 = vand.u32 %v663, 4294901760
    %v1668 = vsub.f32 %v663, %v1667
    %v1669 = vand.u32 %v1668, 4294901760
    %1670 = vmatpush1.msra.mxu0 %v1669
    %v1671 = vand.u32 %v666, 4294901760
    %v1672 = vsub.f32 %v666, %v1671
    %v1673 = vand.u32 %v1672, 4294901760
    %1674 = vmatprep.subr.mxu0 %v1673
    %v1675 = vand.u32 %v665, 4294901760
    %v1676 = vsub.f32 %v665, %v1675
    %v1677 = vand.u32 %v1676, 4294901760
    %1678 = vmatpush1.msra.mxu0 %v1677
    %v1679 = vand.u32 %v668, 4294901760
    %v1680 = vsub.f32 %v668, %v1679
    %v1681 = vand.u32 %v1680, 4294901760
    %1682 = vmatprep.subr.mxu0 %v1681
    %v1683 = vand.u32 %v667, 4294901760
    %v1684 = vsub.f32 %v667, %v1683
    %v1685 = vand.u32 %v1684, 4294901760
    %1686 = vmatpush1.msra.mxu0 %v1685
    %v1687 = vand.u32 %v670, 4294901760
    %v1688 = vsub.f32 %v670, %v1687
    %v1689 = vand.u32 %v1688, 4294901760
    %1690 = vmatprep.subr.mxu0 %v1689
    %v1691 = vand.u32 %v669, 4294901760
    %v1692 = vsub.f32 %v669, %v1691
    %v1693 = vand.u32 %v1692, 4294901760
    %1694 = vmatpush1.msra.mxu0 %v1693
    %v1695 = vand.u32 %v672, 4294901760
    %v1696 = vsub.f32 %v672, %v1695
    %v1697 = vand.u32 %v1696, 4294901760
    %1698 = vmatprep.subr.mxu0 %v1697
    %v1699 = vand.u32 %v671, 4294901760
    %v1700 = vsub.f32 %v671, %v1699
    %v1701 = vand.u32 %v1700, 4294901760
    %1702 = vmatpush1.msra.mxu0 %v1701
    %v1703 = vand.u32 %v674, 4294901760
    %v1704 = vsub.f32 %v674, %v1703
    %v1705 = vand.u32 %v1704, 4294901760
    %1706 = vmatprep.subr.mxu0 %v1705
    %v1707 = vand.u32 %v673, 4294901760
    %v1708 = vsub.f32 %v673, %v1707
    %v1709 = vand.u32 %v1708, 4294901760
    %1710 = vmatpush1.msra.mxu0 %v1709
    %v1711 = vand.u32 %v676, 4294901760
    %v1712 = vsub.f32 %v676, %v1711
    %v1713 = vand.u32 %v1712, 4294901760
    %1714 = vmatprep.subr.mxu0 %v1713
    %v1715 = vand.u32 %v675, 4294901760
    %v1716 = vsub.f32 %v675, %v1715
    %v1717 = vand.u32 %v1716, 4294901760
    %1718 = vmatpush1.msra.mxu0 %v1717
    %v1719 = vand.u32 %v678, 4294901760
    %v1720 = vsub.f32 %v678, %v1719
    %v1721 = vand.u32 %v1720, 4294901760
    %1722 = vmatprep.subr.mxu0 %v1721
    %v1723 = vand.u32 %v677, 4294901760
    %v1724 = vsub.f32 %v677, %v1723
    %v1725 = vand.u32 %v1724, 4294901760
    %1726 = vmatpush1.msra.mxu0 %v1725
    %v1727 = vand.u32 %v680, 4294901760
    %v1728 = vsub.f32 %v680, %v1727
    %v1729 = vand.u32 %v1728, 4294901760
    %1730 = vmatprep.subr.mxu0 %v1729
    %v1731 = vand.u32 %v679, 4294901760
    %v1732 = vsub.f32 %v679, %v1731
    %v1733 = vand.u32 %v1732, 4294901760
    %1734 = vmatpush1.msra.mxu0 %v1733
    %v1735 = vand.u32 %v682, 4294901760
    %v1736 = vsub.f32 %v682, %v1735
    %v1737 = vand.u32 %v1736, 4294901760
    %1738 = vmatprep.subr.mxu0 %v1737
    %v1739 = vand.u32 %v681, 4294901760
    %v1740 = vsub.f32 %v681, %v1739
    %v1741 = vand.u32 %v1740, 4294901760
    %1742 = vmatpush1.msra.mxu0 %v1741
    %v1743 = vand.u32 %v684, 4294901760
    %v1744 = vsub.f32 %v684, %v1743
    %v1745 = vand.u32 %v1744, 4294901760
    %1746 = vmatprep.subr.mxu0 %v1745
    %v1747 = vand.u32 %v683, 4294901760
    %v1748 = vsub.f32 %v683, %v1747
    %v1749 = vand.u32 %v1748, 4294901760
    %1750 = vmatpush1.msra.mxu0 %v1749
    %v1751 = vand.u32 %v686, 4294901760
    %v1752 = vsub.f32 %v686, %v1751
    %v1753 = vand.u32 %v1752, 4294901760
    %1754 = vmatprep.subr.mxu0 %v1753
    %v1755 = vand.u32 %v685, 4294901760
    %v1756 = vsub.f32 %v685, %v1755
    %v1757 = vand.u32 %v1756, 4294901760
    %1758 = vmatpush1.msra.mxu0 %v1757
    %v1759 = vand.u32 %v688, 4294901760
    %v1760 = vsub.f32 %v688, %v1759
    %v1761 = vand.u32 %v1760, 4294901760
    %1762 = vmatprep.subr.mxu0 %v1761
    %v1763 = vand.u32 %v687, 4294901760
    %v1764 = vsub.f32 %v687, %v1763
    %v1765 = vand.u32 %v1764, 4294901760
    %1766 = vmatpush1.msra.mxu0 %v1765
    %v1767 = vand.u32 %v690, 4294901760
    %v1768 = vsub.f32 %v690, %v1767
    %v1769 = vand.u32 %v1768, 4294901760
    %1770 = vmatprep.subr.mxu0 %v1769
    %v1771 = vand.u32 %v689, 4294901760
    %v1772 = vsub.f32 %v689, %v1771
    %v1773 = vand.u32 %v1772, 4294901760
    %1774 = vmatpush1.msra.mxu0 %v1773
    %v1775 = vand.u32 %v692, 4294901760
    %v1776 = vsub.f32 %v692, %v1775
    %v1777 = vand.u32 %v1776, 4294901760
    %1778 = vmatprep.subr.mxu0 %v1777
    %v1779 = vand.u32 %v691, 4294901760
    %v1780 = vsub.f32 %v691, %v1779
    %v1781 = vand.u32 %v1780, 4294901760
    %1782 = vmatpush1.msra.mxu0 %v1781
    %v1783 = vand.u32 %v694, 4294901760
    %v1784 = vsub.f32 %v694, %v1783
    %v1785 = vand.u32 %v1784, 4294901760
    %1786 = vmatprep.subr.mxu0 %v1785
    %v1787 = vand.u32 %v693, 4294901760
    %v1788 = vsub.f32 %v693, %v1787
    %v1789 = vand.u32 %v1788, 4294901760
    %1790 = vmatpush1.msra.mxu0 %v1789
    %v1791 = vand.u32 %v696, 4294901760
    %v1792 = vsub.f32 %v696, %v1791
    %v1793 = vand.u32 %v1792, 4294901760
    %1794 = vmatprep.subr.mxu0 %v1793
    %v1795 = vand.u32 %v695, 4294901760
    %v1796 = vsub.f32 %v695, %v1795
    %v1797 = vand.u32 %v1796, 4294901760
    %1798 = vmatpush1.msra.mxu0 %v1797
    %v1799 = vand.u32 %v698, 4294901760
    %v1800 = vsub.f32 %v698, %v1799
    %v1801 = vand.u32 %v1800, 4294901760
    %1802 = vmatprep.subr.mxu0 %v1801
    %v1803 = vand.u32 %v697, 4294901760
    %v1804 = vsub.f32 %v697, %v1803
    %v1805 = vand.u32 %v1804, 4294901760
    %1806 = vmatpush1.msra.mxu0 %v1805
    %v1807 = vand.u32 %v700, 4294901760
    %v1808 = vsub.f32 %v700, %v1807
    %v1809 = vand.u32 %v1808, 4294901760
    %1810 = vmatprep.subr.mxu0 %v1809
    %v1811 = vand.u32 %v699, 4294901760
    %v1812 = vsub.f32 %v699, %v1811
    %v1813 = vand.u32 %v1812, 4294901760
    %1814 = vmatpush1.msra.mxu0 %v1813
    %v1815 = vand.u32 %v702, 4294901760
    %v1816 = vsub.f32 %v702, %v1815
    %v1817 = vand.u32 %v1816, 4294901760
    %1818 = vmatprep.subr.mxu0 %v1817
    %v1819 = vand.u32 %v701, 4294901760
    %v1820 = vsub.f32 %v701, %v1819
    %v1821 = vand.u32 %v1820, 4294901760
    %1822 = vmatpush1.msra.mxu0 %v1821
    %v1823 = vand.u32 %v704, 4294901760
    %v1824 = vsub.f32 %v704, %v1823
    %v1825 = vand.u32 %v1824, 4294901760
    %1826 = vmatprep.subr.mxu0 %v1825
    %v1827 = vand.u32 %v703, 4294901760
    %v1828 = vsub.f32 %v703, %v1827
    %v1829 = vand.u32 %v1828, 4294901760
    %1830 = vmatpush1.msra.mxu0 %v1829
    %v1831 = vand.u32 %v706, 4294901760
    %v1832 = vsub.f32 %v706, %v1831
    %v1833 = vand.u32 %v1832, 4294901760
    %1834 = vmatprep.subr.mxu0 %v1833
    %v1835 = vand.u32 %v705, 4294901760
    %v1836 = vsub.f32 %v705, %v1835
    %v1837 = vand.u32 %v1836, 4294901760
    %1838 = vmatpush1.msra.mxu0 %v1837
    %v1839 = vand.u32 %v708, 4294901760
    %v1840 = vsub.f32 %v708, %v1839
    %v1841 = vand.u32 %v1840, 4294901760
    %1842 = vmatprep.subr.mxu0 %v1841
    %v1843 = vand.u32 %v707, 4294901760
    %v1844 = vsub.f32 %v707, %v1843
    %v1845 = vand.u32 %v1844, 4294901760
    %1846 = vmatpush1.msra.mxu0 %v1845
    %v1847 = vand.u32 %v710, 4294901760
    %v1848 = vsub.f32 %v710, %v1847
    %v1849 = vand.u32 %v1848, 4294901760
    %1850 = vmatprep.subr.mxu0 %v1849
    %v1851 = vand.u32 %v709, 4294901760
    %v1852 = vsub.f32 %v709, %v1851
    %v1853 = vand.u32 %v1852, 4294901760
    %1854 = vmatpush1.msra.mxu0 %v1853
    %v1855 = vand.u32 %v712, 4294901760
    %v1856 = vsub.f32 %v712, %v1855
    %v1857 = vand.u32 %v1856, 4294901760
    %1858 = vmatprep.subr.mxu0 %v1857
    %v1859 = vand.u32 %v711, 4294901760
    %v1860 = vsub.f32 %v711, %v1859
    %v1861 = vand.u32 %v1860, 4294901760
    %1862 = vmatpush1.msra.mxu0 %v1861
    %v1863 = vand.u32 %v648, 4294901760
    %1864 = vmatprep.mubr.f32.mxu0 %v1863
    %v1865 = vand.u32 %v647, 4294901760
    %1866 = vmatmul.mubr.f32.gmra.mrb[0].mxu0 %v1865
    %v1867 = vpop.f32.mrb[0].mxu0
    %v1868 = vadd.f32 %v1603, %v1867
    %v1869 = vpop.f32.mrb[0].mxu0
    %v1870 = vadd.f32 %v1605, %v1869
    %1871 = vdwg.mxu0
    %v1872 = vand.u32 %v650, 4294901760
    %1873 = vmatprep.subr.mxu0 %v1872
    %v1874 = vand.u32 %v649, 4294901760
    %1875 = vmatpush1.msra.mxu0 %v1874
    %v1876 = vand.u32 %v652, 4294901760
    %1877 = vmatprep.subr.mxu0 %v1876
    %v1878 = vand.u32 %v651, 4294901760
    %1879 = vmatpush1.msra.mxu0 %v1878
    %v1880 = vand.u32 %v654, 4294901760
    %1881 = vmatprep.subr.mxu0 %v1880
    %v1882 = vand.u32 %v653, 4294901760
    %1883 = vmatpush1.msra.mxu0 %v1882
    %v1884 = vand.u32 %v656, 4294901760
    %1885 = vmatprep.subr.mxu0 %v1884
    %v1886 = vand.u32 %v655, 4294901760
    %1887 = vmatpush1.msra.mxu0 %v1886
    %v1888 = vand.u32 %v658, 4294901760
    %1889 = vmatprep.subr.mxu0 %v1888
    %v1890 = vand.u32 %v657, 4294901760
    %1891 = vmatpush1.msra.mxu0 %v1890
    %v1892 = vand.u32 %v660, 4294901760
    %1893 = vmatprep.subr.mxu0 %v1892
    %v1894 = vand.u32 %v659, 4294901760
    %1895 = vmatpush1.msra.mxu0 %v1894
    %v1896 = vand.u32 %v662, 4294901760
    %1897 = vmatprep.subr.mxu0 %v1896
    %v1898 = vand.u32 %v661, 4294901760
    %1899 = vmatpush1.msra.mxu0 %v1898
    %v1900 = vand.u32 %v664, 4294901760
    %1901 = vmatprep.subr.mxu0 %v1900
    %v1902 = vand.u32 %v663, 4294901760
    %1903 = vmatpush1.msra.mxu0 %v1902
    %v1904 = vand.u32 %v666, 4294901760
    %1905 = vmatprep.subr.mxu0 %v1904
    %v1906 = vand.u32 %v665, 4294901760
    %1907 = vmatpush1.msra.mxu0 %v1906
    %v1908 = vand.u32 %v668, 4294901760
    %1909 = vmatprep.subr.mxu0 %v1908
    %v1910 = vand.u32 %v667, 4294901760
    %1911 = vmatpush1.msra.mxu0 %v1910
    %v1912 = vand.u32 %v670, 4294901760
    %1913 = vmatprep.subr.mxu0 %v1912
    %v1914 = vand.u32 %v669, 4294901760
    %1915 = vmatpush1.msra.mxu0 %v1914
    %v1916 = vand.u32 %v672, 4294901760
    %1917 = vmatprep.subr.mxu0 %v1916
    %v1918 = vand.u32 %v671, 4294901760
    %1919 = vmatpush1.msra.mxu0 %v1918
    %v1920 = vand.u32 %v674, 4294901760
    %1921 = vmatprep.subr.mxu0 %v1920
    %v1922 = vand.u32 %v673, 4294901760
    %1923 = vmatpush1.msra.mxu0 %v1922
    %v1924 = vand.u32 %v676, 4294901760
    %1925 = vmatprep.subr.mxu0 %v1924
    %v1926 = vand.u32 %v675, 4294901760
    %1927 = vmatpush1.msra.mxu0 %v1926
    %v1928 = vand.u32 %v678, 4294901760
    %1929 = vmatprep.subr.mxu0 %v1928
    %v1930 = vand.u32 %v677, 4294901760
    %1931 = vmatpush1.msra.mxu0 %v1930
    %v1932 = vand.u32 %v680, 4294901760
    %1933 = vmatprep.subr.mxu0 %v1932
    %v1934 = vand.u32 %v679, 4294901760
    %1935 = vmatpush1.msra.mxu0 %v1934
    %v1936 = vand.u32 %v682, 4294901760
    %1937 = vmatprep.subr.mxu0 %v1936
    %v1938 = vand.u32 %v681, 4294901760
    %1939 = vmatpush1.msra.mxu0 %v1938
    %v1940 = vand.u32 %v684, 4294901760
    %1941 = vmatprep.subr.mxu0 %v1940
    %v1942 = vand.u32 %v683, 4294901760
    %1943 = vmatpush1.msra.mxu0 %v1942
    %v1944 = vand.u32 %v686, 4294901760
    %1945 = vmatprep.subr.mxu0 %v1944
    %v1946 = vand.u32 %v685, 4294901760
    %1947 = vmatpush1.msra.mxu0 %v1946
    %v1948 = vand.u32 %v688, 4294901760
    %1949 = vmatprep.subr.mxu0 %v1948
    %v1950 = vand.u32 %v687, 4294901760
    %1951 = vmatpush1.msra.mxu0 %v1950
    %v1952 = vand.u32 %v690, 4294901760
    %1953 = vmatprep.subr.mxu0 %v1952
    %v1954 = vand.u32 %v689, 4294901760
    %1955 = vmatpush1.msra.mxu0 %v1954
    %v1956 = vand.u32 %v692, 4294901760
    %1957 = vmatprep.subr.mxu0 %v1956
    %v1958 = vand.u32 %v691, 4294901760
    %1959 = vmatpush1.msra.mxu0 %v1958
    %v1960 = vand.u32 %v694, 4294901760
    %1961 = vmatprep.subr.mxu0 %v1960
    %v1962 = vand.u32 %v693, 4294901760
    %1963 = vmatpush1.msra.mxu0 %v1962
    %v1964 = vand.u32 %v696, 4294901760
    %1965 = vmatprep.subr.mxu0 %v1964
    %v1966 = vand.u32 %v695, 4294901760
    %1967 = vmatpush1.msra.mxu0 %v1966
    %v1968 = vand.u32 %v698, 4294901760
    %1969 = vmatprep.subr.mxu0 %v1968
    %v1970 = vand.u32 %v697, 4294901760
    %1971 = vmatpush1.msra.mxu0 %v1970
    %v1972 = vand.u32 %v700, 4294901760
    %1973 = vmatprep.subr.mxu0 %v1972
    %v1974 = vand.u32 %v699, 4294901760
    %1975 = vmatpush1.msra.mxu0 %v1974
    %v1976 = vand.u32 %v702, 4294901760
    %1977 = vmatprep.subr.mxu0 %v1976
    %v1978 = vand.u32 %v701, 4294901760
    %1979 = vmatpush1.msra.mxu0 %v1978
    %v1980 = vand.u32 %v704, 4294901760
    %1981 = vmatprep.subr.mxu0 %v1980
    %v1982 = vand.u32 %v703, 4294901760
    %1983 = vmatpush1.msra.mxu0 %v1982
    %v1984 = vand.u32 %v706, 4294901760
    %1985 = vmatprep.subr.mxu0 %v1984
    %v1986 = vand.u32 %v705, 4294901760
    %1987 = vmatpush1.msra.mxu0 %v1986
    %v1988 = vand.u32 %v708, 4294901760
    %1989 = vmatprep.subr.mxu0 %v1988
    %v1990 = vand.u32 %v707, 4294901760
    %1991 = vmatpush1.msra.mxu0 %v1990
    %v1992 = vand.u32 %v710, 4294901760
    %1993 = vmatprep.subr.mxu0 %v1992
    %v1994 = vand.u32 %v709, 4294901760
    %1995 = vmatpush1.msra.mxu0 %v1994
    %v1996 = vand.u32 %v712, 4294901760
    %1997 = vmatprep.subr.mxu0 %v1996
    %v1998 = vand.u32 %v711, 4294901760
    %1999 = vmatpush1.msra.mxu0 %v1998
    %v2000 = vand.u32 %v648, 4294901760
    %2001 = vmatprep.mubr.f32.mxu0 %v2000
    %v2002 = vand.u32 %v647, 4294901760
    %2003 = vmatmul.mubr.f32.gmra.mrb[0].mxu0 %v2002
    %v2004 = vpop.f32.mrb[0].mxu0
    %v2005 = vadd.f32 %v1868, %v2004
    %v2006 = vpop.f32.mrb[0].mxu0
    %v2007 = vadd.f32 %v1870, %v2006
    %2008 = vdwg.mxu0
    %v2009 = vtanh.pop %v2005
    %v2010 = vtanh.pop %v2007
    %v2011 = vld [vmem:[#allocation5] sm:$0xff]
    %v2012 = vld [vmem:[#allocation5 + $0x8] sm:$0xff]
    %v2013 = vld [vmem:[#allocation5 + $0x10] sm:$0xff]
    %v2014 = vld [vmem:[#allocation5 + $0x18] sm:$0xff]
    %v2015 = vld [vmem:[#allocation5 + $0x20] sm:$0xff]
    %v2016 = vld [vmem:[#allocation5 + $0x28] sm:$0xff]
    %v2017 = vld [vmem:[#allocation5 + $0x30] sm:$0xff]
    %v2018 = vld [vmem:[#allocation5 + $0x38] sm:$0xff]
    %v2019 = vld [vmem:[#allocation5 + $0x40] sm:$0xff]
    %v2020 = vld [vmem:[#allocation5 + $0x48] sm:$0xff]
    %v2021 = vld [vmem:[#allocation5 + $0x50] sm:$0xff]
    %v2022 = vld [vmem:[#allocation5 + $0x58] sm:$0xff]
    %v2023 = vld [vmem:[#allocation5 + $0x60] sm:$0xff]
    %v2024 = vld [vmem:[#allocation5 + $0x68] sm:$0xff]
    %v2025 = vld [vmem:[#allocation5 + $0x70] sm:$0xff]
    %v2026 = vld [vmem:[#allocation5 + $0x78] sm:$0xff]
    %v2027 = vld [vmem:[#allocation5 + $0x80] sm:$0xff]
    %v2028 = vld [vmem:[#allocation5 + $0x88] sm:$0xff]
    %v2029 = vld [vmem:[#allocation5 + $0x90] sm:$0xff]
    %v2030 = vld [vmem:[#allocation5 + $0x98] sm:$0xff]
    %v2031 = vld [vmem:[#allocation5 + $0xa0] sm:$0xff]
    %v2032 = vld [vmem:[#allocation5 + $0xa8] sm:$0xff]
    %v2033 = vld [vmem:[#allocation5 + $0xb0] sm:$0xff]
    %v2034 = vld [vmem:[#allocation5 + $0xb8] sm:$0xff]
    %v2035 = vld [vmem:[#allocation5 + $0xc0] sm:$0xff]
    %v2036 = vld [vmem:[#allocation5 + $0xc8] sm:$0xff]
    %v2037 = vld [vmem:[#allocation5 + $0xd0] sm:$0xff]
    %v2038 = vld [vmem:[#allocation5 + $0xd8] sm:$0xff]
    %v2039 = vld [vmem:[#allocation5 + $0xe0] sm:$0xff]
    %v2040 = vld [vmem:[#allocation5 + $0xe8] sm:$0xff]
    %v2041 = vld [vmem:[#allocation5 + $0xf0] sm:$0xff]
    %v2042 = vld [vmem:[#allocation5 + $0xf8] sm:$0xff]
    %v2043 = vld [vmem:[#allocation5 + $0x100] sm:$0xff]
    %v2044 = vld [vmem:[#allocation5 + $0x108] sm:$0xff]
    %v2045 = vld [vmem:[#allocation5 + $0x110] sm:$0xff]
    %v2046 = vld [vmem:[#allocation5 + $0x118] sm:$0xff]
    %v2047 = vld [vmem:[#allocation5 + $0x120] sm:$0xff]
    %v2048 = vld [vmem:[#allocation5 + $0x128] sm:$0xff]
    %v2049 = vld [vmem:[#allocation5 + $0x130] sm:$0xff]
    %v2050 = vld [vmem:[#allocation5 + $0x138] sm:$0xff]
    %v2051 = vld [vmem:[#allocation5 + $0x140] sm:$0xff]
    %v2052 = vld [vmem:[#allocation5 + $0x148] sm:$0xff]
    %v2053 = vld [vmem:[#allocation5 + $0x150] sm:$0xff]
    %v2054 = vld [vmem:[#allocation5 + $0x158] sm:$0xff]
    %v2055 = vld [vmem:[#allocation5 + $0x160] sm:$0xff]
    %v2056 = vld [vmem:[#allocation5 + $0x168] sm:$0xff]
    %v2057 = vld [vmem:[#allocation5 + $0x170] sm:$0xff]
    %v2058 = vld [vmem:[#allocation5 + $0x178] sm:$0xff]
    %v2059 = vld [vmem:[#allocation5 + $0x180] sm:$0xff]
    %v2060 = vld [vmem:[#allocation5 + $0x188] sm:$0xff]
    %v2061 = vld [vmem:[#allocation5 + $0x190] sm:$0xff]
    %v2062 = vld [vmem:[#allocation5 + $0x198] sm:$0xff]
    %v2063 = vld [vmem:[#allocation5 + $0x1a0] sm:$0xff]
    %v2064 = vld [vmem:[#allocation5 + $0x1a8] sm:$0xff]
    %v2065 = vld [vmem:[#allocation5 + $0x1b0] sm:$0xff]
    %v2066 = vld [vmem:[#allocation5 + $0x1b8] sm:$0xff]
    %v2067 = vld [vmem:[#allocation5 + $0x1c0] sm:$0xff]
    %v2068 = vld [vmem:[#allocation5 + $0x1c8] sm:$0xff]
    %v2069 = vld [vmem:[#allocation5 + $0x1d0] sm:$0xff]
    %v2070 = vld [vmem:[#allocation5 + $0x1d8] sm:$0xff]
    %v2071 = vld [vmem:[#allocation5 + $0x1e0] sm:$0xff]
    %v2072 = vld [vmem:[#allocation5 + $0x1e8] sm:$0xff]
    %v2073 = vld [vmem:[#allocation5 + $0x1f0] sm:$0xff]
    %v2074 = vld [vmem:[#allocation5 + $0x1f8] sm:$0xff]
    %v2075 = vld [vmem:[%s7] sm:$0x3]
    %v2077 = vlaneseq
    %v2078 = vshrl.u32 %v2077, 7
    %v2079 = vsub.s32 0, %v2078
    %v2080 = vrot.slane %v2075, %v2079
    %v2081 = vlaneseq
    %v2082 = vshrl.u32 %v2081, 7
    %v2083 = vsub.s32 1, %v2082
    %v2084 = vrot.slane %v2075, %v2083
    %v2087 = vand.u32 %v2012, 4294901760
    %2088 = vmatprep.subr.mxu0 %v2087
    %v2089 = vand.u32 %v2011, 4294901760
    %2090 = vmatpush1.msra.mxu0 %v2089
    %v2091 = vand.u32 %v2014, 4294901760
    %2092 = vmatprep.subr.mxu0 %v2091
    %v2093 = vand.u32 %v2013, 4294901760
    %2094 = vmatpush1.msra.mxu0 %v2093
    %v2095 = vand.u32 %v2016, 4294901760
    %2096 = vmatprep.subr.mxu0 %v2095
    %v2097 = vand.u32 %v2015, 4294901760
    %2098 = vmatpush1.msra.mxu0 %v2097
    %v2099 = vand.u32 %v2018, 4294901760
    %2100 = vmatprep.subr.mxu0 %v2099
    %v2101 = vand.u32 %v2017, 4294901760
    %2102 = vmatpush1.msra.mxu0 %v2101
    %v2103 = vand.u32 %v2020, 4294901760
    %2104 = vmatprep.subr.mxu0 %v2103
    %v2105 = vand.u32 %v2019, 4294901760
    %2106 = vmatpush1.msra.mxu0 %v2105
    %v2107 = vand.u32 %v2022, 4294901760
    %2108 = vmatprep.subr.mxu0 %v2107
    %v2109 = vand.u32 %v2021, 4294901760
    %2110 = vmatpush1.msra.mxu0 %v2109
    %v2111 = vand.u32 %v2024, 4294901760
    %2112 = vmatprep.subr.mxu0 %v2111
    %v2113 = vand.u32 %v2023, 4294901760
    %2114 = vmatpush1.msra.mxu0 %v2113
    %v2115 = vand.u32 %v2026, 4294901760
    %2116 = vmatprep.subr.mxu0 %v2115
    %v2117 = vand.u32 %v2025, 4294901760
    %2118 = vmatpush1.msra.mxu0 %v2117
    %v2119 = vand.u32 %v2028, 4294901760
    %2120 = vmatprep.subr.mxu0 %v2119
    %v2121 = vand.u32 %v2027, 4294901760
    %2122 = vmatpush1.msra.mxu0 %v2121
    %v2123 = vand.u32 %v2030, 4294901760
    %2124 = vmatprep.subr.mxu0 %v2123
    %v2125 = vand.u32 %v2029, 4294901760
    %2126 = vmatpush1.msra.mxu0 %v2125
    %v2127 = vand.u32 %v2032, 4294901760
    %2128 = vmatprep.subr.mxu0 %v2127
    %v2129 = vand.u32 %v2031, 4294901760
    %2130 = vmatpush1.msra.mxu0 %v2129
    %v2131 = vand.u32 %v2034, 4294901760
    %2132 = vmatprep.subr.mxu0 %v2131
    %v2133 = vand.u32 %v2033, 4294901760
    %2134 = vmatpush1.msra.mxu0 %v2133
    %v2135 = vand.u32 %v2036, 4294901760
    %2136 = vmatprep.subr.mxu0 %v2135
    %v2137 = vand.u32 %v2035, 4294901760
    %2138 = vmatpush1.msra.mxu0 %v2137
    %v2139 = vand.u32 %v2038, 4294901760
    %2140 = vmatprep.subr.mxu0 %v2139
    %v2141 = vand.u32 %v2037, 4294901760
    %2142 = vmatpush1.msra.mxu0 %v2141
    %v2143 = vand.u32 %v2040, 4294901760
    %2144 = vmatprep.subr.mxu0 %v2143
    %v2145 = vand.u32 %v2039, 4294901760
    %2146 = vmatpush1.msra.mxu0 %v2145
    %v2147 = vand.u32 %v2042, 4294901760
    %2148 = vmatprep.subr.mxu0 %v2147
    %v2149 = vand.u32 %v2041, 4294901760
    %2150 = vmatpush1.msra.mxu0 %v2149
    %v2151 = vand.u32 %v2044, 4294901760
    %2152 = vmatprep.subr.mxu0 %v2151
    %v2153 = vand.u32 %v2043, 4294901760
    %2154 = vmatpush1.msra.mxu0 %v2153
    %v2155 = vand.u32 %v2046, 4294901760
    %2156 = vmatprep.subr.mxu0 %v2155
    %v2157 = vand.u32 %v2045, 4294901760
    %2158 = vmatpush1.msra.mxu0 %v2157
    %v2159 = vand.u32 %v2048, 4294901760
    %2160 = vmatprep.subr.mxu0 %v2159
    %v2161 = vand.u32 %v2047, 4294901760
    %2162 = vmatpush1.msra.mxu0 %v2161
    %v2163 = vand.u32 %v2050, 4294901760
    %2164 = vmatprep.subr.mxu0 %v2163
    %v2165 = vand.u32 %v2049, 4294901760
    %2166 = vmatpush1.msra.mxu0 %v2165
    %v2167 = vand.u32 %v2052, 4294901760
    %2168 = vmatprep.subr.mxu0 %v2167
    %v2169 = vand.u32 %v2051, 4294901760
    %2170 = vmatpush1.msra.mxu0 %v2169
    %v2171 = vand.u32 %v2054, 4294901760
    %2172 = vmatprep.subr.mxu0 %v2171
    %v2173 = vand.u32 %v2053, 4294901760
    %2174 = vmatpush1.msra.mxu0 %v2173
    %v2175 = vand.u32 %v2056, 4294901760
    %2176 = vmatprep.subr.mxu0 %v2175
    %v2177 = vand.u32 %v2055, 4294901760
    %2178 = vmatpush1.msra.mxu0 %v2177
    %v2179 = vand.u32 %v2058, 4294901760
    %2180 = vmatprep.subr.mxu0 %v2179
    %v2181 = vand.u32 %v2057, 4294901760
    %2182 = vmatpush1.msra.mxu0 %v2181
    %v2183 = vand.u32 %v2060, 4294901760
    %2184 = vmatprep.subr.mxu0 %v2183
    %v2185 = vand.u32 %v2059, 4294901760
    %2186 = vmatpush1.msra.mxu0 %v2185
    %v2187 = vand.u32 %v2062, 4294901760
    %2188 = vmatprep.subr.mxu0 %v2187
    %v2189 = vand.u32 %v2061, 4294901760
    %2190 = vmatpush1.msra.mxu0 %v2189
    %v2191 = vand.u32 %v2064, 4294901760
    %2192 = vmatprep.subr.mxu0 %v2191
    %v2193 = vand.u32 %v2063, 4294901760
    %2194 = vmatpush1.msra.mxu0 %v2193
    %v2195 = vand.u32 %v2066, 4294901760
    %2196 = vmatprep.subr.mxu0 %v2195
    %v2197 = vand.u32 %v2065, 4294901760
    %2198 = vmatpush1.msra.mxu0 %v2197
    %v2199 = vand.u32 %v2068, 4294901760
    %2200 = vmatprep.subr.mxu0 %v2199
    %v2201 = vand.u32 %v2067, 4294901760
    %2202 = vmatpush1.msra.mxu0 %v2201
    %v2203 = vand.u32 %v2070, 4294901760
    %2204 = vmatprep.subr.mxu0 %v2203
    %v2205 = vand.u32 %v2069, 4294901760
    %2206 = vmatpush1.msra.mxu0 %v2205
    %v2207 = vand.u32 %v2072, 4294901760
    %2208 = vmatprep.subr.mxu0 %v2207
    %v2209 = vand.u32 %v2071, 4294901760
    %2210 = vmatpush1.msra.mxu0 %v2209
    %v2211 = vand.u32 %v2074, 4294901760
    %2212 = vmatprep.subr.mxu0 %v2211
    %v2213 = vand.u32 %v2073, 4294901760
    %2214 = vmatpush1.msra.mxu0 %v2213
    %v2215 = vand.u32 %v2010, 4294901760
    %v2216 = vsub.f32 %v2010, %v2215
    %v2217 = vand.u32 %v2216, 4294901760
    %v2218 = vsub.f32 %v2216, %v2217
    %v2219 = vand.u32 %v2218, 4294901760
    %2220 = vmatprep.mubr.f32.mxu0 %v2219
    %v2221 = vand.u32 %v2009, 4294901760
    %v2222 = vsub.f32 %v2009, %v2221
    %v2223 = vand.u32 %v2222, 4294901760
    %v2224 = vsub.f32 %v2222, %v2223
    %v2225 = vand.u32 %v2224, 4294901760
    %2226 = vmatmul.mubr.f32.gmra.mrb[0].mxu0 %v2225
    %v2227 = vpop.f32.mrb[0].mxu0
    %v2228 = vadd.f32 %v2080, %v2227
    %v2229 = vpop.f32.mrb[0].mxu0
    %v2230 = vadd.f32 %v2084, %v2229
    %2231 = vdwg.mxu0
    %v2232 = vand.u32 %v2012, 4294901760
    %v2233 = vsub.f32 %v2012, %v2232
    %v2234 = vand.u32 %v2233, 4294901760
    %v2235 = vsub.f32 %v2233, %v2234
    %v2236 = vand.u32 %v2235, 4294901760
    %2237 = vmatprep.subr.mxu0 %v2236
    %v2238 = vand.u32 %v2011, 4294901760
    %v2239 = vsub.f32 %v2011, %v2238
    %v2240 = vand.u32 %v2239, 4294901760
    %v2241 = vsub.f32 %v2239, %v2240
    %v2242 = vand.u32 %v2241, 4294901760
    %2243 = vmatpush1.msra.mxu0 %v2242
    %v2244 = vand.u32 %v2014, 4294901760
    %v2245 = vsub.f32 %v2014, %v2244
    %v2246 = vand.u32 %v2245, 4294901760
    %v2247 = vsub.f32 %v2245, %v2246
    %v2248 = vand.u32 %v2247, 4294901760
    %2249 = vmatprep.subr.mxu0 %v2248
    %v2250 = vand.u32 %v2013, 4294901760
    %v2251 = vsub.f32 %v2013, %v2250
    %v2252 = vand.u32 %v2251, 4294901760
    %v2253 = vsub.f32 %v2251, %v2252
    %v2254 = vand.u32 %v2253, 4294901760
    %2255 = vmatpush1.msra.mxu0 %v2254
    %v2256 = vand.u32 %v2016, 4294901760
    %v2257 = vsub.f32 %v2016, %v2256
    %v2258 = vand.u32 %v2257, 4294901760
    %v2259 = vsub.f32 %v2257, %v2258
    %v2260 = vand.u32 %v2259, 4294901760
    %2261 = vmatprep.subr.mxu0 %v2260
    %v2262 = vand.u32 %v2015, 4294901760
    %v2263 = vsub.f32 %v2015, %v2262
    %v2264 = vand.u32 %v2263, 4294901760
    %v2265 = vsub.f32 %v2263, %v2264
    %v2266 = vand.u32 %v2265, 4294901760
    %2267 = vmatpush1.msra.mxu0 %v2266
    %v2268 = vand.u32 %v2018, 4294901760
    %v2269 = vsub.f32 %v2018, %v2268
    %v2270 = vand.u32 %v2269, 4294901760
    %v2271 = vsub.f32 %v2269, %v2270
    %v2272 = vand.u32 %v2271, 4294901760
    %2273 = vmatprep.subr.mxu0 %v2272
    %v2274 = vand.u32 %v2017, 4294901760
    %v2275 = vsub.f32 %v2017, %v2274
    %v2276 = vand.u32 %v2275, 4294901760
    %v2277 = vsub.f32 %v2275, %v2276
    %v2278 = vand.u32 %v2277, 4294901760
    %2279 = vmatpush1.msra.mxu0 %v2278
    %v2280 = vand.u32 %v2020, 4294901760
    %v2281 = vsub.f32 %v2020, %v2280
    %v2282 = vand.u32 %v2281, 4294901760
    %v2283 = vsub.f32 %v2281, %v2282
    %v2284 = vand.u32 %v2283, 4294901760
    %2285 = vmatprep.subr.mxu0 %v2284
    %v2286 = vand.u32 %v2019, 4294901760
    %v2287 = vsub.f32 %v2019, %v2286
    %v2288 = vand.u32 %v2287, 4294901760
    %v2289 = vsub.f32 %v2287, %v2288
    %v2290 = vand.u32 %v2289, 4294901760
    %2291 = vmatpush1.msra.mxu0 %v2290
    %v2292 = vand.u32 %v2022, 4294901760
    %v2293 = vsub.f32 %v2022, %v2292
    %v2294 = vand.u32 %v2293, 4294901760
    %v2295 = vsub.f32 %v2293, %v2294
    %v2296 = vand.u32 %v2295, 4294901760
    %2297 = vmatprep.subr.mxu0 %v2296
    %v2298 = vand.u32 %v2021, 4294901760
    %v2299 = vsub.f32 %v2021, %v2298
    %v2300 = vand.u32 %v2299, 4294901760
    %v2301 = vsub.f32 %v2299, %v2300
    %v2302 = vand.u32 %v2301, 4294901760
    %2303 = vmatpush1.msra.mxu0 %v2302
    %v2304 = vand.u32 %v2024, 4294901760
    %v2305 = vsub.f32 %v2024, %v2304
    %v2306 = vand.u32 %v2305, 4294901760
    %v2307 = vsub.f32 %v2305, %v2306
    %v2308 = vand.u32 %v2307, 4294901760
    %2309 = vmatprep.subr.mxu0 %v2308
    %v2310 = vand.u32 %v2023, 4294901760
    %v2311 = vsub.f32 %v2023, %v2310
    %v2312 = vand.u32 %v2311, 4294901760
    %v2313 = vsub.f32 %v2311, %v2312
    %v2314 = vand.u32 %v2313, 4294901760
    %2315 = vmatpush1.msra.mxu0 %v2314
    %v2316 = vand.u32 %v2026, 4294901760
    %v2317 = vsub.f32 %v2026, %v2316
    %v2318 = vand.u32 %v2317, 4294901760
    %v2319 = vsub.f32 %v2317, %v2318
    %v2320 = vand.u32 %v2319, 4294901760
    %2321 = vmatprep.subr.mxu0 %v2320
    %v2322 = vand.u32 %v2025, 4294901760
    %v2323 = vsub.f32 %v2025, %v2322
    %v2324 = vand.u32 %v2323, 4294901760
    %v2325 = vsub.f32 %v2323, %v2324
    %v2326 = vand.u32 %v2325, 4294901760
    %2327 = vmatpush1.msra.mxu0 %v2326
    %v2328 = vand.u32 %v2028, 4294901760
    %v2329 = vsub.f32 %v2028, %v2328
    %v2330 = vand.u32 %v2329, 4294901760
    %v2331 = vsub.f32 %v2329, %v2330
    %v2332 = vand.u32 %v2331, 4294901760
    %2333 = vmatprep.subr.mxu0 %v2332
    %v2334 = vand.u32 %v2027, 4294901760
    %v2335 = vsub.f32 %v2027, %v2334
    %v2336 = vand.u32 %v2335, 4294901760
    %v2337 = vsub.f32 %v2335, %v2336
    %v2338 = vand.u32 %v2337, 4294901760
    %2339 = vmatpush1.msra.mxu0 %v2338
    %v2340 = vand.u32 %v2030, 4294901760
    %v2341 = vsub.f32 %v2030, %v2340
    %v2342 = vand.u32 %v2341, 4294901760
    %v2343 = vsub.f32 %v2341, %v2342
    %v2344 = vand.u32 %v2343, 4294901760
    %2345 = vmatprep.subr.mxu0 %v2344
    %v2346 = vand.u32 %v2029, 4294901760
    %v2347 = vsub.f32 %v2029, %v2346
    %v2348 = vand.u32 %v2347, 4294901760
    %v2349 = vsub.f32 %v2347, %v2348
    %v2350 = vand.u32 %v2349, 4294901760
    %2351 = vmatpush1.msra.mxu0 %v2350
    %v2352 = vand.u32 %v2032, 4294901760
    %v2353 = vsub.f32 %v2032, %v2352
    %v2354 = vand.u32 %v2353, 4294901760
    %v2355 = vsub.f32 %v2353, %v2354
    %v2356 = vand.u32 %v2355, 4294901760
    %2357 = vmatprep.subr.mxu0 %v2356
    %v2358 = vand.u32 %v2031, 4294901760
    %v2359 = vsub.f32 %v2031, %v2358
    %v2360 = vand.u32 %v2359, 4294901760
    %v2361 = vsub.f32 %v2359, %v2360
    %v2362 = vand.u32 %v2361, 4294901760
    %2363 = vmatpush1.msra.mxu0 %v2362
    %v2364 = vand.u32 %v2034, 4294901760
    %v2365 = vsub.f32 %v2034, %v2364
    %v2366 = vand.u32 %v2365, 4294901760
    %v2367 = vsub.f32 %v2365, %v2366
    %v2368 = vand.u32 %v2367, 4294901760
    %2369 = vmatprep.subr.mxu0 %v2368
    %v2370 = vand.u32 %v2033, 4294901760
    %v2371 = vsub.f32 %v2033, %v2370
    %v2372 = vand.u32 %v2371, 4294901760
    %v2373 = vsub.f32 %v2371, %v2372
    %v2374 = vand.u32 %v2373, 4294901760
    %2375 = vmatpush1.msra.mxu0 %v2374
    %v2376 = vand.u32 %v2036, 4294901760
    %v2377 = vsub.f32 %v2036, %v2376
    %v2378 = vand.u32 %v2377, 4294901760
    %v2379 = vsub.f32 %v2377, %v2378
    %v2380 = vand.u32 %v2379, 4294901760
    %2381 = vmatprep.subr.mxu0 %v2380
    %v2382 = vand.u32 %v2035, 4294901760
    %v2383 = vsub.f32 %v2035, %v2382
    %v2384 = vand.u32 %v2383, 4294901760
    %v2385 = vsub.f32 %v2383, %v2384
    %v2386 = vand.u32 %v2385, 4294901760
    %2387 = vmatpush1.msra.mxu0 %v2386
    %v2388 = vand.u32 %v2038, 4294901760
    %v2389 = vsub.f32 %v2038, %v2388
    %v2390 = vand.u32 %v2389, 4294901760
    %v2391 = vsub.f32 %v2389, %v2390
    %v2392 = vand.u32 %v2391, 4294901760
    %2393 = vmatprep.subr.mxu0 %v2392
    %v2394 = vand.u32 %v2037, 4294901760
    %v2395 = vsub.f32 %v2037, %v2394
    %v2396 = vand.u32 %v2395, 4294901760
    %v2397 = vsub.f32 %v2395, %v2396
    %v2398 = vand.u32 %v2397, 4294901760
    %2399 = vmatpush1.msra.mxu0 %v2398
    %v2400 = vand.u32 %v2040, 4294901760
    %v2401 = vsub.f32 %v2040, %v2400
    %v2402 = vand.u32 %v2401, 4294901760
    %v2403 = vsub.f32 %v2401, %v2402
    %v2404 = vand.u32 %v2403, 4294901760
    %2405 = vmatprep.subr.mxu0 %v2404
    %v2406 = vand.u32 %v2039, 4294901760
    %v2407 = vsub.f32 %v2039, %v2406
    %v2408 = vand.u32 %v2407, 4294901760
    %v2409 = vsub.f32 %v2407, %v2408
    %v2410 = vand.u32 %v2409, 4294901760
    %2411 = vmatpush1.msra.mxu0 %v2410
    %v2412 = vand.u32 %v2042, 4294901760
    %v2413 = vsub.f32 %v2042, %v2412
    %v2414 = vand.u32 %v2413, 4294901760
    %v2415 = vsub.f32 %v2413, %v2414
    %v2416 = vand.u32 %v2415, 4294901760
    %2417 = vmatprep.subr.mxu0 %v2416
    %v2418 = vand.u32 %v2041, 4294901760
    %v2419 = vsub.f32 %v2041, %v2418
    %v2420 = vand.u32 %v2419, 4294901760
    %v2421 = vsub.f32 %v2419, %v2420
    %v2422 = vand.u32 %v2421, 4294901760
    %2423 = vmatpush1.msra.mxu0 %v2422
    %v2424 = vand.u32 %v2044, 4294901760
    %v2425 = vsub.f32 %v2044, %v2424
    %v2426 = vand.u32 %v2425, 4294901760
    %v2427 = vsub.f32 %v2425, %v2426
    %v2428 = vand.u32 %v2427, 4294901760
    %2429 = vmatprep.subr.mxu0 %v2428
    %v2430 = vand.u32 %v2043, 4294901760
    %v2431 = vsub.f32 %v2043, %v2430
    %v2432 = vand.u32 %v2431, 4294901760
    %v2433 = vsub.f32 %v2431, %v2432
    %v2434 = vand.u32 %v2433, 4294901760
    %2435 = vmatpush1.msra.mxu0 %v2434
    %v2436 = vand.u32 %v2046, 4294901760
    %v2437 = vsub.f32 %v2046, %v2436
    %v2438 = vand.u32 %v2437, 4294901760
    %v2439 = vsub.f32 %v2437, %v2438
    %v2440 = vand.u32 %v2439, 4294901760
    %2441 = vmatprep.subr.mxu0 %v2440
    %v2442 = vand.u32 %v2045, 4294901760
    %v2443 = vsub.f32 %v2045, %v2442
    %v2444 = vand.u32 %v2443, 4294901760
    %v2445 = vsub.f32 %v2443, %v2444
    %v2446 = vand.u32 %v2445, 4294901760
    %2447 = vmatpush1.msra.mxu0 %v2446
    %v2448 = vand.u32 %v2048, 4294901760
    %v2449 = vsub.f32 %v2048, %v2448
    %v2450 = vand.u32 %v2449, 4294901760
    %v2451 = vsub.f32 %v2449, %v2450
    %v2452 = vand.u32 %v2451, 4294901760
    %2453 = vmatprep.subr.mxu0 %v2452
    %v2454 = vand.u32 %v2047, 4294901760
    %v2455 = vsub.f32 %v2047, %v2454
    %v2456 = vand.u32 %v2455, 4294901760
    %v2457 = vsub.f32 %v2455, %v2456
    %v2458 = vand.u32 %v2457, 4294901760
    %2459 = vmatpush1.msra.mxu0 %v2458
    %v2460 = vand.u32 %v2050, 4294901760
    %v2461 = vsub.f32 %v2050, %v2460
    %v2462 = vand.u32 %v2461, 4294901760
    %v2463 = vsub.f32 %v2461, %v2462
    %v2464 = vand.u32 %v2463, 4294901760
    %2465 = vmatprep.subr.mxu0 %v2464
    %v2466 = vand.u32 %v2049, 4294901760
    %v2467 = vsub.f32 %v2049, %v2466
    %v2468 = vand.u32 %v2467, 4294901760
    %v2469 = vsub.f32 %v2467, %v2468
    %v2470 = vand.u32 %v2469, 4294901760
    %2471 = vmatpush1.msra.mxu0 %v2470
    %v2472 = vand.u32 %v2052, 4294901760
    %v2473 = vsub.f32 %v2052, %v2472
    %v2474 = vand.u32 %v2473, 4294901760
    %v2475 = vsub.f32 %v2473, %v2474
    %v2476 = vand.u32 %v2475, 4294901760
    %2477 = vmatprep.subr.mxu0 %v2476
    %v2478 = vand.u32 %v2051, 4294901760
    %v2479 = vsub.f32 %v2051, %v2478
    %v2480 = vand.u32 %v2479, 4294901760
    %v2481 = vsub.f32 %v2479, %v2480
    %v2482 = vand.u32 %v2481, 4294901760
    %2483 = vmatpush1.msra.mxu0 %v2482
    %v2484 = vand.u32 %v2054, 4294901760
    %v2485 = vsub.f32 %v2054, %v2484
    %v2486 = vand.u32 %v2485, 4294901760
    %v2487 = vsub.f32 %v2485, %v2486
    %v2488 = vand.u32 %v2487, 4294901760
    %2489 = vmatprep.subr.mxu0 %v2488
    %v2490 = vand.u32 %v2053, 4294901760
    %v2491 = vsub.f32 %v2053, %v2490
    %v2492 = vand.u32 %v2491, 4294901760
    %v2493 = vsub.f32 %v2491, %v2492
    %v2494 = vand.u32 %v2493, 4294901760
    %2495 = vmatpush1.msra.mxu0 %v2494
    %v2496 = vand.u32 %v2056, 4294901760
    %v2497 = vsub.f32 %v2056, %v2496
    %v2498 = vand.u32 %v2497, 4294901760
    %v2499 = vsub.f32 %v2497, %v2498
    %v2500 = vand.u32 %v2499, 4294901760
    %2501 = vmatprep.subr.mxu0 %v2500
    %v2502 = vand.u32 %v2055, 4294901760
    %v2503 = vsub.f32 %v2055, %v2502
    %v2504 = vand.u32 %v2503, 4294901760
    %v2505 = vsub.f32 %v2503, %v2504
    %v2506 = vand.u32 %v2505, 4294901760
    %2507 = vmatpush1.msra.mxu0 %v2506
    %v2508 = vand.u32 %v2058, 4294901760
    %v2509 = vsub.f32 %v2058, %v2508
    %v2510 = vand.u32 %v2509, 4294901760
    %v2511 = vsub.f32 %v2509, %v2510
    %v2512 = vand.u32 %v2511, 4294901760
    %2513 = vmatprep.subr.mxu0 %v2512
    %v2514 = vand.u32 %v2057, 4294901760
    %v2515 = vsub.f32 %v2057, %v2514
    %v2516 = vand.u32 %v2515, 4294901760
    %v2517 = vsub.f32 %v2515, %v2516
    %v2518 = vand.u32 %v2517, 4294901760
    %2519 = vmatpush1.msra.mxu0 %v2518
    %v2520 = vand.u32 %v2060, 4294901760
    %v2521 = vsub.f32 %v2060, %v2520
    %v2522 = vand.u32 %v2521, 4294901760
    %v2523 = vsub.f32 %v2521, %v2522
    %v2524 = vand.u32 %v2523, 4294901760
    %2525 = vmatprep.subr.mxu0 %v2524
    %v2526 = vand.u32 %v2059, 4294901760
    %v2527 = vsub.f32 %v2059, %v2526
    %v2528 = vand.u32 %v2527, 4294901760
    %v2529 = vsub.f32 %v2527, %v2528
    %v2530 = vand.u32 %v2529, 4294901760
    %2531 = vmatpush1.msra.mxu0 %v2530
    %v2532 = vand.u32 %v2062, 4294901760
    %v2533 = vsub.f32 %v2062, %v2532
    %v2534 = vand.u32 %v2533, 4294901760
    %v2535 = vsub.f32 %v2533, %v2534
    %v2536 = vand.u32 %v2535, 4294901760
    %2537 = vmatprep.subr.mxu0 %v2536
    %v2538 = vand.u32 %v2061, 4294901760
    %v2539 = vsub.f32 %v2061, %v2538
    %v2540 = vand.u32 %v2539, 4294901760
    %v2541 = vsub.f32 %v2539, %v2540
    %v2542 = vand.u32 %v2541, 4294901760
    %2543 = vmatpush1.msra.mxu0 %v2542
    %v2544 = vand.u32 %v2064, 4294901760
    %v2545 = vsub.f32 %v2064, %v2544
    %v2546 = vand.u32 %v2545, 4294901760
    %v2547 = vsub.f32 %v2545, %v2546
    %v2548 = vand.u32 %v2547, 4294901760
    %2549 = vmatprep.subr.mxu0 %v2548
    %v2550 = vand.u32 %v2063, 4294901760
    %v2551 = vsub.f32 %v2063, %v2550
    %v2552 = vand.u32 %v2551, 4294901760
    %v2553 = vsub.f32 %v2551, %v2552
    %v2554 = vand.u32 %v2553, 4294901760
    %2555 = vmatpush1.msra.mxu0 %v2554
    %v2556 = vand.u32 %v2066, 4294901760
    %v2557 = vsub.f32 %v2066, %v2556
    %v2558 = vand.u32 %v2557, 4294901760
    %v2559 = vsub.f32 %v2557, %v2558
    %v2560 = vand.u32 %v2559, 4294901760
    %2561 = vmatprep.subr.mxu0 %v2560
    %v2562 = vand.u32 %v2065, 4294901760
    %v2563 = vsub.f32 %v2065, %v2562
    %v2564 = vand.u32 %v2563, 4294901760
    %v2565 = vsub.f32 %v2563, %v2564
    %v2566 = vand.u32 %v2565, 4294901760
    %2567 = vmatpush1.msra.mxu0 %v2566
    %v2568 = vand.u32 %v2068, 4294901760
    %v2569 = vsub.f32 %v2068, %v2568
    %v2570 = vand.u32 %v2569, 4294901760
    %v2571 = vsub.f32 %v2569, %v2570
    %v2572 = vand.u32 %v2571, 4294901760
    %2573 = vmatprep.subr.mxu0 %v2572
    %v2574 = vand.u32 %v2067, 4294901760
    %v2575 = vsub.f32 %v2067, %v2574
    %v2576 = vand.u32 %v2575, 4294901760
    %v2577 = vsub.f32 %v2575, %v2576
    %v2578 = vand.u32 %v2577, 4294901760
    %2579 = vmatpush1.msra.mxu0 %v2578
    %v2580 = vand.u32 %v2070, 4294901760
    %v2581 = vsub.f32 %v2070, %v2580
    %v2582 = vand.u32 %v2581, 4294901760
    %v2583 = vsub.f32 %v2581, %v2582
    %v2584 = vand.u32 %v2583, 4294901760
    %2585 = vmatprep.subr.mxu0 %v2584
    %v2586 = vand.u32 %v2069, 4294901760
    %v2587 = vsub.f32 %v2069, %v2586
    %v2588 = vand.u32 %v2587, 4294901760
    %v2589 = vsub.f32 %v2587, %v2588
    %v2590 = vand.u32 %v2589, 4294901760
    %2591 = vmatpush1.msra.mxu0 %v2590
    %v2592 = vand.u32 %v2072, 4294901760
    %v2593 = vsub.f32 %v2072, %v2592
    %v2594 = vand.u32 %v2593, 4294901760
    %v2595 = vsub.f32 %v2593, %v2594
    %v2596 = vand.u32 %v2595, 4294901760
    %2597 = vmatprep.subr.mxu0 %v2596
    %v2598 = vand.u32 %v2071, 4294901760
    %v2599 = vsub.f32 %v2071, %v2598
    %v2600 = vand.u32 %v2599, 4294901760
    %v2601 = vsub.f32 %v2599, %v2600
    %v2602 = vand.u32 %v2601, 4294901760
    %2603 = vmatpush1.msra.mxu0 %v2602
    %v2604 = vand.u32 %v2074, 4294901760
    %v2605 = vsub.f32 %v2074, %v2604
    %v2606 = vand.u32 %v2605, 4294901760
    %v2607 = vsub.f32 %v2605, %v2606
    %v2608 = vand.u32 %v2607, 4294901760
    %2609 = vmatprep.subr.mxu0 %v2608
    %v2610 = vand.u32 %v2073, 4294901760
    %v2611 = vsub.f32 %v2073, %v2610
    %v2612 = vand.u32 %v2611, 4294901760
    %v2613 = vsub.f32 %v2611, %v2612
    %v2614 = vand.u32 %v2613, 4294901760
    %2615 = vmatpush1.msra.mxu0 %v2614
    %v2616 = vand.u32 %v2010, 4294901760
    %2617 = vmatprep.mubr.f32.mxu0 %v2616
    %v2618 = vand.u32 %v2009, 4294901760
    %2619 = vmatmul.mubr.f32.gmra.mrb[0].mxu0 %v2618
    %v2620 = vpop.f32.mrb[0].mxu0
    %v2621 = vadd.f32 %v2228, %v2620
    %v2622 = vpop.f32.mrb[0].mxu0
    %v2623 = vadd.f32 %v2230, %v2622
    %2624 = vdwg.mxu0
    %v2625 = vand.u32 %v2012, 4294901760
    %v2626 = vsub.f32 %v2012, %v2625
    %2627 = vmatprep.subr.mxu0 %v2626
    %v2628 = vand.u32 %v2011, 4294901760
    %v2629 = vsub.f32 %v2011, %v2628
    %2630 = vmatpush1.msra.mxu0 %v2629
    %v2631 = vand.u32 %v2014, 4294901760
    %v2632 = vsub.f32 %v2014, %v2631
    %2633 = vmatprep.subr.mxu0 %v2632
    %v2634 = vand.u32 %v2013, 4294901760
    %v2635 = vsub.f32 %v2013, %v2634
    %2636 = vmatpush1.msra.mxu0 %v2635
    %v2637 = vand.u32 %v2016, 4294901760
    %v2638 = vsub.f32 %v2016, %v2637
    %2639 = vmatprep.subr.mxu0 %v2638
    %v2640 = vand.u32 %v2015, 4294901760
    %v2641 = vsub.f32 %v2015, %v2640
    %2642 = vmatpush1.msra.mxu0 %v2641
    %v2643 = vand.u32 %v2018, 4294901760
    %v2644 = vsub.f32 %v2018, %v2643
    %2645 = vmatprep.subr.mxu0 %v2644
    %v2646 = vand.u32 %v2017, 4294901760
    %v2647 = vsub.f32 %v2017, %v2646
    %2648 = vmatpush1.msra.mxu0 %v2647
    %v2649 = vand.u32 %v2020, 4294901760
    %v2650 = vsub.f32 %v2020, %v2649
    %2651 = vmatprep.subr.mxu0 %v2650
    %v2652 = vand.u32 %v2019, 4294901760
    %v2653 = vsub.f32 %v2019, %v2652
    %2654 = vmatpush1.msra.mxu0 %v2653
    %v2655 = vand.u32 %v2022, 4294901760
    %v2656 = vsub.f32 %v2022, %v2655
    %2657 = vmatprep.subr.mxu0 %v2656
    %v2658 = vand.u32 %v2021, 4294901760
    %v2659 = vsub.f32 %v2021, %v2658
    %2660 = vmatpush1.msra.mxu0 %v2659
    %v2661 = vand.u32 %v2024, 4294901760
    %v2662 = vsub.f32 %v2024, %v2661
    %2663 = vmatprep.subr.mxu0 %v2662
    %v2664 = vand.u32 %v2023, 4294901760
    %v2665 = vsub.f32 %v2023, %v2664
    %2666 = vmatpush1.msra.mxu0 %v2665
    %v2667 = vand.u32 %v2026, 4294901760
    %v2668 = vsub.f32 %v2026, %v2667
    %2669 = vmatprep.subr.mxu0 %v2668
    %v2670 = vand.u32 %v2025, 4294901760
    %v2671 = vsub.f32 %v2025, %v2670
    %2672 = vmatpush1.msra.mxu0 %v2671
    %v2673 = vand.u32 %v2028, 4294901760
    %v2674 = vsub.f32 %v2028, %v2673
    %2675 = vmatprep.subr.mxu0 %v2674
    %v2676 = vand.u32 %v2027, 4294901760
    %v2677 = vsub.f32 %v2027, %v2676
    %2678 = vmatpush1.msra.mxu0 %v2677
    %v2679 = vand.u32 %v2030, 4294901760
    %v2680 = vsub.f32 %v2030, %v2679
    %2681 = vmatprep.subr.mxu0 %v2680
    %v2682 = vand.u32 %v2029, 4294901760
    %v2683 = vsub.f32 %v2029, %v2682
    %2684 = vmatpush1.msra.mxu0 %v2683
    %v2685 = vand.u32 %v2032, 4294901760
    %v2686 = vsub.f32 %v2032, %v2685
    %2687 = vmatprep.subr.mxu0 %v2686
    %v2688 = vand.u32 %v2031, 4294901760
    %v2689 = vsub.f32 %v2031, %v2688
    %2690 = vmatpush1.msra.mxu0 %v2689
    %v2691 = vand.u32 %v2034, 4294901760
    %v2692 = vsub.f32 %v2034, %v2691
    %2693 = vmatprep.subr.mxu0 %v2692
    %v2694 = vand.u32 %v2033, 4294901760
    %v2695 = vsub.f32 %v2033, %v2694
    %2696 = vmatpush1.msra.mxu0 %v2695
    %v2697 = vand.u32 %v2036, 4294901760
    %v2698 = vsub.f32 %v2036, %v2697
    %2699 = vmatprep.subr.mxu0 %v2698
    %v2700 = vand.u32 %v2035, 4294901760
    %v2701 = vsub.f32 %v2035, %v2700
    %2702 = vmatpush1.msra.mxu0 %v2701
    %v2703 = vand.u32 %v2038, 4294901760
    %v2704 = vsub.f32 %v2038, %v2703
    %2705 = vmatprep.subr.mxu0 %v2704
    %v2706 = vand.u32 %v2037, 4294901760
    %v2707 = vsub.f32 %v2037, %v2706
    %2708 = vmatpush1.msra.mxu0 %v2707
    %v2709 = vand.u32 %v2040, 4294901760
    %v2710 = vsub.f32 %v2040, %v2709
    %2711 = vmatprep.subr.mxu0 %v2710
    %v2712 = vand.u32 %v2039, 4294901760
    %v2713 = vsub.f32 %v2039, %v2712
    %2714 = vmatpush1.msra.mxu0 %v2713
    %v2715 = vand.u32 %v2042, 4294901760
    %v2716 = vsub.f32 %v2042, %v2715
    %2717 = vmatprep.subr.mxu0 %v2716
    %v2718 = vand.u32 %v2041, 4294901760
    %v2719 = vsub.f32 %v2041, %v2718
    %2720 = vmatpush1.msra.mxu0 %v2719
    %v2721 = vand.u32 %v2044, 4294901760
    %v2722 = vsub.f32 %v2044, %v2721
    %2723 = vmatprep.subr.mxu0 %v2722
    %v2724 = vand.u32 %v2043, 4294901760
    %v2725 = vsub.f32 %v2043, %v2724
    %2726 = vmatpush1.msra.mxu0 %v2725
    %v2727 = vand.u32 %v2046, 4294901760
    %v2728 = vsub.f32 %v2046, %v2727
    %2729 = vmatprep.subr.mxu0 %v2728
    %v2730 = vand.u32 %v2045, 4294901760
    %v2731 = vsub.f32 %v2045, %v2730
    %2732 = vmatpush1.msra.mxu0 %v2731
    %v2733 = vand.u32 %v2048, 4294901760
    %v2734 = vsub.f32 %v2048, %v2733
    %2735 = vmatprep.subr.mxu0 %v2734
    %v2736 = vand.u32 %v2047, 4294901760
    %v2737 = vsub.f32 %v2047, %v2736
    %2738 = vmatpush1.msra.mxu0 %v2737
    %v2739 = vand.u32 %v2050, 4294901760
    %v2740 = vsub.f32 %v2050, %v2739
    %2741 = vmatprep.subr.mxu0 %v2740
    %v2742 = vand.u32 %v2049, 4294901760
    %v2743 = vsub.f32 %v2049, %v2742
    %2744 = vmatpush1.msra.mxu0 %v2743
    %v2745 = vand.u32 %v2052, 4294901760
    %v2746 = vsub.f32 %v2052, %v2745
    %2747 = vmatprep.subr.mxu0 %v2746
    %v2748 = vand.u32 %v2051, 4294901760
    %v2749 = vsub.f32 %v2051, %v2748
    %2750 = vmatpush1.msra.mxu0 %v2749
    %v2751 = vand.u32 %v2054, 4294901760
    %v2752 = vsub.f32 %v2054, %v2751
    %2753 = vmatprep.subr.mxu0 %v2752
    %v2754 = vand.u32 %v2053, 4294901760
    %v2755 = vsub.f32 %v2053, %v2754
    %2756 = vmatpush1.msra.mxu0 %v2755
    %v2757 = vand.u32 %v2056, 4294901760
    %v2758 = vsub.f32 %v2056, %v2757
    %2759 = vmatprep.subr.mxu0 %v2758
    %v2760 = vand.u32 %v2055, 4294901760
    %v2761 = vsub.f32 %v2055, %v2760
    %2762 = vmatpush1.msra.mxu0 %v2761
    %v2763 = vand.u32 %v2058, 4294901760
    %v2764 = vsub.f32 %v2058, %v2763
    %2765 = vmatprep.subr.mxu0 %v2764
    %v2766 = vand.u32 %v2057, 4294901760
    %v2767 = vsub.f32 %v2057, %v2766
    %2768 = vmatpush1.msra.mxu0 %v2767
    %v2769 = vand.u32 %v2060, 4294901760
    %v2770 = vsub.f32 %v2060, %v2769
    %2771 = vmatprep.subr.mxu0 %v2770
    %v2772 = vand.u32 %v2059, 4294901760
    %v2773 = vsub.f32 %v2059, %v2772
    %2774 = vmatpush1.msra.mxu0 %v2773
    %v2775 = vand.u32 %v2062, 4294901760
    %v2776 = vsub.f32 %v2062, %v2775
    %2777 = vmatprep.subr.mxu0 %v2776
    %v2778 = vand.u32 %v2061, 4294901760
    %v2779 = vsub.f32 %v2061, %v2778
    %2780 = vmatpush1.msra.mxu0 %v2779
    %v2781 = vand.u32 %v2064, 4294901760
    %v2782 = vsub.f32 %v2064, %v2781
    %2783 = vmatprep.subr.mxu0 %v2782
    %v2784 = vand.u32 %v2063, 4294901760
    %v2785 = vsub.f32 %v2063, %v2784
    %2786 = vmatpush1.msra.mxu0 %v2785
    %v2787 = vand.u32 %v2066, 4294901760
    %v2788 = vsub.f32 %v2066, %v2787
    %2789 = vmatprep.subr.mxu0 %v2788
    %v2790 = vand.u32 %v2065, 4294901760
    %v2791 = vsub.f32 %v2065, %v2790
    %2792 = vmatpush1.msra.mxu0 %v2791
    %v2793 = vand.u32 %v2068, 4294901760
    %v2794 = vsub.f32 %v2068, %v2793
    %2795 = vmatprep.subr.mxu0 %v2794
    %v2796 = vand.u32 %v2067, 4294901760
    %v2797 = vsub.f32 %v2067, %v2796
    %2798 = vmatpush1.msra.mxu0 %v2797
    %v2799 = vand.u32 %v2070, 4294901760
    %v2800 = vsub.f32 %v2070, %v2799
    %2801 = vmatprep.subr.mxu0 %v2800
    %v2802 = vand.u32 %v2069, 4294901760
    %v2803 = vsub.f32 %v2069, %v2802
    %2804 = vmatpush1.msra.mxu0 %v2803
    %v2805 = vand.u32 %v2072, 4294901760
    %v2806 = vsub.f32 %v2072, %v2805
    %2807 = vmatprep.subr.mxu0 %v2806
    %v2808 = vand.u32 %v2071, 4294901760
    %v2809 = vsub.f32 %v2071, %v2808
    %2810 = vmatpush1.msra.mxu0 %v2809
    %v2811 = vand.u32 %v2074, 4294901760
    %v2812 = vsub.f32 %v2074, %v2811
    %2813 = vmatprep.subr.mxu0 %v2812
    %v2814 = vand.u32 %v2073, 4294901760
    %v2815 = vsub.f32 %v2073, %v2814
    %2816 = vmatpush1.msra.mxu0 %v2815
    %v2817 = vand.u32 %v2010, 4294901760
    %v2818 = vsub.f32 %v2010, %v2817
    %2819 = vmatprep.mubr.f32.mxu0 %v2818
    %v2820 = vand.u32 %v2009, 4294901760
    %v2821 = vsub.f32 %v2009, %v2820
    %2822 = vmatmul.mubr.f32.gmra.mrb[0].mxu0 %v2821
    %v2823 = vpop.f32.mrb[0].mxu0
    %v2824 = vadd.f32 %v2621, %v2823
    %v2825 = vpop.f32.mrb[0].mxu0
    %v2826 = vadd.f32 %v2623, %v2825
    %2827 = vdwg.mxu0
    %v2828 = vand.u32 %v2012, 4294901760
    %2829 = vmatprep.subr.mxu0 %v2828
    %v2830 = vand.u32 %v2011, 4294901760
    %2831 = vmatpush1.msra.mxu0 %v2830
    %v2832 = vand.u32 %v2014, 4294901760
    %2833 = vmatprep.subr.mxu0 %v2832
    %v2834 = vand.u32 %v2013, 4294901760
    %2835 = vmatpush1.msra.mxu0 %v2834
    %v2836 = vand.u32 %v2016, 4294901760
    %2837 = vmatprep.subr.mxu0 %v2836
    %v2838 = vand.u32 %v2015, 4294901760
    %2839 = vmatpush1.msra.mxu0 %v2838
    %v2840 = vand.u32 %v2018, 4294901760
    %2841 = vmatprep.subr.mxu0 %v2840
    %v2842 = vand.u32 %v2017, 4294901760
    %2843 = vmatpush1.msra.mxu0 %v2842
    %v2844 = vand.u32 %v2020, 4294901760
    %2845 = vmatprep.subr.mxu0 %v2844
    %v2846 = vand.u32 %v2019, 4294901760
    %2847 = vmatpush1.msra.mxu0 %v2846
    %v2848 = vand.u32 %v2022, 4294901760
    %2849 = vmatprep.subr.mxu0 %v2848
    %v2850 = vand.u32 %v2021, 4294901760
    %2851 = vmatpush1.msra.mxu0 %v2850
    %v2852 = vand.u32 %v2024, 4294901760
    %2853 = vmatprep.subr.mxu0 %v2852
    %v2854 = vand.u32 %v2023, 4294901760
    %2855 = vmatpush1.msra.mxu0 %v2854
    %v2856 = vand.u32 %v2026, 4294901760
    %2857 = vmatprep.subr.mxu0 %v2856
    %v2858 = vand.u32 %v2025, 4294901760
    %2859 = vmatpush1.msra.mxu0 %v2858
    %v2860 = vand.u32 %v2028, 4294901760
    %2861 = vmatprep.subr.mxu0 %v2860
    %v2862 = vand.u32 %v2027, 4294901760
    %2863 = vmatpush1.msra.mxu0 %v2862
    %v2864 = vand.u32 %v2030, 4294901760
    %2865 = vmatprep.subr.mxu0 %v2864
    %v2866 = vand.u32 %v2029, 4294901760
    %2867 = vmatpush1.msra.mxu0 %v2866
    %v2868 = vand.u32 %v2032, 4294901760
    %2869 = vmatprep.subr.mxu0 %v2868
    %v2870 = vand.u32 %v2031, 4294901760
    %2871 = vmatpush1.msra.mxu0 %v2870
    %v2872 = vand.u32 %v2034, 4294901760
    %2873 = vmatprep.subr.mxu0 %v2872
    %v2874 = vand.u32 %v2033, 4294901760
    %2875 = vmatpush1.msra.mxu0 %v2874
    %v2876 = vand.u32 %v2036, 4294901760
    %2877 = vmatprep.subr.mxu0 %v2876
    %v2878 = vand.u32 %v2035, 4294901760
    %2879 = vmatpush1.msra.mxu0 %v2878
    %v2880 = vand.u32 %v2038, 4294901760
    %2881 = vmatprep.subr.mxu0 %v2880
    %v2882 = vand.u32 %v2037, 4294901760
    %2883 = vmatpush1.msra.mxu0 %v2882
    %v2884 = vand.u32 %v2040, 4294901760
    %2885 = vmatprep.subr.mxu0 %v2884
    %v2886 = vand.u32 %v2039, 4294901760
    %2887 = vmatpush1.msra.mxu0 %v2886
    %v2888 = vand.u32 %v2042, 4294901760
    %2889 = vmatprep.subr.mxu0 %v2888
    %v2890 = vand.u32 %v2041, 4294901760
    %2891 = vmatpush1.msra.mxu0 %v2890
    %v2892 = vand.u32 %v2044, 4294901760
    %2893 = vmatprep.subr.mxu0 %v2892
    %v2894 = vand.u32 %v2043, 4294901760
    %2895 = vmatpush1.msra.mxu0 %v2894
    %v2896 = vand.u32 %v2046, 4294901760
    %2897 = vmatprep.subr.mxu0 %v2896
    %v2898 = vand.u32 %v2045, 4294901760
    %2899 = vmatpush1.msra.mxu0 %v2898
    %v2900 = vand.u32 %v2048, 4294901760
    %2901 = vmatprep.subr.mxu0 %v2900
    %v2902 = vand.u32 %v2047, 4294901760
    %2903 = vmatpush1.msra.mxu0 %v2902
    %v2904 = vand.u32 %v2050, 4294901760
    %2905 = vmatprep.subr.mxu0 %v2904
    %v2906 = vand.u32 %v2049, 4294901760
    %2907 = vmatpush1.msra.mxu0 %v2906
    %v2908 = vand.u32 %v2052, 4294901760
    %2909 = vmatprep.subr.mxu0 %v2908
    %v2910 = vand.u32 %v2051, 4294901760
    %2911 = vmatpush1.msra.mxu0 %v2910
    %v2912 = vand.u32 %v2054, 4294901760
    %2913 = vmatprep.subr.mxu0 %v2912
    %v2914 = vand.u32 %v2053, 4294901760
    %2915 = vmatpush1.msra.mxu0 %v2914
    %v2916 = vand.u32 %v2056, 4294901760
    %2917 = vmatprep.subr.mxu0 %v2916
    %v2918 = vand.u32 %v2055, 4294901760
    %2919 = vmatpush1.msra.mxu0 %v2918
    %v2920 = vand.u32 %v2058, 4294901760
    %2921 = vmatprep.subr.mxu0 %v2920
    %v2922 = vand.u32 %v2057, 4294901760
    %2923 = vmatpush1.msra.mxu0 %v2922
    %v2924 = vand.u32 %v2060, 4294901760
    %2925 = vmatprep.subr.mxu0 %v2924
    %v2926 = vand.u32 %v2059, 4294901760
    %2927 = vmatpush1.msra.mxu0 %v2926
    %v2928 = vand.u32 %v2062, 4294901760
    %2929 = vmatprep.subr.mxu0 %v2928
    %v2930 = vand.u32 %v2061, 4294901760
    %2931 = vmatpush1.msra.mxu0 %v2930
    %v2932 = vand.u32 %v2064, 4294901760
    %2933 = vmatprep.subr.mxu0 %v2932
    %v2934 = vand.u32 %v2063, 4294901760
    %2935 = vmatpush1.msra.mxu0 %v2934
    %v2936 = vand.u32 %v2066, 4294901760
    %2937 = vmatprep.subr.mxu0 %v2936
    %v2938 = vand.u32 %v2065, 4294901760
    %2939 = vmatpush1.msra.mxu0 %v2938
    %v2940 = vand.u32 %v2068, 4294901760
    %2941 = vmatprep.subr.mxu0 %v2940
    %v2942 = vand.u32 %v2067, 4294901760
    %2943 = vmatpush1.msra.mxu0 %v2942
    %v2944 = vand.u32 %v2070, 4294901760
    %2945 = vmatprep.subr.mxu0 %v2944
    %v2946 = vand.u32 %v2069, 4294901760
    %2947 = vmatpush1.msra.mxu0 %v2946
    %v2948 = vand.u32 %v2072, 4294901760
    %2949 = vmatprep.subr.mxu0 %v2948
    %v2950 = vand.u32 %v2071, 4294901760
    %2951 = vmatpush1.msra.mxu0 %v2950
    %v2952 = vand.u32 %v2074, 4294901760
    %2953 = vmatprep.subr.mxu0 %v2952
    %v2954 = vand.u32 %v2073, 4294901760
    %2955 = vmatpush1.msra.mxu0 %v2954
    %v2956 = vand.u32 %v2010, 4294901760
    %v2957 = vsub.f32 %v2010, %v2956
    %v2958 = vand.u32 %v2957, 4294901760
    %2959 = vmatprep.mubr.f32.mxu0 %v2958
    %v2960 = vand.u32 %v2009, 4294901760
    %v2961 = vsub.f32 %v2009, %v2960
    %v2962 = vand.u32 %v2961, 4294901760
    %2963 = vmatmul.mubr.f32.gmra.mrb[0].mxu0 %v2962
    %v2964 = vpop.f32.mrb[0].mxu0
    %v2965 = vadd.f32 %v2824, %v2964
    %v2966 = vpop.f32.mrb[0].mxu0
    %v2967 = vadd.f32 %v2826, %v2966
    %2968 = vdwg.mxu0
    %v2969 = vand.u32 %v2012, 4294901760
    %v2970 = vsub.f32 %v2012, %v2969
    %v2971 = vand.u32 %v2970, 4294901760
    %2972 = vmatprep.subr.mxu0 %v2971
    %v2973 = vand.u32 %v2011, 4294901760
    %v2974 = vsub.f32 %v2011, %v2973
    %v2975 = vand.u32 %v2974, 4294901760
    %2976 = vmatpush1.msra.mxu0 %v2975
    %v2977 = vand.u32 %v2014, 4294901760
    %v2978 = vsub.f32 %v2014, %v2977
    %v2979 = vand.u32 %v2978, 4294901760
    %2980 = vmatprep.subr.mxu0 %v2979
    %v2981 = vand.u32 %v2013, 4294901760
    %v2982 = vsub.f32 %v2013, %v2981
    %v2983 = vand.u32 %v2982, 4294901760
    %2984 = vmatpush1.msra.mxu0 %v2983
    %v2985 = vand.u32 %v2016, 4294901760
    %v2986 = vsub.f32 %v2016, %v2985
    %v2987 = vand.u32 %v2986, 4294901760
    %2988 = vmatprep.subr.mxu0 %v2987
    %v2989 = vand.u32 %v2015, 4294901760
    %v2990 = vsub.f32 %v2015, %v2989
    %v2991 = vand.u32 %v2990, 4294901760
    %2992 = vmatpush1.msra.mxu0 %v2991
    %v2993 = vand.u32 %v2018, 4294901760
    %v2994 = vsub.f32 %v2018, %v2993
    %v2995 = vand.u32 %v2994, 4294901760
    %2996 = vmatprep.subr.mxu0 %v2995
    %v2997 = vand.u32 %v2017, 4294901760
    %v2998 = vsub.f32 %v2017, %v2997
    %v2999 = vand.u32 %v2998, 4294901760
    %3000 = vmatpush1.msra.mxu0 %v2999
    %v3001 = vand.u32 %v2020, 4294901760
    %v3002 = vsub.f32 %v2020, %v3001
    %v3003 = vand.u32 %v3002, 4294901760
    %3004 = vmatprep.subr.mxu0 %v3003
    %v3005 = vand.u32 %v2019, 4294901760
    %v3006 = vsub.f32 %v2019, %v3005
    %v3007 = vand.u32 %v3006, 4294901760
    %3008 = vmatpush1.msra.mxu0 %v3007
    %v3009 = vand.u32 %v2022, 4294901760
    %v3010 = vsub.f32 %v2022, %v3009
    %v3011 = vand.u32 %v3010, 4294901760
    %3012 = vmatprep.subr.mxu0 %v3011
    %v3013 = vand.u32 %v2021, 4294901760
    %v3014 = vsub.f32 %v2021, %v3013
    %v3015 = vand.u32 %v3014, 4294901760
    %3016 = vmatpush1.msra.mxu0 %v3015
    %v3017 = vand.u32 %v2024, 4294901760
    %v3018 = vsub.f32 %v2024, %v3017
    %v3019 = vand.u32 %v3018, 4294901760
    %3020 = vmatprep.subr.mxu0 %v3019
    %v3021 = vand.u32 %v2023, 4294901760
    %v3022 = vsub.f32 %v2023, %v3021
    %v3023 = vand.u32 %v3022, 4294901760
    %3024 = vmatpush1.msra.mxu0 %v3023
    %v3025 = vand.u32 %v2026, 4294901760
    %v3026 = vsub.f32 %v2026, %v3025
    %v3027 = vand.u32 %v3026, 4294901760
    %3028 = vmatprep.subr.mxu0 %v3027
    %v3029 = vand.u32 %v2025, 4294901760
    %v3030 = vsub.f32 %v2025, %v3029
    %v3031 = vand.u32 %v3030, 4294901760
    %3032 = vmatpush1.msra.mxu0 %v3031
    %v3033 = vand.u32 %v2028, 4294901760
    %v3034 = vsub.f32 %v2028, %v3033
    %v3035 = vand.u32 %v3034, 4294901760
    %3036 = vmatprep.subr.mxu0 %v3035
    %v3037 = vand.u32 %v2027, 4294901760
    %v3038 = vsub.f32 %v2027, %v3037
    %v3039 = vand.u32 %v3038, 4294901760
    %3040 = vmatpush1.msra.mxu0 %v3039
    %v3041 = vand.u32 %v2030, 4294901760
    %v3042 = vsub.f32 %v2030, %v3041
    %v3043 = vand.u32 %v3042, 4294901760
    %3044 = vmatprep.subr.mxu0 %v3043
    %v3045 = vand.u32 %v2029, 4294901760
    %v3046 = vsub.f32 %v2029, %v3045
    %v3047 = vand.u32 %v3046, 4294901760
    %3048 = vmatpush1.msra.mxu0 %v3047
    %v3049 = vand.u32 %v2032, 4294901760
    %v3050 = vsub.f32 %v2032, %v3049
    %v3051 = vand.u32 %v3050, 4294901760
    %3052 = vmatprep.subr.mxu0 %v3051
    %v3053 = vand.u32 %v2031, 4294901760
    %v3054 = vsub.f32 %v2031, %v3053
    %v3055 = vand.u32 %v3054, 4294901760
    %3056 = vmatpush1.msra.mxu0 %v3055
    %v3057 = vand.u32 %v2034, 4294901760
    %v3058 = vsub.f32 %v2034, %v3057
    %v3059 = vand.u32 %v3058, 4294901760
    %3060 = vmatprep.subr.mxu0 %v3059
    %v3061 = vand.u32 %v2033, 4294901760
    %v3062 = vsub.f32 %v2033, %v3061
    %v3063 = vand.u32 %v3062, 4294901760
    %3064 = vmatpush1.msra.mxu0 %v3063
    %v3065 = vand.u32 %v2036, 4294901760
    %v3066 = vsub.f32 %v2036, %v3065
    %v3067 = vand.u32 %v3066, 4294901760
    %3068 = vmatprep.subr.mxu0 %v3067
    %v3069 = vand.u32 %v2035, 4294901760
    %v3070 = vsub.f32 %v2035, %v3069
    %v3071 = vand.u32 %v3070, 4294901760
    %3072 = vmatpush1.msra.mxu0 %v3071
    %v3073 = vand.u32 %v2038, 4294901760
    %v3074 = vsub.f32 %v2038, %v3073
    %v3075 = vand.u32 %v3074, 4294901760
    %3076 = vmatprep.subr.mxu0 %v3075
    %v3077 = vand.u32 %v2037, 4294901760
    %v3078 = vsub.f32 %v2037, %v3077
    %v3079 = vand.u32 %v3078, 4294901760
    %3080 = vmatpush1.msra.mxu0 %v3079
    %v3081 = vand.u32 %v2040, 4294901760
    %v3082 = vsub.f32 %v2040, %v3081
    %v3083 = vand.u32 %v3082, 4294901760
    %3084 = vmatprep.subr.mxu0 %v3083
    %v3085 = vand.u32 %v2039, 4294901760
    %v3086 = vsub.f32 %v2039, %v3085
    %v3087 = vand.u32 %v3086, 4294901760
    %3088 = vmatpush1.msra.mxu0 %v3087
    %v3089 = vand.u32 %v2042, 4294901760
    %v3090 = vsub.f32 %v2042, %v3089
    %v3091 = vand.u32 %v3090, 4294901760
    %3092 = vmatprep.subr.mxu0 %v3091
    %v3093 = vand.u32 %v2041, 4294901760
    %v3094 = vsub.f32 %v2041, %v3093
    %v3095 = vand.u32 %v3094, 4294901760
    %3096 = vmatpush1.msra.mxu0 %v3095
    %v3097 = vand.u32 %v2044, 4294901760
    %v3098 = vsub.f32 %v2044, %v3097
    %v3099 = vand.u32 %v3098, 4294901760
    %3100 = vmatprep.subr.mxu0 %v3099
    %v3101 = vand.u32 %v2043, 4294901760
    %v3102 = vsub.f32 %v2043, %v3101
    %v3103 = vand.u32 %v3102, 4294901760
    %3104 = vmatpush1.msra.mxu0 %v3103
    %v3105 = vand.u32 %v2046, 4294901760
    %v3106 = vsub.f32 %v2046, %v3105
    %v3107 = vand.u32 %v3106, 4294901760
    %3108 = vmatprep.subr.mxu0 %v3107
    %v3109 = vand.u32 %v2045, 4294901760
    %v3110 = vsub.f32 %v2045, %v3109
    %v3111 = vand.u32 %v3110, 4294901760
    %3112 = vmatpush1.msra.mxu0 %v3111
    %v3113 = vand.u32 %v2048, 4294901760
    %v3114 = vsub.f32 %v2048, %v3113
    %v3115 = vand.u32 %v3114, 4294901760
    %3116 = vmatprep.subr.mxu0 %v3115
    %v3117 = vand.u32 %v2047, 4294901760
    %v3118 = vsub.f32 %v2047, %v3117
    %v3119 = vand.u32 %v3118, 4294901760
    %3120 = vmatpush1.msra.mxu0 %v3119
    %v3121 = vand.u32 %v2050, 4294901760
    %v3122 = vsub.f32 %v2050, %v3121
    %v3123 = vand.u32 %v3122, 4294901760
    %3124 = vmatprep.subr.mxu0 %v3123
    %v3125 = vand.u32 %v2049, 4294901760
    %v3126 = vsub.f32 %v2049, %v3125
    %v3127 = vand.u32 %v3126, 4294901760
    %3128 = vmatpush1.msra.mxu0 %v3127
    %v3129 = vand.u32 %v2052, 4294901760
    %v3130 = vsub.f32 %v2052, %v3129
    %v3131 = vand.u32 %v3130, 4294901760
    %3132 = vmatprep.subr.mxu0 %v3131
    %v3133 = vand.u32 %v2051, 4294901760
    %v3134 = vsub.f32 %v2051, %v3133
    %v3135 = vand.u32 %v3134, 4294901760
    %3136 = vmatpush1.msra.mxu0 %v3135
    %v3137 = vand.u32 %v2054, 4294901760
    %v3138 = vsub.f32 %v2054, %v3137
    %v3139 = vand.u32 %v3138, 4294901760
    %3140 = vmatprep.subr.mxu0 %v3139
    %v3141 = vand.u32 %v2053, 4294901760
    %v3142 = vsub.f32 %v2053, %v3141
    %v3143 = vand.u32 %v3142, 4294901760
    %3144 = vmatpush1.msra.mxu0 %v3143
    %v3145 = vand.u32 %v2056, 4294901760
    %v3146 = vsub.f32 %v2056, %v3145
    %v3147 = vand.u32 %v3146, 4294901760
    %3148 = vmatprep.subr.mxu0 %v3147
    %v3149 = vand.u32 %v2055, 4294901760
    %v3150 = vsub.f32 %v2055, %v3149
    %v3151 = vand.u32 %v3150, 4294901760
    %3152 = vmatpush1.msra.mxu0 %v3151
    %v3153 = vand.u32 %v2058, 4294901760
    %v3154 = vsub.f32 %v2058, %v3153
    %v3155 = vand.u32 %v3154, 4294901760
    %3156 = vmatprep.subr.mxu0 %v3155
    %v3157 = vand.u32 %v2057, 4294901760
    %v3158 = vsub.f32 %v2057, %v3157
    %v3159 = vand.u32 %v3158, 4294901760
    %3160 = vmatpush1.msra.mxu0 %v3159
    %v3161 = vand.u32 %v2060, 4294901760
    %v3162 = vsub.f32 %v2060, %v3161
    %v3163 = vand.u32 %v3162, 4294901760
    %3164 = vmatprep.subr.mxu0 %v3163
    %v3165 = vand.u32 %v2059, 4294901760
    %v3166 = vsub.f32 %v2059, %v3165
    %v3167 = vand.u32 %v3166, 4294901760
    %3168 = vmatpush1.msra.mxu0 %v3167
    %v3169 = vand.u32 %v2062, 4294901760
    %v3170 = vsub.f32 %v2062, %v3169
    %v3171 = vand.u32 %v3170, 4294901760
    %3172 = vmatprep.subr.mxu0 %v3171
    %v3173 = vand.u32 %v2061, 4294901760
    %v3174 = vsub.f32 %v2061, %v3173
    %v3175 = vand.u32 %v3174, 4294901760
    %3176 = vmatpush1.msra.mxu0 %v3175
    %v3177 = vand.u32 %v2064, 4294901760
    %v3178 = vsub.f32 %v2064, %v3177
    %v3179 = vand.u32 %v3178, 4294901760
    %3180 = vmatprep.subr.mxu0 %v3179
    %v3181 = vand.u32 %v2063, 4294901760
    %v3182 = vsub.f32 %v2063, %v3181
    %v3183 = vand.u32 %v3182, 4294901760
    %3184 = vmatpush1.msra.mxu0 %v3183
    %v3185 = vand.u32 %v2066, 4294901760
    %v3186 = vsub.f32 %v2066, %v3185
    %v3187 = vand.u32 %v3186, 4294901760
    %3188 = vmatprep.subr.mxu0 %v3187
    %v3189 = vand.u32 %v2065, 4294901760
    %v3190 = vsub.f32 %v2065, %v3189
    %v3191 = vand.u32 %v3190, 4294901760
    %3192 = vmatpush1.msra.mxu0 %v3191
    %v3193 = vand.u32 %v2068, 4294901760
    %v3194 = vsub.f32 %v2068, %v3193
    %v3195 = vand.u32 %v3194, 4294901760
    %3196 = vmatprep.subr.mxu0 %v3195
    %v3197 = vand.u32 %v2067, 4294901760
    %v3198 = vsub.f32 %v2067, %v3197
    %v3199 = vand.u32 %v3198, 4294901760
    %3200 = vmatpush1.msra.mxu0 %v3199
    %v3201 = vand.u32 %v2070, 4294901760
    %v3202 = vsub.f32 %v2070, %v3201
    %v3203 = vand.u32 %v3202, 4294901760
    %3204 = vmatprep.subr.mxu0 %v3203
    %v3205 = vand.u32 %v2069, 4294901760
    %v3206 = vsub.f32 %v2069, %v3205
    %v3207 = vand.u32 %v3206, 4294901760
    %3208 = vmatpush1.msra.mxu0 %v3207
    %v3209 = vand.u32 %v2072, 4294901760
    %v3210 = vsub.f32 %v2072, %v3209
    %v3211 = vand.u32 %v3210, 4294901760
    %3212 = vmatprep.subr.mxu0 %v3211
    %v3213 = vand.u32 %v2071, 4294901760
    %v3214 = vsub.f32 %v2071, %v3213
    %v3215 = vand.u32 %v3214, 4294901760
    %3216 = vmatpush1.msra.mxu0 %v3215
    %v3217 = vand.u32 %v2074, 4294901760
    %v3218 = vsub.f32 %v2074, %v3217
    %v3219 = vand.u32 %v3218, 4294901760
    %3220 = vmatprep.subr.mxu0 %v3219
    %v3221 = vand.u32 %v2073, 4294901760
    %v3222 = vsub.f32 %v2073, %v3221
    %v3223 = vand.u32 %v3222, 4294901760
    %3224 = vmatpush1.msra.mxu0 %v3223
    %v3225 = vand.u32 %v2010, 4294901760
    %3226 = vmatprep.mubr.f32.mxu0 %v3225
    %v3227 = vand.u32 %v2009, 4294901760
    %3228 = vmatmul.mubr.f32.gmra.mrb[0].mxu0 %v3227
    %v3229 = vpop.f32.mrb[0].mxu0
    %v3230 = vadd.f32 %v2965, %v3229
    %v3231 = vpop.f32.mrb[0].mxu0
    %v3232 = vadd.f32 %v2967, %v3231
    %3233 = vdwg.mxu0
    %v3234 = vand.u32 %v2012, 4294901760
    %3235 = vmatprep.subr.mxu0 %v3234
    %v3236 = vand.u32 %v2011, 4294901760
    %3237 = vmatpush1.msra.mxu0 %v3236
    %v3238 = vand.u32 %v2014, 4294901760
    %3239 = vmatprep.subr.mxu0 %v3238
    %v3240 = vand.u32 %v2013, 4294901760
    %3241 = vmatpush1.msra.mxu0 %v3240
    %v3242 = vand.u32 %v2016, 4294901760
    %3243 = vmatprep.subr.mxu0 %v3242
    %v3244 = vand.u32 %v2015, 4294901760
    %3245 = vmatpush1.msra.mxu0 %v3244
    %v3246 = vand.u32 %v2018, 4294901760
    %3247 = vmatprep.subr.mxu0 %v3246
    %v3248 = vand.u32 %v2017, 4294901760
    %3249 = vmatpush1.msra.mxu0 %v3248
    %v3250 = vand.u32 %v2020, 4294901760
    %3251 = vmatprep.subr.mxu0 %v3250
    %v3252 = vand.u32 %v2019, 4294901760
    %3253 = vmatpush1.msra.mxu0 %v3252
    %v3254 = vand.u32 %v2022, 4294901760
    %3255 = vmatprep.subr.mxu0 %v3254
    %v3256 = vand.u32 %v2021, 4294901760
    %3257 = vmatpush1.msra.mxu0 %v3256
    %v3258 = vand.u32 %v2024, 4294901760
    %3259 = vmatprep.subr.mxu0 %v3258
    %v3260 = vand.u32 %v2023, 4294901760
    %3261 = vmatpush1.msra.mxu0 %v3260
    %v3262 = vand.u32 %v2026, 4294901760
    %3263 = vmatprep.subr.mxu0 %v3262
    %v3264 = vand.u32 %v2025, 4294901760
    %3265 = vmatpush1.msra.mxu0 %v3264
    %v3266 = vand.u32 %v2028, 4294901760
    %3267 = vmatprep.subr.mxu0 %v3266
    %v3268 = vand.u32 %v2027, 4294901760
    %3269 = vmatpush1.msra.mxu0 %v3268
    %v3270 = vand.u32 %v2030, 4294901760
    %3271 = vmatprep.subr.mxu0 %v3270
    %v3272 = vand.u32 %v2029, 4294901760
    %3273 = vmatpush1.msra.mxu0 %v3272
    %v3274 = vand.u32 %v2032, 4294901760
    %3275 = vmatprep.subr.mxu0 %v3274
    %v3276 = vand.u32 %v2031, 4294901760
    %3277 = vmatpush1.msra.mxu0 %v3276
    %v3278 = vand.u32 %v2034, 4294901760
    %3279 = vmatprep.subr.mxu0 %v3278
    %v3280 = vand.u32 %v2033, 4294901760
    %3281 = vmatpush1.msra.mxu0 %v3280
    %v3282 = vand.u32 %v2036, 4294901760
    %3283 = vmatprep.subr.mxu0 %v3282
    %v3284 = vand.u32 %v2035, 4294901760
    %3285 = vmatpush1.msra.mxu0 %v3284
    %v3286 = vand.u32 %v2038, 4294901760
    %3287 = vmatprep.subr.mxu0 %v3286
    %v3288 = vand.u32 %v2037, 4294901760
    %3289 = vmatpush1.msra.mxu0 %v3288
    %v3290 = vand.u32 %v2040, 4294901760
    %3291 = vmatprep.subr.mxu0 %v3290
    %v3292 = vand.u32 %v2039, 4294901760
    %3293 = vmatpush1.msra.mxu0 %v3292
    %v3294 = vand.u32 %v2042, 4294901760
    %3295 = vmatprep.subr.mxu0 %v3294
    %v3296 = vand.u32 %v2041, 4294901760
    %3297 = vmatpush1.msra.mxu0 %v3296
    %v3298 = vand.u32 %v2044, 4294901760
    %3299 = vmatprep.subr.mxu0 %v3298
    %v3300 = vand.u32 %v2043, 4294901760
    %3301 = vmatpush1.msra.mxu0 %v3300
    %v3302 = vand.u32 %v2046, 4294901760
    %3303 = vmatprep.subr.mxu0 %v3302
    %v3304 = vand.u32 %v2045, 4294901760
    %3305 = vmatpush1.msra.mxu0 %v3304
    %v3306 = vand.u32 %v2048, 4294901760
    %3307 = vmatprep.subr.mxu0 %v3306
    %v3308 = vand.u32 %v2047, 4294901760
    %3309 = vmatpush1.msra.mxu0 %v3308
    %v3310 = vand.u32 %v2050, 4294901760
    %3311 = vmatprep.subr.mxu0 %v3310
    %v3312 = vand.u32 %v2049, 4294901760
    %3313 = vmatpush1.msra.mxu0 %v3312
    %v3314 = vand.u32 %v2052, 4294901760
    %3315 = vmatprep.subr.mxu0 %v3314
    %v3316 = vand.u32 %v2051, 4294901760
    %3317 = vmatpush1.msra.mxu0 %v3316
    %v3318 = vand.u32 %v2054, 4294901760
    %3319 = vmatprep.subr.mxu0 %v3318
    %v3320 = vand.u32 %v2053, 4294901760
    %3321 = vmatpush1.msra.mxu0 %v3320
    %v3322 = vand.u32 %v2056, 4294901760
    %3323 = vmatprep.subr.mxu0 %v3322
    %v3324 = vand.u32 %v2055, 4294901760
    %3325 = vmatpush1.msra.mxu0 %v3324
    %v3326 = vand.u32 %v2058, 4294901760
    %3327 = vmatprep.subr.mxu0 %v3326
    %v3328 = vand.u32 %v2057, 4294901760
    %3329 = vmatpush1.msra.mxu0 %v3328
    %v3330 = vand.u32 %v2060, 4294901760
    %3331 = vmatprep.subr.mxu0 %v3330
    %v3332 = vand.u32 %v2059, 4294901760
    %3333 = vmatpush1.msra.mxu0 %v3332
    %v3334 = vand.u32 %v2062, 4294901760
    %3335 = vmatprep.subr.mxu0 %v3334
    %v3336 = vand.u32 %v2061, 4294901760
    %3337 = vmatpush1.msra.mxu0 %v3336
    %v3338 = vand.u32 %v2064, 4294901760
    %3339 = vmatprep.subr.mxu0 %v3338
    %v3340 = vand.u32 %v2063, 4294901760
    %3341 = vmatpush1.msra.mxu0 %v3340
    %v3342 = vand.u32 %v2066, 4294901760
    %3343 = vmatprep.subr.mxu0 %v3342
    %v3344 = vand.u32 %v2065, 4294901760
    %3345 = vmatpush1.msra.mxu0 %v3344
    %v3346 = vand.u32 %v2068, 4294901760
    %3347 = vmatprep.subr.mxu0 %v3346
    %v3348 = vand.u32 %v2067, 4294901760
    %3349 = vmatpush1.msra.mxu0 %v3348
    %v3350 = vand.u32 %v2070, 4294901760
    %3351 = vmatprep.subr.mxu0 %v3350
    %v3352 = vand.u32 %v2069, 4294901760
    %3353 = vmatpush1.msra.mxu0 %v3352
    %v3354 = vand.u32 %v2072, 4294901760
    %3355 = vmatprep.subr.mxu0 %v3354
    %v3356 = vand.u32 %v2071, 4294901760
    %3357 = vmatpush1.msra.mxu0 %v3356
    %v3358 = vand.u32 %v2074, 4294901760
    %3359 = vmatprep.subr.mxu0 %v3358
    %v3360 = vand.u32 %v2073, 4294901760
    %3361 = vmatpush1.msra.mxu0 %v3360
    %v3362 = vand.u32 %v2010, 4294901760
    %3363 = vmatprep.mubr.f32.mxu0 %v3362
    %v3364 = vand.u32 %v2009, 4294901760
    %3365 = vmatmul.mubr.f32.gmra.mrb[0].mxu0 %v3364
    %v3366 = vpop.f32.mrb[0].mxu0
    %v3367 = vadd.f32 %v3230, %v3366
    %v3368 = vpop.f32.mrb[0].mxu0
    %v3369 = vadd.f32 %v3232, %v3368
    %3370 = vdwg.mxu0
    %v3371 = vld [vmem:[%s1] sm:$0xff]
    %v3372 = vld [vmem:[%s8] sm:$0xf]
    %v3373 = vld [vmem:[%s9] sm:$0x1]
    %v3375 = vlaneseq
    %v3376 = vshrl.u32 %v3375, 7
    %v3377 = vsub.s32 0, %v3376
    %v3378 = vrot.slane %v3373, %v3377
    %vm3380 = vcmask 31744
    %v3382 = vsel %vm3380, %v3371, 0
    %vm3384 = vcmask 1043456
    %v3386 = vsel %vm3384, %v3372, 0
    %3388 = vmatprep.subr.mxu0 0.0
    %v3389 = vand.u32 %v3386, 4294901760
    %3390 = vmatpush1.msra.mxu0 %v3389
    %3391 = vmatprep.subr.mxu0 0.0
    %3392 = vmatpush1.msra.mxu0 0.0
    %3393 = vmatprep.subr.mxu0 0.0
    %3394 = vmatpush1.msra.mxu0 0.0
    %3395 = vmatprep.subr.mxu0 0.0
    %3396 = vmatpush1.msra.mxu0 0.0
    %3397 = vmatprep.subr.mxu0 0.0
    %3398 = vmatpush1.msra.mxu0 0.0
    %3399 = vmatprep.subr.mxu0 0.0
    %3400 = vmatpush1.msra.mxu0 0.0
    %3401 = vmatprep.subr.mxu0 0.0
    %3402 = vmatpush1.msra.mxu0 0.0
    %3403 = vmatprep.subr.mxu0 0.0
    %3404 = vmatpush1.msra.mxu0 0.0
    %3405 = vmatprep.subr.mxu0 0.0
    %3406 = vmatpush1.msra.mxu0 0.0
    %3407 = vmatprep.subr.mxu0 0.0
    %3408 = vmatpush1.msra.mxu0 0.0
    %3409 = vmatprep.subr.mxu0 0.0
    %3410 = vmatpush1.msra.mxu0 0.0
    %3411 = vmatprep.subr.mxu0 0.0
    %3412 = vmatpush1.msra.mxu0 0.0
    %3413 = vmatprep.subr.mxu0 0.0
    %3414 = vmatpush1.msra.mxu0 0.0
    %3415 = vmatprep.subr.mxu0 0.0
    %3416 = vmatpush1.msra.mxu0 0.0
    %3417 = vmatprep.subr.mxu0 0.0
    %3418 = vmatpush1.msra.mxu0 0.0
    %3419 = vmatprep.subr.mxu0 0.0
    %3420 = vmatpush1.msra.mxu0 0.0
    %3421 = vmatprep.subr.mxu0 0.0
    %3422 = vmatpush1.msra.mxu0 0.0
    %3423 = vmatprep.subr.mxu0 0.0
    %3424 = vmatpush1.msra.mxu0 0.0
    %3425 = vmatprep.subr.mxu0 0.0
    %3426 = vmatpush1.msra.mxu0 0.0
    %3427 = vmatprep.subr.mxu0 0.0
    %3428 = vmatpush1.msra.mxu0 0.0
    %3429 = vmatprep.subr.mxu0 0.0
    %3430 = vmatpush1.msra.mxu0 0.0
    %3431 = vmatprep.subr.mxu0 0.0
    %3432 = vmatpush1.msra.mxu0 0.0
    %3433 = vmatprep.subr.mxu0 0.0
    %3434 = vmatpush1.msra.mxu0 0.0
    %3435 = vmatprep.subr.mxu0 0.0
    %3436 = vmatpush1.msra.mxu0 0.0
    %3437 = vmatprep.subr.mxu0 0.0
    %3438 = vmatpush1.msra.mxu0 0.0
    %3439 = vmatprep.subr.mxu0 0.0
    %3440 = vmatpush1.msra.mxu0 0.0
    %3441 = vmatprep.subr.mxu0 0.0
    %3442 = vmatpush1.msra.mxu0 0.0
    %3443 = vmatprep.subr.mxu0 0.0
    %3444 = vmatpush1.msra.mxu0 0.0
    %3445 = vmatprep.subr.mxu0 0.0
    %3446 = vmatpush1.msra.mxu0 0.0
    %3447 = vmatprep.subr.mxu0 0.0
    %3448 = vmatpush1.msra.mxu0 0.0
    %3449 = vmatprep.subr.mxu0 0.0
    %3450 = vmatpush1.msra.mxu0 0.0
    %3451 = vmatprep.subr.mxu0 0.0
    %3452 = vmatpush1.msra.mxu0 0.0
    %3453 = vmatprep.mubr.f32.mxu0 0.0
    %v3454 = vand.u32 %v3382, 4294901760
    %v3455 = vsub.f32 %v3382, %v3454
    %v3456 = vand.u32 %v3455, 4294901760
    %v3457 = vsub.f32 %v3455, %v3456
    %v3458 = vand.u32 %v3457, 4294901760
    %3459 = vmatmul.mubr.f32.gmra.mrb[0].mxu0 %v3458
    %v3460 = vpop.f32.mrb[0].mxu0
    %v3461 = vadd.f32 %v3378, %v3460
    %v3462 = vpop.f32.mrb[0].mxu0
    %3463 = vdwg.mxu0
    %3464 = vmatprep.subr.mxu0 0.0
    %v3465 = vand.u32 %v3386, 4294901760
    %v3466 = vsub.f32 %v3386, %v3465
    %v3467 = vand.u32 %v3466, 4294901760
    %v3468 = vsub.f32 %v3466, %v3467
    %v3469 = vand.u32 %v3468, 4294901760
    %3470 = vmatpush1.msra.mxu0 %v3469
    %3471 = vmatprep.subr.mxu0 0.0
    %3472 = vmatpush1.msra.mxu0 0.0
    %3473 = vmatprep.subr.mxu0 0.0
    %3474 = vmatpush1.msra.mxu0 0.0
    %3475 = vmatprep.subr.mxu0 0.0
    %3476 = vmatpush1.msra.mxu0 0.0
    %3477 = vmatprep.subr.mxu0 0.0
    %3478 = vmatpush1.msra.mxu0 0.0
    %3479 = vmatprep.subr.mxu0 0.0
    %3480 = vmatpush1.msra.mxu0 0.0
    %3481 = vmatprep.subr.mxu0 0.0
    %3482 = vmatpush1.msra.mxu0 0.0
    %3483 = vmatprep.subr.mxu0 0.0
    %3484 = vmatpush1.msra.mxu0 0.0
    %3485 = vmatprep.subr.mxu0 0.0
    %3486 = vmatpush1.msra.mxu0 0.0
    %3487 = vmatprep.subr.mxu0 0.0
    %3488 = vmatpush1.msra.mxu0 0.0
    %3489 = vmatprep.subr.mxu0 0.0
    %3490 = vmatpush1.msra.mxu0 0.0
    %3491 = vmatprep.subr.mxu0 0.0
    %3492 = vmatpush1.msra.mxu0 0.0
    %3493 = vmatprep.subr.mxu0 0.0
    %3494 = vmatpush1.msra.mxu0 0.0
    %3495 = vmatprep.subr.mxu0 0.0
    %3496 = vmatpush1.msra.mxu0 0.0
    %3497 = vmatprep.subr.mxu0 0.0
    %3498 = vmatpush1.msra.mxu0 0.0
    %3499 = vmatprep.subr.mxu0 0.0
    %3500 = vmatpush1.msra.mxu0 0.0
    %3501 = vmatprep.subr.mxu0 0.0
    %3502 = vmatpush1.msra.mxu0 0.0
    %3503 = vmatprep.subr.mxu0 0.0
    %3504 = vmatpush1.msra.mxu0 0.0
    %3505 = vmatprep.subr.mxu0 0.0
    %3506 = vmatpush1.msra.mxu0 0.0
    %3507 = vmatprep.subr.mxu0 0.0
    %3508 = vmatpush1.msra.mxu0 0.0
    %3509 = vmatprep.subr.mxu0 0.0
    %3510 = vmatpush1.msra.mxu0 0.0
    %3511 = vmatprep.subr.mxu0 0.0
    %3512 = vmatpush1.msra.mxu0 0.0
    %3513 = vmatprep.subr.mxu0 0.0
    %3514 = vmatpush1.msra.mxu0 0.0
    %3515 = vmatprep.subr.mxu0 0.0
    %3516 = vmatpush1.msra.mxu0 0.0
    %3517 = vmatprep.subr.mxu0 0.0
    %3518 = vmatpush1.msra.mxu0 0.0
    %3519 = vmatprep.subr.mxu0 0.0
    %3520 = vmatpush1.msra.mxu0 0.0
    %3521 = vmatprep.subr.mxu0 0.0
    %3522 = vmatpush1.msra.mxu0 0.0
    %3523 = vmatprep.subr.mxu0 0.0
    %3524 = vmatpush1.msra.mxu0 0.0
    %3525 = vmatprep.subr.mxu0 0.0
    %3526 = vmatpush1.msra.mxu0 0.0
    %3527 = vmatprep.subr.mxu0 0.0
    %3528 = vmatpush1.msra.mxu0 0.0
    %3529 = vmatprep.subr.mxu0 0.0
    %3530 = vmatpush1.msra.mxu0 0.0
    %3531 = vmatprep.subr.mxu0 0.0
    %3532 = vmatpush1.msra.mxu0 0.0
    %3533 = vmatprep.mubr.f32.mxu0 0.0
    %v3534 = vand.u32 %v3382, 4294901760
    %3535 = vmatmul.mubr.f32.gmra.mrb[0].mxu0 %v3534
    %v3536 = vpop.f32.mrb[0].mxu0
    %v3537 = vadd.f32 %v3461, %v3536
    %v3538 = vpop.f32.mrb[0].mxu0
    %3539 = vdwg.mxu0
    %3540 = vmatprep.subr.mxu0 0.0
    %v3541 = vand.u32 %v3386, 4294901760
    %v3542 = vsub.f32 %v3386, %v3541
    %3543 = vmatpush1.msra.mxu0 %v3542
    %3544 = vmatprep.subr.mxu0 0.0
    %3545 = vmatpush1.msra.mxu0 0.0
    %3546 = vmatprep.subr.mxu0 0.0
    %3547 = vmatpush1.msra.mxu0 0.0
    %3548 = vmatprep.subr.mxu0 0.0
    %3549 = vmatpush1.msra.mxu0 0.0
    %3550 = vmatprep.subr.mxu0 0.0
    %3551 = vmatpush1.msra.mxu0 0.0
    %3552 = vmatprep.subr.mxu0 0.0
    %3553 = vmatpush1.msra.mxu0 0.0
    %3554 = vmatprep.subr.mxu0 0.0
    %3555 = vmatpush1.msra.mxu0 0.0
    %3556 = vmatprep.subr.mxu0 0.0
    %3557 = vmatpush1.msra.mxu0 0.0
    %3558 = vmatprep.subr.mxu0 0.0
    %3559 = vmatpush1.msra.mxu0 0.0
    %3560 = vmatprep.subr.mxu0 0.0
    %3561 = vmatpush1.msra.mxu0 0.0
    %3562 = vmatprep.subr.mxu0 0.0
    %3563 = vmatpush1.msra.mxu0 0.0
    %3564 = vmatprep.subr.mxu0 0.0
    %3565 = vmatpush1.msra.mxu0 0.0
    %3566 = vmatprep.subr.mxu0 0.0
    %3567 = vmatpush1.msra.mxu0 0.0
    %3568 = vmatprep.subr.mxu0 0.0
    %3569 = vmatpush1.msra.mxu0 0.0
    %3570 = vmatprep.subr.mxu0 0.0
    %3571 = vmatpush1.msra.mxu0 0.0
    %3572 = vmatprep.subr.mxu0 0.0
    %3573 = vmatpush1.msra.mxu0 0.0
    %3574 = vmatprep.subr.mxu0 0.0
    %3575 = vmatpush1.msra.mxu0 0.0
    %3576 = vmatprep.subr.mxu0 0.0
    %3577 = vmatpush1.msra.mxu0 0.0
    %3578 = vmatprep.subr.mxu0 0.0
    %3579 = vmatpush1.msra.mxu0 0.0
    %3580 = vmatprep.subr.mxu0 0.0
    %3581 = vmatpush1.msra.mxu0 0.0
    %3582 = vmatprep.subr.mxu0 0.0
    %3583 = vmatpush1.msra.mxu0 0.0
    %3584 = vmatprep.subr.mxu0 0.0
    %3585 = vmatpush1.msra.mxu0 0.0
    %3586 = vmatprep.subr.mxu0 0.0
    %3587 = vmatpush1.msra.mxu0 0.0
    %3588 = vmatprep.subr.mxu0 0.0
    %3589 = vmatpush1.msra.mxu0 0.0
    %3590 = vmatprep.subr.mxu0 0.0
    %3591 = vmatpush1.msra.mxu0 0.0
    %3592 = vmatprep.subr.mxu0 0.0
    %3593 = vmatpush1.msra.mxu0 0.0
    %3594 = vmatprep.subr.mxu0 0.0
    %3595 = vmatpush1.msra.mxu0 0.0
    %3596 = vmatprep.subr.mxu0 0.0
    %3597 = vmatpush1.msra.mxu0 0.0
    %3598 = vmatprep.subr.mxu0 0.0
    %3599 = vmatpush1.msra.mxu0 0.0
    %3600 = vmatprep.subr.mxu0 0.0
    %3601 = vmatpush1.msra.mxu0 0.0
    %3602 = vmatprep.subr.mxu0 0.0
    %3603 = vmatpush1.msra.mxu0 0.0
    %3604 = vmatprep.subr.mxu0 0.0
    %3605 = vmatpush1.msra.mxu0 0.0
    %3606 = vmatprep.mubr.f32.mxu0 0.0
    %v3607 = vand.u32 %v3382, 4294901760
    %v3608 = vsub.f32 %v3382, %v3607
    %3609 = vmatmul.mubr.f32.gmra.mrb[0].mxu0 %v3608
    %v3610 = vpop.f32.mrb[0].mxu0
    %v3611 = vadd.f32 %v3537, %v3610
    %v3612 = vpop.f32.mrb[0].mxu0
    %3613 = vdwg.mxu0
    %3614 = vmatprep.subr.mxu0 0.0
    %v3615 = vand.u32 %v3386, 4294901760
    %3616 = vmatpush1.msra.mxu0 %v3615
    %3617 = vmatprep.subr.mxu0 0.0
    %3618 = vmatpush1.msra.mxu0 0.0
    %3619 = vmatprep.subr.mxu0 0.0
    %3620 = vmatpush1.msra.mxu0 0.0
    %3621 = vmatprep.subr.mxu0 0.0
    %3622 = vmatpush1.msra.mxu0 0.0
    %3623 = vmatprep.subr.mxu0 0.0
    %3624 = vmatpush1.msra.mxu0 0.0
    %3625 = vmatprep.subr.mxu0 0.0
    %3626 = vmatpush1.msra.mxu0 0.0
    %3627 = vmatprep.subr.mxu0 0.0
    %3628 = vmatpush1.msra.mxu0 0.0
    %3629 = vmatprep.subr.mxu0 0.0
    %3630 = vmatpush1.msra.mxu0 0.0
    %3631 = vmatprep.subr.mxu0 0.0
    %3632 = vmatpush1.msra.mxu0 0.0
    %3633 = vmatprep.subr.mxu0 0.0
    %3634 = vmatpush1.msra.mxu0 0.0
    %3635 = vmatprep.subr.mxu0 0.0
    %3636 = vmatpush1.msra.mxu0 0.0
    %3637 = vmatprep.subr.mxu0 0.0
    %3638 = vmatpush1.msra.mxu0 0.0
    %3639 = vmatprep.subr.mxu0 0.0
    %3640 = vmatpush1.msra.mxu0 0.0
    %3641 = vmatprep.subr.mxu0 0.0
    %3642 = vmatpush1.msra.mxu0 0.0
    %3643 = vmatprep.subr.mxu0 0.0
    %3644 = vmatpush1.msra.mxu0 0.0
    %3645 = vmatprep.subr.mxu0 0.0
    %3646 = vmatpush1.msra.mxu0 0.0
    %3647 = vmatprep.subr.mxu0 0.0
    %3648 = vmatpush1.msra.mxu0 0.0
    %3649 = vmatprep.subr.mxu0 0.0
    %3650 = vmatpush1.msra.mxu0 0.0
    %3651 = vmatprep.subr.mxu0 0.0
    %3652 = vmatpush1.msra.mxu0 0.0
    %3653 = vmatprep.subr.mxu0 0.0
    %3654 = vmatpush1.msra.mxu0 0.0
    %3655 = vmatprep.subr.mxu0 0.0
    %3656 = vmatpush1.msra.mxu0 0.0
    %3657 = vmatprep.subr.mxu0 0.0
    %3658 = vmatpush1.msra.mxu0 0.0
    %3659 = vmatprep.subr.mxu0 0.0
    %3660 = vmatpush1.msra.mxu0 0.0
    %3661 = vmatprep.subr.mxu0 0.0
    %3662 = vmatpush1.msra.mxu0 0.0
    %3663 = vmatprep.subr.mxu0 0.0
    %3664 = vmatpush1.msra.mxu0 0.0
    %3665 = vmatprep.subr.mxu0 0.0
    %3666 = vmatpush1.msra.mxu0 0.0
    %3667 = vmatprep.subr.mxu0 0.0
    %3668 = vmatpush1.msra.mxu0 0.0
    %3669 = vmatprep.subr.mxu0 0.0
    %3670 = vmatpush1.msra.mxu0 0.0
    %3671 = vmatprep.subr.mxu0 0.0
    %3672 = vmatpush1.msra.mxu0 0.0
    %3673 = vmatprep.subr.mxu0 0.0
    %3674 = vmatpush1.msra.mxu0 0.0
    %3675 = vmatprep.subr.mxu0 0.0
    %3676 = vmatpush1.msra.mxu0 0.0
    %3677 = vmatprep.subr.mxu0 0.0
    %3678 = vmatpush1.msra.mxu0 0.0
    %3679 = vmatprep.mubr.f32.mxu0 0.0
    %v3680 = vand.u32 %v3382, 4294901760
    %v3681 = vsub.f32 %v3382, %v3680
    %v3682 = vand.u32 %v3681, 4294901760
    %3683 = vmatmul.mubr.f32.gmra.mrb[0].mxu0 %v3682
    %v3684 = vpop.f32.mrb[0].mxu0
    %v3685 = vadd.f32 %v3611, %v3684
    %v3686 = vpop.f32.mrb[0].mxu0
    %3687 = vdwg.mxu0
    %3688 = vmatprep.subr.mxu0 0.0
    %v3689 = vand.u32 %v3386, 4294901760
    %v3690 = vsub.f32 %v3386, %v3689
    %v3691 = vand.u32 %v3690, 4294901760
    %3692 = vmatpush1.msra.mxu0 %v3691
    %3693 = vmatprep.subr.mxu0 0.0
    %3694 = vmatpush1.msra.mxu0 0.0
    %3695 = vmatprep.subr.mxu0 0.0
    %3696 = vmatpush1.msra.mxu0 0.0
    %3697 = vmatprep.subr.mxu0 0.0
    %3698 = vmatpush1.msra.mxu0 0.0
    %3699 = vmatprep.subr.mxu0 0.0
    %3700 = vmatpush1.msra.mxu0 0.0
    %3701 = vmatprep.subr.mxu0 0.0
    %3702 = vmatpush1.msra.mxu0 0.0
    %3703 = vmatprep.subr.mxu0 0.0
    %3704 = vmatpush1.msra.mxu0 0.0
    %3705 = vmatprep.subr.mxu0 0.0
    %3706 = vmatpush1.msra.mxu0 0.0
    %3707 = vmatprep.subr.mxu0 0.0
    %3708 = vmatpush1.msra.mxu0 0.0
    %3709 = vmatprep.subr.mxu0 0.0
    %3710 = vmatpush1.msra.mxu0 0.0
    %3711 = vmatprep.subr.mxu0 0.0
    %3712 = vmatpush1.msra.mxu0 0.0
    %3713 = vmatprep.subr.mxu0 0.0
    %3714 = vmatpush1.msra.mxu0 0.0
    %3715 = vmatprep.subr.mxu0 0.0
    %3716 = vmatpush1.msra.mxu0 0.0
    %3717 = vmatprep.subr.mxu0 0.0
    %3718 = vmatpush1.msra.mxu0 0.0
    %3719 = vmatprep.subr.mxu0 0.0
    %3720 = vmatpush1.msra.mxu0 0.0
    %3721 = vmatprep.subr.mxu0 0.0
    %3722 = vmatpush1.msra.mxu0 0.0
    %3723 = vmatprep.subr.mxu0 0.0
    %3724 = vmatpush1.msra.mxu0 0.0
    %3725 = vmatprep.subr.mxu0 0.0
    %3726 = vmatpush1.msra.mxu0 0.0
    %3727 = vmatprep.subr.mxu0 0.0
    %3728 = vmatpush1.msra.mxu0 0.0
    %3729 = vmatprep.subr.mxu0 0.0
    %3730 = vmatpush1.msra.mxu0 0.0
    %3731 = vmatprep.subr.mxu0 0.0
    %3732 = vmatpush1.msra.mxu0 0.0
    %3733 = vmatprep.subr.mxu0 0.0
    %3734 = vmatpush1.msra.mxu0 0.0
    %3735 = vmatprep.subr.mxu0 0.0
    %3736 = vmatpush1.msra.mxu0 0.0
    %3737 = vmatprep.subr.mxu0 0.0
    %3738 = vmatpush1.msra.mxu0 0.0
    %3739 = vmatprep.subr.mxu0 0.0
    %3740 = vmatpush1.msra.mxu0 0.0
    %3741 = vmatprep.subr.mxu0 0.0
    %3742 = vmatpush1.msra.mxu0 0.0
    %3743 = vmatprep.subr.mxu0 0.0
    %3744 = vmatpush1.msra.mxu0 0.0
    %3745 = vmatprep.subr.mxu0 0.0
    %3746 = vmatpush1.msra.mxu0 0.0
    %3747 = vmatprep.subr.mxu0 0.0
    %3748 = vmatpush1.msra.mxu0 0.0
    %3749 = vmatprep.subr.mxu0 0.0
    %3750 = vmatpush1.msra.mxu0 0.0
    %3751 = vmatprep.subr.mxu0 0.0
    %3752 = vmatpush1.msra.mxu0 0.0
    %3753 = vmatprep.subr.mxu0 0.0
    %3754 = vmatpush1.msra.mxu0 0.0
    %3755 = vmatprep.mubr.f32.mxu0 0.0
    %v3756 = vand.u32 %v3382, 4294901760
    %3757 = vmatmul.mubr.f32.gmra.mrb[0].mxu0 %v3756
    %v3758 = vpop.f32.mrb[0].mxu0
    %v3759 = vadd.f32 %v3685, %v3758
    %v3760 = vpop.f32.mrb[0].mxu0
    %3761 = vdwg.mxu0
    %3762 = vmatprep.subr.mxu0 0.0
    %v3763 = vand.u32 %v3386, 4294901760
    %3764 = vmatpush1.msra.mxu0 %v3763
    %3765 = vmatprep.subr.mxu0 0.0
    %3766 = vmatpush1.msra.mxu0 0.0
    %3767 = vmatprep.subr.mxu0 0.0
    %3768 = vmatpush1.msra.mxu0 0.0
    %3769 = vmatprep.subr.mxu0 0.0
    %3770 = vmatpush1.msra.mxu0 0.0
    %3771 = vmatprep.subr.mxu0 0.0
    %3772 = vmatpush1.msra.mxu0 0.0
    %3773 = vmatprep.subr.mxu0 0.0
    %3774 = vmatpush1.msra.mxu0 0.0
    %3775 = vmatprep.subr.mxu0 0.0
    %3776 = vmatpush1.msra.mxu0 0.0
    %3777 = vmatprep.subr.mxu0 0.0
    %3778 = vmatpush1.msra.mxu0 0.0
    %3779 = vmatprep.subr.mxu0 0.0
    %3780 = vmatpush1.msra.mxu0 0.0
    %3781 = vmatprep.subr.mxu0 0.0
    %3782 = vmatpush1.msra.mxu0 0.0
    %3783 = vmatprep.subr.mxu0 0.0
    %3784 = vmatpush1.msra.mxu0 0.0
    %3785 = vmatprep.subr.mxu0 0.0
    %3786 = vmatpush1.msra.mxu0 0.0
    %3787 = vmatprep.subr.mxu0 0.0
    %3788 = vmatpush1.msra.mxu0 0.0
    %3789 = vmatprep.subr.mxu0 0.0
    %3790 = vmatpush1.msra.mxu0 0.0
    %3791 = vmatprep.subr.mxu0 0.0
    %3792 = vmatpush1.msra.mxu0 0.0
    %3793 = vmatprep.subr.mxu0 0.0
    %3794 = vmatpush1.msra.mxu0 0.0
    %3795 = vmatprep.subr.mxu0 0.0
    %3796 = vmatpush1.msra.mxu0 0.0
    %3797 = vmatprep.subr.mxu0 0.0
    %3798 = vmatpush1.msra.mxu0 0.0
    %3799 = vmatprep.subr.mxu0 0.0
    %3800 = vmatpush1.msra.mxu0 0.0
    %3801 = vmatprep.subr.mxu0 0.0
    %3802 = vmatpush1.msra.mxu0 0.0
    %3803 = vmatprep.subr.mxu0 0.0
    %3804 = vmatpush1.msra.mxu0 0.0
    %3805 = vmatprep.subr.mxu0 0.0
    %3806 = vmatpush1.msra.mxu0 0.0
    %3807 = vmatprep.subr.mxu0 0.0
    %3808 = vmatpush1.msra.mxu0 0.0
    %3809 = vmatprep.subr.mxu0 0.0
    %3810 = vmatpush1.msra.mxu0 0.0
    %3811 = vmatprep.subr.mxu0 0.0
    %3812 = vmatpush1.msra.mxu0 0.0
    %3813 = vmatprep.subr.mxu0 0.0
    %3814 = vmatpush1.msra.mxu0 0.0
    %3815 = vmatprep.subr.mxu0 0.0
    %3816 = vmatpush1.msra.mxu0 0.0
    %3817 = vmatprep.subr.mxu0 0.0
    %3818 = vmatpush1.msra.mxu0 0.0
    %3819 = vmatprep.subr.mxu0 0.0
    %3820 = vmatpush1.msra.mxu0 0.0
    %3821 = vmatprep.subr.mxu0 0.0
    %3822 = vmatpush1.msra.mxu0 0.0
    %3823 = vmatprep.subr.mxu0 0.0
    %3824 = vmatpush1.msra.mxu0 0.0
    %3825 = vmatprep.subr.mxu0 0.0
    %3826 = vmatpush1.msra.mxu0 0.0
    %3827 = vmatprep.mubr.f32.mxu0 0.0
    %v3828 = vand.u32 %v3382, 4294901760
    %3829 = vmatmul.mubr.f32.gmra.mrb[0].mxu0 %v3828
    %v3830 = vpop.f32.mrb[0].mxu0
    %v3831 = vadd.f32 %v3759, %v3830
    %v3832 = vpop.f32.mrb[0].mxu0
    %3833 = vdwg.mxu0
    %vm3834 = vcmask 64512
    %v3835 = vsel %vm3834, %v3831, -inf
    %3836 = vmax.xlane.f32.xlu0 %v3835
    %v3837 = vpop.xlane.xlu0 %3836
    %v3838 = vsub.f32 %v3831, %v3837
    %v3839 = vmul.f32 %v3838, 1.442695
    %v3840 = vpow.pop %v3839
    %v3841 = vld [vmem:[%s10] sm:$0xff]
    %v3843 = vsel %vm3834, %v3840, 0
    %3845 = vmatprep.subr.mxu0 0.0
    %v3846 = vand.u32 %v3841, 4294901760
    %3847 = vmatpush1.msra.mxu0 %v3846
    %3848 = vmatprep.subr.mxu0 0.0
    %3849 = vmatpush1.msra.mxu0 0.0
    %3850 = vmatprep.subr.mxu0 0.0
    %3851 = vmatpush1.msra.mxu0 0.0
    %3852 = vmatprep.subr.mxu0 0.0
    %3853 = vmatpush1.msra.mxu0 0.0
    %3854 = vmatprep.subr.mxu0 0.0
    %3855 = vmatpush1.msra.mxu0 0.0
    %3856 = vmatprep.subr.mxu0 0.0
    %3857 = vmatpush1.msra.mxu0 0.0
    %3858 = vmatprep.subr.mxu0 0.0
    %3859 = vmatpush1.msra.mxu0 0.0
    %3860 = vmatprep.subr.mxu0 0.0
    %3861 = vmatpush1.msra.mxu0 0.0
    %3862 = vmatprep.subr.mxu0 0.0
    %3863 = vmatpush1.msra.mxu0 0.0
    %3864 = vmatprep.subr.mxu0 0.0
    %3865 = vmatpush1.msra.mxu0 0.0
    %3866 = vmatprep.subr.mxu0 0.0
    %3867 = vmatpush1.msra.mxu0 0.0
    %3868 = vmatprep.subr.mxu0 0.0
    %3869 = vmatpush1.msra.mxu0 0.0
    %3870 = vmatprep.subr.mxu0 0.0
    %3871 = vmatpush1.msra.mxu0 0.0
    %3872 = vmatprep.subr.mxu0 0.0
    %3873 = vmatpush1.msra.mxu0 0.0
    %3874 = vmatprep.subr.mxu0 0.0
    %3875 = vmatpush1.msra.mxu0 0.0
    %3876 = vmatprep.subr.mxu0 0.0
    %3877 = vmatpush1.msra.mxu0 0.0
    %3878 = vmatprep.subr.mxu0 0.0
    %3879 = vmatpush1.msra.mxu0 0.0
    %3880 = vmatprep.subr.mxu0 0.0
    %3881 = vmatpush1.msra.mxu0 0.0
    %3882 = vmatprep.subr.mxu0 0.0
    %3883 = vmatpush1.msra.mxu0 0.0
    %3884 = vmatprep.subr.mxu0 0.0
    %3885 = vmatpush1.msra.mxu0 0.0
    %3886 = vmatprep.subr.mxu0 0.0
    %3887 = vmatpush1.msra.mxu0 0.0
    %3888 = vmatprep.subr.mxu0 0.0
    %3889 = vmatpush1.msra.mxu0 0.0
    %3890 = vmatprep.subr.mxu0 0.0
    %3891 = vmatpush1.msra.mxu0 0.0
    %3892 = vmatprep.subr.mxu0 0.0
    %3893 = vmatpush1.msra.mxu0 0.0
    %3894 = vmatprep.subr.mxu0 0.0
    %3895 = vmatpush1.msra.mxu0 0.0
    %3896 = vmatprep.subr.mxu0 0.0
    %3897 = vmatpush1.msra.mxu0 0.0
    %3898 = vmatprep.subr.mxu0 0.0
    %3899 = vmatpush1.msra.mxu0 0.0
    %3900 = vmatprep.subr.mxu0 0.0
    %3901 = vmatpush1.msra.mxu0 0.0
    %3902 = vmatprep.subr.mxu0 0.0
    %3903 = vmatpush1.msra.mxu0 0.0
    %3904 = vmatprep.subr.mxu0 0.0
    %3905 = vmatpush1.msra.mxu0 0.0
    %3906 = vmatprep.subr.mxu0 0.0
    %3907 = vmatpush1.msra.mxu0 0.0
    %3908 = vmatprep.subr.mxu0 0.0
    %3909 = vmatpush1.msra.mxu0 0.0
    %3910 = vmatprep.mubr.f32.mxu0 0.0
    %v3911 = vand.u32 %v3843, 4294901760
    %v3912 = vsub.f32 %v3843, %v3911
    %v3913 = vand.u32 %v3912, 4294901760
    %v3914 = vsub.f32 %v3912, %v3913
    %v3915 = vand.u32 %v3914, 4294901760
    %3916 = vmatmul.mubr.f32.gmra.mrb[0].mxu0 %v3915
    %v3917 = vpop.f32.mrb[0].mxu0
    %v3918 = vadd.f32 0.0, %v3917
    %v3919 = vpop.f32.mrb[0].mxu0
    %3920 = vdwg.mxu0
    %3921 = vmatprep.subr.mxu0 0.0
    %v3922 = vand.u32 %v3841, 4294901760
    %v3923 = vsub.f32 %v3841, %v3922
    %v3924 = vand.u32 %v3923, 4294901760
    %v3925 = vsub.f32 %v3923, %v3924
    %v3926 = vand.u32 %v3925, 4294901760
    %3927 = vmatpush1.msra.mxu0 %v3926
    %3928 = vmatprep.subr.mxu0 0.0
    %3929 = vmatpush1.msra.mxu0 0.0
    %3930 = vmatprep.subr.mxu0 0.0
    %3931 = vmatpush1.msra.mxu0 0.0
    %3932 = vmatprep.subr.mxu0 0.0
    %3933 = vmatpush1.msra.mxu0 0.0
    %3934 = vmatprep.subr.mxu0 0.0
    %3935 = vmatpush1.msra.mxu0 0.0
    %3936 = vmatprep.subr.mxu0 0.0
    %3937 = vmatpush1.msra.mxu0 0.0
    %3938 = vmatprep.subr.mxu0 0.0
    %3939 = vmatpush1.msra.mxu0 0.0
    %3940 = vmatprep.subr.mxu0 0.0
    %3941 = vmatpush1.msra.mxu0 0.0
    %3942 = vmatprep.subr.mxu0 0.0
    %3943 = vmatpush1.msra.mxu0 0.0
    %3944 = vmatprep.subr.mxu0 0.0
    %3945 = vmatpush1.msra.mxu0 0.0
    %3946 = vmatprep.subr.mxu0 0.0
    %3947 = vmatpush1.msra.mxu0 0.0
    %3948 = vmatprep.subr.mxu0 0.0
    %3949 = vmatpush1.msra.mxu0 0.0
    %3950 = vmatprep.subr.mxu0 0.0
    %3951 = vmatpush1.msra.mxu0 0.0
    %3952 = vmatprep.subr.mxu0 0.0
    %3953 = vmatpush1.msra.mxu0 0.0
    %3954 = vmatprep.subr.mxu0 0.0
    %3955 = vmatpush1.msra.mxu0 0.0
    %3956 = vmatprep.subr.mxu0 0.0
    %3957 = vmatpush1.msra.mxu0 0.0
    %3958 = vmatprep.subr.mxu0 0.0
    %3959 = vmatpush1.msra.mxu0 0.0
    %3960 = vmatprep.subr.mxu0 0.0
    %3961 = vmatpush1.msra.mxu0 0.0
    %3962 = vmatprep.subr.mxu0 0.0
    %3963 = vmatpush1.msra.mxu0 0.0
    %3964 = vmatprep.subr.mxu0 0.0
    %3965 = vmatpush1.msra.mxu0 0.0
    %3966 = vmatprep.subr.mxu0 0.0
    %3967 = vmatpush1.msra.mxu0 0.0
    %3968 = vmatprep.subr.mxu0 0.0
    %3969 = vmatpush1.msra.mxu0 0.0
    %3970 = vmatprep.subr.mxu0 0.0
    %3971 = vmatpush1.msra.mxu0 0.0
    %3972 = vmatprep.subr.mxu0 0.0
    %3973 = vmatpush1.msra.mxu0 0.0
    %3974 = vmatprep.subr.mxu0 0.0
    %3975 = vmatpush1.msra.mxu0 0.0
    %3976 = vmatprep.subr.mxu0 0.0
    %3977 = vmatpush1.msra.mxu0 0.0
    %3978 = vmatprep.subr.mxu0 0.0
    %3979 = vmatpush1.msra.mxu0 0.0
    %3980 = vmatprep.subr.mxu0 0.0
    %3981 = vmatpush1.msra.mxu0 0.0
    %3982 = vmatprep.subr.mxu0 0.0
    %3983 = vmatpush1.msra.mxu0 0.0
    %3984 = vmatprep.subr.mxu0 0.0
    %3985 = vmatpush1.msra.mxu0 0.0
    %3986 = vmatprep.subr.mxu0 0.0
    %3987 = vmatpush1.msra.mxu0 0.0
    %3988 = vmatprep.subr.mxu0 0.0
    %3989 = vmatpush1.msra.mxu0 0.0
    %3990 = vmatprep.mubr.f32.mxu0 0.0
    %v3991 = vand.u32 %v3843, 4294901760
    %3992 = vmatmul.mubr.f32.gmra.mrb[0].mxu0 %v3991
    %v3993 = vpop.f32.mrb[0].mxu0
    %v3994 = vadd.f32 %v3918, %v3993
    %v3995 = vpop.f32.mrb[0].mxu0
    %3996 = vdwg.mxu0
    %3997 = vmatprep.subr.mxu0 0.0
    %v3998 = vand.u32 %v3841, 4294901760
    %v3999 = vsub.f32 %v3841, %v3998
    %4000 = vmatpush1.msra.mxu0 %v3999
    %4001 = vmatprep.subr.mxu0 0.0
    %4002 = vmatpush1.msra.mxu0 0.0
    %4003 = vmatprep.subr.mxu0 0.0
    %4004 = vmatpush1.msra.mxu0 0.0
    %4005 = vmatprep.subr.mxu0 0.0
    %4006 = vmatpush1.msra.mxu0 0.0
    %4007 = vmatprep.subr.mxu0 0.0
    %4008 = vmatpush1.msra.mxu0 0.0
    %4009 = vmatprep.subr.mxu0 0.0
    %4010 = vmatpush1.msra.mxu0 0.0
    %4011 = vmatprep.subr.mxu0 0.0
    %4012 = vmatpush1.msra.mxu0 0.0
    %4013 = vmatprep.subr.mxu0 0.0
    %4014 = vmatpush1.msra.mxu0 0.0
    %4015 = vmatprep.subr.mxu0 0.0
    %4016 = vmatpush1.msra.mxu0 0.0
    %4017 = vmatprep.subr.mxu0 0.0
    %4018 = vmatpush1.msra.mxu0 0.0
    %4019 = vmatprep.subr.mxu0 0.0
    %4020 = vmatpush1.msra.mxu0 0.0
    %4021 = vmatprep.subr.mxu0 0.0
    %4022 = vmatpush1.msra.mxu0 0.0
    %4023 = vmatprep.subr.mxu0 0.0
    %4024 = vmatpush1.msra.mxu0 0.0
    %4025 = vmatprep.subr.mxu0 0.0
    %4026 = vmatpush1.msra.mxu0 0.0
    %4027 = vmatprep.subr.mxu0 0.0
    %4028 = vmatpush1.msra.mxu0 0.0
    %4029 = vmatprep.subr.mxu0 0.0
    %4030 = vmatpush1.msra.mxu0 0.0
    %4031 = vmatprep.subr.mxu0 0.0
    %4032 = vmatpush1.msra.mxu0 0.0
    %4033 = vmatprep.subr.mxu0 0.0
    %4034 = vmatpush1.msra.mxu0 0.0
    %4035 = vmatprep.subr.mxu0 0.0
    %4036 = vmatpush1.msra.mxu0 0.0
    %4037 = vmatprep.subr.mxu0 0.0
    %4038 = vmatpush1.msra.mxu0 0.0
    %4039 = vmatprep.subr.mxu0 0.0
    %4040 = vmatpush1.msra.mxu0 0.0
    %4041 = vmatprep.subr.mxu0 0.0
    %4042 = vmatpush1.msra.mxu0 0.0
    %4043 = vmatprep.subr.mxu0 0.0
    %4044 = vmatpush1.msra.mxu0 0.0
    %4045 = vmatprep.subr.mxu0 0.0
    %4046 = vmatpush1.msra.mxu0 0.0
    %4047 = vmatprep.subr.mxu0 0.0
    %4048 = vmatpush1.msra.mxu0 0.0
    %4049 = vmatprep.subr.mxu0 0.0
    %4050 = vmatpush1.msra.mxu0 0.0
    %4051 = vmatprep.subr.mxu0 0.0
    %4052 = vmatpush1.msra.mxu0 0.0
    %4053 = vmatprep.subr.mxu0 0.0
    %4054 = vmatpush1.msra.mxu0 0.0
    %4055 = vmatprep.subr.mxu0 0.0
    %4056 = vmatpush1.msra.mxu0 0.0
    %4057 = vmatprep.subr.mxu0 0.0
    %4058 = vmatpush1.msra.mxu0 0.0
    %4059 = vmatprep.subr.mxu0 0.0
    %4060 = vmatpush1.msra.mxu0 0.0
    %4061 = vmatprep.subr.mxu0 0.0
    %4062 = vmatpush1.msra.mxu0 0.0
    %4063 = vmatprep.mubr.f32.mxu0 0.0
    %v4064 = vand.u32 %v3843, 4294901760
    %v4065 = vsub.f32 %v3843, %v4064
    %4066 = vmatmul.mubr.f32.gmra.mrb[0].mxu0 %v4065
    %v4067 = vpop.f32.mrb[0].mxu0
    %v4068 = vadd.f32 %v3994, %v4067
    %v4069 = vpop.f32.mrb[0].mxu0
    %4070 = vdwg.mxu0
    %4071 = vmatprep.subr.mxu0 0.0
    %v4072 = vand.u32 %v3841, 4294901760
    %4073 = vmatpush1.msra.mxu0 %v4072
    %4074 = vmatprep.subr.mxu0 0.0
    %4075 = vmatpush1.msra.mxu0 0.0
    %4076 = vmatprep.subr.mxu0 0.0
    %4077 = vmatpush1.msra.mxu0 0.0
    %4078 = vmatprep.subr.mxu0 0.0
    %4079 = vmatpush1.msra.mxu0 0.0
    %4080 = vmatprep.subr.mxu0 0.0
    %4081 = vmatpush1.msra.mxu0 0.0
    %4082 = vmatprep.subr.mxu0 0.0
    %4083 = vmatpush1.msra.mxu0 0.0
    %4084 = vmatprep.subr.mxu0 0.0
    %4085 = vmatpush1.msra.mxu0 0.0
    %4086 = vmatprep.subr.mxu0 0.0
    %4087 = vmatpush1.msra.mxu0 0.0
    %4088 = vmatprep.subr.mxu0 0.0
    %4089 = vmatpush1.msra.mxu0 0.0
    %4090 = vmatprep.subr.mxu0 0.0
    %4091 = vmatpush1.msra.mxu0 0.0
    %4092 = vmatprep.subr.mxu0 0.0
    %4093 = vmatpush1.msra.mxu0 0.0
    %4094 = vmatprep.subr.mxu0 0.0
    %4095 = vmatpush1.msra.mxu0 0.0
    %4096 = vmatprep.subr.mxu0 0.0
    %4097 = vmatpush1.msra.mxu0 0.0
    %4098 = vmatprep.subr.mxu0 0.0
    %4099 = vmatpush1.msra.mxu0 0.0
    %4100 = vmatprep.subr.mxu0 0.0
    %4101 = vmatpush1.msra.mxu0 0.0
    %4102 = vmatprep.subr.mxu0 0.0
    %4103 = vmatpush1.msra.mxu0 0.0
    %4104 = vmatprep.subr.mxu0 0.0
    %4105 = vmatpush1.msra.mxu0 0.0
    %4106 = vmatprep.subr.mxu0 0.0
    %4107 = vmatpush1.msra.mxu0 0.0
    %4108 = vmatprep.subr.mxu0 0.0
    %4109 = vmatpush1.msra.mxu0 0.0
    %4110 = vmatprep.subr.mxu0 0.0
    %4111 = vmatpush1.msra.mxu0 0.0
    %4112 = vmatprep.subr.mxu0 0.0
    %4113 = vmatpush1.msra.mxu0 0.0
    %4114 = vmatprep.subr.mxu0 0.0
    %4115 = vmatpush1.msra.mxu0 0.0
    %4116 = vmatprep.subr.mxu0 0.0
    %4117 = vmatpush1.msra.mxu0 0.0
    %4118 = vmatprep.subr.mxu0 0.0
    %4119 = vmatpush1.msra.mxu0 0.0
    %4120 = vmatprep.subr.mxu0 0.0
    %4121 = vmatpush1.msra.mxu0 0.0
    %4122 = vmatprep.subr.mxu0 0.0
    %4123 = vmatpush1.msra.mxu0 0.0
    %4124 = vmatprep.subr.mxu0 0.0
    %4125 = vmatpush1.msra.mxu0 0.0
    %4126 = vmatprep.subr.mxu0 0.0
    %4127 = vmatpush1.msra.mxu0 0.0
    %4128 = vmatprep.subr.mxu0 0.0
    %4129 = vmatpush1.msra.mxu0 0.0
    %4130 = vmatprep.subr.mxu0 0.0
    %4131 = vmatpush1.msra.mxu0 0.0
    %4132 = vmatprep.subr.mxu0 0.0
    %4133 = vmatpush1.msra.mxu0 0.0
    %4134 = vmatprep.subr.mxu0 0.0
    %4135 = vmatpush1.msra.mxu0 0.0
    %4136 = vmatprep.mubr.f32.mxu0 0.0
    %v4137 = vand.u32 %v3843, 4294901760
    %v4138 = vsub.f32 %v3843, %v4137
    %v4139 = vand.u32 %v4138, 4294901760
    %4140 = vmatmul.mubr.f32.gmra.mrb[0].mxu0 %v4139
    %v4141 = vpop.f32.mrb[0].mxu0
    %v4142 = vadd.f32 %v4068, %v4141
    %v4143 = vpop.f32.mrb[0].mxu0
    %4144 = vdwg.mxu0
    %4145 = vmatprep.subr.mxu0 0.0
    %v4146 = vand.u32 %v3841, 4294901760
    %v4147 = vsub.f32 %v3841, %v4146
    %v4148 = vand.u32 %v4147, 4294901760
    %4149 = vmatpush1.msra.mxu0 %v4148
    %4150 = vmatprep.subr.mxu0 0.0
    %4151 = vmatpush1.msra.mxu0 0.0
    %4152 = vmatprep.subr.mxu0 0.0
    %4153 = vmatpush1.msra.mxu0 0.0
    %4154 = vmatprep.subr.mxu0 0.0
    %4155 = vmatpush1.msra.mxu0 0.0
    %4156 = vmatprep.subr.mxu0 0.0
    %4157 = vmatpush1.msra.mxu0 0.0
    %4158 = vmatprep.subr.mxu0 0.0
    %4159 = vmatpush1.msra.mxu0 0.0
    %4160 = vmatprep.subr.mxu0 0.0
    %4161 = vmatpush1.msra.mxu0 0.0
    %4162 = vmatprep.subr.mxu0 0.0
    %4163 = vmatpush1.msra.mxu0 0.0
    %4164 = vmatprep.subr.mxu0 0.0
    %4165 = vmatpush1.msra.mxu0 0.0
    %4166 = vmatprep.subr.mxu0 0.0
    %4167 = vmatpush1.msra.mxu0 0.0
    %4168 = vmatprep.subr.mxu0 0.0
    %4169 = vmatpush1.msra.mxu0 0.0
    %4170 = vmatprep.subr.mxu0 0.0
    %4171 = vmatpush1.msra.mxu0 0.0
    %4172 = vmatprep.subr.mxu0 0.0
    %4173 = vmatpush1.msra.mxu0 0.0
    %4174 = vmatprep.subr.mxu0 0.0
    %4175 = vmatpush1.msra.mxu0 0.0
    %4176 = vmatprep.subr.mxu0 0.0
    %4177 = vmatpush1.msra.mxu0 0.0
    %4178 = vmatprep.subr.mxu0 0.0
    %4179 = vmatpush1.msra.mxu0 0.0
    %4180 = vmatprep.subr.mxu0 0.0
    %4181 = vmatpush1.msra.mxu0 0.0
    %4182 = vmatprep.subr.mxu0 0.0
    %4183 = vmatpush1.msra.mxu0 0.0
    %4184 = vmatprep.subr.mxu0 0.0
    %4185 = vmatpush1.msra.mxu0 0.0
    %4186 = vmatprep.subr.mxu0 0.0
    %4187 = vmatpush1.msra.mxu0 0.0
    %4188 = vmatprep.subr.mxu0 0.0
    %4189 = vmatpush1.msra.mxu0 0.0
    %4190 = vmatprep.subr.mxu0 0.0
    %4191 = vmatpush1.msra.mxu0 0.0
    %4192 = vmatprep.subr.mxu0 0.0
    %4193 = vmatpush1.msra.mxu0 0.0
    %4194 = vmatprep.subr.mxu0 0.0
    %4195 = vmatpush1.msra.mxu0 0.0
    %4196 = vmatprep.subr.mxu0 0.0
    %4197 = vmatpush1.msra.mxu0 0.0
    %4198 = vmatprep.subr.mxu0 0.0
    %4199 = vmatpush1.msra.mxu0 0.0
    %4200 = vmatprep.subr.mxu0 0.0
    %4201 = vmatpush1.msra.mxu0 0.0
    %4202 = vmatprep.subr.mxu0 0.0
    %4203 = vmatpush1.msra.mxu0 0.0
    %4204 = vmatprep.subr.mxu0 0.0
    %4205 = vmatpush1.msra.mxu0 0.0
    %4206 = vmatprep.subr.mxu0 0.0
    %4207 = vmatpush1.msra.mxu0 0.0
    %4208 = vmatprep.subr.mxu0 0.0
    %4209 = vmatpush1.msra.mxu0 0.0
    %4210 = vmatprep.subr.mxu0 0.0
    %4211 = vmatpush1.msra.mxu0 0.0
    %4212 = vmatprep.mubr.f32.mxu0 0.0
    %v4213 = vand.u32 %v3843, 4294901760
    %4214 = vmatmul.mubr.f32.gmra.mrb[0].mxu0 %v4213
    %v4215 = vpop.f32.mrb[0].mxu0
    %v4216 = vadd.f32 %v4142, %v4215
    %v4217 = vpop.f32.mrb[0].mxu0
    %4218 = vdwg.mxu0
    %4219 = vmatprep.subr.mxu0 0.0
    %v4220 = vand.u32 %v3841, 4294901760
    %4221 = vmatpush1.msra.mxu0 %v4220
    %4222 = vmatprep.subr.mxu0 0.0
    %4223 = vmatpush1.msra.mxu0 0.0
    %4224 = vmatprep.subr.mxu0 0.0
    %4225 = vmatpush1.msra.mxu0 0.0
    %4226 = vmatprep.subr.mxu0 0.0
    %4227 = vmatpush1.msra.mxu0 0.0
    %4228 = vmatprep.subr.mxu0 0.0
    %4229 = vmatpush1.msra.mxu0 0.0
    %4230 = vmatprep.subr.mxu0 0.0
    %4231 = vmatpush1.msra.mxu0 0.0
    %4232 = vmatprep.subr.mxu0 0.0
    %4233 = vmatpush1.msra.mxu0 0.0
    %4234 = vmatprep.subr.mxu0 0.0
    %4235 = vmatpush1.msra.mxu0 0.0
    %4236 = vmatprep.subr.mxu0 0.0
    %4237 = vmatpush1.msra.mxu0 0.0
    %4238 = vmatprep.subr.mxu0 0.0
    %4239 = vmatpush1.msra.mxu0 0.0
    %4240 = vmatprep.subr.mxu0 0.0
    %4241 = vmatpush1.msra.mxu0 0.0
    %4242 = vmatprep.subr.mxu0 0.0
    %4243 = vmatpush1.msra.mxu0 0.0
    %4244 = vmatprep.subr.mxu0 0.0
    %4245 = vmatpush1.msra.mxu0 0.0
    %4246 = vmatprep.subr.mxu0 0.0
    %4247 = vmatpush1.msra.mxu0 0.0
    %4248 = vmatprep.subr.mxu0 0.0
    %4249 = vmatpush1.msra.mxu0 0.0
    %4250 = vmatprep.subr.mxu0 0.0
    %4251 = vmatpush1.msra.mxu0 0.0
    %4252 = vmatprep.subr.mxu0 0.0
    %4253 = vmatpush1.msra.mxu0 0.0
    %4254 = vmatprep.subr.mxu0 0.0
    %4255 = vmatpush1.msra.mxu0 0.0
    %4256 = vmatprep.subr.mxu0 0.0
    %4257 = vmatpush1.msra.mxu0 0.0
    %4258 = vmatprep.subr.mxu0 0.0
    %4259 = vmatpush1.msra.mxu0 0.0
    %4260 = vmatprep.subr.mxu0 0.0
    %4261 = vmatpush1.msra.mxu0 0.0
    %4262 = vmatprep.subr.mxu0 0.0
    %4263 = vmatpush1.msra.mxu0 0.0
    %4264 = vmatprep.subr.mxu0 0.0
    %4265 = vmatpush1.msra.mxu0 0.0
    %4266 = vmatprep.subr.mxu0 0.0
    %4267 = vmatpush1.msra.mxu0 0.0
    %4268 = vmatprep.subr.mxu0 0.0
    %4269 = vmatpush1.msra.mxu0 0.0
    %4270 = vmatprep.subr.mxu0 0.0
    %4271 = vmatpush1.msra.mxu0 0.0
    %4272 = vmatprep.subr.mxu0 0.0
    %4273 = vmatpush1.msra.mxu0 0.0
    %4274 = vmatprep.subr.mxu0 0.0
    %4275 = vmatpush1.msra.mxu0 0.0
    %4276 = vmatprep.subr.mxu0 0.0
    %4277 = vmatpush1.msra.mxu0 0.0
    %4278 = vmatprep.subr.mxu0 0.0
    %4279 = vmatpush1.msra.mxu0 0.0
    %4280 = vmatprep.subr.mxu0 0.0
    %4281 = vmatpush1.msra.mxu0 0.0
    %4282 = vmatprep.subr.mxu0 0.0
    %4283 = vmatpush1.msra.mxu0 0.0
    %4284 = vmatprep.mubr.f32.mxu0 0.0
    %v4285 = vand.u32 %v3843, 4294901760
    %4286 = vmatmul.mubr.f32.gmra.mrb[0].mxu0 %v4285
    %v4287 = vpop.f32.mrb[0].mxu0
    %v4288 = vadd.f32 %v4216, %v4287
    %v4289 = vpop.f32.mrb[0].mxu0
    %4290 = vdwg.mxu0
    %v4291 = vrcp.pop %v4288
    %v4292 = vmul.f32 %v3840, %v4291
    %v4293 = vld [vmem:[%s11] sm:$0xff]
    %v4294 = vld [vmem:[%s11 + $0x8] sm:$0xff]
    %v4296 = vsel %vm3834, %v4292, 0
    %v4298 = vand.u32 %v4294, 4294901760
    %4299 = vmatprep.subr.mxu0 %v4298
    %v4300 = vand.u32 %v4293, 4294901760
    %4301 = vmatpush1.msra.mxu0 %v4300
    %4302 = vmatprep.subr.mxu0 0.0
    %4303 = vmatpush1.msra.mxu0 0.0
    %4304 = vmatprep.subr.mxu0 0.0
    %4305 = vmatpush1.msra.mxu0 0.0
    %4306 = vmatprep.subr.mxu0 0.0
    %4307 = vmatpush1.msra.mxu0 0.0
    %4308 = vmatprep.subr.mxu0 0.0
    %4309 = vmatpush1.msra.mxu0 0.0
    %4310 = vmatprep.subr.mxu0 0.0
    %4311 = vmatpush1.msra.mxu0 0.0
    %4312 = vmatprep.subr.mxu0 0.0
    %4313 = vmatpush1.msra.mxu0 0.0
    %4314 = vmatprep.subr.mxu0 0.0
    %4315 = vmatpush1.msra.mxu0 0.0
    %4316 = vmatprep.subr.mxu0 0.0
    %4317 = vmatpush1.msra.mxu0 0.0
    %4318 = vmatprep.subr.mxu0 0.0
    %4319 = vmatpush1.msra.mxu0 0.0
    %4320 = vmatprep.subr.mxu0 0.0
    %4321 = vmatpush1.msra.mxu0 0.0
    %4322 = vmatprep.subr.mxu0 0.0
    %4323 = vmatpush1.msra.mxu0 0.0
    %4324 = vmatprep.subr.mxu0 0.0
    %4325 = vmatpush1.msra.mxu0 0.0
    %4326 = vmatprep.subr.mxu0 0.0
    %4327 = vmatpush1.msra.mxu0 0.0
    %4328 = vmatprep.subr.mxu0 0.0
    %4329 = vmatpush1.msra.mxu0 0.0
    %4330 = vmatprep.subr.mxu0 0.0
    %4331 = vmatpush1.msra.mxu0 0.0
    %4332 = vmatprep.subr.mxu0 0.0
    %4333 = vmatpush1.msra.mxu0 0.0
    %4334 = vmatprep.subr.mxu0 0.0
    %4335 = vmatpush1.msra.mxu0 0.0
    %4336 = vmatprep.subr.mxu0 0.0
    %4337 = vmatpush1.msra.mxu0 0.0
    %4338 = vmatprep.subr.mxu0 0.0
    %4339 = vmatpush1.msra.mxu0 0.0
    %4340 = vmatprep.subr.mxu0 0.0
    %4341 = vmatpush1.msra.mxu0 0.0
    %4342 = vmatprep.subr.mxu0 0.0
    %4343 = vmatpush1.msra.mxu0 0.0
    %4344 = vmatprep.subr.mxu0 0.0
    %4345 = vmatpush1.msra.mxu0 0.0
    %4346 = vmatprep.subr.mxu0 0.0
    %4347 = vmatpush1.msra.mxu0 0.0
    %4348 = vmatprep.subr.mxu0 0.0
    %4349 = vmatpush1.msra.mxu0 0.0
    %4350 = vmatprep.subr.mxu0 0.0
    %4351 = vmatpush1.msra.mxu0 0.0
    %4352 = vmatprep.subr.mxu0 0.0
    %4353 = vmatpush1.msra.mxu0 0.0
    %4354 = vmatprep.subr.mxu0 0.0
    %4355 = vmatpush1.msra.mxu0 0.0
    %4356 = vmatprep.subr.mxu0 0.0
    %4357 = vmatpush1.msra.mxu0 0.0
    %4358 = vmatprep.subr.mxu0 0.0
    %4359 = vmatpush1.msra.mxu0 0.0
    %4360 = vmatprep.subr.mxu0 0.0
    %4361 = vmatpush1.msra.mxu0 0.0
    %4362 = vmatprep.subr.mxu0 0.0
    %4363 = vmatpush1.msra.mxu0 0.0
    %4364 = vmatprep.mubr.f32.mxu0 0.0
    %v4365 = vand.u32 %v4296, 4294901760
    %v4366 = vsub.f32 %v4296, %v4365
    %v4367 = vand.u32 %v4366, 4294901760
    %v4368 = vsub.f32 %v4366, %v4367
    %v4369 = vand.u32 %v4368, 4294901760
    %4370 = vmatmul.mubr.f32.gmra.mrb[0].mxu0 %v4369
    %v4371 = vpop.f32.mrb[0].mxu0
    %v4372 = vadd.f32 0.0, %v4371
    %v4373 = vpop.f32.mrb[0].mxu0
    %v4374 = vadd.f32 0.0, %v4373
    %4375 = vdwg.mxu0
    %v4376 = vand.u32 %v4294, 4294901760
    %v4377 = vsub.f32 %v4294, %v4376
    %v4378 = vand.u32 %v4377, 4294901760
    %v4379 = vsub.f32 %v4377, %v4378
    %v4380 = vand.u32 %v4379, 4294901760
    %4381 = vmatprep.subr.mxu0 %v4380
    %v4382 = vand.u32 %v4293, 4294901760
    %v4383 = vsub.f32 %v4293, %v4382
    %v4384 = vand.u32 %v4383, 4294901760
    %v4385 = vsub.f32 %v4383, %v4384
    %v4386 = vand.u32 %v4385, 4294901760
    %4387 = vmatpush1.msra.mxu0 %v4386
    %4388 = vmatprep.subr.mxu0 0.0
    %4389 = vmatpush1.msra.mxu0 0.0
    %4390 = vmatprep.subr.mxu0 0.0
    %4391 = vmatpush1.msra.mxu0 0.0
    %4392 = vmatprep.subr.mxu0 0.0
    %4393 = vmatpush1.msra.mxu0 0.0
    %4394 = vmatprep.subr.mxu0 0.0
    %4395 = vmatpush1.msra.mxu0 0.0
    %4396 = vmatprep.subr.mxu0 0.0
    %4397 = vmatpush1.msra.mxu0 0.0
    %4398 = vmatprep.subr.mxu0 0.0
    %4399 = vmatpush1.msra.mxu0 0.0
    %4400 = vmatprep.subr.mxu0 0.0
    %4401 = vmatpush1.msra.mxu0 0.0
    %4402 = vmatprep.subr.mxu0 0.0
    %4403 = vmatpush1.msra.mxu0 0.0
    %4404 = vmatprep.subr.mxu0 0.0
    %4405 = vmatpush1.msra.mxu0 0.0
    %4406 = vmatprep.subr.mxu0 0.0
    %4407 = vmatpush1.msra.mxu0 0.0
    %4408 = vmatprep.subr.mxu0 0.0
    %4409 = vmatpush1.msra.mxu0 0.0
    %4410 = vmatprep.subr.mxu0 0.0
    %4411 = vmatpush1.msra.mxu0 0.0
    %4412 = vmatprep.subr.mxu0 0.0
    %4413 = vmatpush1.msra.mxu0 0.0
    %4414 = vmatprep.subr.mxu0 0.0
    %4415 = vmatpush1.msra.mxu0 0.0
    %4416 = vmatprep.subr.mxu0 0.0
    %4417 = vmatpush1.msra.mxu0 0.0
    %4418 = vmatprep.subr.mxu0 0.0
    %4419 = vmatpush1.msra.mxu0 0.0
    %4420 = vmatprep.subr.mxu0 0.0
    %4421 = vmatpush1.msra.mxu0 0.0
    %4422 = vmatprep.subr.mxu0 0.0
    %4423 = vmatpush1.msra.mxu0 0.0
    %4424 = vmatprep.subr.mxu0 0.0
    %4425 = vmatpush1.msra.mxu0 0.0
    %4426 = vmatprep.subr.mxu0 0.0
    %4427 = vmatpush1.msra.mxu0 0.0
    %4428 = vmatprep.subr.mxu0 0.0
    %4429 = vmatpush1.msra.mxu0 0.0
    %4430 = vmatprep.subr.mxu0 0.0
    %4431 = vmatpush1.msra.mxu0 0.0
    %4432 = vmatprep.subr.mxu0 0.0
    %4433 = vmatpush1.msra.mxu0 0.0
    %4434 = vmatprep.subr.mxu0 0.0
    %4435 = vmatpush1.msra.mxu0 0.0
    %4436 = vmatprep.subr.mxu0 0.0
    %4437 = vmatpush1.msra.mxu0 0.0
    %4438 = vmatprep.subr.mxu0 0.0
    %4439 = vmatpush1.msra.mxu0 0.0
    %4440 = vmatprep.subr.mxu0 0.0
    %4441 = vmatpush1.msra.mxu0 0.0
    %4442 = vmatprep.subr.mxu0 0.0
    %4443 = vmatpush1.msra.mxu0 0.0
    %4444 = vmatprep.subr.mxu0 0.0
    %4445 = vmatpush1.msra.mxu0 0.0
    %4446 = vmatprep.subr.mxu0 0.0
    %4447 = vmatpush1.msra.mxu0 0.0
    %4448 = vmatprep.subr.mxu0 0.0
    %4449 = vmatpush1.msra.mxu0 0.0
    %4450 = vmatprep.mubr.f32.mxu0 0.0
    %v4451 = vand.u32 %v4296, 4294901760
    %4452 = vmatmul.mubr.f32.gmra.mrb[0].mxu0 %v4451
    %v4453 = vpop.f32.mrb[0].mxu0
    %v4454 = vadd.f32 %v4372, %v4453
    %v4455 = vpop.f32.mrb[0].mxu0
    %v4456 = vadd.f32 %v4374, %v4455
    %4457 = vdwg.mxu0
    %v4458 = vand.u32 %v4294, 4294901760
    %v4459 = vsub.f32 %v4294, %v4458
    %4460 = vmatprep.subr.mxu0 %v4459
    %v4461 = vand.u32 %v4293, 4294901760
    %v4462 = vsub.f32 %v4293, %v4461
    %4463 = vmatpush1.msra.mxu0 %v4462
    %4464 = vmatprep.subr.mxu0 0.0
    %4465 = vmatpush1.msra.mxu0 0.0
    %4466 = vmatprep.subr.mxu0 0.0
    %4467 = vmatpush1.msra.mxu0 0.0
    %4468 = vmatprep.subr.mxu0 0.0
    %4469 = vmatpush1.msra.mxu0 0.0
    %4470 = vmatprep.subr.mxu0 0.0
    %4471 = vmatpush1.msra.mxu0 0.0
    %4472 = vmatprep.subr.mxu0 0.0
    %4473 = vmatpush1.msra.mxu0 0.0
    %4474 = vmatprep.subr.mxu0 0.0
    %4475 = vmatpush1.msra.mxu0 0.0
    %4476 = vmatprep.subr.mxu0 0.0
    %4477 = vmatpush1.msra.mxu0 0.0
    %4478 = vmatprep.subr.mxu0 0.0
    %4479 = vmatpush1.msra.mxu0 0.0
    %4480 = vmatprep.subr.mxu0 0.0
    %4481 = vmatpush1.msra.mxu0 0.0
    %4482 = vmatprep.subr.mxu0 0.0
    %4483 = vmatpush1.msra.mxu0 0.0
    %4484 = vmatprep.subr.mxu0 0.0
    %4485 = vmatpush1.msra.mxu0 0.0
    %4486 = vmatprep.subr.mxu0 0.0
    %4487 = vmatpush1.msra.mxu0 0.0
    %4488 = vmatprep.subr.mxu0 0.0
    %4489 = vmatpush1.msra.mxu0 0.0
    %4490 = vmatprep.subr.mxu0 0.0
    %4491 = vmatpush1.msra.mxu0 0.0
    %4492 = vmatprep.subr.mxu0 0.0
    %4493 = vmatpush1.msra.mxu0 0.0
    %4494 = vmatprep.subr.mxu0 0.0
    %4495 = vmatpush1.msra.mxu0 0.0
    %4496 = vmatprep.subr.mxu0 0.0
    %4497 = vmatpush1.msra.mxu0 0.0
    %4498 = vmatprep.subr.mxu0 0.0
    %4499 = vmatpush1.msra.mxu0 0.0
    %4500 = vmatprep.subr.mxu0 0.0
    %4501 = vmatpush1.msra.mxu0 0.0
    %4502 = vmatprep.subr.mxu0 0.0
    %4503 = vmatpush1.msra.mxu0 0.0
    %4504 = vmatprep.subr.mxu0 0.0
    %4505 = vmatpush1.msra.mxu0 0.0
    %4506 = vmatprep.subr.mxu0 0.0
    %4507 = vmatpush1.msra.mxu0 0.0
    %4508 = vmatprep.subr.mxu0 0.0
    %4509 = vmatpush1.msra.mxu0 0.0
    %4510 = vmatprep.subr.mxu0 0.0
    %4511 = vmatpush1.msra.mxu0 0.0
    %4512 = vmatprep.subr.mxu0 0.0
    %4513 = vmatpush1.msra.mxu0 0.0
    %4514 = vmatprep.subr.mxu0 0.0
    %4515 = vmatpush1.msra.mxu0 0.0
    %4516 = vmatprep.subr.mxu0 0.0
    %4517 = vmatpush1.msra.mxu0 0.0
    %4518 = vmatprep.subr.mxu0 0.0
    %4519 = vmatpush1.msra.mxu0 0.0
    %4520 = vmatprep.subr.mxu0 0.0
    %4521 = vmatpush1.msra.mxu0 0.0
    %4522 = vmatprep.subr.mxu0 0.0
    %4523 = vmatpush1.msra.mxu0 0.0
    %4524 = vmatprep.subr.mxu0 0.0
    %4525 = vmatpush1.msra.mxu0 0.0
    %4526 = vmatprep.mubr.f32.mxu0 0.0
    %v4527 = vand.u32 %v4296, 4294901760
    %v4528 = vsub.f32 %v4296, %v4527
    %4529 = vmatmul.mubr.f32.gmra.mrb[0].mxu0 %v4528
    %v4530 = vpop.f32.mrb[0].mxu0
    %v4531 = vadd.f32 %v4454, %v4530
    %v4532 = vpop.f32.mrb[0].mxu0
    %v4533 = vadd.f32 %v4456, %v4532
    %4534 = vdwg.mxu0
    %v4535 = vand.u32 %v4294, 4294901760
    %4536 = vmatprep.subr.mxu0 %v4535
    %v4537 = vand.u32 %v4293, 4294901760
    %4538 = vmatpush1.msra.mxu0 %v4537
    %4539 = vmatprep.subr.mxu0 0.0
    %4540 = vmatpush1.msra.mxu0 0.0
    %4541 = vmatprep.subr.mxu0 0.0
    %4542 = vmatpush1.msra.mxu0 0.0
    %4543 = vmatprep.subr.mxu0 0.0
    %4544 = vmatpush1.msra.mxu0 0.0
    %4545 = vmatprep.subr.mxu0 0.0
    %4546 = vmatpush1.msra.mxu0 0.0
    %4547 = vmatprep.subr.mxu0 0.0
    %4548 = vmatpush1.msra.mxu0 0.0
    %4549 = vmatprep.subr.mxu0 0.0
    %4550 = vmatpush1.msra.mxu0 0.0
    %4551 = vmatprep.subr.mxu0 0.0
    %4552 = vmatpush1.msra.mxu0 0.0
    %4553 = vmatprep.subr.mxu0 0.0
    %4554 = vmatpush1.msra.mxu0 0.0
    %4555 = vmatprep.subr.mxu0 0.0
    %4556 = vmatpush1.msra.mxu0 0.0
    %4557 = vmatprep.subr.mxu0 0.0
    %4558 = vmatpush1.msra.mxu0 0.0
    %4559 = vmatprep.subr.mxu0 0.0
    %4560 = vmatpush1.msra.mxu0 0.0
    %4561 = vmatprep.subr.mxu0 0.0
    %4562 = vmatpush1.msra.mxu0 0.0
    %4563 = vmatprep.subr.mxu0 0.0
    %4564 = vmatpush1.msra.mxu0 0.0
    %4565 = vmatprep.subr.mxu0 0.0
    %4566 = vmatpush1.msra.mxu0 0.0
    %4567 = vmatprep.subr.mxu0 0.0
    %4568 = vmatpush1.msra.mxu0 0.0
    %4569 = vmatprep.subr.mxu0 0.0
    %4570 = vmatpush1.msra.mxu0 0.0
    %4571 = vmatprep.subr.mxu0 0.0
    %4572 = vmatpush1.msra.mxu0 0.0
    %4573 = vmatprep.subr.mxu0 0.0
    %4574 = vmatpush1.msra.mxu0 0.0
    %4575 = vmatprep.subr.mxu0 0.0
    %4576 = vmatpush1.msra.mxu0 0.0
    %4577 = vmatprep.subr.mxu0 0.0
    %4578 = vmatpush1.msra.mxu0 0.0
    %4579 = vmatprep.subr.mxu0 0.0
    %4580 = vmatpush1.msra.mxu0 0.0
    %4581 = vmatprep.subr.mxu0 0.0
    %4582 = vmatpush1.msra.mxu0 0.0
    %4583 = vmatprep.subr.mxu0 0.0
    %4584 = vmatpush1.msra.mxu0 0.0
    %4585 = vmatprep.subr.mxu0 0.0
    %4586 = vmatpush1.msra.mxu0 0.0
    %4587 = vmatprep.subr.mxu0 0.0
    %4588 = vmatpush1.msra.mxu0 0.0
    %4589 = vmatprep.subr.mxu0 0.0
    %4590 = vmatpush1.msra.mxu0 0.0
    %4591 = vmatprep.subr.mxu0 0.0
    %4592 = vmatpush1.msra.mxu0 0.0
    %4593 = vmatprep.subr.mxu0 0.0
    %4594 = vmatpush1.msra.mxu0 0.0
    %4595 = vmatprep.subr.mxu0 0.0
    %4596 = vmatpush1.msra.mxu0 0.0
    %4597 = vmatprep.subr.mxu0 0.0
    %4598 = vmatpush1.msra.mxu0 0.0
    %4599 = vmatprep.subr.mxu0 0.0
    %4600 = vmatpush1.msra.mxu0 0.0
    %4601 = vmatprep.mubr.f32.mxu0 0.0
    %v4602 = vand.u32 %v4296, 4294901760
    %v4603 = vsub.f32 %v4296, %v4602
    %v4604 = vand.u32 %v4603, 4294901760
    %4605 = vmatmul.mubr.f32.gmra.mrb[0].mxu0 %v4604
    %v4606 = vpop.f32.mrb[0].mxu0
    %v4607 = vadd.f32 %v4531, %v4606
    %v4608 = vpop.f32.mrb[0].mxu0
    %v4609 = vadd.f32 %v4533, %v4608
    %4610 = vdwg.mxu0
    %v4611 = vand.u32 %v4294, 4294901760
    %v4612 = vsub.f32 %v4294, %v4611
    %v4613 = vand.u32 %v4612, 4294901760
    %4614 = vmatprep.subr.mxu0 %v4613
    %v4615 = vand.u32 %v4293, 4294901760
    %v4616 = vsub.f32 %v4293, %v4615
    %v4617 = vand.u32 %v4616, 4294901760
    %4618 = vmatpush1.msra.mxu0 %v4617
    %4619 = vmatprep.subr.mxu0 0.0
    %4620 = vmatpush1.msra.mxu0 0.0
    %4621 = vmatprep.subr.mxu0 0.0
    %4622 = vmatpush1.msra.mxu0 0.0
    %4623 = vmatprep.subr.mxu0 0.0
    %4624 = vmatpush1.msra.mxu0 0.0
    %4625 = vmatprep.subr.mxu0 0.0
    %4626 = vmatpush1.msra.mxu0 0.0
    %4627 = vmatprep.subr.mxu0 0.0
    %4628 = vmatpush1.msra.mxu0 0.0
    %4629 = vmatprep.subr.mxu0 0.0
    %4630 = vmatpush1.msra.mxu0 0.0
    %4631 = vmatprep.subr.mxu0 0.0
    %4632 = vmatpush1.msra.mxu0 0.0
    %4633 = vmatprep.subr.mxu0 0.0
    %4634 = vmatpush1.msra.mxu0 0.0
    %4635 = vmatprep.subr.mxu0 0.0
    %4636 = vmatpush1.msra.mxu0 0.0
    %4637 = vmatprep.subr.mxu0 0.0
    %4638 = vmatpush1.msra.mxu0 0.0
    %4639 = vmatprep.subr.mxu0 0.0
    %4640 = vmatpush1.msra.mxu0 0.0
    %4641 = vmatprep.subr.mxu0 0.0
    %4642 = vmatpush1.msra.mxu0 0.0
    %4643 = vmatprep.subr.mxu0 0.0
    %4644 = vmatpush1.msra.mxu0 0.0
    %4645 = vmatprep.subr.mxu0 0.0
    %4646 = vmatpush1.msra.mxu0 0.0
    %4647 = vmatprep.subr.mxu0 0.0
    %4648 = vmatpush1.msra.mxu0 0.0
    %4649 = vmatprep.subr.mxu0 0.0
    %4650 = vmatpush1.msra.mxu0 0.0
    %4651 = vmatprep.subr.mxu0 0.0
    %4652 = vmatpush1.msra.mxu0 0.0
    %4653 = vmatprep.subr.mxu0 0.0
    %4654 = vmatpush1.msra.mxu0 0.0
    %4655 = vmatprep.subr.mxu0 0.0
    %4656 = vmatpush1.msra.mxu0 0.0
    %4657 = vmatprep.subr.mxu0 0.0
    %4658 = vmatpush1.msra.mxu0 0.0
    %4659 = vmatprep.subr.mxu0 0.0
    %4660 = vmatpush1.msra.mxu0 0.0
    %4661 = vmatprep.subr.mxu0 0.0
    %4662 = vmatpush1.msra.mxu0 0.0
    %4663 = vmatprep.subr.mxu0 0.0
    %4664 = vmatpush1.msra.mxu0 0.0
    %4665 = vmatprep.subr.mxu0 0.0
    %4666 = vmatpush1.msra.mxu0 0.0
    %4667 = vmatprep.subr.mxu0 0.0
    %4668 = vmatpush1.msra.mxu0 0.0
    %4669 = vmatprep.subr.mxu0 0.0
    %4670 = vmatpush1.msra.mxu0 0.0
    %4671 = vmatprep.subr.mxu0 0.0
    %4672 = vmatpush1.msra.mxu0 0.0
    %4673 = vmatprep.subr.mxu0 0.0
    %4674 = vmatpush1.msra.mxu0 0.0
    %4675 = vmatprep.subr.mxu0 0.0
    %4676 = vmatpush1.msra.mxu0 0.0
    %4677 = vmatprep.subr.mxu0 0.0
    %4678 = vmatpush1.msra.mxu0 0.0
    %4679 = vmatprep.subr.mxu0 0.0
    %4680 = vmatpush1.msra.mxu0 0.0
    %4681 = vmatprep.mubr.f32.mxu0 0.0
    %v4682 = vand.u32 %v4296, 4294901760
    %4683 = vmatmul.mubr.f32.gmra.mrb[0].mxu0 %v4682
    %v4684 = vpop.f32.mrb[0].mxu0
    %v4685 = vadd.f32 %v4607, %v4684
    %v4686 = vpop.f32.mrb[0].mxu0
    %v4687 = vadd.f32 %v4609, %v4686
    %4688 = vdwg.mxu0
    %v4689 = vand.u32 %v4294, 4294901760
    %4690 = vmatprep.subr.mxu0 %v4689
    %v4691 = vand.u32 %v4293, 4294901760
    %4692 = vmatpush1.msra.mxu0 %v4691
    %4693 = vmatprep.subr.mxu0 0.0
    %4694 = vmatpush1.msra.mxu0 0.0
    %4695 = vmatprep.subr.mxu0 0.0
    %4696 = vmatpush1.msra.mxu0 0.0
    %4697 = vmatprep.subr.mxu0 0.0
    %4698 = vmatpush1.msra.mxu0 0.0
    %4699 = vmatprep.subr.mxu0 0.0
    %4700 = vmatpush1.msra.mxu0 0.0
    %4701 = vmatprep.subr.mxu0 0.0
    %4702 = vmatpush1.msra.mxu0 0.0
    %4703 = vmatprep.subr.mxu0 0.0
    %4704 = vmatpush1.msra.mxu0 0.0
    %4705 = vmatprep.subr.mxu0 0.0
    %4706 = vmatpush1.msra.mxu0 0.0
    %4707 = vmatprep.subr.mxu0 0.0
    %4708 = vmatpush1.msra.mxu0 0.0
    %4709 = vmatprep.subr.mxu0 0.0
    %4710 = vmatpush1.msra.mxu0 0.0
    %4711 = vmatprep.subr.mxu0 0.0
    %4712 = vmatpush1.msra.mxu0 0.0
    %4713 = vmatprep.subr.mxu0 0.0
    %4714 = vmatpush1.msra.mxu0 0.0
    %4715 = vmatprep.subr.mxu0 0.0
    %4716 = vmatpush1.msra.mxu0 0.0
    %4717 = vmatprep.subr.mxu0 0.0
    %4718 = vmatpush1.msra.mxu0 0.0
    %4719 = vmatprep.subr.mxu0 0.0
    %4720 = vmatpush1.msra.mxu0 0.0
    %4721 = vmatprep.subr.mxu0 0.0
    %4722 = vmatpush1.msra.mxu0 0.0
    %4723 = vmatprep.subr.mxu0 0.0
    %4724 = vmatpush1.msra.mxu0 0.0
    %4725 = vmatprep.subr.mxu0 0.0
    %4726 = vmatpush1.msra.mxu0 0.0
    %4727 = vmatprep.subr.mxu0 0.0
    %4728 = vmatpush1.msra.mxu0 0.0
    %4729 = vmatprep.subr.mxu0 0.0
    %4730 = vmatpush1.msra.mxu0 0.0
    %4731 = vmatprep.subr.mxu0 0.0
    %4732 = vmatpush1.msra.mxu0 0.0
    %4733 = vmatprep.subr.mxu0 0.0
    %4734 = vmatpush1.msra.mxu0 0.0
    %4735 = vmatprep.subr.mxu0 0.0
    %4736 = vmatpush1.msra.mxu0 0.0
    %4737 = vmatprep.subr.mxu0 0.0
    %4738 = vmatpush1.msra.mxu0 0.0
    %4739 = vmatprep.subr.mxu0 0.0
    %4740 = vmatpush1.msra.mxu0 0.0
    %4741 = vmatprep.subr.mxu0 0.0
    %4742 = vmatpush1.msra.mxu0 0.0
    %4743 = vmatprep.subr.mxu0 0.0
    %4744 = vmatpush1.msra.mxu0 0.0
    %4745 = vmatprep.subr.mxu0 0.0
    %4746 = vmatpush1.msra.mxu0 0.0
    %4747 = vmatprep.subr.mxu0 0.0
    %4748 = vmatpush1.msra.mxu0 0.0
    %4749 = vmatprep.subr.mxu0 0.0
    %4750 = vmatpush1.msra.mxu0 0.0
    %4751 = vmatprep.subr.mxu0 0.0
    %4752 = vmatpush1.msra.mxu0 0.0
    %4753 = vmatprep.subr.mxu0 0.0
    %4754 = vmatpush1.msra.mxu0 0.0
    %4755 = vmatprep.mubr.f32.mxu0 0.0
    %v4756 = vand.u32 %v4296, 4294901760
    %4757 = vmatmul.mubr.f32.gmra.mrb[0].mxu0 %v4756
    %v4758 = vpop.f32.mrb[0].mxu0
    %v4759 = vadd.f32 %v4685, %v4758
    %v4760 = vpop.f32.mrb[0].mxu0
    %v4761 = vadd.f32 %v4687, %v4760
    %4762 = vdwg.mxu0
    %v4763 = vmul.f32 %v3367, %v4759
    %v4764 = vmul.f32 %v3369, %v4761
    %v4765 = vld [vmem:[%s12] sm:$0xff]
    %v4766 = vld [vmem:[%s12 + $0x8] sm:$0xff]
    %v4767 = vld [vmem:[%s12 + $0x10] sm:$0xff]
    %v4768 = vld [vmem:[%s12 + $0x18] sm:$0xff]
    %v4769 = vld [vmem:[%s12 + $0x20] sm:$0xff]
    %v4770 = vld [vmem:[%s12 + $0x28] sm:$0xff]
    %v4771 = vld [vmem:[%s12 + $0x30] sm:$0xff]
    %v4772 = vld [vmem:[%s12 + $0x38] sm:$0xff]
    %v4773 = vld [vmem:[%s12 + $0x40] sm:$0xff]
    %v4774 = vld [vmem:[%s12 + $0x48] sm:$0xff]
    %v4775 = vld [vmem:[%s12 + $0x50] sm:$0xff]
    %v4776 = vld [vmem:[%s12 + $0x58] sm:$0xff]
    %v4777 = vld [vmem:[%s12 + $0x60] sm:$0xff]
    %v4778 = vld [vmem:[%s12 + $0x68] sm:$0xff]
    %v4779 = vld [vmem:[%s12 + $0x70] sm:$0xff]
    %v4780 = vld [vmem:[%s12 + $0x78] sm:$0xff]
    %v4781 = vld [vmem:[%s12 + $0x80] sm:$0xff]
    %v4782 = vld [vmem:[%s12 + $0x88] sm:$0xff]
    %v4783 = vld [vmem:[%s12 + $0x90] sm:$0xff]
    %v4784 = vld [vmem:[%s12 + $0x98] sm:$0xff]
    %v4785 = vld [vmem:[%s12 + $0xa0] sm:$0xff]
    %v4786 = vld [vmem:[%s12 + $0xa8] sm:$0xff]
    %v4787 = vld [vmem:[%s12 + $0xb0] sm:$0xff]
    %v4788 = vld [vmem:[%s12 + $0xb8] sm:$0xff]
    %v4789 = vld [vmem:[%s12 + $0xc0] sm:$0xff]
    %v4790 = vld [vmem:[%s12 + $0xc8] sm:$0xff]
    %v4791 = vld [vmem:[%s12 + $0xd0] sm:$0xff]
    %v4792 = vld [vmem:[%s12 + $0xd8] sm:$0xff]
    %v4793 = vld [vmem:[%s12 + $0xe0] sm:$0xff]
    %v4794 = vld [vmem:[%s12 + $0xe8] sm:$0xff]
    %v4795 = vld [vmem:[%s12 + $0xf0] sm:$0xff]
    %v4796 = vld [vmem:[%s12 + $0xf8] sm:$0xff]
    %4797 = vmatprep.subr.mxu0 0.0
    %v4798 = vand.u32 %v4765, 4294901760
    %4799 = vmatpush1.msra.mxu0 %v4798
    %4800 = vmatprep.subr.mxu0 0.0
    %v4801 = vand.u32 %v4766, 4294901760
    %4802 = vmatpush1.msra.mxu0 %v4801
    %4803 = vmatprep.subr.mxu0 0.0
    %v4804 = vand.u32 %v4767, 4294901760
    %4805 = vmatpush1.msra.mxu0 %v4804
    %4806 = vmatprep.subr.mxu0 0.0
    %v4807 = vand.u32 %v4768, 4294901760
    %4808 = vmatpush1.msra.mxu0 %v4807
    %4809 = vmatprep.subr.mxu0 0.0
    %v4810 = vand.u32 %v4769, 4294901760
    %4811 = vmatpush1.msra.mxu0 %v4810
    %4812 = vmatprep.subr.mxu0 0.0
    %v4813 = vand.u32 %v4770, 4294901760
    %4814 = vmatpush1.msra.mxu0 %v4813
    %4815 = vmatprep.subr.mxu0 0.0
    %v4816 = vand.u32 %v4771, 4294901760
    %4817 = vmatpush1.msra.mxu0 %v4816
    %4818 = vmatprep.subr.mxu0 0.0
    %v4819 = vand.u32 %v4772, 4294901760
    %4820 = vmatpush1.msra.mxu0 %v4819
    %4821 = vmatprep.subr.mxu0 0.0
    %v4822 = vand.u32 %v4773, 4294901760
    %4823 = vmatpush1.msra.mxu0 %v4822
    %4824 = vmatprep.subr.mxu0 0.0
    %v4825 = vand.u32 %v4774, 4294901760
    %4826 = vmatpush1.msra.mxu0 %v4825
    %4827 = vmatprep.subr.mxu0 0.0
    %v4828 = vand.u32 %v4775, 4294901760
    %4829 = vmatpush1.msra.mxu0 %v4828
    %4830 = vmatprep.subr.mxu0 0.0
    %v4831 = vand.u32 %v4776, 4294901760
    %4832 = vmatpush1.msra.mxu0 %v4831
    %4833 = vmatprep.subr.mxu0 0.0
    %v4834 = vand.u32 %v4777, 4294901760
    %4835 = vmatpush1.msra.mxu0 %v4834
    %4836 = vmatprep.subr.mxu0 0.0
    %v4837 = vand.u32 %v4778, 4294901760
    %4838 = vmatpush1.msra.mxu0 %v4837
    %4839 = vmatprep.subr.mxu0 0.0
    %v4840 = vand.u32 %v4779, 4294901760
    %4841 = vmatpush1.msra.mxu0 %v4840
    %4842 = vmatprep.subr.mxu0 0.0
    %v4843 = vand.u32 %v4780, 4294901760
    %4844 = vmatpush1.msra.mxu0 %v4843
    %4845 = vmatprep.subr.mxu0 0.0
    %v4846 = vand.u32 %v4781, 4294901760
    %4847 = vmatpush1.msra.mxu0 %v4846
    %4848 = vmatprep.subr.mxu0 0.0
    %v4849 = vand.u32 %v4782, 4294901760
    %4850 = vmatpush1.msra.mxu0 %v4849
    %4851 = vmatprep.subr.mxu0 0.0
    %v4852 = vand.u32 %v4783, 4294901760
    %4853 = vmatpush1.msra.mxu0 %v4852
    %4854 = vmatprep.subr.mxu0 0.0
    %v4855 = vand.u32 %v4784, 4294901760
    %4856 = vmatpush1.msra.mxu0 %v4855
    %4857 = vmatprep.subr.mxu0 0.0
    %v4858 = vand.u32 %v4785, 4294901760
    %4859 = vmatpush1.msra.mxu0 %v4858
    %4860 = vmatprep.subr.mxu0 0.0
    %v4861 = vand.u32 %v4786, 4294901760
    %4862 = vmatpush1.msra.mxu0 %v4861
    %4863 = vmatprep.subr.mxu0 0.0
    %v4864 = vand.u32 %v4787, 4294901760
    %4865 = vmatpush1.msra.mxu0 %v4864
    %4866 = vmatprep.subr.mxu0 0.0
    %v4867 = vand.u32 %v4788, 4294901760
    %4868 = vmatpush1.msra.mxu0 %v4867
    %4869 = vmatprep.subr.mxu0 0.0
    %v4870 = vand.u32 %v4789, 4294901760
    %4871 = vmatpush1.msra.mxu0 %v4870
    %4872 = vmatprep.subr.mxu0 0.0
    %v4873 = vand.u32 %v4790, 4294901760
    %4874 = vmatpush1.msra.mxu0 %v4873
    %4875 = vmatprep.subr.mxu0 0.0
    %v4876 = vand.u32 %v4791, 4294901760
    %4877 = vmatpush1.msra.mxu0 %v4876
    %4878 = vmatprep.subr.mxu0 0.0
    %v4879 = vand.u32 %v4792, 4294901760
    %4880 = vmatpush1.msra.mxu0 %v4879
    %4881 = vmatprep.subr.mxu0 0.0
    %v4882 = vand.u32 %v4793, 4294901760
    %4883 = vmatpush1.msra.mxu0 %v4882
    %4884 = vmatprep.subr.mxu0 0.0
    %v4885 = vand.u32 %v4794, 4294901760
    %4886 = vmatpush1.msra.mxu0 %v4885
    %4887 = vmatprep.subr.mxu0 0.0
    %v4888 = vand.u32 %v4795, 4294901760
    %4889 = vmatpush1.msra.mxu0 %v4888
    %4890 = vmatprep.subr.mxu0 0.0
    %v4891 = vand.u32 %v4796, 4294901760
    %4892 = vmatpush1.msra.mxu0 %v4891
    %v4893 = vand.u32 %v4764, 4294901760
    %v4894 = vsub.f32 %v4764, %v4893
    %v4895 = vand.u32 %v4894, 4294901760
    %v4896 = vsub.f32 %v4894, %v4895
    %v4897 = vand.u32 %v4896, 4294901760
    %4898 = vmatprep.mubr.f32.mxu0 %v4897
    %v4899 = vand.u32 %v4763, 4294901760
    %v4900 = vsub.f32 %v4763, %v4899
    %v4901 = vand.u32 %v4900, 4294901760
    %v4902 = vsub.f32 %v4900, %v4901
    %v4903 = vand.u32 %v4902, 4294901760
    %4904 = vmatmul.mubr.f32.gmra.mrb[0].mxu0 %v4903
    %v4905 = vpop.f32.mrb[0].mxu0
    %v4906 = vadd.f32 0.0, %v4905
    %v4907 = vpop.f32.mrb[0].mxu0
    %4908 = vdwg.mxu0
    %4909 = vmatprep.subr.mxu0 0.0
    %v4910 = vand.u32 %v4765, 4294901760
    %v4911 = vsub.f32 %v4765, %v4910
    %v4912 = vand.u32 %v4911, 4294901760
    %v4913 = vsub.f32 %v4911, %v4912
    %v4914 = vand.u32 %v4913, 4294901760
    %4915 = vmatpush1.msra.mxu0 %v4914
    %4916 = vmatprep.subr.mxu0 0.0
    %v4917 = vand.u32 %v4766, 4294901760
    %v4918 = vsub.f32 %v4766, %v4917
    %v4919 = vand.u32 %v4918, 4294901760
    %v4920 = vsub.f32 %v4918, %v4919
    %v4921 = vand.u32 %v4920, 4294901760
    %4922 = vmatpush1.msra.mxu0 %v4921
    %4923 = vmatprep.subr.mxu0 0.0
    %v4924 = vand.u32 %v4767, 4294901760
    %v4925 = vsub.f32 %v4767, %v4924
    %v4926 = vand.u32 %v4925, 4294901760
    %v4927 = vsub.f32 %v4925, %v4926
    %v4928 = vand.u32 %v4927, 4294901760
    %4929 = vmatpush1.msra.mxu0 %v4928
    %4930 = vmatprep.subr.mxu0 0.0
    %v4931 = vand.u32 %v4768, 4294901760
    %v4932 = vsub.f32 %v4768, %v4931
    %v4933 = vand.u32 %v4932, 4294901760
    %v4934 = vsub.f32 %v4932, %v4933
    %v4935 = vand.u32 %v4934, 4294901760
    %4936 = vmatpush1.msra.mxu0 %v4935
    %4937 = vmatprep.subr.mxu0 0.0
    %v4938 = vand.u32 %v4769, 4294901760
    %v4939 = vsub.f32 %v4769, %v4938
    %v4940 = vand.u32 %v4939, 4294901760
    %v4941 = vsub.f32 %v4939, %v4940
    %v4942 = vand.u32 %v4941, 4294901760
    %4943 = vmatpush1.msra.mxu0 %v4942
    %4944 = vmatprep.subr.mxu0 0.0
    %v4945 = vand.u32 %v4770, 4294901760
    %v4946 = vsub.f32 %v4770, %v4945
    %v4947 = vand.u32 %v4946, 4294901760
    %v4948 = vsub.f32 %v4946, %v4947
    %v4949 = vand.u32 %v4948, 4294901760
    %4950 = vmatpush1.msra.mxu0 %v4949
    %4951 = vmatprep.subr.mxu0 0.0
    %v4952 = vand.u32 %v4771, 4294901760
    %v4953 = vsub.f32 %v4771, %v4952
    %v4954 = vand.u32 %v4953, 4294901760
    %v4955 = vsub.f32 %v4953, %v4954
    %v4956 = vand.u32 %v4955, 4294901760
    %4957 = vmatpush1.msra.mxu0 %v4956
    %4958 = vmatprep.subr.mxu0 0.0
    %v4959 = vand.u32 %v4772, 4294901760
    %v4960 = vsub.f32 %v4772, %v4959
    %v4961 = vand.u32 %v4960, 4294901760
    %v4962 = vsub.f32 %v4960, %v4961
    %v4963 = vand.u32 %v4962, 4294901760
    %4964 = vmatpush1.msra.mxu0 %v4963
    %4965 = vmatprep.subr.mxu0 0.0
    %v4966 = vand.u32 %v4773, 4294901760
    %v4967 = vsub.f32 %v4773, %v4966
    %v4968 = vand.u32 %v4967, 4294901760
    %v4969 = vsub.f32 %v4967, %v4968
    %v4970 = vand.u32 %v4969, 4294901760
    %4971 = vmatpush1.msra.mxu0 %v4970
    %4972 = vmatprep.subr.mxu0 0.0
    %v4973 = vand.u32 %v4774, 4294901760
    %v4974 = vsub.f32 %v4774, %v4973
    %v4975 = vand.u32 %v4974, 4294901760
    %v4976 = vsub.f32 %v4974, %v4975
    %v4977 = vand.u32 %v4976, 4294901760
    %4978 = vmatpush1.msra.mxu0 %v4977
    %4979 = vmatprep.subr.mxu0 0.0
    %v4980 = vand.u32 %v4775, 4294901760
    %v4981 = vsub.f32 %v4775, %v4980
    %v4982 = vand.u32 %v4981, 4294901760
    %v4983 = vsub.f32 %v4981, %v4982
    %v4984 = vand.u32 %v4983, 4294901760
    %4985 = vmatpush1.msra.mxu0 %v4984
    %4986 = vmatprep.subr.mxu0 0.0
    %v4987 = vand.u32 %v4776, 4294901760
    %v4988 = vsub.f32 %v4776, %v4987
    %v4989 = vand.u32 %v4988, 4294901760
    %v4990 = vsub.f32 %v4988, %v4989
    %v4991 = vand.u32 %v4990, 4294901760
    %4992 = vmatpush1.msra.mxu0 %v4991
    %4993 = vmatprep.subr.mxu0 0.0
    %v4994 = vand.u32 %v4777, 4294901760
    %v4995 = vsub.f32 %v4777, %v4994
    %v4996 = vand.u32 %v4995, 4294901760
    %v4997 = vsub.f32 %v4995, %v4996
    %v4998 = vand.u32 %v4997, 4294901760
    %4999 = vmatpush1.msra.mxu0 %v4998
    %5000 = vmatprep.subr.mxu0 0.0
    %v5001 = vand.u32 %v4778, 4294901760
    %v5002 = vsub.f32 %v4778, %v5001
    %v5003 = vand.u32 %v5002, 4294901760
    %v5004 = vsub.f32 %v5002, %v5003
    %v5005 = vand.u32 %v5004, 4294901760
    %5006 = vmatpush1.msra.mxu0 %v5005
    %5007 = vmatprep.subr.mxu0 0.0
    %v5008 = vand.u32 %v4779, 4294901760
    %v5009 = vsub.f32 %v4779, %v5008
    %v5010 = vand.u32 %v5009, 4294901760
    %v5011 = vsub.f32 %v5009, %v5010
    %v5012 = vand.u32 %v5011, 4294901760
    %5013 = vmatpush1.msra.mxu0 %v5012
    %5014 = vmatprep.subr.mxu0 0.0
    %v5015 = vand.u32 %v4780, 4294901760
    %v5016 = vsub.f32 %v4780, %v5015
    %v5017 = vand.u32 %v5016, 4294901760
    %v5018 = vsub.f32 %v5016, %v5017
    %v5019 = vand.u32 %v5018, 4294901760
    %5020 = vmatpush1.msra.mxu0 %v5019
    %5021 = vmatprep.subr.mxu0 0.0
    %v5022 = vand.u32 %v4781, 4294901760
    %v5023 = vsub.f32 %v4781, %v5022
    %v5024 = vand.u32 %v5023, 4294901760
    %v5025 = vsub.f32 %v5023, %v5024
    %v5026 = vand.u32 %v5025, 4294901760
    %5027 = vmatpush1.msra.mxu0 %v5026
    %5028 = vmatprep.subr.mxu0 0.0
    %v5029 = vand.u32 %v4782, 4294901760
    %v5030 = vsub.f32 %v4782, %v5029
    %v5031 = vand.u32 %v5030, 4294901760
    %v5032 = vsub.f32 %v5030, %v5031
    %v5033 = vand.u32 %v5032, 4294901760
    %5034 = vmatpush1.msra.mxu0 %v5033
    %5035 = vmatprep.subr.mxu0 0.0
    %v5036 = vand.u32 %v4783, 4294901760
    %v5037 = vsub.f32 %v4783, %v5036
    %v5038 = vand.u32 %v5037, 4294901760
    %v5039 = vsub.f32 %v5037, %v5038
    %v5040 = vand.u32 %v5039, 4294901760
    %5041 = vmatpush1.msra.mxu0 %v5040
    %5042 = vmatprep.subr.mxu0 0.0
    %v5043 = vand.u32 %v4784, 4294901760
    %v5044 = vsub.f32 %v4784, %v5043
    %v5045 = vand.u32 %v5044, 4294901760
    %v5046 = vsub.f32 %v5044, %v5045
    %v5047 = vand.u32 %v5046, 4294901760
    %5048 = vmatpush1.msra.mxu0 %v5047
    %5049 = vmatprep.subr.mxu0 0.0
    %v5050 = vand.u32 %v4785, 4294901760
    %v5051 = vsub.f32 %v4785, %v5050
    %v5052 = vand.u32 %v5051, 4294901760
    %v5053 = vsub.f32 %v5051, %v5052
    %v5054 = vand.u32 %v5053, 4294901760
    %5055 = vmatpush1.msra.mxu0 %v5054
    %5056 = vmatprep.subr.mxu0 0.0
    %v5057 = vand.u32 %v4786, 4294901760
    %v5058 = vsub.f32 %v4786, %v5057
    %v5059 = vand.u32 %v5058, 4294901760
    %v5060 = vsub.f32 %v5058, %v5059
    %v5061 = vand.u32 %v5060, 4294901760
    %5062 = vmatpush1.msra.mxu0 %v5061
    %5063 = vmatprep.subr.mxu0 0.0
    %v5064 = vand.u32 %v4787, 4294901760
    %v5065 = vsub.f32 %v4787, %v5064
    %v5066 = vand.u32 %v5065, 4294901760
    %v5067 = vsub.f32 %v5065, %v5066
    %v5068 = vand.u32 %v5067, 4294901760
    %5069 = vmatpush1.msra.mxu0 %v5068
    %5070 = vmatprep.subr.mxu0 0.0
    %v5071 = vand.u32 %v4788, 4294901760
    %v5072 = vsub.f32 %v4788, %v5071
    %v5073 = vand.u32 %v5072, 4294901760
    %v5074 = vsub.f32 %v5072, %v5073
    %v5075 = vand.u32 %v5074, 4294901760
    %5076 = vmatpush1.msra.mxu0 %v5075
    %5077 = vmatprep.subr.mxu0 0.0
    %v5078 = vand.u32 %v4789, 4294901760
    %v5079 = vsub.f32 %v4789, %v5078
    %v5080 = vand.u32 %v5079, 4294901760
    %v5081 = vsub.f32 %v5079, %v5080
    %v5082 = vand.u32 %v5081, 4294901760
    %5083 = vmatpush1.msra.mxu0 %v5082
    %5084 = vmatprep.subr.mxu0 0.0
    %v5085 = vand.u32 %v4790, 4294901760
    %v5086 = vsub.f32 %v4790, %v5085
    %v5087 = vand.u32 %v5086, 4294901760
    %v5088 = vsub.f32 %v5086, %v5087
    %v5089 = vand.u32 %v5088, 4294901760
    %5090 = vmatpush1.msra.mxu0 %v5089
    %5091 = vmatprep.subr.mxu0 0.0
    %v5092 = vand.u32 %v4791, 4294901760
    %v5093 = vsub.f32 %v4791, %v5092
    %v5094 = vand.u32 %v5093, 4294901760
    %v5095 = vsub.f32 %v5093, %v5094
    %v5096 = vand.u32 %v5095, 4294901760
    %5097 = vmatpush1.msra.mxu0 %v5096
    %5098 = vmatprep.subr.mxu0 0.0
    %v5099 = vand.u32 %v4792, 4294901760
    %v5100 = vsub.f32 %v4792, %v5099
    %v5101 = vand.u32 %v5100, 4294901760
    %v5102 = vsub.f32 %v5100, %v5101
    %v5103 = vand.u32 %v5102, 4294901760
    %5104 = vmatpush1.msra.mxu0 %v5103
    %5105 = vmatprep.subr.mxu0 0.0
    %v5106 = vand.u32 %v4793, 4294901760
    %v5107 = vsub.f32 %v4793, %v5106
    %v5108 = vand.u32 %v5107, 4294901760
    %v5109 = vsub.f32 %v5107, %v5108
    %v5110 = vand.u32 %v5109, 4294901760
    %5111 = vmatpush1.msra.mxu0 %v5110
    %5112 = vmatprep.subr.mxu0 0.0
    %v5113 = vand.u32 %v4794, 4294901760
    %v5114 = vsub.f32 %v4794, %v5113
    %v5115 = vand.u32 %v5114, 4294901760
    %v5116 = vsub.f32 %v5114, %v5115
    %v5117 = vand.u32 %v5116, 4294901760
    %5118 = vmatpush1.msra.mxu0 %v5117
    %5119 = vmatprep.subr.mxu0 0.0
    %v5120 = vand.u32 %v4795, 4294901760
    %v5121 = vsub.f32 %v4795, %v5120
    %v5122 = vand.u32 %v5121, 4294901760
    %v5123 = vsub.f32 %v5121, %v5122
    %v5124 = vand.u32 %v5123, 4294901760
    %5125 = vmatpush1.msra.mxu0 %v5124
    %5126 = vmatprep.subr.mxu0 0.0
    %v5127 = vand.u32 %v4796, 4294901760
    %v5128 = vsub.f32 %v4796, %v5127
    %v5129 = vand.u32 %v5128, 4294901760
    %v5130 = vsub.f32 %v5128, %v5129
    %v5131 = vand.u32 %v5130, 4294901760
    %5132 = vmatpush1.msra.mxu0 %v5131
    %v5133 = vand.u32 %v4764, 4294901760
    %5134 = vmatprep.mubr.f32.mxu0 %v5133
    %v5135 = vand.u32 %v4763, 4294901760
    %5136 = vmatmul.mubr.f32.gmra.mrb[0].mxu0 %v5135
    %v5137 = vpop.f32.mrb[0].mxu0
    %v5138 = vadd.f32 %v4906, %v5137
    %v5139 = vpop.f32.mrb[0].mxu0
    %5140 = vdwg.mxu0
    %5141 = vmatprep.subr.mxu0 0.0
    %v5142 = vand.u32 %v4765, 4294901760
    %v5143 = vsub.f32 %v4765, %v5142
    %5144 = vmatpush1.msra.mxu0 %v5143
    %5145 = vmatprep.subr.mxu0 0.0
    %v5146 = vand.u32 %v4766, 4294901760
    %v5147 = vsub.f32 %v4766, %v5146
    %5148 = vmatpush1.msra.mxu0 %v5147
    %5149 = vmatprep.subr.mxu0 0.0
    %v5150 = vand.u32 %v4767, 4294901760
    %v5151 = vsub.f32 %v4767, %v5150
    %5152 = vmatpush1.msra.mxu0 %v5151
    %5153 = vmatprep.subr.mxu0 0.0
    %v5154 = vand.u32 %v4768, 4294901760
    %v5155 = vsub.f32 %v4768, %v5154
    %5156 = vmatpush1.msra.mxu0 %v5155
    %5157 = vmatprep.subr.mxu0 0.0
    %v5158 = vand.u32 %v4769, 4294901760
    %v5159 = vsub.f32 %v4769, %v5158
    %5160 = vmatpush1.msra.mxu0 %v5159
    %5161 = vmatprep.subr.mxu0 0.0
    %v5162 = vand.u32 %v4770, 4294901760
    %v5163 = vsub.f32 %v4770, %v5162
    %5164 = vmatpush1.msra.mxu0 %v5163
    %5165 = vmatprep.subr.mxu0 0.0
    %v5166 = vand.u32 %v4771, 4294901760
    %v5167 = vsub.f32 %v4771, %v5166
    %5168 = vmatpush1.msra.mxu0 %v5167
    %5169 = vmatprep.subr.mxu0 0.0
    %v5170 = vand.u32 %v4772, 4294901760
    %v5171 = vsub.f32 %v4772, %v5170
    %5172 = vmatpush1.msra.mxu0 %v5171
    %5173 = vmatprep.subr.mxu0 0.0
    %v5174 = vand.u32 %v4773, 4294901760
    %v5175 = vsub.f32 %v4773, %v5174
    %5176 = vmatpush1.msra.mxu0 %v5175
    %5177 = vmatprep.subr.mxu0 0.0
    %v5178 = vand.u32 %v4774, 4294901760
    %v5179 = vsub.f32 %v4774, %v5178
    %5180 = vmatpush1.msra.mxu0 %v5179
    %5181 = vmatprep.subr.mxu0 0.0
    %v5182 = vand.u32 %v4775, 4294901760
    %v5183 = vsub.f32 %v4775, %v5182
    %5184 = vmatpush1.msra.mxu0 %v5183
    %5185 = vmatprep.subr.mxu0 0.0
    %v5186 = vand.u32 %v4776, 4294901760
    %v5187 = vsub.f32 %v4776, %v5186
    %5188 = vmatpush1.msra.mxu0 %v5187
    %5189 = vmatprep.subr.mxu0 0.0
    %v5190 = vand.u32 %v4777, 4294901760
    %v5191 = vsub.f32 %v4777, %v5190
    %5192 = vmatpush1.msra.mxu0 %v5191
    %5193 = vmatprep.subr.mxu0 0.0
    %v5194 = vand.u32 %v4778, 4294901760
    %v5195 = vsub.f32 %v4778, %v5194
    %5196 = vmatpush1.msra.mxu0 %v5195
    %5197 = vmatprep.subr.mxu0 0.0
    %v5198 = vand.u32 %v4779, 4294901760
    %v5199 = vsub.f32 %v4779, %v5198
    %5200 = vmatpush1.msra.mxu0 %v5199
    %5201 = vmatprep.subr.mxu0 0.0
    %v5202 = vand.u32 %v4780, 4294901760
    %v5203 = vsub.f32 %v4780, %v5202
    %5204 = vmatpush1.msra.mxu0 %v5203
    %5205 = vmatprep.subr.mxu0 0.0
    %v5206 = vand.u32 %v4781, 4294901760
    %v5207 = vsub.f32 %v4781, %v5206
    %5208 = vmatpush1.msra.mxu0 %v5207
    %5209 = vmatprep.subr.mxu0 0.0
    %v5210 = vand.u32 %v4782, 4294901760
    %v5211 = vsub.f32 %v4782, %v5210
    %5212 = vmatpush1.msra.mxu0 %v5211
    %5213 = vmatprep.subr.mxu0 0.0
    %v5214 = vand.u32 %v4783, 4294901760
    %v5215 = vsub.f32 %v4783, %v5214
    %5216 = vmatpush1.msra.mxu0 %v5215
    %5217 = vmatprep.subr.mxu0 0.0
    %v5218 = vand.u32 %v4784, 4294901760
    %v5219 = vsub.f32 %v4784, %v5218
    %5220 = vmatpush1.msra.mxu0 %v5219
    %5221 = vmatprep.subr.mxu0 0.0
    %v5222 = vand.u32 %v4785, 4294901760
    %v5223 = vsub.f32 %v4785, %v5222
    %5224 = vmatpush1.msra.mxu0 %v5223
    %5225 = vmatprep.subr.mxu0 0.0
    %v5226 = vand.u32 %v4786, 4294901760
    %v5227 = vsub.f32 %v4786, %v5226
    %5228 = vmatpush1.msra.mxu0 %v5227
    %5229 = vmatprep.subr.mxu0 0.0
    %v5230 = vand.u32 %v4787, 4294901760
    %v5231 = vsub.f32 %v4787, %v5230
    %5232 = vmatpush1.msra.mxu0 %v5231
    %5233 = vmatprep.subr.mxu0 0.0
    %v5234 = vand.u32 %v4788, 4294901760
    %v5235 = vsub.f32 %v4788, %v5234
    %5236 = vmatpush1.msra.mxu0 %v5235
    %5237 = vmatprep.subr.mxu0 0.0
    %v5238 = vand.u32 %v4789, 4294901760
    %v5239 = vsub.f32 %v4789, %v5238
    %5240 = vmatpush1.msra.mxu0 %v5239
    %5241 = vmatprep.subr.mxu0 0.0
    %v5242 = vand.u32 %v4790, 4294901760
    %v5243 = vsub.f32 %v4790, %v5242
    %5244 = vmatpush1.msra.mxu0 %v5243
    %5245 = vmatprep.subr.mxu0 0.0
    %v5246 = vand.u32 %v4791, 4294901760
    %v5247 = vsub.f32 %v4791, %v5246
    %5248 = vmatpush1.msra.mxu0 %v5247
    %5249 = vmatprep.subr.mxu0 0.0
    %v5250 = vand.u32 %v4792, 4294901760
    %v5251 = vsub.f32 %v4792, %v5250
    %5252 = vmatpush1.msra.mxu0 %v5251
    %5253 = vmatprep.subr.mxu0 0.0
    %v5254 = vand.u32 %v4793, 4294901760
    %v5255 = vsub.f32 %v4793, %v5254
    %5256 = vmatpush1.msra.mxu0 %v5255
    %5257 = vmatprep.subr.mxu0 0.0
    %v5258 = vand.u32 %v4794, 4294901760
    %v5259 = vsub.f32 %v4794, %v5258
    %5260 = vmatpush1.msra.mxu0 %v5259
    %5261 = vmatprep.subr.mxu0 0.0
    %v5262 = vand.u32 %v4795, 4294901760
    %v5263 = vsub.f32 %v4795, %v5262
    %5264 = vmatpush1.msra.mxu0 %v5263
    %5265 = vmatprep.subr.mxu0 0.0
    %v5266 = vand.u32 %v4796, 4294901760
    %v5267 = vsub.f32 %v4796, %v5266
    %5268 = vmatpush1.msra.mxu0 %v5267
    %v5269 = vand.u32 %v4764, 4294901760
    %v5270 = vsub.f32 %v4764, %v5269
    %5271 = vmatprep.mubr.f32.mxu0 %v5270
    %v5272 = vand.u32 %v4763, 4294901760
    %v5273 = vsub.f32 %v4763, %v5272
    %5274 = vmatmul.mubr.f32.gmra.mrb[0].mxu0 %v5273
    %v5275 = vpop.f32.mrb[0].mxu0
    %v5276 = vadd.f32 %v5138, %v5275
    %v5277 = vpop.f32.mrb[0].mxu0
    %5278 = vdwg.mxu0
    %5279 = vmatprep.subr.mxu0 0.0
    %v5280 = vand.u32 %v4765, 4294901760
    %5281 = vmatpush1.msra.mxu0 %v5280
    %5282 = vmatprep.subr.mxu0 0.0
    %v5283 = vand.u32 %v4766, 4294901760
    %5284 = vmatpush1.msra.mxu0 %v5283
    %5285 = vmatprep.subr.mxu0 0.0
    %v5286 = vand.u32 %v4767, 4294901760
    %5287 = vmatpush1.msra.mxu0 %v5286
    %5288 = vmatprep.subr.mxu0 0.0
    %v5289 = vand.u32 %v4768, 4294901760
    %5290 = vmatpush1.msra.mxu0 %v5289
    %5291 = vmatprep.subr.mxu0 0.0
    %v5292 = vand.u32 %v4769, 4294901760
    %5293 = vmatpush1.msra.mxu0 %v5292
    %5294 = vmatprep.subr.mxu0 0.0
    %v5295 = vand.u32 %v4770, 4294901760
    %5296 = vmatpush1.msra.mxu0 %v5295
    %5297 = vmatprep.subr.mxu0 0.0
    %v5298 = vand.u32 %v4771, 4294901760
    %5299 = vmatpush1.msra.mxu0 %v5298
    %5300 = vmatprep.subr.mxu0 0.0
    %v5301 = vand.u32 %v4772, 4294901760
    %5302 = vmatpush1.msra.mxu0 %v5301
    %5303 = vmatprep.subr.mxu0 0.0
    %v5304 = vand.u32 %v4773, 4294901760
    %5305 = vmatpush1.msra.mxu0 %v5304
    %5306 = vmatprep.subr.mxu0 0.0
    %v5307 = vand.u32 %v4774, 4294901760
    %5308 = vmatpush1.msra.mxu0 %v5307
    %5309 = vmatprep.subr.mxu0 0.0
    %v5310 = vand.u32 %v4775, 4294901760
    %5311 = vmatpush1.msra.mxu0 %v5310
    %5312 = vmatprep.subr.mxu0 0.0
    %v5313 = vand.u32 %v4776, 4294901760
    %5314 = vmatpush1.msra.mxu0 %v5313
    %5315 = vmatprep.subr.mxu0 0.0
    %v5316 = vand.u32 %v4777, 4294901760
    %5317 = vmatpush1.msra.mxu0 %v5316
    %5318 = vmatprep.subr.mxu0 0.0
    %v5319 = vand.u32 %v4778, 4294901760
    %5320 = vmatpush1.msra.mxu0 %v5319
    %5321 = vmatprep.subr.mxu0 0.0
    %v5322 = vand.u32 %v4779, 4294901760
    %5323 = vmatpush1.msra.mxu0 %v5322
    %5324 = vmatprep.subr.mxu0 0.0
    %v5325 = vand.u32 %v4780, 4294901760
    %5326 = vmatpush1.msra.mxu0 %v5325
    %5327 = vmatprep.subr.mxu0 0.0
    %v5328 = vand.u32 %v4781, 4294901760
    %5329 = vmatpush1.msra.mxu0 %v5328
    %5330 = vmatprep.subr.mxu0 0.0
    %v5331 = vand.u32 %v4782, 4294901760
    %5332 = vmatpush1.msra.mxu0 %v5331
    %5333 = vmatprep.subr.mxu0 0.0
    %v5334 = vand.u32 %v4783, 4294901760
    %5335 = vmatpush1.msra.mxu0 %v5334
    %5336 = vmatprep.subr.mxu0 0.0
    %v5337 = vand.u32 %v4784, 4294901760
    %5338 = vmatpush1.msra.mxu0 %v5337
    %5339 = vmatprep.subr.mxu0 0.0
    %v5340 = vand.u32 %v4785, 4294901760
    %5341 = vmatpush1.msra.mxu0 %v5340
    %5342 = vmatprep.subr.mxu0 0.0
    %v5343 = vand.u32 %v4786, 4294901760
    %5344 = vmatpush1.msra.mxu0 %v5343
    %5345 = vmatprep.subr.mxu0 0.0
    %v5346 = vand.u32 %v4787, 4294901760
    %5347 = vmatpush1.msra.mxu0 %v5346
    %5348 = vmatprep.subr.mxu0 0.0
    %v5349 = vand.u32 %v4788, 4294901760
    %5350 = vmatpush1.msra.mxu0 %v5349
    %5351 = vmatprep.subr.mxu0 0.0
    %v5352 = vand.u32 %v4789, 4294901760
    %5353 = vmatpush1.msra.mxu0 %v5352
    %5354 = vmatprep.subr.mxu0 0.0
    %v5355 = vand.u32 %v4790, 4294901760
    %5356 = vmatpush1.msra.mxu0 %v5355
    %5357 = vmatprep.subr.mxu0 0.0
    %v5358 = vand.u32 %v4791, 4294901760
    %5359 = vmatpush1.msra.mxu0 %v5358
    %5360 = vmatprep.subr.mxu0 0.0
    %v5361 = vand.u32 %v4792, 4294901760
    %5362 = vmatpush1.msra.mxu0 %v5361
    %5363 = vmatprep.subr.mxu0 0.0
    %v5364 = vand.u32 %v4793, 4294901760
    %5365 = vmatpush1.msra.mxu0 %v5364
    %5366 = vmatprep.subr.mxu0 0.0
    %v5367 = vand.u32 %v4794, 4294901760
    %5368 = vmatpush1.msra.mxu0 %v5367
    %5369 = vmatprep.subr.mxu0 0.0
    %v5370 = vand.u32 %v4795, 4294901760
    %5371 = vmatpush1.msra.mxu0 %v5370
    %5372 = vmatprep.subr.mxu0 0.0
    %v5373 = vand.u32 %v4796, 4294901760
    %5374 = vmatpush1.msra.mxu0 %v5373
    %v5375 = vand.u32 %v4764, 4294901760
    %v5376 = vsub.f32 %v4764, %v5375
    %v5377 = vand.u32 %v5376, 4294901760
    %5378 = vmatprep.mubr.f32.mxu0 %v5377
    %v5379 = vand.u32 %v4763, 4294901760
    %v5380 = vsub.f32 %v4763, %v5379
    %v5381 = vand.u32 %v5380, 4294901760
    %5382 = vmatmul.mubr.f32.gmra.mrb[0].mxu0 %v5381
    %v5383 = vpop.f32.mrb[0].mxu0
    %v5384 = vadd.f32 %v5276, %v5383
    %v5385 = vpop.f32.mrb[0].mxu0
    %5386 = vdwg.mxu0
    %5387 = vmatprep.subr.mxu0 0.0
    %v5388 = vand.u32 %v4765, 4294901760
    %v5389 = vsub.f32 %v4765, %v5388
    %v5390 = vand.u32 %v5389, 4294901760
    %5391 = vmatpush1.msra.mxu0 %v5390
    %5392 = vmatprep.subr.mxu0 0.0
    %v5393 = vand.u32 %v4766, 4294901760
    %v5394 = vsub.f32 %v4766, %v5393
    %v5395 = vand.u32 %v5394, 4294901760
    %5396 = vmatpush1.msra.mxu0 %v5395
    %5397 = vmatprep.subr.mxu0 0.0
    %v5398 = vand.u32 %v4767, 4294901760
    %v5399 = vsub.f32 %v4767, %v5398
    %v5400 = vand.u32 %v5399, 4294901760
    %5401 = vmatpush1.msra.mxu0 %v5400
    %5402 = vmatprep.subr.mxu0 0.0
    %v5403 = vand.u32 %v4768, 4294901760
    %v5404 = vsub.f32 %v4768, %v5403
    %v5405 = vand.u32 %v5404, 4294901760
    %5406 = vmatpush1.msra.mxu0 %v5405
    %5407 = vmatprep.subr.mxu0 0.0
    %v5408 = vand.u32 %v4769, 4294901760
    %v5409 = vsub.f32 %v4769, %v5408
    %v5410 = vand.u32 %v5409, 4294901760
    %5411 = vmatpush1.msra.mxu0 %v5410
    %5412 = vmatprep.subr.mxu0 0.0
    %v5413 = vand.u32 %v4770, 4294901760
    %v5414 = vsub.f32 %v4770, %v5413
    %v5415 = vand.u32 %v5414, 4294901760
    %5416 = vmatpush1.msra.mxu0 %v5415
    %5417 = vmatprep.subr.mxu0 0.0
    %v5418 = vand.u32 %v4771, 4294901760
    %v5419 = vsub.f32 %v4771, %v5418
    %v5420 = vand.u32 %v5419, 4294901760
    %5421 = vmatpush1.msra.mxu0 %v5420
    %5422 = vmatprep.subr.mxu0 0.0
    %v5423 = vand.u32 %v4772, 4294901760
    %v5424 = vsub.f32 %v4772, %v5423
    %v5425 = vand.u32 %v5424, 4294901760
    %5426 = vmatpush1.msra.mxu0 %v5425
    %5427 = vmatprep.subr.mxu0 0.0
    %v5428 = vand.u32 %v4773, 4294901760
    %v5429 = vsub.f32 %v4773, %v5428
    %v5430 = vand.u32 %v5429, 4294901760
    %5431 = vmatpush1.msra.mxu0 %v5430
    %5432 = vmatprep.subr.mxu0 0.0
    %v5433 = vand.u32 %v4774, 4294901760
    %v5434 = vsub.f32 %v4774, %v5433
    %v5435 = vand.u32 %v5434, 4294901760
    %5436 = vmatpush1.msra.mxu0 %v5435
    %5437 = vmatprep.subr.mxu0 0.0
    %v5438 = vand.u32 %v4775, 4294901760
    %v5439 = vsub.f32 %v4775, %v5438
    %v5440 = vand.u32 %v5439, 4294901760
    %5441 = vmatpush1.msra.mxu0 %v5440
    %5442 = vmatprep.subr.mxu0 0.0
    %v5443 = vand.u32 %v4776, 4294901760
    %v5444 = vsub.f32 %v4776, %v5443
    %v5445 = vand.u32 %v5444, 4294901760
    %5446 = vmatpush1.msra.mxu0 %v5445
    %5447 = vmatprep.subr.mxu0 0.0
    %v5448 = vand.u32 %v4777, 4294901760
    %v5449 = vsub.f32 %v4777, %v5448
    %v5450 = vand.u32 %v5449, 4294901760
    %5451 = vmatpush1.msra.mxu0 %v5450
    %5452 = vmatprep.subr.mxu0 0.0
    %v5453 = vand.u32 %v4778, 4294901760
    %v5454 = vsub.f32 %v4778, %v5453
    %v5455 = vand.u32 %v5454, 4294901760
    %5456 = vmatpush1.msra.mxu0 %v5455
    %5457 = vmatprep.subr.mxu0 0.0
    %v5458 = vand.u32 %v4779, 4294901760
    %v5459 = vsub.f32 %v4779, %v5458
    %v5460 = vand.u32 %v5459, 4294901760
    %5461 = vmatpush1.msra.mxu0 %v5460
    %5462 = vmatprep.subr.mxu0 0.0
    %v5463 = vand.u32 %v4780, 4294901760
    %v5464 = vsub.f32 %v4780, %v5463
    %v5465 = vand.u32 %v5464, 4294901760
    %5466 = vmatpush1.msra.mxu0 %v5465
    %5467 = vmatprep.subr.mxu0 0.0
    %v5468 = vand.u32 %v4781, 4294901760
    %v5469 = vsub.f32 %v4781, %v5468
    %v5470 = vand.u32 %v5469, 4294901760
    %5471 = vmatpush1.msra.mxu0 %v5470
    %5472 = vmatprep.subr.mxu0 0.0
    %v5473 = vand.u32 %v4782, 4294901760
    %v5474 = vsub.f32 %v4782, %v5473
    %v5475 = vand.u32 %v5474, 4294901760
    %5476 = vmatpush1.msra.mxu0 %v5475
    %5477 = vmatprep.subr.mxu0 0.0
    %v5478 = vand.u32 %v4783, 4294901760
    %v5479 = vsub.f32 %v4783, %v5478
    %v5480 = vand.u32 %v5479, 4294901760
    %5481 = vmatpush1.msra.mxu0 %v5480
    %5482 = vmatprep.subr.mxu0 0.0
    %v5483 = vand.u32 %v4784, 4294901760
    %v5484 = vsub.f32 %v4784, %v5483
    %v5485 = vand.u32 %v5484, 4294901760
    %5486 = vmatpush1.msra.mxu0 %v5485
    %5487 = vmatprep.subr.mxu0 0.0
    %v5488 = vand.u32 %v4785, 4294901760
    %v5489 = vsub.f32 %v4785, %v5488
    %v5490 = vand.u32 %v5489, 4294901760
    %5491 = vmatpush1.msra.mxu0 %v5490
    %5492 = vmatprep.subr.mxu0 0.0
    %v5493 = vand.u32 %v4786, 4294901760
    %v5494 = vsub.f32 %v4786, %v5493
    %v5495 = vand.u32 %v5494, 4294901760
    %5496 = vmatpush1.msra.mxu0 %v5495
    %5497 = vmatprep.subr.mxu0 0.0
    %v5498 = vand.u32 %v4787, 4294901760
    %v5499 = vsub.f32 %v4787, %v5498
    %v5500 = vand.u32 %v5499, 4294901760
    %5501 = vmatpush1.msra.mxu0 %v5500
    %5502 = vmatprep.subr.mxu0 0.0
    %v5503 = vand.u32 %v4788, 4294901760
    %v5504 = vsub.f32 %v4788, %v5503
    %v5505 = vand.u32 %v5504, 4294901760
    %5506 = vmatpush1.msra.mxu0 %v5505
    %5507 = vmatprep.subr.mxu0 0.0
    %v5508 = vand.u32 %v4789, 4294901760
    %v5509 = vsub.f32 %v4789, %v5508
    %v5510 = vand.u32 %v5509, 4294901760
    %5511 = vmatpush1.msra.mxu0 %v5510
    %5512 = vmatprep.subr.mxu0 0.0
    %v5513 = vand.u32 %v4790, 4294901760
    %v5514 = vsub.f32 %v4790, %v5513
    %v5515 = vand.u32 %v5514, 4294901760
    %5516 = vmatpush1.msra.mxu0 %v5515
    %5517 = vmatprep.subr.mxu0 0.0
    %v5518 = vand.u32 %v4791, 4294901760
    %v5519 = vsub.f32 %v4791, %v5518
    %v5520 = vand.u32 %v5519, 4294901760
    %5521 = vmatpush1.msra.mxu0 %v5520
    %5522 = vmatprep.subr.mxu0 0.0
    %v5523 = vand.u32 %v4792, 4294901760
    %v5524 = vsub.f32 %v4792, %v5523
    %v5525 = vand.u32 %v5524, 4294901760
    %5526 = vmatpush1.msra.mxu0 %v5525
    %5527 = vmatprep.subr.mxu0 0.0
    %v5528 = vand.u32 %v4793, 4294901760
    %v5529 = vsub.f32 %v4793, %v5528
    %v5530 = vand.u32 %v5529, 4294901760
    %5531 = vmatpush1.msra.mxu0 %v5530
    %5532 = vmatprep.subr.mxu0 0.0
    %v5533 = vand.u32 %v4794, 4294901760
    %v5534 = vsub.f32 %v4794, %v5533
    %v5535 = vand.u32 %v5534, 4294901760
    %5536 = vmatpush1.msra.mxu0 %v5535
    %5537 = vmatprep.subr.mxu0 0.0
    %v5538 = vand.u32 %v4795, 4294901760
    %v5539 = vsub.f32 %v4795, %v5538
    %v5540 = vand.u32 %v5539, 4294901760
    %5541 = vmatpush1.msra.mxu0 %v5540
    %5542 = vmatprep.subr.mxu0 0.0
    %v5543 = vand.u32 %v4796, 4294901760
    %v5544 = vsub.f32 %v4796, %v5543
    %v5545 = vand.u32 %v5544, 4294901760
    %5546 = vmatpush1.msra.mxu0 %v5545
    %v5547 = vand.u32 %v4764, 4294901760
    %5548 = vmatprep.mubr.f32.mxu0 %v5547
    %v5549 = vand.u32 %v4763, 4294901760
    %5550 = vmatmul.mubr.f32.gmra.mrb[0].mxu0 %v5549
    %v5551 = vpop.f32.mrb[0].mxu0
    %v5552 = vadd.f32 %v5384, %v5551
    %v5553 = vpop.f32.mrb[0].mxu0
    %5554 = vdwg.mxu0
    %5555 = vmatprep.subr.mxu0 0.0
    %v5556 = vand.u32 %v4765, 4294901760
    %5557 = vmatpush1.msra.mxu0 %v5556
    %5558 = vmatprep.subr.mxu0 0.0
    %v5559 = vand.u32 %v4766, 4294901760
    %5560 = vmatpush1.msra.mxu0 %v5559
    %5561 = vmatprep.subr.mxu0 0.0
    %v5562 = vand.u32 %v4767, 4294901760
    %5563 = vmatpush1.msra.mxu0 %v5562
    %5564 = vmatprep.subr.mxu0 0.0
    %v5565 = vand.u32 %v4768, 4294901760
    %5566 = vmatpush1.msra.mxu0 %v5565
    %5567 = vmatprep.subr.mxu0 0.0
    %v5568 = vand.u32 %v4769, 4294901760
    %5569 = vmatpush1.msra.mxu0 %v5568
    %5570 = vmatprep.subr.mxu0 0.0
    %v5571 = vand.u32 %v4770, 4294901760
    %5572 = vmatpush1.msra.mxu0 %v5571
    %5573 = vmatprep.subr.mxu0 0.0
    %v5574 = vand.u32 %v4771, 4294901760
    %5575 = vmatpush1.msra.mxu0 %v5574
    %5576 = vmatprep.subr.mxu0 0.0
    %v5577 = vand.u32 %v4772, 4294901760
    %5578 = vmatpush1.msra.mxu0 %v5577
    %5579 = vmatprep.subr.mxu0 0.0
    %v5580 = vand.u32 %v4773, 4294901760
    %5581 = vmatpush1.msra.mxu0 %v5580
    %5582 = vmatprep.subr.mxu0 0.0
    %v5583 = vand.u32 %v4774, 4294901760
    %5584 = vmatpush1.msra.mxu0 %v5583
    %5585 = vmatprep.subr.mxu0 0.0
    %v5586 = vand.u32 %v4775, 4294901760
    %5587 = vmatpush1.msra.mxu0 %v5586
    %5588 = vmatprep.subr.mxu0 0.0
    %v5589 = vand.u32 %v4776, 4294901760
    %5590 = vmatpush1.msra.mxu0 %v5589
    %5591 = vmatprep.subr.mxu0 0.0
    %v5592 = vand.u32 %v4777, 4294901760
    %5593 = vmatpush1.msra.mxu0 %v5592
    %5594 = vmatprep.subr.mxu0 0.0
    %v5595 = vand.u32 %v4778, 4294901760
    %5596 = vmatpush1.msra.mxu0 %v5595
    %5597 = vmatprep.subr.mxu0 0.0
    %v5598 = vand.u32 %v4779, 4294901760
    %5599 = vmatpush1.msra.mxu0 %v5598
    %5600 = vmatprep.subr.mxu0 0.0
    %v5601 = vand.u32 %v4780, 4294901760
    %5602 = vmatpush1.msra.mxu0 %v5601
    %5603 = vmatprep.subr.mxu0 0.0
    %v5604 = vand.u32 %v4781, 4294901760
    %5605 = vmatpush1.msra.mxu0 %v5604
    %5606 = vmatprep.subr.mxu0 0.0
    %v5607 = vand.u32 %v4782, 4294901760
    %5608 = vmatpush1.msra.mxu0 %v5607
    %5609 = vmatprep.subr.mxu0 0.0
    %v5610 = vand.u32 %v4783, 4294901760
    %5611 = vmatpush1.msra.mxu0 %v5610
    %5612 = vmatprep.subr.mxu0 0.0
    %v5613 = vand.u32 %v4784, 4294901760
    %5614 = vmatpush1.msra.mxu0 %v5613
    %5615 = vmatprep.subr.mxu0 0.0
    %v5616 = vand.u32 %v4785, 4294901760
    %5617 = vmatpush1.msra.mxu0 %v5616
    %5618 = vmatprep.subr.mxu0 0.0
    %v5619 = vand.u32 %v4786, 4294901760
    %5620 = vmatpush1.msra.mxu0 %v5619
    %5621 = vmatprep.subr.mxu0 0.0
    %v5622 = vand.u32 %v4787, 4294901760
    %5623 = vmatpush1.msra.mxu0 %v5622
    %5624 = vmatprep.subr.mxu0 0.0
    %v5625 = vand.u32 %v4788, 4294901760
    %5626 = vmatpush1.msra.mxu0 %v5625
    %5627 = vmatprep.subr.mxu0 0.0
    %v5628 = vand.u32 %v4789, 4294901760
    %5629 = vmatpush1.msra.mxu0 %v5628
    %5630 = vmatprep.subr.mxu0 0.0
    %v5631 = vand.u32 %v4790, 4294901760
    %5632 = vmatpush1.msra.mxu0 %v5631
    %5633 = vmatprep.subr.mxu0 0.0
    %v5634 = vand.u32 %v4791, 4294901760
    %5635 = vmatpush1.msra.mxu0 %v5634
    %5636 = vmatprep.subr.mxu0 0.0
    %v5637 = vand.u32 %v4792, 4294901760
    %5638 = vmatpush1.msra.mxu0 %v5637
    %5639 = vmatprep.subr.mxu0 0.0
    %v5640 = vand.u32 %v4793, 4294901760
    %5641 = vmatpush1.msra.mxu0 %v5640
    %5642 = vmatprep.subr.mxu0 0.0
    %v5643 = vand.u32 %v4794, 4294901760
    %5644 = vmatpush1.msra.mxu0 %v5643
    %5645 = vmatprep.subr.mxu0 0.0
    %v5646 = vand.u32 %v4795, 4294901760
    %5647 = vmatpush1.msra.mxu0 %v5646
    %5648 = vmatprep.subr.mxu0 0.0
    %v5649 = vand.u32 %v4796, 4294901760
    %5650 = vmatpush1.msra.mxu0 %v5649
    %v5651 = vand.u32 %v4764, 4294901760
    %5652 = vmatprep.mubr.f32.mxu0 %v5651
    %v5653 = vand.u32 %v4763, 4294901760
    %5654 = vmatmul.mubr.f32.gmra.mrb[0].mxu0 %v5653
    %v5655 = vpop.f32.mrb[0].mxu0
    %v5656 = vadd.f32 %v5552, %v5655
    %v5657 = vpop.f32.mrb[0].mxu0
    %5658 = vdwg.mxu0
    %v5659 = vtanh.pop %v5656
    %v5660 = vld [vmem:[%s13] sm:$0xff]
    %v5661 = vld [vmem:[%s13 + $0x8] sm:$0xff]
    %v5662 = vld [vmem:[%s13 + $0x10] sm:$0xff]
    %v5663 = vld [vmem:[%s13 + $0x18] sm:$0xff]
    %v5664 = vld [vmem:[%s13 + $0x20] sm:$0xff]
    %v5665 = vld [vmem:[%s13 + $0x28] sm:$0xff]
    %v5666 = vld [vmem:[%s13 + $0x30] sm:$0xff]
    %v5667 = vld [vmem:[%s13 + $0x38] sm:$0xff]
    %v5668 = vld [vmem:[%s14] sm:$0x1]
    %v5670 = vlaneseq
    %v5671 = vshrl.u32 %v5670, 7
    %v5672 = vsub.s32 0, %v5671
    %v5673 = vrot.slane %v5668, %v5672
    %vm5675 = vcmask 523264
    %v5677 = vsel %vm5675, %v5659, 0
    %5679 = vmatprep.subr.mxu0 0.0
    %v5680 = vand.u32 %v5660, 4294901760
    %5681 = vmatpush1.msra.mxu0 %v5680
    %5682 = vmatprep.subr.mxu0 0.0
    %v5683 = vand.u32 %v5661, 4294901760
    %5684 = vmatpush1.msra.mxu0 %v5683
    %5685 = vmatprep.subr.mxu0 0.0
    %v5686 = vand.u32 %v5662, 4294901760
    %5687 = vmatpush1.msra.mxu0 %v5686
    %5688 = vmatprep.subr.mxu0 0.0
    %v5689 = vand.u32 %v5663, 4294901760
    %5690 = vmatpush1.msra.mxu0 %v5689
    %5691 = vmatprep.subr.mxu0 0.0
    %v5692 = vand.u32 %v5664, 4294901760
    %5693 = vmatpush1.msra.mxu0 %v5692
    %5694 = vmatprep.subr.mxu0 0.0
    %v5695 = vand.u32 %v5665, 4294901760
    %5696 = vmatpush1.msra.mxu0 %v5695
    %5697 = vmatprep.subr.mxu0 0.0
    %v5698 = vand.u32 %v5666, 4294901760
    %5699 = vmatpush1.msra.mxu0 %v5698
    %5700 = vmatprep.subr.mxu0 0.0
    %v5701 = vand.u32 %v5667, 4294901760
    %5702 = vmatpush1.msra.mxu0 %v5701
    %5703 = vmatprep.subr.mxu0 0.0
    %5704 = vmatpush1.msra.mxu0 0.0
    %5705 = vmatprep.subr.mxu0 0.0
    %5706 = vmatpush1.msra.mxu0 0.0
    %5707 = vmatprep.subr.mxu0 0.0
    %5708 = vmatpush1.msra.mxu0 0.0
    %5709 = vmatprep.subr.mxu0 0.0
    %5710 = vmatpush1.msra.mxu0 0.0
    %5711 = vmatprep.subr.mxu0 0.0
    %5712 = vmatpush1.msra.mxu0 0.0
    %5713 = vmatprep.subr.mxu0 0.0
    %5714 = vmatpush1.msra.mxu0 0.0
    %5715 = vmatprep.subr.mxu0 0.0
    %5716 = vmatpush1.msra.mxu0 0.0
    %5717 = vmatprep.subr.mxu0 0.0
    %5718 = vmatpush1.msra.mxu0 0.0
    %5719 = vmatprep.subr.mxu0 0.0
    %5720 = vmatpush1.msra.mxu0 0.0
    %5721 = vmatprep.subr.mxu0 0.0
    %5722 = vmatpush1.msra.mxu0 0.0
    %5723 = vmatprep.subr.mxu0 0.0
    %5724 = vmatpush1.msra.mxu0 0.0
    %5725 = vmatprep.subr.mxu0 0.0
    %5726 = vmatpush1.msra.mxu0 0.0
    %5727 = vmatprep.subr.mxu0 0.0
    %5728 = vmatpush1.msra.mxu0 0.0
    %5729 = vmatprep.subr.mxu0 0.0
    %5730 = vmatpush1.msra.mxu0 0.0
    %5731 = vmatprep.subr.mxu0 0.0
    %5732 = vmatpush1.msra.mxu0 0.0
    %5733 = vmatprep.subr.mxu0 0.0
    %5734 = vmatpush1.msra.mxu0 0.0
    %5735 = vmatprep.subr.mxu0 0.0
    %5736 = vmatpush1.msra.mxu0 0.0
    %5737 = vmatprep.subr.mxu0 0.0
    %5738 = vmatpush1.msra.mxu0 0.0
    %5739 = vmatprep.subr.mxu0 0.0
    %5740 = vmatpush1.msra.mxu0 0.0
    %5741 = vmatprep.subr.mxu0 0.0
    %5742 = vmatpush1.msra.mxu0 0.0
    %5743 = vmatprep.subr.mxu0 0.0
    %5744 = vmatpush1.msra.mxu0 0.0
    %5745 = vmatprep.subr.mxu0 0.0
    %5746 = vmatpush1.msra.mxu0 0.0
    %5747 = vmatprep.subr.mxu0 0.0
    %5748 = vmatpush1.msra.mxu0 0.0
    %5749 = vmatprep.subr.mxu0 0.0
    %5750 = vmatpush1.msra.mxu0 0.0
    %5751 = vmatprep.mubr.f32.mxu0 0.0
    %v5752 = vand.u32 %v5677, 4294901760
    %v5753 = vsub.f32 %v5677, %v5752
    %v5754 = vand.u32 %v5753, 4294901760
    %v5755 = vsub.f32 %v5753, %v5754
    %v5756 = vand.u32 %v5755, 4294901760
    %5757 = vmatmul.mubr.f32.gmra.mrb[0].mxu0 %v5756
    %v5758 = vpop.f32.mrb[0].mxu0
    %v5759 = vadd.f32 %v5673, %v5758
    %v5760 = vpop.f32.mrb[0].mxu0
    %5761 = vdwg.mxu0
    %5762 = vmatprep.subr.mxu0 0.0
    %v5763 = vand.u32 %v5660, 4294901760
    %v5764 = vsub.f32 %v5660, %v5763
    %v5765 = vand.u32 %v5764, 4294901760
    %v5766 = vsub.f32 %v5764, %v5765
    %v5767 = vand.u32 %v5766, 4294901760
    %5768 = vmatpush1.msra.mxu0 %v5767
    %5769 = vmatprep.subr.mxu0 0.0
    %v5770 = vand.u32 %v5661, 4294901760
    %v5771 = vsub.f32 %v5661, %v5770
    %v5772 = vand.u32 %v5771, 4294901760
    %v5773 = vsub.f32 %v5771, %v5772
    %v5774 = vand.u32 %v5773, 4294901760
    %5775 = vmatpush1.msra.mxu0 %v5774
    %5776 = vmatprep.subr.mxu0 0.0
    %v5777 = vand.u32 %v5662, 4294901760
    %v5778 = vsub.f32 %v5662, %v5777
    %v5779 = vand.u32 %v5778, 4294901760
    %v5780 = vsub.f32 %v5778, %v5779
    %v5781 = vand.u32 %v5780, 4294901760
    %5782 = vmatpush1.msra.mxu0 %v5781
    %5783 = vmatprep.subr.mxu0 0.0
    %v5784 = vand.u32 %v5663, 4294901760
    %v5785 = vsub.f32 %v5663, %v5784
    %v5786 = vand.u32 %v5785, 4294901760
    %v5787 = vsub.f32 %v5785, %v5786
    %v5788 = vand.u32 %v5787, 4294901760
    %5789 = vmatpush1.msra.mxu0 %v5788
    %5790 = vmatprep.subr.mxu0 0.0
    %v5791 = vand.u32 %v5664, 4294901760
    %v5792 = vsub.f32 %v5664, %v5791
    %v5793 = vand.u32 %v5792, 4294901760
    %v5794 = vsub.f32 %v5792, %v5793
    %v5795 = vand.u32 %v5794, 4294901760
    %5796 = vmatpush1.msra.mxu0 %v5795
    %5797 = vmatprep.subr.mxu0 0.0
    %v5798 = vand.u32 %v5665, 4294901760
    %v5799 = vsub.f32 %v5665, %v5798
    %v5800 = vand.u32 %v5799, 4294901760
    %v5801 = vsub.f32 %v5799, %v5800
    %v5802 = vand.u32 %v5801, 4294901760
    %5803 = vmatpush1.msra.mxu0 %v5802
    %5804 = vmatprep.subr.mxu0 0.0
    %v5805 = vand.u32 %v5666, 4294901760
    %v5806 = vsub.f32 %v5666, %v5805
    %v5807 = vand.u32 %v5806, 4294901760
    %v5808 = vsub.f32 %v5806, %v5807
    %v5809 = vand.u32 %v5808, 4294901760
    %5810 = vmatpush1.msra.mxu0 %v5809
    %5811 = vmatprep.subr.mxu0 0.0
    %v5812 = vand.u32 %v5667, 4294901760
    %v5813 = vsub.f32 %v5667, %v5812
    %v5814 = vand.u32 %v5813, 4294901760
    %v5815 = vsub.f32 %v5813, %v5814
    %v5816 = vand.u32 %v5815, 4294901760
    %5817 = vmatpush1.msra.mxu0 %v5816
    %5818 = vmatprep.subr.mxu0 0.0
    %5819 = vmatpush1.msra.mxu0 0.0
    %5820 = vmatprep.subr.mxu0 0.0
    %5821 = vmatpush1.msra.mxu0 0.0
    %5822 = vmatprep.subr.mxu0 0.0
    %5823 = vmatpush1.msra.mxu0 0.0
    %5824 = vmatprep.subr.mxu0 0.0
    %5825 = vmatpush1.msra.mxu0 0.0
    %5826 = vmatprep.subr.mxu0 0.0
    %5827 = vmatpush1.msra.mxu0 0.0
    %5828 = vmatprep.subr.mxu0 0.0
    %5829 = vmatpush1.msra.mxu0 0.0
    %5830 = vmatprep.subr.mxu0 0.0
    %5831 = vmatpush1.msra.mxu0 0.0
    %5832 = vmatprep.subr.mxu0 0.0
    %5833 = vmatpush1.msra.mxu0 0.0
    %5834 = vmatprep.subr.mxu0 0.0
    %5835 = vmatpush1.msra.mxu0 0.0
    %5836 = vmatprep.subr.mxu0 0.0
    %5837 = vmatpush1.msra.mxu0 0.0
    %5838 = vmatprep.subr.mxu0 0.0
    %5839 = vmatpush1.msra.mxu0 0.0
    %5840 = vmatprep.subr.mxu0 0.0
    %5841 = vmatpush1.msra.mxu0 0.0
    %5842 = vmatprep.subr.mxu0 0.0
    %5843 = vmatpush1.msra.mxu0 0.0
    %5844 = vmatprep.subr.mxu0 0.0
    %5845 = vmatpush1.msra.mxu0 0.0
    %5846 = vmatprep.subr.mxu0 0.0
    %5847 = vmatpush1.msra.mxu0 0.0
    %5848 = vmatprep.subr.mxu0 0.0
    %5849 = vmatpush1.msra.mxu0 0.0
    %5850 = vmatprep.subr.mxu0 0.0
    %5851 = vmatpush1.msra.mxu0 0.0
    %5852 = vmatprep.subr.mxu0 0.0
    %5853 = vmatpush1.msra.mxu0 0.0
    %5854 = vmatprep.subr.mxu0 0.0
    %5855 = vmatpush1.msra.mxu0 0.0
    %5856 = vmatprep.subr.mxu0 0.0
    %5857 = vmatpush1.msra.mxu0 0.0
    %5858 = vmatprep.subr.mxu0 0.0
    %5859 = vmatpush1.msra.mxu0 0.0
    %5860 = vmatprep.subr.mxu0 0.0
    %5861 = vmatpush1.msra.mxu0 0.0
    %5862 = vmatprep.subr.mxu0 0.0
    %5863 = vmatpush1.msra.mxu0 0.0
    %5864 = vmatprep.subr.mxu0 0.0
    %5865 = vmatpush1.msra.mxu0 0.0
    %5866 = vmatprep.mubr.f32.mxu0 0.0
    %v5867 = vand.u32 %v5677, 4294901760
    %5868 = vmatmul.mubr.f32.gmra.mrb[0].mxu0 %v5867
    %v5869 = vpop.f32.mrb[0].mxu0
    %v5870 = vadd.f32 %v5759, %v5869
    %v5871 = vpop.f32.mrb[0].mxu0
    %5872 = vdwg.mxu0
    %5873 = vmatprep.subr.mxu0 0.0
    %v5874 = vand.u32 %v5660, 4294901760
    %v5875 = vsub.f32 %v5660, %v5874
    %5876 = vmatpush1.msra.mxu0 %v5875
    %5877 = vmatprep.subr.mxu0 0.0
    %v5878 = vand.u32 %v5661, 4294901760
    %v5879 = vsub.f32 %v5661, %v5878
    %5880 = vmatpush1.msra.mxu0 %v5879
    %5881 = vmatprep.subr.mxu0 0.0
    %v5882 = vand.u32 %v5662, 4294901760
    %v5883 = vsub.f32 %v5662, %v5882
    %5884 = vmatpush1.msra.mxu0 %v5883
    %5885 = vmatprep.subr.mxu0 0.0
    %v5886 = vand.u32 %v5663, 4294901760
    %v5887 = vsub.f32 %v5663, %v5886
    %5888 = vmatpush1.msra.mxu0 %v5887
    %5889 = vmatprep.subr.mxu0 0.0
    %v5890 = vand.u32 %v5664, 4294901760
    %v5891 = vsub.f32 %v5664, %v5890
    %5892 = vmatpush1.msra.mxu0 %v5891
    %5893 = vmatprep.subr.mxu0 0.0
    %v5894 = vand.u32 %v5665, 4294901760
    %v5895 = vsub.f32 %v5665, %v5894
    %5896 = vmatpush1.msra.mxu0 %v5895
    %5897 = vmatprep.subr.mxu0 0.0
    %v5898 = vand.u32 %v5666, 4294901760
    %v5899 = vsub.f32 %v5666, %v5898
    %5900 = vmatpush1.msra.mxu0 %v5899
    %5901 = vmatprep.subr.mxu0 0.0
    %v5902 = vand.u32 %v5667, 4294901760
    %v5903 = vsub.f32 %v5667, %v5902
    %5904 = vmatpush1.msra.mxu0 %v5903
    %5905 = vmatprep.subr.mxu0 0.0
    %5906 = vmatpush1.msra.mxu0 0.0
    %5907 = vmatprep.subr.mxu0 0.0
    %5908 = vmatpush1.msra.mxu0 0.0
    %5909 = vmatprep.subr.mxu0 0.0
    %5910 = vmatpush1.msra.mxu0 0.0
    %5911 = vmatprep.subr.mxu0 0.0
    %5912 = vmatpush1.msra.mxu0 0.0
    %5913 = vmatprep.subr.mxu0 0.0
    %5914 = vmatpush1.msra.mxu0 0.0
    %5915 = vmatprep.subr.mxu0 0.0
    %5916 = vmatpush1.msra.mxu0 0.0
    %5917 = vmatprep.subr.mxu0 0.0
    %5918 = vmatpush1.msra.mxu0 0.0
    %5919 = vmatprep.subr.mxu0 0.0
    %5920 = vmatpush1.msra.mxu0 0.0
    %5921 = vmatprep.subr.mxu0 0.0
    %5922 = vmatpush1.msra.mxu0 0.0
    %5923 = vmatprep.subr.mxu0 0.0
    %5924 = vmatpush1.msra.mxu0 0.0
    %5925 = vmatprep.subr.mxu0 0.0
    %5926 = vmatpush1.msra.mxu0 0.0
    %5927 = vmatprep.subr.mxu0 0.0
    %5928 = vmatpush1.msra.mxu0 0.0
    %5929 = vmatprep.subr.mxu0 0.0
    %5930 = vmatpush1.msra.mxu0 0.0
    %5931 = vmatprep.subr.mxu0 0.0
    %5932 = vmatpush1.msra.mxu0 0.0
    %5933 = vmatprep.subr.mxu0 0.0
    %5934 = vmatpush1.msra.mxu0 0.0
    %5935 = vmatprep.subr.mxu0 0.0
    %5936 = vmatpush1.msra.mxu0 0.0
    %5937 = vmatprep.subr.mxu0 0.0
    %5938 = vmatpush1.msra.mxu0 0.0
    %5939 = vmatprep.subr.mxu0 0.0
    %5940 = vmatpush1.msra.mxu0 0.0
    %5941 = vmatprep.subr.mxu0 0.0
    %5942 = vmatpush1.msra.mxu0 0.0
    %5943 = vmatprep.subr.mxu0 0.0
    %5944 = vmatpush1.msra.mxu0 0.0
    %5945 = vmatprep.subr.mxu0 0.0
    %5946 = vmatpush1.msra.mxu0 0.0
    %5947 = vmatprep.subr.mxu0 0.0
    %5948 = vmatpush1.msra.mxu0 0.0
    %5949 = vmatprep.subr.mxu0 0.0
    %5950 = vmatpush1.msra.mxu0 0.0
    %5951 = vmatprep.subr.mxu0 0.0
    %5952 = vmatpush1.msra.mxu0 0.0
    %5953 = vmatprep.mubr.f32.mxu0 0.0
    %v5954 = vand.u32 %v5677, 4294901760
    %v5955 = vsub.f32 %v5677, %v5954
    %5956 = vmatmul.mubr.f32.gmra.mrb[0].mxu0 %v5955
    %v5957 = vpop.f32.mrb[0].mxu0
    %v5958 = vadd.f32 %v5870, %v5957
    %v5959 = vpop.f32.mrb[0].mxu0
    %5960 = vdwg.mxu0
    %5961 = vmatprep.subr.mxu0 0.0
    %v5962 = vand.u32 %v5660, 4294901760
    %5963 = vmatpush1.msra.mxu0 %v5962
    %5964 = vmatprep.subr.mxu0 0.0
    %v5965 = vand.u32 %v5661, 4294901760
    %5966 = vmatpush1.msra.mxu0 %v5965
    %5967 = vmatprep.subr.mxu0 0.0
    %v5968 = vand.u32 %v5662, 4294901760
    %5969 = vmatpush1.msra.mxu0 %v5968
    %5970 = vmatprep.subr.mxu0 0.0
    %v5971 = vand.u32 %v5663, 4294901760
    %5972 = vmatpush1.msra.mxu0 %v5971
    %5973 = vmatprep.subr.mxu0 0.0
    %v5974 = vand.u32 %v5664, 4294901760
    %5975 = vmatpush1.msra.mxu0 %v5974
    %5976 = vmatprep.subr.mxu0 0.0
    %v5977 = vand.u32 %v5665, 4294901760
    %5978 = vmatpush1.msra.mxu0 %v5977
    %5979 = vmatprep.subr.mxu0 0.0
    %v5980 = vand.u32 %v5666, 4294901760
    %5981 = vmatpush1.msra.mxu0 %v5980
    %5982 = vmatprep.subr.mxu0 0.0
    %v5983 = vand.u32 %v5667, 4294901760
    %5984 = vmatpush1.msra.mxu0 %v5983
    %5985 = vmatprep.subr.mxu0 0.0
    %5986 = vmatpush1.msra.mxu0 0.0
    %5987 = vmatprep.subr.mxu0 0.0
    %5988 = vmatpush1.msra.mxu0 0.0
    %5989 = vmatprep.subr.mxu0 0.0
    %5990 = vmatpush1.msra.mxu0 0.0
    %5991 = vmatprep.subr.mxu0 0.0
    %5992 = vmatpush1.msra.mxu0 0.0
    %5993 = vmatprep.subr.mxu0 0.0
    %5994 = vmatpush1.msra.mxu0 0.0
    %5995 = vmatprep.subr.mxu0 0.0
    %5996 = vmatpush1.msra.mxu0 0.0
    %5997 = vmatprep.subr.mxu0 0.0
    %5998 = vmatpush1.msra.mxu0 0.0
    %5999 = vmatprep.subr.mxu0 0.0
    %6000 = vmatpush1.msra.mxu0 0.0
    %6001 = vmatprep.subr.mxu0 0.0
    %6002 = vmatpush1.msra.mxu0 0.0
    %6003 = vmatprep.subr.mxu0 0.0
    %6004 = vmatpush1.msra.mxu0 0.0
    %6005 = vmatprep.subr.mxu0 0.0
    %6006 = vmatpush1.msra.mxu0 0.0
    %6007 = vmatprep.subr.mxu0 0.0
    %6008 = vmatpush1.msra.mxu0 0.0
    %6009 = vmatprep.subr.mxu0 0.0
    %6010 = vmatpush1.msra.mxu0 0.0
    %6011 = vmatprep.subr.mxu0 0.0
    %6012 = vmatpush1.msra.mxu0 0.0
    %6013 = vmatprep.subr.mxu0 0.0
    %6014 = vmatpush1.msra.mxu0 0.0
    %6015 = vmatprep.subr.mxu0 0.0
    %6016 = vmatpush1.msra.mxu0 0.0
    %6017 = vmatprep.subr.mxu0 0.0
    %6018 = vmatpush1.msra.mxu0 0.0
    %6019 = vmatprep.subr.mxu0 0.0
    %6020 = vmatpush1.msra.mxu0 0.0
    %6021 = vmatprep.subr.mxu0 0.0
    %6022 = vmatpush1.msra.mxu0 0.0
    %6023 = vmatprep.subr.mxu0 0.0
    %6024 = vmatpush1.msra.mxu0 0.0
    %6025 = vmatprep.subr.mxu0 0.0
    %6026 = vmatpush1.msra.mxu0 0.0
    %6027 = vmatprep.subr.mxu0 0.0
    %6028 = vmatpush1.msra.mxu0 0.0
    %6029 = vmatprep.subr.mxu0 0.0
    %6030 = vmatpush1.msra.mxu0 0.0
    %6031 = vmatprep.subr.mxu0 0.0
    %6032 = vmatpush1.msra.mxu0 0.0
    %6033 = vmatprep.mubr.f32.mxu0 0.0
    %v6034 = vand.u32 %v5677, 4294901760
    %v6035 = vsub.f32 %v5677, %v6034
    %v6036 = vand.u32 %v6035, 4294901760
    %6037 = vmatmul.mubr.f32.gmra.mrb[0].mxu0 %v6036
    %v6038 = vpop.f32.mrb[0].mxu0
    %v6039 = vadd.f32 %v5958, %v6038
    %v6040 = vpop.f32.mrb[0].mxu0
    %6041 = vdwg.mxu0
    %6042 = vmatprep.subr.mxu0 0.0
    %v6043 = vand.u32 %v5660, 4294901760
    %v6044 = vsub.f32 %v5660, %v6043
    %v6045 = vand.u32 %v6044, 4294901760
    %6046 = vmatpush1.msra.mxu0 %v6045
    %6047 = vmatprep.subr.mxu0 0.0
    %v6048 = vand.u32 %v5661, 4294901760
    %v6049 = vsub.f32 %v5661, %v6048
    %v6050 = vand.u32 %v6049, 4294901760
    %6051 = vmatpush1.msra.mxu0 %v6050
    %6052 = vmatprep.subr.mxu0 0.0
    %v6053 = vand.u32 %v5662, 4294901760
    %v6054 = vsub.f32 %v5662, %v6053
    %v6055 = vand.u32 %v6054, 4294901760
    %6056 = vmatpush1.msra.mxu0 %v6055
    %6057 = vmatprep.subr.mxu0 0.0
    %v6058 = vand.u32 %v5663, 4294901760
    %v6059 = vsub.f32 %v5663, %v6058
    %v6060 = vand.u32 %v6059, 4294901760
    %6061 = vmatpush1.msra.mxu0 %v6060
    %6062 = vmatprep.subr.mxu0 0.0
    %v6063 = vand.u32 %v5664, 4294901760
    %v6064 = vsub.f32 %v5664, %v6063
    %v6065 = vand.u32 %v6064, 4294901760
    %6066 = vmatpush1.msra.mxu0 %v6065
    %6067 = vmatprep.subr.mxu0 0.0
    %v6068 = vand.u32 %v5665, 4294901760
    %v6069 = vsub.f32 %v5665, %v6068
    %v6070 = vand.u32 %v6069, 4294901760
    %6071 = vmatpush1.msra.mxu0 %v6070
    %6072 = vmatprep.subr.mxu0 0.0
    %v6073 = vand.u32 %v5666, 4294901760
    %v6074 = vsub.f32 %v5666, %v6073
    %v6075 = vand.u32 %v6074, 4294901760
    %6076 = vmatpush1.msra.mxu0 %v6075
    %6077 = vmatprep.subr.mxu0 0.0
    %v6078 = vand.u32 %v5667, 4294901760
    %v6079 = vsub.f32 %v5667, %v6078
    %v6080 = vand.u32 %v6079, 4294901760
    %6081 = vmatpush1.msra.mxu0 %v6080
    %6082 = vmatprep.subr.mxu0 0.0
    %6083 = vmatpush1.msra.mxu0 0.0
    %6084 = vmatprep.subr.mxu0 0.0
    %6085 = vmatpush1.msra.mxu0 0.0
    %6086 = vmatprep.subr.mxu0 0.0
    %6087 = vmatpush1.msra.mxu0 0.0
    %6088 = vmatprep.subr.mxu0 0.0
    %6089 = vmatpush1.msra.mxu0 0.0
    %6090 = vmatprep.subr.mxu0 0.0
    %6091 = vmatpush1.msra.mxu0 0.0
    %6092 = vmatprep.subr.mxu0 0.0
    %6093 = vmatpush1.msra.mxu0 0.0
    %6094 = vmatprep.subr.mxu0 0.0
    %6095 = vmatpush1.msra.mxu0 0.0
    %6096 = vmatprep.subr.mxu0 0.0
    %6097 = vmatpush1.msra.mxu0 0.0
    %6098 = vmatprep.subr.mxu0 0.0
    %6099 = vmatpush1.msra.mxu0 0.0
    %6100 = vmatprep.subr.mxu0 0.0
    %6101 = vmatpush1.msra.mxu0 0.0
    %6102 = vmatprep.subr.mxu0 0.0
    %6103 = vmatpush1.msra.mxu0 0.0
    %6104 = vmatprep.subr.mxu0 0.0
    %6105 = vmatpush1.msra.mxu0 0.0
    %6106 = vmatprep.subr.mxu0 0.0
    %6107 = vmatpush1.msra.mxu0 0.0
    %6108 = vmatprep.subr.mxu0 0.0
    %6109 = vmatpush1.msra.mxu0 0.0
    %6110 = vmatprep.subr.mxu0 0.0
    %6111 = vmatpush1.msra.mxu0 0.0
    %6112 = vmatprep.subr.mxu0 0.0
    %6113 = vmatpush1.msra.mxu0 0.0
    %6114 = vmatprep.subr.mxu0 0.0
    %6115 = vmatpush1.msra.mxu0 0.0
    %6116 = vmatprep.subr.mxu0 0.0
    %6117 = vmatpush1.msra.mxu0 0.0
    %6118 = vmatprep.subr.mxu0 0.0
    %6119 = vmatpush1.msra.mxu0 0.0
    %6120 = vmatprep.subr.mxu0 0.0
    %6121 = vmatpush1.msra.mxu0 0.0
    %6122 = vmatprep.subr.mxu0 0.0
    %6123 = vmatpush1.msra.mxu0 0.0
    %6124 = vmatprep.subr.mxu0 0.0
    %6125 = vmatpush1.msra.mxu0 0.0
    %6126 = vmatprep.subr.mxu0 0.0
    %6127 = vmatpush1.msra.mxu0 0.0
    %6128 = vmatprep.subr.mxu0 0.0
    %6129 = vmatpush1.msra.mxu0 0.0
    %6130 = vmatprep.mubr.f32.mxu0 0.0
    %v6131 = vand.u32 %v5677, 4294901760
    %6132 = vmatmul.mubr.f32.gmra.mrb[0].mxu0 %v6131
    %v6133 = vpop.f32.mrb[0].mxu0
    %v6134 = vadd.f32 %v6039, %v6133
    %v6135 = vpop.f32.mrb[0].mxu0
    %6136 = vdwg.mxu0
    %6137 = vmatprep.subr.mxu0 0.0
    %v6138 = vand.u32 %v5660, 4294901760
    %6139 = vmatpush1.msra.mxu0 %v6138
    %6140 = vmatprep.subr.mxu0 0.0
    %v6141 = vand.u32 %v5661, 4294901760
    %6142 = vmatpush1.msra.mxu0 %v6141
    %6143 = vmatprep.subr.mxu0 0.0
    %v6144 = vand.u32 %v5662, 4294901760
    %6145 = vmatpush1.msra.mxu0 %v6144
    %6146 = vmatprep.subr.mxu0 0.0
    %v6147 = vand.u32 %v5663, 4294901760
    %6148 = vmatpush1.msra.mxu0 %v6147
    %6149 = vmatprep.subr.mxu0 0.0
    %v6150 = vand.u32 %v5664, 4294901760
    %6151 = vmatpush1.msra.mxu0 %v6150
    %6152 = vmatprep.subr.mxu0 0.0
    %v6153 = vand.u32 %v5665, 4294901760
    %6154 = vmatpush1.msra.mxu0 %v6153
    %6155 = vmatprep.subr.mxu0 0.0
    %v6156 = vand.u32 %v5666, 4294901760
    %6157 = vmatpush1.msra.mxu0 %v6156
    %6158 = vmatprep.subr.mxu0 0.0
    %v6159 = vand.u32 %v5667, 4294901760
    %6160 = vmatpush1.msra.mxu0 %v6159
    %6161 = vmatprep.subr.mxu0 0.0
    %6162 = vmatpush1.msra.mxu0 0.0
    %6163 = vmatprep.subr.mxu0 0.0
    %6164 = vmatpush1.msra.mxu0 0.0
    %6165 = vmatprep.subr.mxu0 0.0
    %6166 = vmatpush1.msra.mxu0 0.0
    %6167 = vmatprep.subr.mxu0 0.0
    %6168 = vmatpush1.msra.mxu0 0.0
    %6169 = vmatprep.subr.mxu0 0.0
    %6170 = vmatpush1.msra.mxu0 0.0
    %6171 = vmatprep.subr.mxu0 0.0
    %6172 = vmatpush1.msra.mxu0 0.0
    %6173 = vmatprep.subr.mxu0 0.0
    %6174 = vmatpush1.msra.mxu0 0.0
    %6175 = vmatprep.subr.mxu0 0.0
    %6176 = vmatpush1.msra.mxu0 0.0
    %6177 = vmatprep.subr.mxu0 0.0
    %6178 = vmatpush1.msra.mxu0 0.0
    %6179 = vmatprep.subr.mxu0 0.0
    %6180 = vmatpush1.msra.mxu0 0.0
    %6181 = vmatprep.subr.mxu0 0.0
    %6182 = vmatpush1.msra.mxu0 0.0
    %6183 = vmatprep.subr.mxu0 0.0
    %6184 = vmatpush1.msra.mxu0 0.0
    %6185 = vmatprep.subr.mxu0 0.0
    %6186 = vmatpush1.msra.mxu0 0.0
    %6187 = vmatprep.subr.mxu0 0.0
    %6188 = vmatpush1.msra.mxu0 0.0
    %6189 = vmatprep.subr.mxu0 0.0
    %6190 = vmatpush1.msra.mxu0 0.0
    %6191 = vmatprep.subr.mxu0 0.0
    %6192 = vmatpush1.msra.mxu0 0.0
    %6193 = vmatprep.subr.mxu0 0.0
    %6194 = vmatpush1.msra.mxu0 0.0
    %6195 = vmatprep.subr.mxu0 0.0
    %6196 = vmatpush1.msra.mxu0 0.0
    %6197 = vmatprep.subr.mxu0 0.0
    %6198 = vmatpush1.msra.mxu0 0.0
    %6199 = vmatprep.subr.mxu0 0.0
    %6200 = vmatpush1.msra.mxu0 0.0
    %6201 = vmatprep.subr.mxu0 0.0
    %6202 = vmatpush1.msra.mxu0 0.0
    %6203 = vmatprep.subr.mxu0 0.0
    %6204 = vmatpush1.msra.mxu0 0.0
    %6205 = vmatprep.subr.mxu0 0.0
    %6206 = vmatpush1.msra.mxu0 0.0
    %6207 = vmatprep.subr.mxu0 0.0
    %6208 = vmatpush1.msra.mxu0 0.0
    %6209 = vmatprep.mubr.f32.mxu0 0.0
    %v6210 = vand.u32 %v5677, 4294901760
    %6211 = vmatmul.mubr.f32.gmra.mrb[0].mxu0 %v6210
    %v6212 = vpop.f32.mrb[0].mxu0
    %v6213 = vadd.f32 %v6134, %v6212
    %v6214 = vpop.f32.mrb[0].mxu0
    %6215 = vdwg.mxu0
    %6216 = vst [vmem:[#allocation7] sm:$0xff] %v6213
    // Predicated region
    $region70: #{tpu_custom_call.1} parent=1 // pred_check
      _
    $region71: #{tpu_custom_call.1} parent=1 // pred_check_branch
      %6218 = sbr.rel (0) target = $region73
    $region72: #{tpu_custom_call.1} parent=1 // pred_region
      %s6220 = ssub.s32 128, 128
      %6221 = vsyncadd [#allocation4], %s6220
      %s6223 = sshll.u32 [#allocation7], 4
      %s6224 = int_to_ptr.vmem [resolvable:$true] %s6223
      %6226 = dma.vmem_to_hbm [thread:$0]  %s6224, 128, %s15, [#allocation4]
    $region73: #{tpu_custom_call.1} parent=1 // pred_fallthru
      _
    // Predicated region
    $region74: #{tpu_custom_call.1} parent=1 // pred_check
      _
    $region75: #{tpu_custom_call.1} parent=1 // pred_check_branch
      %6228 = sbr.rel (0) target = $region77
    $region76: #{tpu_custom_call.1} parent=1 // pred_region
      %6229 = dma.done [#allocation4], 128
    $region77: #{tpu_custom_call.1} parent=1 // pred_fallthru
      _
    %6230 = vsyncpa [#allocation3], 1
    %6231 = vsyncpa [#allocation6], 1
    %6232 = vsyncpa [#allocation4], 1

</llo_original>
